<compile_context>
chip_gen: v7x
topology: tpu7x:2x2x1
jax: 0.10.0
libtpu: 0.0.40
codegen_flags: <defaults>
</compile_context>

<pallas_src>
import jax
import jax.numpy as jnp
from jax import lax
from jax.experimental import pallas as pl
from jax.experimental.pallas import tpu as pltpu

EPS = 1e-5                      # PyTorch BatchNorm2d default
MATMUL_DTYPE = jnp.bfloat16     # MXU operand dtype (set jnp.float32 for exact f32)


def _residual_block_kernel(x_ref, w1_ref, g1_ref, b1_ref, w2_ref, g2_ref,
                           b2_ref, out_ref, xpad_ref, patch_ref):
  """Whole residual block in one invocation (all tensors fit in VMEM).

  x_ref    : (N, H, W, C)   f32 input (NHWC)
  w1_ref   : (9*C, C)       bf16 conv1 weight, im2col-reshaped (HWIO flattened)
  w2_ref   : (9*C, C)       bf16 conv2 weight
  g*/b*    : (1, C)         f32 BN gamma / beta
  out_ref  : (N, H, W, C)   f32 output
  xpad_ref : (N, H+2, W+2, C) f32 scratch: 1-pixel-halo buffer (reused twice)
  patch_ref: (N*H*W, 9*C)   f32 scratch: im2col patch (reused twice)
  """
  N, H, W, C = x_ref.shape
  Hp, Wp = H + 2, W + 2
  nhw = N * H * W
  inv_nhw = 1.0 / nhw

  # ---- zero ONLY the 1-pixel halo border, once.  The interior is always
  #      overwritten before each conv, so the border stays valid for conv2. ----
  xpad_ref[:, 0:1, :, :] = jnp.zeros((N, 1, Wp, C), jnp.float32)
  xpad_ref[:, H + 1:Hp, :, :] = jnp.zeros((N, 1, Wp, C), jnp.float32)
  xpad_ref[:, 1:H + 1, 0:1, :] = jnp.zeros((N, H, 1, C), jnp.float32)
  xpad_ref[:, 1:H + 1, W + 1:Wp, :] = jnp.zeros((N, H, 1, C), jnp.float32)

  def conv3x3(w_ref):
    """im2col patch built once in VMEM + a single MXU matmul with K = 9*C."""
    for kh in range(3):
      for kw in range(3):
        t = kh * 3 + kw
        tap = xpad_ref[:, kh:kh + H, kw:kw + W, :]          # (N, H, W, C)
        patch_ref[:, t * C:(t + 1) * C] = tap.reshape(nhw, C)
    patch = patch_ref[...].astype(w_ref.dtype)              # bf16 MXU operand
    return jnp.dot(patch, w_ref[...],
                   preferred_element_type=jnp.float32)      # (nhw, C) f32

  def batchnorm(acc, g_ref, b_ref):
    """Single-pass training-mode BN folded into one per-channel scale/shift."""
    mean = jnp.sum(acc, axis=0, keepdims=True) * inv_nhw          # (1, C)
    ex2 = jnp.sum(acc * acc, axis=0, keepdims=True) * inv_nhw     # E[x^2]
    var = ex2 - mean * mean                                       # biased var
    scale = g_ref[...] * lax.rsqrt(var + EPS)
    shift = b_ref[...] - mean * scale
    return acc * scale + shift

  # ---- conv1 -> BN1 -> ReLU ----
  xpad_ref[:, 1:H + 1, 1:W + 1, :] = x_ref[...]
  h1 = jnp.maximum(batchnorm(conv3x3(w1_ref), g1_ref, b1_ref), 0.0)

  # ---- conv2 -> BN2 (reuse the padded scratch; halo is still zero) ----
  xpad_ref[:, 1:H + 1, 1:W + 1, :] = h1.reshape(N, H, W, C)
  h2 = batchnorm(conv3x3(w2_ref), g2_ref, b2_ref)

  # ---- identity shortcut (stride=1, downsample=None => Cin == Cout) + ReLU ----
  out = jnp.maximum(x_ref[...].reshape(nhw, C) + h2, 0.0)
  out_ref[...] = out.reshape(N, H, W, C)


def residual_block_nhwc(x_nhwc, w1, g1, b1, w2, g2, b2):
  N, H, W, C = x_nhwc.shape
  assert w1.shape == (3, 3, C, C) and w2.shape == (3, 3, C, C), \
      "identity shortcut requires in_channels == out_channels"
  nhw = N * H * W

  # Host-side weight prep for im2col: HWIO (3,3,Cin,Cout) -> (9*Cin, Cout), bf16.
  w1m = w1.reshape(9 * C, C).astype(MATMUL_DTYPE)
  w2m = w2.reshape(9 * C, C).astype(MATMUL_DTYPE)

  # Explicit VMEM budget: resident footprint (x, out, halo scratch, patch)
  # with headroom, clamped to a safe range for v5e/v6e/v7x.
  resident = 4 * (2 * nhw * C + N * (H + 2) * (W + 2) * C + nhw * 9 * C)
  vmem_bytes = int(min(max(2 * resident + (8 << 20), 32 << 20), 96 << 20))

  vmem = pl.BlockSpec(memory_space=pltpu.MemorySpace.VMEM)
  return pl.pallas_call(
      _residual_block_kernel,
      out_shape=jax.ShapeDtypeStruct((N, H, W, C), jnp.float32),
      in_specs=[vmem] * 7,
      out_specs=vmem,
      scratch_shapes=[
          pltpu.VMEM((N, H + 2, W + 2, C), jnp.float32),   # halo buffer
          pltpu.VMEM((nhw, 9 * C), jnp.float32),           # im2col patch
      ],
      compiler_params=pltpu.CompilerParams(vmem_limit_bytes=vmem_bytes),
  )(x_nhwc.astype(jnp.float32), w1m,
    g1.reshape(1, C).astype(jnp.float32), b1.reshape(1, C).astype(jnp.float32),
    w2m,
    g2.reshape(1, C).astype(jnp.float32), b2.reshape(1, C).astype(jnp.float32))


@jax.jit
def residual_block_nchw(x_nchw, params):
  """PyTorch-facing wrapper: NCHW in / NCHW out (layout plumbing only)."""
  w1, g1, b1, w2, g2, b2 = params
  x_nhwc = jnp.transpose(x_nchw, (0, 2, 3, 1)).astype(jnp.float32)
  out = residual_block_nhwc(x_nhwc, w1, g1, b1, w2, g2, b2)
  return jnp.transpose(out, (0, 3, 1, 2))


def _reference_nhwc(x, w1, g1, b1, w2, g2, b2):
  """Pure-JAX reference (lax.conv + training-mode BN), matching the kernel's
  precision choice (bf16 conv operands, f32 accumulation / BN / residual)."""
  def conv(a, w):
    dn = lax.conv_dimension_numbers(a.shape, w.shape, ('NHWC', 'HWIO', 'NHWC'))
    return lax.conv_general_dilated(
        a.astype(MATMUL_DTYPE), w.astype(MATMUL_DTYPE), (1, 1), 'SAME',
        dimension_numbers=dn, preferred_element_type=jnp.float32)

  c1 = conv(x, w1)
  m1, v1 = c1.mean(axis=(0, 1, 2)), c1.var(axis=(0, 1, 2))
  h1 = jnp.maximum((c1 - m1) / jnp.sqrt(v1 + EPS) * g1 + b1, 0.0)
  c2 = conv(h1, w2)
  m2, v2 = c2.mean(axis=(0, 1, 2)), c2.var(axis=(0, 1, 2))
  h2 = (c2 - m2) / jnp.sqrt(v2 + EPS) * g2 + b2
  return jnp.maximum(x + h2, 0.0)


if __name__ == "__main__":
  # ResidualBlock(in_channels=4, out_channels=4, stride=1, downsample=None)
  N, C, H, W = 2, 4, 16, 16

  key = jax.random.PRNGKey(0)
  kx, k1, k2, kg1, kb1, kg2, kb2 = jax.random.split(key, 7)

  x_nchw = jax.random.normal(kx, (N, C, H, W), jnp.float32)

  w1 = jax.random.normal(k1, (3, 3, C, C), jnp.float32) * 0.2   # HWIO
  w2 = jax.random.normal(k2, (3, 3, C, C), jnp.float32) * 0.2
  g1 = 1.0 + 0.1 * jax.random.normal(kg1, (C,), jnp.float32)
  b1 = 0.1 * jax.random.normal(kb1, (C,), jnp.float32)
  g2 = 1.0 + 0.1 * jax.random.normal(kg2, (C,), jnp.float32)
  b2 = 0.1 * jax.random.normal(kb2, (C,), jnp.float32)

  params = (w1, g1, b1, w2, g2, b2)

  out = residual_block_nchw(x_nchw, params)
  out = jax.block_until_ready(out)

  # sanity-check against a pure-JAX reference of matching precision
  x_nhwc = jnp.transpose(x_nchw, (0, 2, 3, 1))
  ref = jnp.transpose(_reference_nhwc(x_nhwc, *params), (0, 3, 1, 2))
  assert out.shape == (N, C, H, W)
  max_err = float(jnp.max(jnp.abs(out - ref)))
  assert jnp.allclose(out, ref, atol=1e-2, rtol=1e-2), max_err

  print("KERNEL_OK")
</pallas_src>

<mosaic_0001>
module attributes {stable_mosaic.version = 11 : i64} {
  func.func @_residual_block_kernel(%arg0: memref<2x16x16x4xf32, #tpu.memory_space<vmem>>, %arg1: memref<36x4xbf16, #tpu.memory_space<vmem>>, %arg2: memref<1x4xf32, #tpu.memory_space<vmem>>, %arg3: memref<1x4xf32, #tpu.memory_space<vmem>>, %arg4: memref<36x4xbf16, #tpu.memory_space<vmem>>, %arg5: memref<1x4xf32, #tpu.memory_space<vmem>>, %arg6: memref<1x4xf32, #tpu.memory_space<vmem>>, %arg7: memref<2x16x16x4xf32, #tpu.memory_space<vmem>>, %arg8: memref<2x18x18x4xf32, #tpu.memory_space<vmem>>, %arg9: memref<512x36xf32, #tpu.memory_space<vmem>>) attributes {dimension_semantics = [], scalar_prefetch = 0 : i64, scratch_operands = 2 : i64, tpu.core_type = #tpu.core_type<tc>} {
    %cst = arith.constant 0.000000e+00 : f32
    %0 = vector.broadcast %cst : f32 to vector<2x1x18x4xf32>
    %c0 = arith.constant 0 : index
    %c0_0 = arith.constant 0 : index
    %c0_1 = arith.constant 0 : index
    %c0_2 = arith.constant 0 : index
    %1 = vector.load %arg8[%c0, %c0_0, %c0_1, %c0_2] : memref<2x18x18x4xf32, #tpu.memory_space<vmem>>, vector<2x1x18x4xf32>
    tpu.vector_store %arg8[%c0, %c0_0, %c0_1, %c0_2], %0 {strides = array<i32>} : memref<2x18x18x4xf32, #tpu.memory_space<vmem>>, vector<2x1x18x4xf32>,
    %cst_3 = arith.constant 0.000000e+00 : f32
    %2 = vector.broadcast %cst_3 : f32 to vector<2x1x18x4xf32>
    %c0_4 = arith.constant 0 : index
    %c17 = arith.constant 17 : index
    %c0_5 = arith.constant 0 : index
    %c0_6 = arith.constant 0 : index
    %3 = vector.load %arg8[%c0_4, %c17, %c0_5, %c0_6] : memref<2x18x18x4xf32, #tpu.memory_space<vmem>>, vector<2x1x18x4xf32>
    tpu.vector_store %arg8[%c0_4, %c17, %c0_5, %c0_6], %2 {strides = array<i32>} : memref<2x18x18x4xf32, #tpu.memory_space<vmem>>, vector<2x1x18x4xf32>,
    %cst_7 = arith.constant 0.000000e+00 : f32
    %4 = vector.broadcast %cst_7 : f32 to vector<2x16x1x4xf32>
    %c0_8 = arith.constant 0 : index
    %c1 = arith.constant 1 : index
    %c0_9 = arith.constant 0 : index
    %c0_10 = arith.constant 0 : index
    %5 = vector.load %arg8[%c0_8, %c1, %c0_9, %c0_10] : memref<2x18x18x4xf32, #tpu.memory_space<vmem>>, vector<2x16x1x4xf32>
    tpu.vector_store %arg8[%c0_8, %c1, %c0_9, %c0_10], %4 {strides = array<i32>} : memref<2x18x18x4xf32, #tpu.memory_space<vmem>>, vector<2x16x1x4xf32>,
    %cst_11 = arith.constant 0.000000e+00 : f32
    %6 = vector.broadcast %cst_11 : f32 to vector<2x16x1x4xf32>
    %c0_12 = arith.constant 0 : index
    %c1_13 = arith.constant 1 : index
    %c17_14 = arith.constant 17 : index
    %c0_15 = arith.constant 0 : index
    %7 = vector.load %arg8[%c0_12, %c1_13, %c17_14, %c0_15] : memref<2x18x18x4xf32, #tpu.memory_space<vmem>>, vector<2x16x1x4xf32>
    tpu.vector_store %arg8[%c0_12, %c1_13, %c17_14, %c0_15], %6 {strides = array<i32>} : memref<2x18x18x4xf32, #tpu.memory_space<vmem>>, vector<2x16x1x4xf32>,
    %c0_16 = arith.constant 0 : index
    %c0_17 = arith.constant 0 : index
    %c0_18 = arith.constant 0 : index
    %c0_19 = arith.constant 0 : index
    %8 = vector.load %arg0[%c0_16, %c0_17, %c0_18, %c0_19] : memref<2x16x16x4xf32, #tpu.memory_space<vmem>>, vector<2x16x16x4xf32>
    %c0_20 = arith.constant 0 : index
    %c1_21 = arith.constant 1 : index
    %c1_22 = arith.constant 1 : index
    %c0_23 = arith.constant 0 : index
    %9 = vector.load %arg8[%c0_20, %c1_21, %c1_22, %c0_23] : memref<2x18x18x4xf32, #tpu.memory_space<vmem>>, vector<2x16x16x4xf32>
    tpu.vector_store %arg8[%c0_20, %c1_21, %c1_22, %c0_23], %8 {strides = array<i32>} : memref<2x18x18x4xf32, #tpu.memory_space<vmem>>, vector<2x16x16x4xf32>,
    %c0_24 = arith.constant 0 : index
    %c0_25 = arith.constant 0 : index
    %c0_26 = arith.constant 0 : index
    %c0_27 = arith.constant 0 : index
    %10 = vector.load %arg8[%c0_24, %c0_25, %c0_26, %c0_27] : memref<2x18x18x4xf32, #tpu.memory_space<vmem>>, vector<2x16x16x4xf32>
    %11 = vector.shape_cast %10 : vector<2x16x16x4xf32> to vector<512x4xf32>
    %c0_28 = arith.constant 0 : index
    %c0_29 = arith.constant 0 : index
    %12 = vector.load %arg9[%c0_28, %c0_29] : memref<512x36xf32, #tpu.memory_space<vmem>>, vector<512x4xf32>
    tpu.vector_store %arg9[%c0_28, %c0_29], %11 {strides = array<i32>} : memref<512x36xf32, #tpu.memory_space<vmem>>, vector<512x4xf32>,
    %c0_30 = arith.constant 0 : index
    %c0_31 = arith.constant 0 : index
    %c1_32 = arith.constant 1 : index
    %c0_33 = arith.constant 0 : index
    %13 = vector.load %arg8[%c0_30, %c0_31, %c1_32, %c0_33] : memref<2x18x18x4xf32, #tpu.memory_space<vmem>>, vector<2x16x16x4xf32>
    %14 = vector.shape_cast %13 : vector<2x16x16x4xf32> to vector<512x4xf32>
    %c0_34 = arith.constant 0 : index
    %c4 = arith.constant 4 : index
    %15 = vector.load %arg9[%c0_34, %c4] : memref<512x36xf32, #tpu.memory_space<vmem>>, vector<512x4xf32>
    tpu.vector_store %arg9[%c0_34, %c4], %14 {strides = array<i32>} : memref<512x36xf32, #tpu.memory_space<vmem>>, vector<512x4xf32>,
    %c0_35 = arith.constant 0 : index
    %c0_36 = arith.constant 0 : index
    %c2 = arith.constant 2 : index
    %c0_37 = arith.constant 0 : index
    %16 = vector.load %arg8[%c0_35, %c0_36, %c2, %c0_37] : memref<2x18x18x4xf32, #tpu.memory_space<vmem>>, vector<2x16x16x4xf32>
    %17 = vector.shape_cast %16 : vector<2x16x16x4xf32> to vector<512x4xf32>
    %c0_38 = arith.constant 0 : index
    %c8 = arith.constant 8 : index
    %18 = vector.load %arg9[%c0_38, %c8] : memref<512x36xf32, #tpu.memory_space<vmem>>, vector<512x4xf32>
    tpu.vector_store %arg9[%c0_38, %c8], %17 {strides = array<i32>} : memref<512x36xf32, #tpu.memory_space<vmem>>, vector<512x4xf32>,
    %c0_39 = arith.constant 0 : index
    %c1_40 = arith.constant 1 : index
    %c0_41 = arith.constant 0 : index
    %c0_42 = arith.constant 0 : index
    %19 = vector.load %arg8[%c0_39, %c1_40, %c0_41, %c0_42] : memref<2x18x18x4xf32, #tpu.memory_space<vmem>>, vector<2x16x16x4xf32>
    %20 = vector.shape_cast %19 : vector<2x16x16x4xf32> to vector<512x4xf32>
    %c0_43 = arith.constant 0 : index
    %c12 = arith.constant 12 : index
    %21 = vector.load %arg9[%c0_43, %c12] : memref<512x36xf32, #tpu.memory_space<vmem>>, vector<512x4xf32>
    tpu.vector_store %arg9[%c0_43, %c12], %20 {strides = array<i32>} : memref<512x36xf32, #tpu.memory_space<vmem>>, vector<512x4xf32>,
    %c0_44 = arith.constant 0 : index
    %c1_45 = arith.constant 1 : index
    %c1_46 = arith.constant 1 : index
    %c0_47 = arith.constant 0 : index
    %22 = vector.load %arg8[%c0_44, %c1_45, %c1_46, %c0_47] : memref<2x18x18x4xf32, #tpu.memory_space<vmem>>, vector<2x16x16x4xf32>
    %23 = vector.shape_cast %22 : vector<2x16x16x4xf32> to vector<512x4xf32>
    %c0_48 = arith.constant 0 : index
    %c16 = arith.constant 16 : index
    %24 = vector.load %arg9[%c0_48, %c16] : memref<512x36xf32, #tpu.memory_space<vmem>>, vector<512x4xf32>
    tpu.vector_store %arg9[%c0_48, %c16], %23 {strides = array<i32>} : memref<512x36xf32, #tpu.memory_space<vmem>>, vector<512x4xf32>,
    %c0_49 = arith.constant 0 : index
    %c1_50 = arith.constant 1 : index
    %c2_51 = arith.constant 2 : index
    %c0_52 = arith.constant 0 : index
    %25 = vector.load %arg8[%c0_49, %c1_50, %c2_51, %c0_52] : memref<2x18x18x4xf32, #tpu.memory_space<vmem>>, vector<2x16x16x4xf32>
    %26 = vector.shape_cast %25 : vector<2x16x16x4xf32> to vector<512x4xf32>
    %c0_53 = arith.constant 0 : index
    %c20 = arith.constant 20 : index
    %27 = vector.load %arg9[%c0_53, %c20] : memref<512x36xf32, #tpu.memory_space<vmem>>, vector<512x4xf32>
    tpu.vector_store %arg9[%c0_53, %c20], %26 {strides = array<i32>} : memref<512x36xf32, #tpu.memory_space<vmem>>, vector<512x4xf32>,
    %c0_54 = arith.constant 0 : index
    %c2_55 = arith.constant 2 : index
    %c0_56 = arith.constant 0 : index
    %c0_57 = arith.constant 0 : index
    %28 = vector.load %arg8[%c0_54, %c2_55, %c0_56, %c0_57] : memref<2x18x18x4xf32, #tpu.memory_space<vmem>>, vector<2x16x16x4xf32>
    %29 = vector.shape_cast %28 : vector<2x16x16x4xf32> to vector<512x4xf32>
    %c0_58 = arith.constant 0 : index
    %c24 = arith.constant 24 : index
    %30 = vector.load %arg9[%c0_58, %c24] : memref<512x36xf32, #tpu.memory_space<vmem>>, vector<512x4xf32>
    tpu.vector_store %arg9[%c0_58, %c24], %29 {strides = array<i32>} : memref<512x36xf32, #tpu.memory_space<vmem>>, vector<512x4xf32>,
    %c0_59 = arith.constant 0 : index
    %c2_60 = arith.constant 2 : index
    %c1_61 = arith.constant 1 : index
    %c0_62 = arith.constant 0 : index
    %31 = vector.load %arg8[%c0_59, %c2_60, %c1_61, %c0_62] : memref<2x18x18x4xf32, #tpu.memory_space<vmem>>, vector<2x16x16x4xf32>
    %32 = vector.shape_cast %31 : vector<2x16x16x4xf32> to vector<512x4xf32>
    %c0_63 = arith.constant 0 : index
    %c28 = arith.constant 28 : index
    %33 = vector.load %arg9[%c0_63, %c28] : memref<512x36xf32, #tpu.memory_space<vmem>>, vector<512x4xf32>
    tpu.vector_store %arg9[%c0_63, %c28], %32 {strides = array<i32>} : memref<512x36xf32, #tpu.memory_space<vmem>>, vector<512x4xf32>,
    %c0_64 = arith.constant 0 : index
    %c2_65 = arith.constant 2 : index
    %c2_66 = arith.constant 2 : index
    %c0_67 = arith.constant 0 : index
    %34 = vector.load %arg8[%c0_64, %c2_65, %c2_66, %c0_67] : memref<2x18x18x4xf32, #tpu.memory_space<vmem>>, vector<2x16x16x4xf32>
    %35 = vector.shape_cast %34 : vector<2x16x16x4xf32> to vector<512x4xf32>
    %c0_68 = arith.constant 0 : index
    %c32 = arith.constant 32 : index
    %36 = vector.load %arg9[%c0_68, %c32] : memref<512x36xf32, #tpu.memory_space<vmem>>, vector<512x4xf32>
    tpu.vector_store %arg9[%c0_68, %c32], %35 {strides = array<i32>} : memref<512x36xf32, #tpu.memory_space<vmem>>, vector<512x4xf32>,
    %c0_69 = arith.constant 0 : index
    %c0_70 = arith.constant 0 : index
    %37 = vector.load %arg9[%c0_69, %c0_70] : memref<512x36xf32, #tpu.memory_space<vmem>>, vector<512x36xf32>
    %38 = arith.truncf %37 : vector<512x36xf32> to vector<512x36xbf16>
    %c0_71 = arith.constant 0 : index
    %c0_72 = arith.constant 0 : index
    %39 = vector.load %arg1[%c0_71, %c0_72] : memref<36x4xbf16, #tpu.memory_space<vmem>>, vector<36x4xbf16>
    %cst_73 = arith.constant dense<0.000000e+00> : vector<512x4xf32>
    %40 = tpu.matmul %38, %39, %cst_73 {dimension_numbers = #tpu.dot_dimension_numbers<[1], [0], [0], [1], [0, 0, 1, 1], [], []>} : vector<512x36xbf16>, vector<36x4xbf16>, vector<512x4xf32> -> vector<512x4xf32>
    %cst_74 = arith.constant dense<0.000000e+00> : vector<4xf32>
    %41 = vector.multi_reduction <add>, %40, %cst_74 [0] : vector<512x4xf32> to vector<4xf32>
    %42 = vector.shape_cast %41 : vector<4xf32> to vector<1x4xf32>
    %cst_75 = arith.constant 0.001953125 : f32
    %43 = vector.broadcast %cst_75 : f32 to vector<1x4xf32>
    %44 = arith.mulf %42, %43 : vector<1x4xf32>
    %45 = arith.mulf %40, %40 : vector<512x4xf32>
    %cst_76 = arith.constant dense<0.000000e+00> : vector<4xf32>
    %46 = vector.multi_reduction <add>, %45, %cst_76 [0] : vector<512x4xf32> to vector<4xf32>
    %47 = vector.shape_cast %46 : vector<4xf32> to vector<1x4xf32>
    %cst_77 = arith.constant 0.001953125 : f32
    %48 = vector.broadcast %cst_77 : f32 to vector<1x4xf32>
    %49 = arith.mulf %47, %48 : vector<1x4xf32>
    %50 = arith.mulf %44, %44 : vector<1x4xf32>
    %51 = arith.subf %49, %50 : vector<1x4xf32>
    %c0_78 = arith.constant 0 : index
    %c0_79 = arith.constant 0 : index
    %52 = vector.load %arg2[%c0_78, %c0_79] : memref<1x4xf32, #tpu.memory_space<vmem>>, vector<1x4xf32>
    %cst_80 = arith.constant 9.99999974E-6 : f32
    %53 = vector.broadcast %cst_80 : f32 to vector<1x4xf32>
    %54 = arith.addf %51, %53 : vector<1x4xf32>
    %55 = math.rsqrt %54 : vector<1x4xf32>
    %56 = arith.mulf %52, %55 : vector<1x4xf32>
    %c0_81 = arith.constant 0 : index
    %c0_82 = arith.constant 0 : index
    %57 = vector.load %arg3[%c0_81, %c0_82] : memref<1x4xf32, #tpu.memory_space<vmem>>, vector<1x4xf32>
    %58 = arith.mulf %44, %56 : vector<1x4xf32>
    %59 = arith.subf %57, %58 : vector<1x4xf32>
    %60 = vector.broadcast %56 : vector<1x4xf32> to vector<512x4xf32>
    %61 = arith.mulf %40, %60 : vector<512x4xf32>
    %62 = vector.broadcast %59 : vector<1x4xf32> to vector<512x4xf32>
    %63 = arith.addf %61, %62 : vector<512x4xf32>
    %cst_83 = arith.constant 0.000000e+00 : f32
    %64 = vector.broadcast %cst_83 : f32 to vector<512x4xf32>
    %65 = arith.maximumf %63, %64 : vector<512x4xf32>
    %66 = vector.shape_cast %65 : vector<512x4xf32> to vector<2x16x16x4xf32>
    %c0_84 = arith.constant 0 : index
    %c1_85 = arith.constant 1 : index
    %c1_86 = arith.constant 1 : index
    %c0_87 = arith.constant 0 : index
    %67 = vector.load %arg8[%c0_84, %c1_85, %c1_86, %c0_87] : memref<2x18x18x4xf32, #tpu.memory_space<vmem>>, vector<2x16x16x4xf32>
    tpu.vector_store %arg8[%c0_84, %c1_85, %c1_86, %c0_87], %66 {strides = array<i32>} : memref<2x18x18x4xf32, #tpu.memory_space<vmem>>, vector<2x16x16x4xf32>,
    %c0_88 = arith.constant 0 : index
    %c0_89 = arith.constant 0 : index
    %c0_90 = arith.constant 0 : index
    %c0_91 = arith.constant 0 : index
    %68 = vector.load %arg8[%c0_88, %c0_89, %c0_90, %c0_91] : memref<2x18x18x4xf32, #tpu.memory_space<vmem>>, vector<2x16x16x4xf32>
    %69 = vector.shape_cast %68 : vector<2x16x16x4xf32> to vector<512x4xf32>
    %c0_92 = arith.constant 0 : index
    %c0_93 = arith.constant 0 : index
    %70 = vector.load %arg9[%c0_92, %c0_93] : memref<512x36xf32, #tpu.memory_space<vmem>>, vector<512x4xf32>
    tpu.vector_store %arg9[%c0_92, %c0_93], %69 {strides = array<i32>} : memref<512x36xf32, #tpu.memory_space<vmem>>, vector<512x4xf32>,
    %c0_94 = arith.constant 0 : index
    %c0_95 = arith.constant 0 : index
    %c1_96 = arith.constant 1 : index
    %c0_97 = arith.constant 0 : index
    %71 = vector.load %arg8[%c0_94, %c0_95, %c1_96, %c0_97] : memref<2x18x18x4xf32, #tpu.memory_space<vmem>>, vector<2x16x16x4xf32>
    %72 = vector.shape_cast %71 : vector<2x16x16x4xf32> to vector<512x4xf32>
    %c0_98 = arith.constant 0 : index
    %c4_99 = arith.constant 4 : index
    %73 = vector.load %arg9[%c0_98, %c4_99] : memref<512x36xf32, #tpu.memory_space<vmem>>, vector<512x4xf32>
    tpu.vector_store %arg9[%c0_98, %c4_99], %72 {strides = array<i32>} : memref<512x36xf32, #tpu.memory_space<vmem>>, vector<512x4xf32>,
    %c0_100 = arith.constant 0 : index
    %c0_101 = arith.constant 0 : index
    %c2_102 = arith.constant 2 : index
    %c0_103 = arith.constant 0 : index
    %74 = vector.load %arg8[%c0_100, %c0_101, %c2_102, %c0_103] : memref<2x18x18x4xf32, #tpu.memory_space<vmem>>, vector<2x16x16x4xf32>
    %75 = vector.shape_cast %74 : vector<2x16x16x4xf32> to vector<512x4xf32>
    %c0_104 = arith.constant 0 : index
    %c8_105 = arith.constant 8 : index
    %76 = vector.load %arg9[%c0_104, %c8_105] : memref<512x36xf32, #tpu.memory_space<vmem>>, vector<512x4xf32>
    tpu.vector_store %arg9[%c0_104, %c8_105], %75 {strides = array<i32>} : memref<512x36xf32, #tpu.memory_space<vmem>>, vector<512x4xf32>,
    %c0_106 = arith.constant 0 : index
    %c1_107 = arith.constant 1 : index
    %c0_108 = arith.constant 0 : index
    %c0_109 = arith.constant 0 : index
    %77 = vector.load %arg8[%c0_106, %c1_107, %c0_108, %c0_109] : memref<2x18x18x4xf32, #tpu.memory_space<vmem>>, vector<2x16x16x4xf32>
    %78 = vector.shape_cast %77 : vector<2x16x16x4xf32> to vector<512x4xf32>
    %c0_110 = arith.constant 0 : index
    %c12_111 = arith.constant 12 : index
    %79 = vector.load %arg9[%c0_110, %c12_111] : memref<512x36xf32, #tpu.memory_space<vmem>>, vector<512x4xf32>
    tpu.vector_store %arg9[%c0_110, %c12_111], %78 {strides = array<i32>} : memref<512x36xf32, #tpu.memory_space<vmem>>, vector<512x4xf32>,
    %c0_112 = arith.constant 0 : index
    %c1_113 = arith.constant 1 : index
    %c1_114 = arith.constant 1 : index
    %c0_115 = arith.constant 0 : index
    %80 = vector.load %arg8[%c0_112, %c1_113, %c1_114, %c0_115] : memref<2x18x18x4xf32, #tpu.memory_space<vmem>>, vector<2x16x16x4xf32>
    %81 = vector.shape_cast %80 : vector<2x16x16x4xf32> to vector<512x4xf32>
    %c0_116 = arith.constant 0 : index
    %c16_117 = arith.constant 16 : index
    %82 = vector.load %arg9[%c0_116, %c16_117] : memref<512x36xf32, #tpu.memory_space<vmem>>, vector<512x4xf32>
    tpu.vector_store %arg9[%c0_116, %c16_117], %81 {strides = array<i32>} : memref<512x36xf32, #tpu.memory_space<vmem>>, vector<512x4xf32>,
    %c0_118 = arith.constant 0 : index
    %c1_119 = arith.constant 1 : index
    %c2_120 = arith.constant 2 : index
    %c0_121 = arith.constant 0 : index
    %83 = vector.load %arg8[%c0_118, %c1_119, %c2_120, %c0_121] : memref<2x18x18x4xf32, #tpu.memory_space<vmem>>, vector<2x16x16x4xf32>
    %84 = vector.shape_cast %83 : vector<2x16x16x4xf32> to vector<512x4xf32>
    %c0_122 = arith.constant 0 : index
    %c20_123 = arith.constant 20 : index
    %85 = vector.load %arg9[%c0_122, %c20_123] : memref<512x36xf32, #tpu.memory_space<vmem>>, vector<512x4xf32>
    tpu.vector_store %arg9[%c0_122, %c20_123], %84 {strides = array<i32>} : memref<512x36xf32, #tpu.memory_space<vmem>>, vector<512x4xf32>,
    %c0_124 = arith.constant 0 : index
    %c2_125 = arith.constant 2 : index
    %c0_126 = arith.constant 0 : index
    %c0_127 = arith.constant 0 : index
    %86 = vector.load %arg8[%c0_124, %c2_125, %c0_126, %c0_127] : memref<2x18x18x4xf32, #tpu.memory_space<vmem>>, vector<2x16x16x4xf32>
    %87 = vector.shape_cast %86 : vector<2x16x16x4xf32> to vector<512x4xf32>
    %c0_128 = arith.constant 0 : index
    %c24_129 = arith.constant 24 : index
    %88 = vector.load %arg9[%c0_128, %c24_129] : memref<512x36xf32, #tpu.memory_space<vmem>>, vector<512x4xf32>
    tpu.vector_store %arg9[%c0_128, %c24_129], %87 {strides = array<i32>} : memref<512x36xf32, #tpu.memory_space<vmem>>, vector<512x4xf32>,
    %c0_130 = arith.constant 0 : index
    %c2_131 = arith.constant 2 : index
    %c1_132 = arith.constant 1 : index
    %c0_133 = arith.constant 0 : index
    %89 = vector.load %arg8[%c0_130, %c2_131, %c1_132, %c0_133] : memref<2x18x18x4xf32, #tpu.memory_space<vmem>>, vector<2x16x16x4xf32>
    %90 = vector.shape_cast %89 : vector<2x16x16x4xf32> to vector<512x4xf32>
    %c0_134 = arith.constant 0 : index
    %c28_135 = arith.constant 28 : index
    %91 = vector.load %arg9[%c0_134, %c28_135] : memref<512x36xf32, #tpu.memory_space<vmem>>, vector<512x4xf32>
    tpu.vector_store %arg9[%c0_134, %c28_135], %90 {strides = array<i32>} : memref<512x36xf32, #tpu.memory_space<vmem>>, vector<512x4xf32>,
    %c0_136 = arith.constant 0 : index
    %c2_137 = arith.constant 2 : index
    %c2_138 = arith.constant 2 : index
    %c0_139 = arith.constant 0 : index
    %92 = vector.load %arg8[%c0_136, %c2_137, %c2_138, %c0_139] : memref<2x18x18x4xf32, #tpu.memory_space<vmem>>, vector<2x16x16x4xf32>
    %93 = vector.shape_cast %92 : vector<2x16x16x4xf32> to vector<512x4xf32>
    %c0_140 = arith.constant 0 : index
    %c32_141 = arith.constant 32 : index
    %94 = vector.load %arg9[%c0_140, %c32_141] : memref<512x36xf32, #tpu.memory_space<vmem>>, vector<512x4xf32>
    tpu.vector_store %arg9[%c0_140, %c32_141], %93 {strides = array<i32>} : memref<512x36xf32, #tpu.memory_space<vmem>>, vector<512x4xf32>,
    %c0_142 = arith.constant 0 : index
    %c0_143 = arith.constant 0 : index
    %95 = vector.load %arg9[%c0_142, %c0_143] : memref<512x36xf32, #tpu.memory_space<vmem>>, vector<512x36xf32>
    %96 = arith.truncf %95 : vector<512x36xf32> to vector<512x36xbf16>
    %c0_144 = arith.constant 0 : index
    %c0_145 = arith.constant 0 : index
    %97 = vector.load %arg4[%c0_144, %c0_145] : memref<36x4xbf16, #tpu.memory_space<vmem>>, vector<36x4xbf16>
    %cst_146 = arith.constant dense<0.000000e+00> : vector<512x4xf32>
    %98 = tpu.matmul %96, %97, %cst_146 {dimension_numbers = #tpu.dot_dimension_numbers<[1], [0], [0], [1], [0, 0, 1, 1], [], []>} : vector<512x36xbf16>, vector<36x4xbf16>, vector<512x4xf32> -> vector<512x4xf32>
    %cst_147 = arith.constant dense<0.000000e+00> : vector<4xf32>
    %99 = vector.multi_reduction <add>, %98, %cst_147 [0] : vector<512x4xf32> to vector<4xf32>
    %100 = vector.shape_cast %99 : vector<4xf32> to vector<1x4xf32>
    %cst_148 = arith.constant 0.001953125 : f32
    %101 = vector.broadcast %cst_148 : f32 to vector<1x4xf32>
    %102 = arith.mulf %100, %101 : vector<1x4xf32>
    %103 = arith.mulf %98, %98 : vector<512x4xf32>
    %cst_149 = arith.constant dense<0.000000e+00> : vector<4xf32>
    %104 = vector.multi_reduction <add>, %103, %cst_149 [0] : vector<512x4xf32> to vector<4xf32>
    %105 = vector.shape_cast %104 : vector<4xf32> to vector<1x4xf32>
    %cst_150 = arith.constant 0.001953125 : f32
    %106 = vector.broadcast %cst_150 : f32 to vector<1x4xf32>
    %107 = arith.mulf %105, %106 : vector<1x4xf32>
    %108 = arith.mulf %102, %102 : vector<1x4xf32>
    %109 = arith.subf %107, %108 : vector<1x4xf32>
    %c0_151 = arith.constant 0 : index
    %c0_152 = arith.constant 0 : index
    %110 = vector.load %arg5[%c0_151, %c0_152] : memref<1x4xf32, #tpu.memory_space<vmem>>, vector<1x4xf32>
    %cst_153 = arith.constant 9.99999974E-6 : f32
    %111 = vector.broadcast %cst_153 : f32 to vector<1x4xf32>
    %112 = arith.addf %109, %111 : vector<1x4xf32>
    %113 = math.rsqrt %112 : vector<1x4xf32>
    %114 = arith.mulf %110, %113 : vector<1x4xf32>
    %c0_154 = arith.constant 0 : index
    %c0_155 = arith.constant 0 : index
    %115 = vector.load %arg6[%c0_154, %c0_155] : memref<1x4xf32, #tpu.memory_space<vmem>>, vector<1x4xf32>
    %116 = arith.mulf %102, %114 : vector<1x4xf32>
    %117 = arith.subf %115, %116 : vector<1x4xf32>
    %118 = vector.broadcast %114 : vector<1x4xf32> to vector<512x4xf32>
    %119 = arith.mulf %98, %118 : vector<512x4xf32>
    %120 = vector.broadcast %117 : vector<1x4xf32> to vector<512x4xf32>
    %121 = arith.addf %119, %120 : vector<512x4xf32>
    %c0_156 = arith.constant 0 : index
    %c0_157 = arith.constant 0 : index
    %c0_158 = arith.constant 0 : index
    %c0_159 = arith.constant 0 : index
    %122 = vector.load %arg0[%c0_156, %c0_157, %c0_158, %c0_159] : memref<2x16x16x4xf32, #tpu.memory_space<vmem>>, vector<2x16x16x4xf32>
    %123 = vector.shape_cast %122 : vector<2x16x16x4xf32> to vector<512x4xf32>
    %124 = arith.addf %123, %121 : vector<512x4xf32>
    %cst_160 = arith.constant 0.000000e+00 : f32
    %125 = vector.broadcast %cst_160 : f32 to vector<512x4xf32>
    %126 = arith.maximumf %124, %125 : vector<512x4xf32>
    %127 = vector.shape_cast %126 : vector<512x4xf32> to vector<2x16x16x4xf32>
    %c0_161 = arith.constant 0 : index
    %c0_162 = arith.constant 0 : index
    %c0_163 = arith.constant 0 : index
    %c0_164 = arith.constant 0 : index
    %128 = vector.load %arg7[%c0_161, %c0_162, %c0_163, %c0_164] : memref<2x16x16x4xf32, #tpu.memory_space<vmem>>, vector<2x16x16x4xf32>
    tpu.vector_store %arg7[%c0_161, %c0_162, %c0_163, %c0_164], %127 {strides = array<i32>} : memref<2x16x16x4xf32, #tpu.memory_space<vmem>>, vector<2x16x16x4xf32>,
    return
  }
}

</mosaic_0001>

<llo_original>
// kernel: residual_block_nchw.1
$region0: #{residual_block_nchw.1}
  #allocation0 [shape = 'u32[]', space=smem, size = 0x4, offset = 0x4, fixed_abs, tag = 'smem constant byte address 0x4 - core index']
  #allocation1 [shape = 'u32[144,128]{1,0:T(1,128)}', space=vmem, size = 0x12000, scoped, tag = 'internal scratch']
  #allocation2 [shape = 'f32[2,18,18,4]{3,2,1,0:T(8,128)}', space=vmem, size = 0x6c000, scoped, tag = 'scratch operand']
  #allocation3 [shape = 'f32[512,36]{1,0:T(8,128)}', space=vmem, size = 0x40000, scoped, tag = 'scratch operand']
  %s0 = inlined_call_operand.vmem [shape: f32[2,16,16,4], index: 0, kind: input, shape index: {}]
  %s1 = inlined_call_operand.vmem [shape: bf16[36,4], index: 1, kind: input, shape index: {}]
  %s2 = inlined_call_operand.vmem [shape: f32[1,4], index: 2, kind: input, shape index: {}]
  %s3 = inlined_call_operand.vmem [shape: f32[1,4], index: 3, kind: input, shape index: {}]
  %s4 = inlined_call_operand.vmem [shape: bf16[36,4], index: 4, kind: input, shape index: {}]
  %s5 = inlined_call_operand.vmem [shape: f32[1,4], index: 5, kind: input, shape index: {}]
  %s6 = inlined_call_operand.vmem [shape: f32[1,4], index: 6, kind: input, shape index: {}]
  %s7 = inlined_call_operand.vmem [shape: f32[2,16,16,4], index: 7, kind: output, shape index: {}]
  %s8 = sld [smem:[#allocation0]]
  $region38: #{residual_block_nchw.1} parent=0
    _
  %s10 = ssub.s32 1, %s8
  %s11 = scalar_select 0, %s10, %s8
  // Predicated region
  $region2: #{residual_block_nchw.1} parent=0 // pred_check
    _
  $region3: #{residual_block_nchw.1} parent=0 // pred_check_branch
    %13 = sbr.rel (0) target = $region5
  $region4: #{residual_block_nchw.1} parent=0 // pred_region
    _
  $region5: #{residual_block_nchw.1} parent=0 // pred_fallthru
    _
  // Predicated region
  $region6: #{residual_block_nchw.1} parent=0 // pred_check
    _
  $region7: #{residual_block_nchw.1} parent=0 // pred_check_branch
    %15 = sbr.rel (0) target = $region9
  $region8: #{residual_block_nchw.1} parent=0 // pred_region
    _
  $region9: #{residual_block_nchw.1} parent=0 // pred_fallthru
    _
  // Predicated region
  $region10: #{residual_block_nchw.1} parent=0 // pred_check
    _
  $region11: #{residual_block_nchw.1} parent=0 // pred_check_branch
    %17 = sbr.rel (0) target = $region13
  $region12: #{residual_block_nchw.1} parent=0 // pred_region
    _
  $region13: #{residual_block_nchw.1} parent=0 // pred_fallthru
    _
  // Predicated region
  $region14: #{residual_block_nchw.1} parent=0 // pred_check
    _
  $region15: #{residual_block_nchw.1} parent=0 // pred_check_branch
    %19 = sbr.rel (0) target = $region17
  $region16: #{residual_block_nchw.1} parent=0 // pred_region
    _
  $region17: #{residual_block_nchw.1} parent=0 // pred_fallthru
    _
  // Predicated region
  $region18: #{residual_block_nchw.1} parent=0 // pred_check
    _
  $region19: #{residual_block_nchw.1} parent=0 // pred_check_branch
    %21 = sbr.rel (0) target = $region21
  $region20: #{residual_block_nchw.1} parent=0 // pred_region
    _
  $region21: #{residual_block_nchw.1} parent=0 // pred_fallthru
    _
  // Predicated region
  $region22: #{residual_block_nchw.1} parent=0 // pred_check
    _
  $region23: #{residual_block_nchw.1} parent=0 // pred_check_branch
    %23 = sbr.rel (0) target = $region25
  $region24: #{residual_block_nchw.1} parent=0 // pred_region
    _
  $region25: #{residual_block_nchw.1} parent=0 // pred_fallthru
    _
  // Predicated region
  $region26: #{residual_block_nchw.1} parent=0 // pred_check
    _
  $region27: #{residual_block_nchw.1} parent=0 // pred_check_branch
    %25 = sbr.rel (0) target = $region29
  $region28: #{residual_block_nchw.1} parent=0 // pred_region
    _
  $region29: #{residual_block_nchw.1} parent=0 // pred_fallthru
    _
  %vm27 = vcmask 31744
  %28 = vst.msk [vmem:[#allocation2] sm:$0xff] %vm27, 0.0
  %29 = vst.msk [vmem:[#allocation2 + $0x8] sm:$0xff] %vm27, 0.0
  %vm30 = vcmask 25600
  %31 = vst.msk [vmem:[#allocation2 + $0x10] sm:$0x3] %vm30, 0.0
  %32 = vst.msk [vmem:[#allocation2 + $0x1b0] sm:$0xff] %vm27, 0.0
  %33 = vst.msk [vmem:[#allocation2 + $0x1b8] sm:$0xff] %vm27, 0.0
  %34 = vst.msk [vmem:[#allocation2 + $0x1c0] sm:$0x3] %vm30, 0.0
  %s35 = scalar_lea.vmem [#allocation2], 408
  %36 = vst.msk [vmem:[%s35] sm:$0xff] %vm27, 0.0
  %37 = vst.msk [vmem:[%s35 + $0x8] sm:$0xff] %vm27, 0.0
  %38 = vst.msk [vmem:[%s35 + $0x10] sm:$0x3] %vm30, 0.0
  %39 = vst.msk [vmem:[%s35 + $0x1b0] sm:$0xff] %vm27, 0.0
  %40 = vst.msk [vmem:[%s35 + $0x1b8] sm:$0xff] %vm27, 0.0
  %41 = vst.msk [vmem:[%s35 + $0x1c0] sm:$0x3] %vm30, 0.0
  %s42 = scalar_lea.vmem [#allocation2], 24
  %vm43 = vcmask 24576
  %44 = vst.msk [vmem:[%s42] sm:$0x1] %vm43, 0.0
  %45 = vst.msk [vmem:[%s42 + $0x18] sm:$0x1] %vm43, 0.0
  %46 = vst.msk [vmem:[%s42 + $0x30] sm:$0x1] %vm43, 0.0
  %47 = vst.msk [vmem:[%s42 + $0x48] sm:$0x1] %vm43, 0.0
  %48 = vst.msk [vmem:[%s42 + $0x60] sm:$0x1] %vm43, 0.0
  %49 = vst.msk [vmem:[%s42 + $0x78] sm:$0x1] %vm43, 0.0
  %50 = vst.msk [vmem:[%s42 + $0x90] sm:$0x1] %vm43, 0.0
  %51 = vst.msk [vmem:[%s42 + $0xa8] sm:$0x1] %vm43, 0.0
  %52 = vst.msk [vmem:[%s42 + $0xc0] sm:$0x1] %vm43, 0.0
  %53 = vst.msk [vmem:[%s42 + $0xd8] sm:$0x1] %vm43, 0.0
  %54 = vst.msk [vmem:[%s42 + $0xf0] sm:$0x1] %vm43, 0.0
  %55 = vst.msk [vmem:[%s42 + $0x108] sm:$0x1] %vm43, 0.0
  %56 = vst.msk [vmem:[%s42 + $0x120] sm:$0x1] %vm43, 0.0
  %57 = vst.msk [vmem:[%s42 + $0x138] sm:$0x1] %vm43, 0.0
  %58 = vst.msk [vmem:[%s42 + $0x150] sm:$0x1] %vm43, 0.0
  %59 = vst.msk [vmem:[%s42 + $0x168] sm:$0x1] %vm43, 0.0
  %60 = vst.msk [vmem:[%s42 + $0x1b0] sm:$0x1] %vm43, 0.0
  %61 = vst.msk [vmem:[%s42 + $0x1c8] sm:$0x1] %vm43, 0.0
  %62 = vst.msk [vmem:[%s42 + $0x1e0] sm:$0x1] %vm43, 0.0
  %63 = vst.msk [vmem:[%s42 + $0x1f8] sm:$0x1] %vm43, 0.0
  %64 = vst.msk [vmem:[%s42 + $0x210] sm:$0x1] %vm43, 0.0
  %65 = vst.msk [vmem:[%s42 + $0x228] sm:$0x1] %vm43, 0.0
  %66 = vst.msk [vmem:[%s42 + $0x240] sm:$0x1] %vm43, 0.0
  %67 = vst.msk [vmem:[%s42 + $0x258] sm:$0x1] %vm43, 0.0
  %68 = vst.msk [vmem:[%s42 + $0x270] sm:$0x1] %vm43, 0.0
  %69 = vst.msk [vmem:[%s42 + $0x288] sm:$0x1] %vm43, 0.0
  %70 = vst.msk [vmem:[%s42 + $0x2a0] sm:$0x1] %vm43, 0.0
  %71 = vst.msk [vmem:[%s42 + $0x2b8] sm:$0x1] %vm43, 0.0
  %72 = vst.msk [vmem:[%s42 + $0x2d0] sm:$0x1] %vm43, 0.0
  %73 = vst.msk [vmem:[%s42 + $0x2e8] sm:$0x1] %vm43, 0.0
  %74 = vst.msk [vmem:[%s42 + $0x300] sm:$0x1] %vm43, 0.0
  %75 = vst.msk [vmem:[%s42 + $0x318] sm:$0x1] %vm43, 0.0
  %76 = vst.msk [vmem:[%s42 + $0x11] sm:$0x1] %vm43, 0.0
  %77 = vst.msk [vmem:[%s42 + $0x29] sm:$0x1] %vm43, 0.0
  %78 = vst.msk [vmem:[%s42 + $0x41] sm:$0x1] %vm43, 0.0
  %79 = vst.msk [vmem:[%s42 + $0x59] sm:$0x1] %vm43, 0.0
  %80 = vst.msk [vmem:[%s42 + $0x71] sm:$0x1] %vm43, 0.0
  %81 = vst.msk [vmem:[%s42 + $0x89] sm:$0x1] %vm43, 0.0
  %82 = vst.msk [vmem:[%s42 + $0xa1] sm:$0x1] %vm43, 0.0
  %83 = vst.msk [vmem:[%s42 + $0xb9] sm:$0x1] %vm43, 0.0
  %84 = vst.msk [vmem:[%s42 + $0xd1] sm:$0x1] %vm43, 0.0
  %85 = vst.msk [vmem:[%s42 + $0xe9] sm:$0x1] %vm43, 0.0
  %86 = vst.msk [vmem:[%s42 + $0x101] sm:$0x1] %vm43, 0.0
  %87 = vst.msk [vmem:[%s42 + $0x119] sm:$0x1] %vm43, 0.0
  %88 = vst.msk [vmem:[%s42 + $0x131] sm:$0x1] %vm43, 0.0
  %89 = vst.msk [vmem:[%s42 + $0x149] sm:$0x1] %vm43, 0.0
  %90 = vst.msk [vmem:[%s42 + $0x161] sm:$0x1] %vm43, 0.0
  %91 = vst.msk [vmem:[%s42 + $0x179] sm:$0x1] %vm43, 0.0
  %92 = vst.msk [vmem:[%s42 + $0x1c1] sm:$0x1] %vm43, 0.0
  %93 = vst.msk [vmem:[%s42 + $0x1d9] sm:$0x1] %vm43, 0.0
  %94 = vst.msk [vmem:[%s42 + $0x1f1] sm:$0x1] %vm43, 0.0
  %95 = vst.msk [vmem:[%s42 + $0x209] sm:$0x1] %vm43, 0.0
  %96 = vst.msk [vmem:[%s42 + $0x221] sm:$0x1] %vm43, 0.0
  %97 = vst.msk [vmem:[%s42 + $0x239] sm:$0x1] %vm43, 0.0
  %98 = vst.msk [vmem:[%s42 + $0x251] sm:$0x1] %vm43, 0.0
  %99 = vst.msk [vmem:[%s42 + $0x269] sm:$0x1] %vm43, 0.0
  %100 = vst.msk [vmem:[%s42 + $0x281] sm:$0x1] %vm43, 0.0
  %101 = vst.msk [vmem:[%s42 + $0x299] sm:$0x1] %vm43, 0.0
  %102 = vst.msk [vmem:[%s42 + $0x2b1] sm:$0x1] %vm43, 0.0
  %103 = vst.msk [vmem:[%s42 + $0x2c9] sm:$0x1] %vm43, 0.0
  %104 = vst.msk [vmem:[%s42 + $0x2e1] sm:$0x1] %vm43, 0.0
  %105 = vst.msk [vmem:[%s42 + $0x2f9] sm:$0x1] %vm43, 0.0
  %106 = vst.msk [vmem:[%s42 + $0x311] sm:$0x1] %vm43, 0.0
  %107 = vst.msk [vmem:[%s42 + $0x329] sm:$0x1] %vm43, 0.0
  %v108 = vld [vmem:[%s0] sm:$0xff]
  %v109 = vld [vmem:[%s0 + $0x8] sm:$0xff]
  %v110 = vld [vmem:[%s0 + $0x10] sm:$0xff]
  %v111 = vld [vmem:[%s0 + $0x18] sm:$0xff]
  %v112 = vld [vmem:[%s0 + $0x20] sm:$0xff]
  %v113 = vld [vmem:[%s0 + $0x28] sm:$0xff]
  %v114 = vld [vmem:[%s0 + $0x30] sm:$0xff]
  %v115 = vld [vmem:[%s0 + $0x38] sm:$0xff]
  %v116 = vld [vmem:[%s0 + $0x40] sm:$0xff]
  %v117 = vld [vmem:[%s0 + $0x48] sm:$0xff]
  %v118 = vld [vmem:[%s0 + $0x50] sm:$0xff]
  %v119 = vld [vmem:[%s0 + $0x58] sm:$0xff]
  %v120 = vld [vmem:[%s0 + $0x60] sm:$0xff]
  %v121 = vld [vmem:[%s0 + $0x68] sm:$0xff]
  %v122 = vld [vmem:[%s0 + $0x70] sm:$0xff]
  %v123 = vld [vmem:[%s0 + $0x78] sm:$0xff]
  %v124 = vld [vmem:[%s0 + $0x80] sm:$0xff]
  %v125 = vld [vmem:[%s0 + $0x88] sm:$0xff]
  %v126 = vld [vmem:[%s0 + $0x90] sm:$0xff]
  %v127 = vld [vmem:[%s0 + $0x98] sm:$0xff]
  %v128 = vld [vmem:[%s0 + $0xa0] sm:$0xff]
  %v129 = vld [vmem:[%s0 + $0xa8] sm:$0xff]
  %v130 = vld [vmem:[%s0 + $0xb0] sm:$0xff]
  %v131 = vld [vmem:[%s0 + $0xb8] sm:$0xff]
  %v132 = vld [vmem:[%s0 + $0xc0] sm:$0xff]
  %v133 = vld [vmem:[%s0 + $0xc8] sm:$0xff]
  %v134 = vld [vmem:[%s0 + $0xd0] sm:$0xff]
  %v135 = vld [vmem:[%s0 + $0xd8] sm:$0xff]
  %v136 = vld [vmem:[%s0 + $0xe0] sm:$0xff]
  %v137 = vld [vmem:[%s0 + $0xe8] sm:$0xff]
  %v138 = vld [vmem:[%s0 + $0xf0] sm:$0xff]
  %v139 = vld [vmem:[%s0 + $0xf8] sm:$0xff]
  %v140 = vld [vmem:[%s0 + $0x100] sm:$0xff]
  %v141 = vld [vmem:[%s0 + $0x108] sm:$0xff]
  %v142 = vld [vmem:[%s0 + $0x110] sm:$0xff]
  %v143 = vld [vmem:[%s0 + $0x118] sm:$0xff]
  %v144 = vld [vmem:[%s0 + $0x120] sm:$0xff]
  %v145 = vld [vmem:[%s0 + $0x128] sm:$0xff]
  %v146 = vld [vmem:[%s0 + $0x130] sm:$0xff]
  %v147 = vld [vmem:[%s0 + $0x138] sm:$0xff]
  %v148 = vld [vmem:[%s0 + $0x140] sm:$0xff]
  %v149 = vld [vmem:[%s0 + $0x148] sm:$0xff]
  %v150 = vld [vmem:[%s0 + $0x150] sm:$0xff]
  %v151 = vld [vmem:[%s0 + $0x158] sm:$0xff]
  %v152 = vld [vmem:[%s0 + $0x160] sm:$0xff]
  %v153 = vld [vmem:[%s0 + $0x168] sm:$0xff]
  %v154 = vld [vmem:[%s0 + $0x170] sm:$0xff]
  %v155 = vld [vmem:[%s0 + $0x178] sm:$0xff]
  %v156 = vld [vmem:[%s0 + $0x180] sm:$0xff]
  %v157 = vld [vmem:[%s0 + $0x188] sm:$0xff]
  %v158 = vld [vmem:[%s0 + $0x190] sm:$0xff]
  %v159 = vld [vmem:[%s0 + $0x198] sm:$0xff]
  %v160 = vld [vmem:[%s0 + $0x1a0] sm:$0xff]
  %v161 = vld [vmem:[%s0 + $0x1a8] sm:$0xff]
  %v162 = vld [vmem:[%s0 + $0x1b0] sm:$0xff]
  %v163 = vld [vmem:[%s0 + $0x1b8] sm:$0xff]
  %v164 = vld [vmem:[%s0 + $0x1c0] sm:$0xff]
  %v165 = vld [vmem:[%s0 + $0x1c8] sm:$0xff]
  %v166 = vld [vmem:[%s0 + $0x1d0] sm:$0xff]
  %v167 = vld [vmem:[%s0 + $0x1d8] sm:$0xff]
  %v168 = vld [vmem:[%s0 + $0x1e0] sm:$0xff]
  %v169 = vld [vmem:[%s0 + $0x1e8] sm:$0xff]
  %v170 = vld [vmem:[%s0 + $0x1f0] sm:$0xff]
  %v171 = vld [vmem:[%s0 + $0x1f8] sm:$0xff]
  %172 = vst.msk [vmem:[%s42 + $0x1] sm:$0xff] %vm27, %v108
  %173 = vst.msk [vmem:[%s42 + $0x9] sm:$0xff] %vm27, %v109
  %174 = vst.msk [vmem:[%s42 + $0x19] sm:$0xff] %vm27, %v110
  %175 = vst.msk [vmem:[%s42 + $0x21] sm:$0xff] %vm27, %v111
  %176 = vst.msk [vmem:[%s42 + $0x31] sm:$0xff] %vm27, %v112
  %177 = vst.msk [vmem:[%s42 + $0x39] sm:$0xff] %vm27, %v113
  %178 = vst.msk [vmem:[%s42 + $0x49] sm:$0xff] %vm27, %v114
  %179 = vst.msk [vmem:[%s42 + $0x51] sm:$0xff] %vm27, %v115
  %180 = vst.msk [vmem:[%s42 + $0x61] sm:$0xff] %vm27, %v116
  %181 = vst.msk [vmem:[%s42 + $0x69] sm:$0xff] %vm27, %v117
  %182 = vst.msk [vmem:[%s42 + $0x79] sm:$0xff] %vm27, %v118
  %183 = vst.msk [vmem:[%s42 + $0x81] sm:$0xff] %vm27, %v119
  %184 = vst.msk [vmem:[%s42 + $0x91] sm:$0xff] %vm27, %v120
  %185 = vst.msk [vmem:[%s42 + $0x99] sm:$0xff] %vm27, %v121
  %186 = vst.msk [vmem:[%s42 + $0xa9] sm:$0xff] %vm27, %v122
  %187 = vst.msk [vmem:[%s42 + $0xb1] sm:$0xff] %vm27, %v123
  %188 = vst.msk [vmem:[%s42 + $0xc1] sm:$0xff] %vm27, %v124
  %189 = vst.msk [vmem:[%s42 + $0xc9] sm:$0xff] %vm27, %v125
  %190 = vst.msk [vmem:[%s42 + $0xd9] sm:$0xff] %vm27, %v126
  %191 = vst.msk [vmem:[%s42 + $0xe1] sm:$0xff] %vm27, %v127
  %192 = vst.msk [vmem:[%s42 + $0xf1] sm:$0xff] %vm27, %v128
  %193 = vst.msk [vmem:[%s42 + $0xf9] sm:$0xff] %vm27, %v129
  %194 = vst.msk [vmem:[%s42 + $0x109] sm:$0xff] %vm27, %v130
  %195 = vst.msk [vmem:[%s42 + $0x111] sm:$0xff] %vm27, %v131
  %196 = vst.msk [vmem:[%s42 + $0x121] sm:$0xff] %vm27, %v132
  %197 = vst.msk [vmem:[%s42 + $0x129] sm:$0xff] %vm27, %v133
  %198 = vst.msk [vmem:[%s42 + $0x139] sm:$0xff] %vm27, %v134
  %199 = vst.msk [vmem:[%s42 + $0x141] sm:$0xff] %vm27, %v135
  %200 = vst.msk [vmem:[%s42 + $0x151] sm:$0xff] %vm27, %v136
  %201 = vst.msk [vmem:[%s42 + $0x159] sm:$0xff] %vm27, %v137
  %202 = vst.msk [vmem:[%s42 + $0x169] sm:$0xff] %vm27, %v138
  %203 = vst.msk [vmem:[%s42 + $0x171] sm:$0xff] %vm27, %v139
  %204 = vst.msk [vmem:[%s42 + $0x1b1] sm:$0xff] %vm27, %v140
  %205 = vst.msk [vmem:[%s42 + $0x1b9] sm:$0xff] %vm27, %v141
  %206 = vst.msk [vmem:[%s42 + $0x1c9] sm:$0xff] %vm27, %v142
  %207 = vst.msk [vmem:[%s42 + $0x1d1] sm:$0xff] %vm27, %v143
  %208 = vst.msk [vmem:[%s42 + $0x1e1] sm:$0xff] %vm27, %v144
  %209 = vst.msk [vmem:[%s42 + $0x1e9] sm:$0xff] %vm27, %v145
  %210 = vst.msk [vmem:[%s42 + $0x1f9] sm:$0xff] %vm27, %v146
  %211 = vst.msk [vmem:[%s42 + $0x201] sm:$0xff] %vm27, %v147
  %212 = vst.msk [vmem:[%s42 + $0x211] sm:$0xff] %vm27, %v148
  %213 = vst.msk [vmem:[%s42 + $0x219] sm:$0xff] %vm27, %v149
  %214 = vst.msk [vmem:[%s42 + $0x229] sm:$0xff] %vm27, %v150
  %215 = vst.msk [vmem:[%s42 + $0x231] sm:$0xff] %vm27, %v151
  %216 = vst.msk [vmem:[%s42 + $0x241] sm:$0xff] %vm27, %v152
  %217 = vst.msk [vmem:[%s42 + $0x249] sm:$0xff] %vm27, %v153
  %218 = vst.msk [vmem:[%s42 + $0x259] sm:$0xff] %vm27, %v154
  %219 = vst.msk [vmem:[%s42 + $0x261] sm:$0xff] %vm27, %v155
  %220 = vst.msk [vmem:[%s42 + $0x271] sm:$0xff] %vm27, %v156
  %221 = vst.msk [vmem:[%s42 + $0x279] sm:$0xff] %vm27, %v157
  %222 = vst.msk [vmem:[%s42 + $0x289] sm:$0xff] %vm27, %v158
  %223 = vst.msk [vmem:[%s42 + $0x291] sm:$0xff] %vm27, %v159
  %224 = vst.msk [vmem:[%s42 + $0x2a1] sm:$0xff] %vm27, %v160
  %225 = vst.msk [vmem:[%s42 + $0x2a9] sm:$0xff] %vm27, %v161
  %226 = vst.msk [vmem:[%s42 + $0x2b9] sm:$0xff] %vm27, %v162
  %227 = vst.msk [vmem:[%s42 + $0x2c1] sm:$0xff] %vm27, %v163
  %228 = vst.msk [vmem:[%s42 + $0x2d1] sm:$0xff] %vm27, %v164
  %229 = vst.msk [vmem:[%s42 + $0x2d9] sm:$0xff] %vm27, %v165
  %230 = vst.msk [vmem:[%s42 + $0x2e9] sm:$0xff] %vm27, %v166
  %231 = vst.msk [vmem:[%s42 + $0x2f1] sm:$0xff] %vm27, %v167
  %232 = vst.msk [vmem:[%s42 + $0x301] sm:$0xff] %vm27, %v168
  %233 = vst.msk [vmem:[%s42 + $0x309] sm:$0xff] %vm27, %v169
  %234 = vst.msk [vmem:[%s42 + $0x319] sm:$0xff] %vm27, %v170
  %235 = vst.msk [vmem:[%s42 + $0x321] sm:$0xff] %vm27, %v171
  %v236 = vld [vmem:[#allocation2] sm:$0xff]
  %v237 = vld [vmem:[#allocation2 + $0x8] sm:$0xff]
  %v238 = vld [vmem:[#allocation2 + $0x18] sm:$0xff]
  %v239 = vld [vmem:[#allocation2 + $0x20] sm:$0xff]
  %v240 = vld [vmem:[#allocation2 + $0x30] sm:$0xff]
  %v241 = vld [vmem:[#allocation2 + $0x38] sm:$0xff]
  %v242 = vld [vmem:[#allocation2 + $0x48] sm:$0xff]
  %v243 = vld [vmem:[#allocation2 + $0x50] sm:$0xff]
  %v244 = vld [vmem:[#allocation2 + $0x60] sm:$0xff]
  %v245 = vld [vmem:[#allocation2 + $0x68] sm:$0xff]
  %v246 = vld [vmem:[#allocation2 + $0x78] sm:$0xff]
  %v247 = vld [vmem:[#allocation2 + $0x80] sm:$0xff]
  %v248 = vld [vmem:[#allocation2 + $0x90] sm:$0xff]
  %v249 = vld [vmem:[#allocation2 + $0x98] sm:$0xff]
  %v250 = vld [vmem:[#allocation2 + $0xa8] sm:$0xff]
  %v251 = vld [vmem:[#allocation2 + $0xb0] sm:$0xff]
  %v252 = vld [vmem:[#allocation2 + $0xc0] sm:$0xff]
  %v253 = vld [vmem:[#allocation2 + $0xc8] sm:$0xff]
  %v254 = vld [vmem:[#allocation2 + $0xd8] sm:$0xff]
  %v255 = vld [vmem:[#allocation2 + $0xe0] sm:$0xff]
  %v256 = vld [vmem:[#allocation2 + $0xf0] sm:$0xff]
  %v257 = vld [vmem:[#allocation2 + $0xf8] sm:$0xff]
  %v258 = vld [vmem:[#allocation2 + $0x108] sm:$0xff]
  %v259 = vld [vmem:[#allocation2 + $0x110] sm:$0xff]
  %v260 = vld [vmem:[#allocation2 + $0x120] sm:$0xff]
  %v261 = vld [vmem:[#allocation2 + $0x128] sm:$0xff]
  %v262 = vld [vmem:[#allocation2 + $0x138] sm:$0xff]
  %v263 = vld [vmem:[#allocation2 + $0x140] sm:$0xff]
  %v264 = vld [vmem:[#allocation2 + $0x150] sm:$0xff]
  %v265 = vld [vmem:[#allocation2 + $0x158] sm:$0xff]
  %v266 = vld [vmem:[#allocation2 + $0x168] sm:$0xff]
  %v267 = vld [vmem:[#allocation2 + $0x170] sm:$0xff]
  %v268 = vld [vmem:[#allocation2 + $0x1b0] sm:$0xff]
  %v269 = vld [vmem:[#allocation2 + $0x1b8] sm:$0xff]
  %v270 = vld [vmem:[#allocation2 + $0x1c8] sm:$0xff]
  %v271 = vld [vmem:[#allocation2 + $0x1d0] sm:$0xff]
  %v272 = vld [vmem:[#allocation2 + $0x1e0] sm:$0xff]
  %v273 = vld [vmem:[#allocation2 + $0x1e8] sm:$0xff]
  %v274 = vld [vmem:[#allocation2 + $0x1f8] sm:$0xff]
  %v275 = vld [vmem:[#allocation2 + $0x200] sm:$0xff]
  %v276 = vld [vmem:[#allocation2 + $0x210] sm:$0xff]
  %v277 = vld [vmem:[#allocation2 + $0x218] sm:$0xff]
  %v278 = vld [vmem:[#allocation2 + $0x228] sm:$0xff]
  %v279 = vld [vmem:[#allocation2 + $0x230] sm:$0xff]
  %v280 = vld [vmem:[#allocation2 + $0x240] sm:$0xff]
  %v281 = vld [vmem:[#allocation2 + $0x248] sm:$0xff]
  %v282 = vld [vmem:[#allocation2 + $0x258] sm:$0xff]
  %v283 = vld [vmem:[#allocation2 + $0x260] sm:$0xff]
  %v284 = vld [vmem:[#allocation2 + $0x270] sm:$0xff]
  %v285 = vld [vmem:[#allocation2 + $0x278] sm:$0xff]
  %v286 = vld [vmem:[#allocation2 + $0x288] sm:$0xff]
  %v287 = vld [vmem:[#allocation2 + $0x290] sm:$0xff]
  %v288 = vld [vmem:[#allocation2 + $0x2a0] sm:$0xff]
  %v289 = vld [vmem:[#allocation2 + $0x2a8] sm:$0xff]
  %v290 = vld [vmem:[#allocation2 + $0x2b8] sm:$0xff]
  %v291 = vld [vmem:[#allocation2 + $0x2c0] sm:$0xff]
  %v292 = vld [vmem:[#allocation2 + $0x2d0] sm:$0xff]
  %v293 = vld [vmem:[#allocation2 + $0x2d8] sm:$0xff]
  %v294 = vld [vmem:[#allocation2 + $0x2e8] sm:$0xff]
  %v295 = vld [vmem:[#allocation2 + $0x2f0] sm:$0xff]
  %v296 = vld [vmem:[#allocation2 + $0x300] sm:$0xff]
  %v297 = vld [vmem:[#allocation2 + $0x308] sm:$0xff]
  %v298 = vld [vmem:[#allocation2 + $0x318] sm:$0xff]
  %v299 = vld [vmem:[#allocation2 + $0x320] sm:$0xff]
  %300 = vst.msk [vmem:[#allocation3] sm:$0xff] %vm27, %v236
  %301 = vst.msk [vmem:[#allocation3 + $0x8] sm:$0xff] %vm27, %v237
  %302 = vst.msk [vmem:[#allocation3 + $0x10] sm:$0xff] %vm27, %v238
  %303 = vst.msk [vmem:[#allocation3 + $0x18] sm:$0xff] %vm27, %v239
  %304 = vst.msk [vmem:[#allocation3 + $0x20] sm:$0xff] %vm27, %v240
  %305 = vst.msk [vmem:[#allocation3 + $0x28] sm:$0xff] %vm27, %v241
  %306 = vst.msk [vmem:[#allocation3 + $0x30] sm:$0xff] %vm27, %v242
  %307 = vst.msk [vmem:[#allocation3 + $0x38] sm:$0xff] %vm27, %v243
  %308 = vst.msk [vmem:[#allocation3 + $0x40] sm:$0xff] %vm27, %v244
  %309 = vst.msk [vmem:[#allocation3 + $0x48] sm:$0xff] %vm27, %v245
  %310 = vst.msk [vmem:[#allocation3 + $0x50] sm:$0xff] %vm27, %v246
  %311 = vst.msk [vmem:[#allocation3 + $0x58] sm:$0xff] %vm27, %v247
  %312 = vst.msk [vmem:[#allocation3 + $0x60] sm:$0xff] %vm27, %v248
  %313 = vst.msk [vmem:[#allocation3 + $0x68] sm:$0xff] %vm27, %v249
  %314 = vst.msk [vmem:[#allocation3 + $0x70] sm:$0xff] %vm27, %v250
  %315 = vst.msk [vmem:[#allocation3 + $0x78] sm:$0xff] %vm27, %v251
  %316 = vst.msk [vmem:[#allocation3 + $0x80] sm:$0xff] %vm27, %v252
  %317 = vst.msk [vmem:[#allocation3 + $0x88] sm:$0xff] %vm27, %v253
  %318 = vst.msk [vmem:[#allocation3 + $0x90] sm:$0xff] %vm27, %v254
  %319 = vst.msk [vmem:[#allocation3 + $0x98] sm:$0xff] %vm27, %v255
  %320 = vst.msk [vmem:[#allocation3 + $0xa0] sm:$0xff] %vm27, %v256
  %321 = vst.msk [vmem:[#allocation3 + $0xa8] sm:$0xff] %vm27, %v257
  %322 = vst.msk [vmem:[#allocation3 + $0xb0] sm:$0xff] %vm27, %v258
  %323 = vst.msk [vmem:[#allocation3 + $0xb8] sm:$0xff] %vm27, %v259
  %324 = vst.msk [vmem:[#allocation3 + $0xc0] sm:$0xff] %vm27, %v260
  %325 = vst.msk [vmem:[#allocation3 + $0xc8] sm:$0xff] %vm27, %v261
  %326 = vst.msk [vmem:[#allocation3 + $0xd0] sm:$0xff] %vm27, %v262
  %327 = vst.msk [vmem:[#allocation3 + $0xd8] sm:$0xff] %vm27, %v263
  %328 = vst.msk [vmem:[#allocation3 + $0xe0] sm:$0xff] %vm27, %v264
  %329 = vst.msk [vmem:[#allocation3 + $0xe8] sm:$0xff] %vm27, %v265
  %330 = vst.msk [vmem:[#allocation3 + $0xf0] sm:$0xff] %vm27, %v266
  %331 = vst.msk [vmem:[#allocation3 + $0xf8] sm:$0xff] %vm27, %v267
  %332 = vst.msk [vmem:[#allocation3 + $0x100] sm:$0xff] %vm27, %v268
  %333 = vst.msk [vmem:[#allocation3 + $0x108] sm:$0xff] %vm27, %v269
  %334 = vst.msk [vmem:[#allocation3 + $0x110] sm:$0xff] %vm27, %v270
  %335 = vst.msk [vmem:[#allocation3 + $0x118] sm:$0xff] %vm27, %v271
  %336 = vst.msk [vmem:[#allocation3 + $0x120] sm:$0xff] %vm27, %v272
  %337 = vst.msk [vmem:[#allocation3 + $0x128] sm:$0xff] %vm27, %v273
  %338 = vst.msk [vmem:[#allocation3 + $0x130] sm:$0xff] %vm27, %v274
  %339 = vst.msk [vmem:[#allocation3 + $0x138] sm:$0xff] %vm27, %v275
  %340 = vst.msk [vmem:[#allocation3 + $0x140] sm:$0xff] %vm27, %v276
  %341 = vst.msk [vmem:[#allocation3 + $0x148] sm:$0xff] %vm27, %v277
  %342 = vst.msk [vmem:[#allocation3 + $0x150] sm:$0xff] %vm27, %v278
  %343 = vst.msk [vmem:[#allocation3 + $0x158] sm:$0xff] %vm27, %v279
  %344 = vst.msk [vmem:[#allocation3 + $0x160] sm:$0xff] %vm27, %v280
  %345 = vst.msk [vmem:[#allocation3 + $0x168] sm:$0xff] %vm27, %v281
  %346 = vst.msk [vmem:[#allocation3 + $0x170] sm:$0xff] %vm27, %v282
  %347 = vst.msk [vmem:[#allocation3 + $0x178] sm:$0xff] %vm27, %v283
  %348 = vst.msk [vmem:[#allocation3 + $0x180] sm:$0xff] %vm27, %v284
  %349 = vst.msk [vmem:[#allocation3 + $0x188] sm:$0xff] %vm27, %v285
  %350 = vst.msk [vmem:[#allocation3 + $0x190] sm:$0xff] %vm27, %v286
  %351 = vst.msk [vmem:[#allocation3 + $0x198] sm:$0xff] %vm27, %v287
  %352 = vst.msk [vmem:[#allocation3 + $0x1a0] sm:$0xff] %vm27, %v288
  %353 = vst.msk [vmem:[#allocation3 + $0x1a8] sm:$0xff] %vm27, %v289
  %354 = vst.msk [vmem:[#allocation3 + $0x1b0] sm:$0xff] %vm27, %v290
  %355 = vst.msk [vmem:[#allocation3 + $0x1b8] sm:$0xff] %vm27, %v291
  %356 = vst.msk [vmem:[#allocation3 + $0x1c0] sm:$0xff] %vm27, %v292
  %357 = vst.msk [vmem:[#allocation3 + $0x1c8] sm:$0xff] %vm27, %v293
  %358 = vst.msk [vmem:[#allocation3 + $0x1d0] sm:$0xff] %vm27, %v294
  %359 = vst.msk [vmem:[#allocation3 + $0x1d8] sm:$0xff] %vm27, %v295
  %360 = vst.msk [vmem:[#allocation3 + $0x1e0] sm:$0xff] %vm27, %v296
  %361 = vst.msk [vmem:[#allocation3 + $0x1e8] sm:$0xff] %vm27, %v297
  %362 = vst.msk [vmem:[#allocation3 + $0x1f0] sm:$0xff] %vm27, %v298
  %363 = vst.msk [vmem:[#allocation3 + $0x1f8] sm:$0xff] %vm27, %v299
  %v364 = vld [vmem:[#allocation2 + $0x1] sm:$0xff]
  %v365 = vld [vmem:[#allocation2 + $0x9] sm:$0xff]
  %v366 = vld [vmem:[#allocation2 + $0x19] sm:$0xff]
  %v367 = vld [vmem:[#allocation2 + $0x21] sm:$0xff]
  %v368 = vld [vmem:[#allocation2 + $0x31] sm:$0xff]
  %v369 = vld [vmem:[#allocation2 + $0x39] sm:$0xff]
  %v370 = vld [vmem:[#allocation2 + $0x49] sm:$0xff]
  %v371 = vld [vmem:[#allocation2 + $0x51] sm:$0xff]
  %v372 = vld [vmem:[#allocation2 + $0x61] sm:$0xff]
  %v373 = vld [vmem:[#allocation2 + $0x69] sm:$0xff]
  %v374 = vld [vmem:[#allocation2 + $0x79] sm:$0xff]
  %v375 = vld [vmem:[#allocation2 + $0x81] sm:$0xff]
  %v376 = vld [vmem:[#allocation2 + $0x91] sm:$0xff]
  %v377 = vld [vmem:[#allocation2 + $0x99] sm:$0xff]
  %v378 = vld [vmem:[#allocation2 + $0xa9] sm:$0xff]
  %v379 = vld [vmem:[#allocation2 + $0xb1] sm:$0xff]
  %v380 = vld [vmem:[#allocation2 + $0xc1] sm:$0xff]
  %v381 = vld [vmem:[#allocation2 + $0xc9] sm:$0xff]
  %v382 = vld [vmem:[#allocation2 + $0xd9] sm:$0xff]
  %v383 = vld [vmem:[#allocation2 + $0xe1] sm:$0xff]
  %v384 = vld [vmem:[#allocation2 + $0xf1] sm:$0xff]
  %v385 = vld [vmem:[#allocation2 + $0xf9] sm:$0xff]
  %v386 = vld [vmem:[#allocation2 + $0x109] sm:$0xff]
  %v387 = vld [vmem:[#allocation2 + $0x111] sm:$0xff]
  %v388 = vld [vmem:[#allocation2 + $0x121] sm:$0xff]
  %v389 = vld [vmem:[#allocation2 + $0x129] sm:$0xff]
  %v390 = vld [vmem:[#allocation2 + $0x139] sm:$0xff]
  %v391 = vld [vmem:[#allocation2 + $0x141] sm:$0xff]
  %v392 = vld [vmem:[#allocation2 + $0x151] sm:$0xff]
  %v393 = vld [vmem:[#allocation2 + $0x159] sm:$0xff]
  %v394 = vld [vmem:[#allocation2 + $0x169] sm:$0xff]
  %v395 = vld [vmem:[#allocation2 + $0x171] sm:$0xff]
  %v396 = vld [vmem:[#allocation2 + $0x1b1] sm:$0xff]
  %v397 = vld [vmem:[#allocation2 + $0x1b9] sm:$0xff]
  %v398 = vld [vmem:[#allocation2 + $0x1c9] sm:$0xff]
  %v399 = vld [vmem:[#allocation2 + $0x1d1] sm:$0xff]
  %v400 = vld [vmem:[#allocation2 + $0x1e1] sm:$0xff]
  %v401 = vld [vmem:[#allocation2 + $0x1e9] sm:$0xff]
  %v402 = vld [vmem:[#allocation2 + $0x1f9] sm:$0xff]
  %v403 = vld [vmem:[#allocation2 + $0x201] sm:$0xff]
  %v404 = vld [vmem:[#allocation2 + $0x211] sm:$0xff]
  %v405 = vld [vmem:[#allocation2 + $0x219] sm:$0xff]
  %v406 = vld [vmem:[#allocation2 + $0x229] sm:$0xff]
  %v407 = vld [vmem:[#allocation2 + $0x231] sm:$0xff]
  %v408 = vld [vmem:[#allocation2 + $0x241] sm:$0xff]
  %v409 = vld [vmem:[#allocation2 + $0x249] sm:$0xff]
  %v410 = vld [vmem:[#allocation2 + $0x259] sm:$0xff]
  %v411 = vld [vmem:[#allocation2 + $0x261] sm:$0xff]
  %v412 = vld [vmem:[#allocation2 + $0x271] sm:$0xff]
  %v413 = vld [vmem:[#allocation2 + $0x279] sm:$0xff]
  %v414 = vld [vmem:[#allocation2 + $0x289] sm:$0xff]
  %v415 = vld [vmem:[#allocation2 + $0x291] sm:$0xff]
  %v416 = vld [vmem:[#allocation2 + $0x2a1] sm:$0xff]
  %v417 = vld [vmem:[#allocation2 + $0x2a9] sm:$0xff]
  %v418 = vld [vmem:[#allocation2 + $0x2b9] sm:$0xff]
  %v419 = vld [vmem:[#allocation2 + $0x2c1] sm:$0xff]
  %v420 = vld [vmem:[#allocation2 + $0x2d1] sm:$0xff]
  %v421 = vld [vmem:[#allocation2 + $0x2d9] sm:$0xff]
  %v422 = vld [vmem:[#allocation2 + $0x2e9] sm:$0xff]
  %v423 = vld [vmem:[#allocation2 + $0x2f1] sm:$0xff]
  %v424 = vld [vmem:[#allocation2 + $0x301] sm:$0xff]
  %v425 = vld [vmem:[#allocation2 + $0x309] sm:$0xff]
  %v426 = vld [vmem:[#allocation2 + $0x319] sm:$0xff]
  %v427 = vld [vmem:[#allocation2 + $0x321] sm:$0xff]
  %492 = vrot.lane.b32.xlu0 %v364, 4
  %v493 = vpop.permute.xlu0 %492
  %494 = vrot.lane.b32.xlu0 %v365, 4
  %v495 = vpop.permute.xlu0 %494
  %496 = vrot.lane.b32.xlu0 %v366, 4
  %v497 = vpop.permute.xlu0 %496
  %498 = vrot.lane.b32.xlu0 %v367, 4
  %v499 = vpop.permute.xlu0 %498
  %500 = vrot.lane.b32.xlu0 %v368, 4
  %v501 = vpop.permute.xlu0 %500
  %502 = vrot.lane.b32.xlu0 %v369, 4
  %v503 = vpop.permute.xlu0 %502
  %504 = vrot.lane.b32.xlu0 %v370, 4
  %v505 = vpop.permute.xlu0 %504
  %506 = vrot.lane.b32.xlu0 %v371, 4
  %v507 = vpop.permute.xlu0 %506
  %508 = vrot.lane.b32.xlu0 %v372, 4
  %v509 = vpop.permute.xlu0 %508
  %510 = vrot.lane.b32.xlu0 %v373, 4
  %v511 = vpop.permute.xlu0 %510
  %512 = vrot.lane.b32.xlu0 %v374, 4
  %v513 = vpop.permute.xlu0 %512
  %514 = vrot.lane.b32.xlu0 %v375, 4
  %v515 = vpop.permute.xlu0 %514
  %516 = vrot.lane.b32.xlu0 %v376, 4
  %v517 = vpop.permute.xlu0 %516
  %518 = vrot.lane.b32.xlu0 %v377, 4
  %v519 = vpop.permute.xlu0 %518
  %520 = vrot.lane.b32.xlu0 %v378, 4
  %v521 = vpop.permute.xlu0 %520
  %522 = vrot.lane.b32.xlu0 %v379, 4
  %v523 = vpop.permute.xlu0 %522
  %524 = vrot.lane.b32.xlu0 %v380, 4
  %v525 = vpop.permute.xlu0 %524
  %526 = vrot.lane.b32.xlu0 %v381, 4
  %v527 = vpop.permute.xlu0 %526
  %528 = vrot.lane.b32.xlu0 %v382, 4
  %v529 = vpop.permute.xlu0 %528
  %530 = vrot.lane.b32.xlu0 %v383, 4
  %v531 = vpop.permute.xlu0 %530
  %532 = vrot.lane.b32.xlu0 %v384, 4
  %v533 = vpop.permute.xlu0 %532
  %534 = vrot.lane.b32.xlu0 %v385, 4
  %v535 = vpop.permute.xlu0 %534
  %536 = vrot.lane.b32.xlu0 %v386, 4
  %v537 = vpop.permute.xlu0 %536
  %538 = vrot.lane.b32.xlu0 %v387, 4
  %v539 = vpop.permute.xlu0 %538
  %540 = vrot.lane.b32.xlu0 %v388, 4
  %v541 = vpop.permute.xlu0 %540
  %542 = vrot.lane.b32.xlu0 %v389, 4
  %v543 = vpop.permute.xlu0 %542
  %544 = vrot.lane.b32.xlu0 %v390, 4
  %v545 = vpop.permute.xlu0 %544
  %546 = vrot.lane.b32.xlu0 %v391, 4
  %v547 = vpop.permute.xlu0 %546
  %548 = vrot.lane.b32.xlu0 %v392, 4
  %v549 = vpop.permute.xlu0 %548
  %550 = vrot.lane.b32.xlu0 %v393, 4
  %v551 = vpop.permute.xlu0 %550
  %552 = vrot.lane.b32.xlu0 %v394, 4
  %v553 = vpop.permute.xlu0 %552
  %554 = vrot.lane.b32.xlu0 %v395, 4
  %v555 = vpop.permute.xlu0 %554
  %556 = vrot.lane.b32.xlu0 %v396, 4
  %v557 = vpop.permute.xlu0 %556
  %558 = vrot.lane.b32.xlu0 %v397, 4
  %v559 = vpop.permute.xlu0 %558
  %560 = vrot.lane.b32.xlu0 %v398, 4
  %v561 = vpop.permute.xlu0 %560
  %562 = vrot.lane.b32.xlu0 %v399, 4
  %v563 = vpop.permute.xlu0 %562
  %564 = vrot.lane.b32.xlu0 %v400, 4
  %v565 = vpop.permute.xlu0 %564
  %566 = vrot.lane.b32.xlu0 %v401, 4
  %v567 = vpop.permute.xlu0 %566
  %568 = vrot.lane.b32.xlu0 %v402, 4
  %v569 = vpop.permute.xlu0 %568
  %570 = vrot.lane.b32.xlu0 %v403, 4
  %v571 = vpop.permute.xlu0 %570
  %572 = vrot.lane.b32.xlu0 %v404, 4
  %v573 = vpop.permute.xlu0 %572
  %574 = vrot.lane.b32.xlu0 %v405, 4
  %v575 = vpop.permute.xlu0 %574
  %576 = vrot.lane.b32.xlu0 %v406, 4
  %v577 = vpop.permute.xlu0 %576
  %578 = vrot.lane.b32.xlu0 %v407, 4
  %v579 = vpop.permute.xlu0 %578
  %580 = vrot.lane.b32.xlu0 %v408, 4
  %v581 = vpop.permute.xlu0 %580
  %582 = vrot.lane.b32.xlu0 %v409, 4
  %v583 = vpop.permute.xlu0 %582
  %584 = vrot.lane.b32.xlu0 %v410, 4
  %v585 = vpop.permute.xlu0 %584
  %586 = vrot.lane.b32.xlu0 %v411, 4
  %v587 = vpop.permute.xlu0 %586
  %588 = vrot.lane.b32.xlu0 %v412, 4
  %v589 = vpop.permute.xlu0 %588
  %590 = vrot.lane.b32.xlu0 %v413, 4
  %v591 = vpop.permute.xlu0 %590
  %592 = vrot.lane.b32.xlu0 %v414, 4
  %v593 = vpop.permute.xlu0 %592
  %594 = vrot.lane.b32.xlu0 %v415, 4
  %v595 = vpop.permute.xlu0 %594
  %596 = vrot.lane.b32.xlu0 %v416, 4
  %v597 = vpop.permute.xlu0 %596
  %598 = vrot.lane.b32.xlu0 %v417, 4
  %v599 = vpop.permute.xlu0 %598
  %600 = vrot.lane.b32.xlu0 %v418, 4
  %v601 = vpop.permute.xlu0 %600
  %602 = vrot.lane.b32.xlu0 %v419, 4
  %v603 = vpop.permute.xlu0 %602
  %604 = vrot.lane.b32.xlu0 %v420, 4
  %v605 = vpop.permute.xlu0 %604
  %606 = vrot.lane.b32.xlu0 %v421, 4
  %v607 = vpop.permute.xlu0 %606
  %608 = vrot.lane.b32.xlu0 %v422, 4
  %v609 = vpop.permute.xlu0 %608
  %610 = vrot.lane.b32.xlu0 %v423, 4
  %v611 = vpop.permute.xlu0 %610
  %612 = vrot.lane.b32.xlu0 %v424, 4
  %v613 = vpop.permute.xlu0 %612
  %614 = vrot.lane.b32.xlu0 %v425, 4
  %v615 = vpop.permute.xlu0 %614
  %616 = vrot.lane.b32.xlu0 %v426, 4
  %v617 = vpop.permute.xlu0 %616
  %618 = vrot.lane.b32.xlu0 %v427, 4
  %v619 = vpop.permute.xlu0 %618
  %vm684 = vcmask 64544
  %685 = vst.msk [vmem:[#allocation3] sm:$0xff] %vm684, %v493
  %686 = vst.msk [vmem:[#allocation3 + $0x8] sm:$0xff] %vm684, %v495
  %687 = vst.msk [vmem:[#allocation3 + $0x10] sm:$0xff] %vm684, %v497
  %688 = vst.msk [vmem:[#allocation3 + $0x18] sm:$0xff] %vm684, %v499
  %689 = vst.msk [vmem:[#allocation3 + $0x20] sm:$0xff] %vm684, %v501
  %690 = vst.msk [vmem:[#allocation3 + $0x28] sm:$0xff] %vm684, %v503
  %691 = vst.msk [vmem:[#allocation3 + $0x30] sm:$0xff] %vm684, %v505
  %692 = vst.msk [vmem:[#allocation3 + $0x38] sm:$0xff] %vm684, %v507
  %693 = vst.msk [vmem:[#allocation3 + $0x40] sm:$0xff] %vm684, %v509
  %694 = vst.msk [vmem:[#allocation3 + $0x48] sm:$0xff] %vm684, %v511
  %695 = vst.msk [vmem:[#allocation3 + $0x50] sm:$0xff] %vm684, %v513
  %696 = vst.msk [vmem:[#allocation3 + $0x58] sm:$0xff] %vm684, %v515
  %697 = vst.msk [vmem:[#allocation3 + $0x60] sm:$0xff] %vm684, %v517
  %698 = vst.msk [vmem:[#allocation3 + $0x68] sm:$0xff] %vm684, %v519
  %699 = vst.msk [vmem:[#allocation3 + $0x70] sm:$0xff] %vm684, %v521
  %700 = vst.msk [vmem:[#allocation3 + $0x78] sm:$0xff] %vm684, %v523
  %701 = vst.msk [vmem:[#allocation3 + $0x80] sm:$0xff] %vm684, %v525
  %702 = vst.msk [vmem:[#allocation3 + $0x88] sm:$0xff] %vm684, %v527
  %703 = vst.msk [vmem:[#allocation3 + $0x90] sm:$0xff] %vm684, %v529
  %704 = vst.msk [vmem:[#allocation3 + $0x98] sm:$0xff] %vm684, %v531
  %705 = vst.msk [vmem:[#allocation3 + $0xa0] sm:$0xff] %vm684, %v533
  %706 = vst.msk [vmem:[#allocation3 + $0xa8] sm:$0xff] %vm684, %v535
  %707 = vst.msk [vmem:[#allocation3 + $0xb0] sm:$0xff] %vm684, %v537
  %708 = vst.msk [vmem:[#allocation3 + $0xb8] sm:$0xff] %vm684, %v539
  %709 = vst.msk [vmem:[#allocation3 + $0xc0] sm:$0xff] %vm684, %v541
  %710 = vst.msk [vmem:[#allocation3 + $0xc8] sm:$0xff] %vm684, %v543
  %711 = vst.msk [vmem:[#allocation3 + $0xd0] sm:$0xff] %vm684, %v545
  %712 = vst.msk [vmem:[#allocation3 + $0xd8] sm:$0xff] %vm684, %v547
  %713 = vst.msk [vmem:[#allocation3 + $0xe0] sm:$0xff] %vm684, %v549
  %714 = vst.msk [vmem:[#allocation3 + $0xe8] sm:$0xff] %vm684, %v551
  %715 = vst.msk [vmem:[#allocation3 + $0xf0] sm:$0xff] %vm684, %v553
  %716 = vst.msk [vmem:[#allocation3 + $0xf8] sm:$0xff] %vm684, %v555
  %717 = vst.msk [vmem:[#allocation3 + $0x100] sm:$0xff] %vm684, %v557
  %718 = vst.msk [vmem:[#allocation3 + $0x108] sm:$0xff] %vm684, %v559
  %719 = vst.msk [vmem:[#allocation3 + $0x110] sm:$0xff] %vm684, %v561
  %720 = vst.msk [vmem:[#allocation3 + $0x118] sm:$0xff] %vm684, %v563
  %721 = vst.msk [vmem:[#allocation3 + $0x120] sm:$0xff] %vm684, %v565
  %722 = vst.msk [vmem:[#allocation3 + $0x128] sm:$0xff] %vm684, %v567
  %723 = vst.msk [vmem:[#allocation3 + $0x130] sm:$0xff] %vm684, %v569
  %724 = vst.msk [vmem:[#allocation3 + $0x138] sm:$0xff] %vm684, %v571
  %725 = vst.msk [vmem:[#allocation3 + $0x140] sm:$0xff] %vm684, %v573
  %726 = vst.msk [vmem:[#allocation3 + $0x148] sm:$0xff] %vm684, %v575
  %727 = vst.msk [vmem:[#allocation3 + $0x150] sm:$0xff] %vm684, %v577
  %728 = vst.msk [vmem:[#allocation3 + $0x158] sm:$0xff] %vm684, %v579
  %729 = vst.msk [vmem:[#allocation3 + $0x160] sm:$0xff] %vm684, %v581
  %730 = vst.msk [vmem:[#allocation3 + $0x168] sm:$0xff] %vm684, %v583
  %731 = vst.msk [vmem:[#allocation3 + $0x170] sm:$0xff] %vm684, %v585
  %732 = vst.msk [vmem:[#allocation3 + $0x178] sm:$0xff] %vm684, %v587
  %733 = vst.msk [vmem:[#allocation3 + $0x180] sm:$0xff] %vm684, %v589
  %734 = vst.msk [vmem:[#allocation3 + $0x188] sm:$0xff] %vm684, %v591
  %735 = vst.msk [vmem:[#allocation3 + $0x190] sm:$0xff] %vm684, %v593
  %736 = vst.msk [vmem:[#allocation3 + $0x198] sm:$0xff] %vm684, %v595
  %737 = vst.msk [vmem:[#allocation3 + $0x1a0] sm:$0xff] %vm684, %v597
  %738 = vst.msk [vmem:[#allocation3 + $0x1a8] sm:$0xff] %vm684, %v599
  %739 = vst.msk [vmem:[#allocation3 + $0x1b0] sm:$0xff] %vm684, %v601
  %740 = vst.msk [vmem:[#allocation3 + $0x1b8] sm:$0xff] %vm684, %v603
  %741 = vst.msk [vmem:[#allocation3 + $0x1c0] sm:$0xff] %vm684, %v605
  %742 = vst.msk [vmem:[#allocation3 + $0x1c8] sm:$0xff] %vm684, %v607
  %743 = vst.msk [vmem:[#allocation3 + $0x1d0] sm:$0xff] %vm684, %v609
  %744 = vst.msk [vmem:[#allocation3 + $0x1d8] sm:$0xff] %vm684, %v611
  %745 = vst.msk [vmem:[#allocation3 + $0x1e0] sm:$0xff] %vm684, %v613
  %746 = vst.msk [vmem:[#allocation3 + $0x1e8] sm:$0xff] %vm684, %v615
  %747 = vst.msk [vmem:[#allocation3 + $0x1f0] sm:$0xff] %vm684, %v617
  %748 = vst.msk [vmem:[#allocation3 + $0x1f8] sm:$0xff] %vm684, %v619
  %v749 = vld [vmem:[#allocation2 + $0x2] sm:$0xff]
  %v750 = vld [vmem:[#allocation2 + $0xa] sm:$0xff]
  %v751 = vld [vmem:[#allocation2 + $0x1a] sm:$0xff]
  %v752 = vld [vmem:[#allocation2 + $0x22] sm:$0xff]
  %v753 = vld [vmem:[#allocation2 + $0x32] sm:$0xff]
  %v754 = vld [vmem:[#allocation2 + $0x3a] sm:$0xff]
  %v755 = vld [vmem:[#allocation2 + $0x4a] sm:$0xff]
  %v756 = vld [vmem:[#allocation2 + $0x52] sm:$0xff]
  %v757 = vld [vmem:[#allocation2 + $0x62] sm:$0xff]
  %v758 = vld [vmem:[#allocation2 + $0x6a] sm:$0xff]
  %v759 = vld [vmem:[#allocation2 + $0x7a] sm:$0xff]
  %v760 = vld [vmem:[#allocation2 + $0x82] sm:$0xff]
  %v761 = vld [vmem:[#allocation2 + $0x92] sm:$0xff]
  %v762 = vld [vmem:[#allocation2 + $0x9a] sm:$0xff]
  %v763 = vld [vmem:[#allocation2 + $0xaa] sm:$0xff]
  %v764 = vld [vmem:[#allocation2 + $0xb2] sm:$0xff]
  %v765 = vld [vmem:[#allocation2 + $0xc2] sm:$0xff]
  %v766 = vld [vmem:[#allocation2 + $0xca] sm:$0xff]
  %v767 = vld [vmem:[#allocation2 + $0xda] sm:$0xff]
  %v768 = vld [vmem:[#allocation2 + $0xe2] sm:$0xff]
  %v769 = vld [vmem:[#allocation2 + $0xf2] sm:$0xff]
  %v770 = vld [vmem:[#allocation2 + $0xfa] sm:$0xff]
  %v771 = vld [vmem:[#allocation2 + $0x10a] sm:$0xff]
  %v772 = vld [vmem:[#allocation2 + $0x112] sm:$0xff]
  %v773 = vld [vmem:[#allocation2 + $0x122] sm:$0xff]
  %v774 = vld [vmem:[#allocation2 + $0x12a] sm:$0xff]
  %v775 = vld [vmem:[#allocation2 + $0x13a] sm:$0xff]
  %v776 = vld [vmem:[#allocation2 + $0x142] sm:$0xff]
  %v777 = vld [vmem:[#allocation2 + $0x152] sm:$0xff]
  %v778 = vld [vmem:[#allocation2 + $0x15a] sm:$0xff]
  %v779 = vld [vmem:[#allocation2 + $0x16a] sm:$0xff]
  %v780 = vld [vmem:[#allocation2 + $0x172] sm:$0xff]
  %v781 = vld [vmem:[#allocation2 + $0x1b2] sm:$0xff]
  %v782 = vld [vmem:[#allocation2 + $0x1ba] sm:$0xff]
  %v783 = vld [vmem:[#allocation2 + $0x1ca] sm:$0xff]
  %v784 = vld [vmem:[#allocation2 + $0x1d2] sm:$0xff]
  %v785 = vld [vmem:[#allocation2 + $0x1e2] sm:$0xff]
  %v786 = vld [vmem:[#allocation2 + $0x1ea] sm:$0xff]
  %v787 = vld [vmem:[#allocation2 + $0x1fa] sm:$0xff]
  %v788 = vld [vmem:[#allocation2 + $0x202] sm:$0xff]
  %v789 = vld [vmem:[#allocation2 + $0x212] sm:$0xff]
  %v790 = vld [vmem:[#allocation2 + $0x21a] sm:$0xff]
  %v791 = vld [vmem:[#allocation2 + $0x22a] sm:$0xff]
  %v792 = vld [vmem:[#allocation2 + $0x232] sm:$0xff]
  %v793 = vld [vmem:[#allocation2 + $0x242] sm:$0xff]
  %v794 = vld [vmem:[#allocation2 + $0x24a] sm:$0xff]
  %v795 = vld [vmem:[#allocation2 + $0x25a] sm:$0xff]
  %v796 = vld [vmem:[#allocation2 + $0x262] sm:$0xff]
  %v797 = vld [vmem:[#allocation2 + $0x272] sm:$0xff]
  %v798 = vld [vmem:[#allocation2 + $0x27a] sm:$0xff]
  %v799 = vld [vmem:[#allocation2 + $0x28a] sm:$0xff]
  %v800 = vld [vmem:[#allocation2 + $0x292] sm:$0xff]
  %v801 = vld [vmem:[#allocation2 + $0x2a2] sm:$0xff]
  %v802 = vld [vmem:[#allocation2 + $0x2aa] sm:$0xff]
  %v803 = vld [vmem:[#allocation2 + $0x2ba] sm:$0xff]
  %v804 = vld [vmem:[#allocation2 + $0x2c2] sm:$0xff]
  %v805 = vld [vmem:[#allocation2 + $0x2d2] sm:$0xff]
  %v806 = vld [vmem:[#allocation2 + $0x2da] sm:$0xff]
  %v807 = vld [vmem:[#allocation2 + $0x2ea] sm:$0xff]
  %v808 = vld [vmem:[#allocation2 + $0x2f2] sm:$0xff]
  %v809 = vld [vmem:[#allocation2 + $0x302] sm:$0xff]
  %v810 = vld [vmem:[#allocation2 + $0x30a] sm:$0xff]
  %v811 = vld [vmem:[#allocation2 + $0x31a] sm:$0xff]
  %v812 = vld [vmem:[#allocation2 + $0x322] sm:$0xff]
  %877 = vrot.lane.b32.xlu0 %v749, 8
  %v878 = vpop.permute.xlu0 %877
  %879 = vrot.lane.b32.xlu0 %v750, 8
  %v880 = vpop.permute.xlu0 %879
  %881 = vrot.lane.b32.xlu0 %v751, 8
  %v882 = vpop.permute.xlu0 %881
  %883 = vrot.lane.b32.xlu0 %v752, 8
  %v884 = vpop.permute.xlu0 %883
  %885 = vrot.lane.b32.xlu0 %v753, 8
  %v886 = vpop.permute.xlu0 %885
  %887 = vrot.lane.b32.xlu0 %v754, 8
  %v888 = vpop.permute.xlu0 %887
  %889 = vrot.lane.b32.xlu0 %v755, 8
  %v890 = vpop.permute.xlu0 %889
  %891 = vrot.lane.b32.xlu0 %v756, 8
  %v892 = vpop.permute.xlu0 %891
  %893 = vrot.lane.b32.xlu0 %v757, 8
  %v894 = vpop.permute.xlu0 %893
  %895 = vrot.lane.b32.xlu0 %v758, 8
  %v896 = vpop.permute.xlu0 %895
  %897 = vrot.lane.b32.xlu0 %v759, 8
  %v898 = vpop.permute.xlu0 %897
  %899 = vrot.lane.b32.xlu0 %v760, 8
  %v900 = vpop.permute.xlu0 %899
  %901 = vrot.lane.b32.xlu0 %v761, 8
  %v902 = vpop.permute.xlu0 %901
  %903 = vrot.lane.b32.xlu0 %v762, 8
  %v904 = vpop.permute.xlu0 %903
  %905 = vrot.lane.b32.xlu0 %v763, 8
  %v906 = vpop.permute.xlu0 %905
  %907 = vrot.lane.b32.xlu0 %v764, 8
  %v908 = vpop.permute.xlu0 %907
  %909 = vrot.lane.b32.xlu0 %v765, 8
  %v910 = vpop.permute.xlu0 %909
  %911 = vrot.lane.b32.xlu0 %v766, 8
  %v912 = vpop.permute.xlu0 %911
  %913 = vrot.lane.b32.xlu0 %v767, 8
  %v914 = vpop.permute.xlu0 %913
  %915 = vrot.lane.b32.xlu0 %v768, 8
  %v916 = vpop.permute.xlu0 %915
  %917 = vrot.lane.b32.xlu0 %v769, 8
  %v918 = vpop.permute.xlu0 %917
  %919 = vrot.lane.b32.xlu0 %v770, 8
  %v920 = vpop.permute.xlu0 %919
  %921 = vrot.lane.b32.xlu0 %v771, 8
  %v922 = vpop.permute.xlu0 %921
  %923 = vrot.lane.b32.xlu0 %v772, 8
  %v924 = vpop.permute.xlu0 %923
  %925 = vrot.lane.b32.xlu0 %v773, 8
  %v926 = vpop.permute.xlu0 %925
  %927 = vrot.lane.b32.xlu0 %v774, 8
  %v928 = vpop.permute.xlu0 %927
  %929 = vrot.lane.b32.xlu0 %v775, 8
  %v930 = vpop.permute.xlu0 %929
  %931 = vrot.lane.b32.xlu0 %v776, 8
  %v932 = vpop.permute.xlu0 %931
  %933 = vrot.lane.b32.xlu0 %v777, 8
  %v934 = vpop.permute.xlu0 %933
  %935 = vrot.lane.b32.xlu0 %v778, 8
  %v936 = vpop.permute.xlu0 %935
  %937 = vrot.lane.b32.xlu0 %v779, 8
  %v938 = vpop.permute.xlu0 %937
  %939 = vrot.lane.b32.xlu0 %v780, 8
  %v940 = vpop.permute.xlu0 %939
  %941 = vrot.lane.b32.xlu0 %v781, 8
  %v942 = vpop.permute.xlu0 %941
  %943 = vrot.lane.b32.xlu0 %v782, 8
  %v944 = vpop.permute.xlu0 %943
  %945 = vrot.lane.b32.xlu0 %v783, 8
  %v946 = vpop.permute.xlu0 %945
  %947 = vrot.lane.b32.xlu0 %v784, 8
  %v948 = vpop.permute.xlu0 %947
  %949 = vrot.lane.b32.xlu0 %v785, 8
  %v950 = vpop.permute.xlu0 %949
  %951 = vrot.lane.b32.xlu0 %v786, 8
  %v952 = vpop.permute.xlu0 %951
  %953 = vrot.lane.b32.xlu0 %v787, 8
  %v954 = vpop.permute.xlu0 %953
  %955 = vrot.lane.b32.xlu0 %v788, 8
  %v956 = vpop.permute.xlu0 %955
  %957 = vrot.lane.b32.xlu0 %v789, 8
  %v958 = vpop.permute.xlu0 %957
  %959 = vrot.lane.b32.xlu0 %v790, 8
  %v960 = vpop.permute.xlu0 %959
  %961 = vrot.lane.b32.xlu0 %v791, 8
  %v962 = vpop.permute.xlu0 %961
  %963 = vrot.lane.b32.xlu0 %v792, 8
  %v964 = vpop.permute.xlu0 %963
  %965 = vrot.lane.b32.xlu0 %v793, 8
  %v966 = vpop.permute.xlu0 %965
  %967 = vrot.lane.b32.xlu0 %v794, 8
  %v968 = vpop.permute.xlu0 %967
  %969 = vrot.lane.b32.xlu0 %v795, 8
  %v970 = vpop.permute.xlu0 %969
  %971 = vrot.lane.b32.xlu0 %v796, 8
  %v972 = vpop.permute.xlu0 %971
  %973 = vrot.lane.b32.xlu0 %v797, 8
  %v974 = vpop.permute.xlu0 %973
  %975 = vrot.lane.b32.xlu0 %v798, 8
  %v976 = vpop.permute.xlu0 %975
  %977 = vrot.lane.b32.xlu0 %v799, 8
  %v978 = vpop.permute.xlu0 %977
  %979 = vrot.lane.b32.xlu0 %v800, 8
  %v980 = vpop.permute.xlu0 %979
  %981 = vrot.lane.b32.xlu0 %v801, 8
  %v982 = vpop.permute.xlu0 %981
  %983 = vrot.lane.b32.xlu0 %v802, 8
  %v984 = vpop.permute.xlu0 %983
  %985 = vrot.lane.b32.xlu0 %v803, 8
  %v986 = vpop.permute.xlu0 %985
  %987 = vrot.lane.b32.xlu0 %v804, 8
  %v988 = vpop.permute.xlu0 %987
  %989 = vrot.lane.b32.xlu0 %v805, 8
  %v990 = vpop.permute.xlu0 %989
  %991 = vrot.lane.b32.xlu0 %v806, 8
  %v992 = vpop.permute.xlu0 %991
  %993 = vrot.lane.b32.xlu0 %v807, 8
  %v994 = vpop.permute.xlu0 %993
  %995 = vrot.lane.b32.xlu0 %v808, 8
  %v996 = vpop.permute.xlu0 %995
  %997 = vrot.lane.b32.xlu0 %v809, 8
  %v998 = vpop.permute.xlu0 %997
  %999 = vrot.lane.b32.xlu0 %v810, 8
  %v1000 = vpop.permute.xlu0 %999
  %1001 = vrot.lane.b32.xlu0 %v811, 8
  %v1002 = vpop.permute.xlu0 %1001
  %1003 = vrot.lane.b32.xlu0 %v812, 8
  %v1004 = vpop.permute.xlu0 %1003
  %vm1069 = vcmask 97344
  %1070 = vst.msk [vmem:[#allocation3] sm:$0xff] %vm1069, %v878
  %1071 = vst.msk [vmem:[#allocation3 + $0x8] sm:$0xff] %vm1069, %v880
  %1072 = vst.msk [vmem:[#allocation3 + $0x10] sm:$0xff] %vm1069, %v882
  %1073 = vst.msk [vmem:[#allocation3 + $0x18] sm:$0xff] %vm1069, %v884
  %1074 = vst.msk [vmem:[#allocation3 + $0x20] sm:$0xff] %vm1069, %v886
  %1075 = vst.msk [vmem:[#allocation3 + $0x28] sm:$0xff] %vm1069, %v888
  %1076 = vst.msk [vmem:[#allocation3 + $0x30] sm:$0xff] %vm1069, %v890
  %1077 = vst.msk [vmem:[#allocation3 + $0x38] sm:$0xff] %vm1069, %v892
  %1078 = vst.msk [vmem:[#allocation3 + $0x40] sm:$0xff] %vm1069, %v894
  %1079 = vst.msk [vmem:[#allocation3 + $0x48] sm:$0xff] %vm1069, %v896
  %1080 = vst.msk [vmem:[#allocation3 + $0x50] sm:$0xff] %vm1069, %v898
  %1081 = vst.msk [vmem:[#allocation3 + $0x58] sm:$0xff] %vm1069, %v900
  %1082 = vst.msk [vmem:[#allocation3 + $0x60] sm:$0xff] %vm1069, %v902
  %1083 = vst.msk [vmem:[#allocation3 + $0x68] sm:$0xff] %vm1069, %v904
  %1084 = vst.msk [vmem:[#allocation3 + $0x70] sm:$0xff] %vm1069, %v906
  %1085 = vst.msk [vmem:[#allocation3 + $0x78] sm:$0xff] %vm1069, %v908
  %1086 = vst.msk [vmem:[#allocation3 + $0x80] sm:$0xff] %vm1069, %v910
  %1087 = vst.msk [vmem:[#allocation3 + $0x88] sm:$0xff] %vm1069, %v912
  %1088 = vst.msk [vmem:[#allocation3 + $0x90] sm:$0xff] %vm1069, %v914
  %1089 = vst.msk [vmem:[#allocation3 + $0x98] sm:$0xff] %vm1069, %v916
  %1090 = vst.msk [vmem:[#allocation3 + $0xa0] sm:$0xff] %vm1069, %v918
  %1091 = vst.msk [vmem:[#allocation3 + $0xa8] sm:$0xff] %vm1069, %v920
  %1092 = vst.msk [vmem:[#allocation3 + $0xb0] sm:$0xff] %vm1069, %v922
  %1093 = vst.msk [vmem:[#allocation3 + $0xb8] sm:$0xff] %vm1069, %v924
  %1094 = vst.msk [vmem:[#allocation3 + $0xc0] sm:$0xff] %vm1069, %v926
  %1095 = vst.msk [vmem:[#allocation3 + $0xc8] sm:$0xff] %vm1069, %v928
  %1096 = vst.msk [vmem:[#allocation3 + $0xd0] sm:$0xff] %vm1069, %v930
  %1097 = vst.msk [vmem:[#allocation3 + $0xd8] sm:$0xff] %vm1069, %v932
  %1098 = vst.msk [vmem:[#allocation3 + $0xe0] sm:$0xff] %vm1069, %v934
  %1099 = vst.msk [vmem:[#allocation3 + $0xe8] sm:$0xff] %vm1069, %v936
  %1100 = vst.msk [vmem:[#allocation3 + $0xf0] sm:$0xff] %vm1069, %v938
  %1101 = vst.msk [vmem:[#allocation3 + $0xf8] sm:$0xff] %vm1069, %v940
  %1102 = vst.msk [vmem:[#allocation3 + $0x100] sm:$0xff] %vm1069, %v942
  %1103 = vst.msk [vmem:[#allocation3 + $0x108] sm:$0xff] %vm1069, %v944
  %1104 = vst.msk [vmem:[#allocation3 + $0x110] sm:$0xff] %vm1069, %v946
  %1105 = vst.msk [vmem:[#allocation3 + $0x118] sm:$0xff] %vm1069, %v948
  %1106 = vst.msk [vmem:[#allocation3 + $0x120] sm:$0xff] %vm1069, %v950
  %1107 = vst.msk [vmem:[#allocation3 + $0x128] sm:$0xff] %vm1069, %v952
  %1108 = vst.msk [vmem:[#allocation3 + $0x130] sm:$0xff] %vm1069, %v954
  %1109 = vst.msk [vmem:[#allocation3 + $0x138] sm:$0xff] %vm1069, %v956
  %1110 = vst.msk [vmem:[#allocation3 + $0x140] sm:$0xff] %vm1069, %v958
  %1111 = vst.msk [vmem:[#allocation3 + $0x148] sm:$0xff] %vm1069, %v960
  %1112 = vst.msk [vmem:[#allocation3 + $0x150] sm:$0xff] %vm1069, %v962
  %1113 = vst.msk [vmem:[#allocation3 + $0x158] sm:$0xff] %vm1069, %v964
  %1114 = vst.msk [vmem:[#allocation3 + $0x160] sm:$0xff] %vm1069, %v966
  %1115 = vst.msk [vmem:[#allocation3 + $0x168] sm:$0xff] %vm1069, %v968
  %1116 = vst.msk [vmem:[#allocation3 + $0x170] sm:$0xff] %vm1069, %v970
  %1117 = vst.msk [vmem:[#allocation3 + $0x178] sm:$0xff] %vm1069, %v972
  %1118 = vst.msk [vmem:[#allocation3 + $0x180] sm:$0xff] %vm1069, %v974
  %1119 = vst.msk [vmem:[#allocation3 + $0x188] sm:$0xff] %vm1069, %v976
  %1120 = vst.msk [vmem:[#allocation3 + $0x190] sm:$0xff] %vm1069, %v978
  %1121 = vst.msk [vmem:[#allocation3 + $0x198] sm:$0xff] %vm1069, %v980
  %1122 = vst.msk [vmem:[#allocation3 + $0x1a0] sm:$0xff] %vm1069, %v982
  %1123 = vst.msk [vmem:[#allocation3 + $0x1a8] sm:$0xff] %vm1069, %v984
  %1124 = vst.msk [vmem:[#allocation3 + $0x1b0] sm:$0xff] %vm1069, %v986
  %1125 = vst.msk [vmem:[#allocation3 + $0x1b8] sm:$0xff] %vm1069, %v988
  %1126 = vst.msk [vmem:[#allocation3 + $0x1c0] sm:$0xff] %vm1069, %v990
  %1127 = vst.msk [vmem:[#allocation3 + $0x1c8] sm:$0xff] %vm1069, %v992
  %1128 = vst.msk [vmem:[#allocation3 + $0x1d0] sm:$0xff] %vm1069, %v994
  %1129 = vst.msk [vmem:[#allocation3 + $0x1d8] sm:$0xff] %vm1069, %v996
  %1130 = vst.msk [vmem:[#allocation3 + $0x1e0] sm:$0xff] %vm1069, %v998
  %1131 = vst.msk [vmem:[#allocation3 + $0x1e8] sm:$0xff] %vm1069, %v1000
  %1132 = vst.msk [vmem:[#allocation3 + $0x1f0] sm:$0xff] %vm1069, %v1002
  %1133 = vst.msk [vmem:[#allocation3 + $0x1f8] sm:$0xff] %vm1069, %v1004
  %v1134 = vld [vmem:[%s42] sm:$0xff]
  %v1135 = vld [vmem:[%s42 + $0x8] sm:$0xff]
  %v1136 = vld [vmem:[%s42 + $0x18] sm:$0xff]
  %v1137 = vld [vmem:[%s42 + $0x20] sm:$0xff]
  %v1138 = vld [vmem:[%s42 + $0x30] sm:$0xff]
  %v1139 = vld [vmem:[%s42 + $0x38] sm:$0xff]
  %v1140 = vld [vmem:[%s42 + $0x48] sm:$0xff]
  %v1141 = vld [vmem:[%s42 + $0x50] sm:$0xff]
  %v1142 = vld [vmem:[%s42 + $0x60] sm:$0xff]
  %v1143 = vld [vmem:[%s42 + $0x68] sm:$0xff]
  %v1144 = vld [vmem:[%s42 + $0x78] sm:$0xff]
  %v1145 = vld [vmem:[%s42 + $0x80] sm:$0xff]
  %v1146 = vld [vmem:[%s42 + $0x90] sm:$0xff]
  %v1147 = vld [vmem:[%s42 + $0x98] sm:$0xff]
  %v1148 = vld [vmem:[%s42 + $0xa8] sm:$0xff]
  %v1149 = vld [vmem:[%s42 + $0xb0] sm:$0xff]
  %v1150 = vld [vmem:[%s42 + $0xc0] sm:$0xff]
  %v1151 = vld [vmem:[%s42 + $0xc8] sm:$0xff]
  %v1152 = vld [vmem:[%s42 + $0xd8] sm:$0xff]
  %v1153 = vld [vmem:[%s42 + $0xe0] sm:$0xff]
  %v1154 = vld [vmem:[%s42 + $0xf0] sm:$0xff]
  %v1155 = vld [vmem:[%s42 + $0xf8] sm:$0xff]
  %v1156 = vld [vmem:[%s42 + $0x108] sm:$0xff]
  %v1157 = vld [vmem:[%s42 + $0x110] sm:$0xff]
  %v1158 = vld [vmem:[%s42 + $0x120] sm:$0xff]
  %v1159 = vld [vmem:[%s42 + $0x128] sm:$0xff]
  %v1160 = vld [vmem:[%s42 + $0x138] sm:$0xff]
  %v1161 = vld [vmem:[%s42 + $0x140] sm:$0xff]
  %v1162 = vld [vmem:[%s42 + $0x150] sm:$0xff]
  %v1163 = vld [vmem:[%s42 + $0x158] sm:$0xff]
  %v1164 = vld [vmem:[%s42 + $0x168] sm:$0xff]
  %v1165 = vld [vmem:[%s42 + $0x170] sm:$0xff]
  %v1166 = vld [vmem:[%s42 + $0x1b0] sm:$0xff]
  %v1167 = vld [vmem:[%s42 + $0x1b8] sm:$0xff]
  %v1168 = vld [vmem:[%s42 + $0x1c8] sm:$0xff]
  %v1169 = vld [vmem:[%s42 + $0x1d0] sm:$0xff]
  %v1170 = vld [vmem:[%s42 + $0x1e0] sm:$0xff]
  %v1171 = vld [vmem:[%s42 + $0x1e8] sm:$0xff]
  %v1172 = vld [vmem:[%s42 + $0x1f8] sm:$0xff]
  %v1173 = vld [vmem:[%s42 + $0x200] sm:$0xff]
  %v1174 = vld [vmem:[%s42 + $0x210] sm:$0xff]
  %v1175 = vld [vmem:[%s42 + $0x218] sm:$0xff]
  %v1176 = vld [vmem:[%s42 + $0x228] sm:$0xff]
  %v1177 = vld [vmem:[%s42 + $0x230] sm:$0xff]
  %v1178 = vld [vmem:[%s42 + $0x240] sm:$0xff]
  %v1179 = vld [vmem:[%s42 + $0x248] sm:$0xff]
  %v1180 = vld [vmem:[%s42 + $0x258] sm:$0xff]
  %v1181 = vld [vmem:[%s42 + $0x260] sm:$0xff]
  %v1182 = vld [vmem:[%s42 + $0x270] sm:$0xff]
  %v1183 = vld [vmem:[%s42 + $0x278] sm:$0xff]
  %v1184 = vld [vmem:[%s42 + $0x288] sm:$0xff]
  %v1185 = vld [vmem:[%s42 + $0x290] sm:$0xff]
  %v1186 = vld [vmem:[%s42 + $0x2a0] sm:$0xff]
  %v1187 = vld [vmem:[%s42 + $0x2a8] sm:$0xff]
  %v1188 = vld [vmem:[%s42 + $0x2b8] sm:$0xff]
  %v1189 = vld [vmem:[%s42 + $0x2c0] sm:$0xff]
  %v1190 = vld [vmem:[%s42 + $0x2d0] sm:$0xff]
  %v1191 = vld [vmem:[%s42 + $0x2d8] sm:$0xff]
  %v1192 = vld [vmem:[%s42 + $0x2e8] sm:$0xff]
  %v1193 = vld [vmem:[%s42 + $0x2f0] sm:$0xff]
  %v1194 = vld [vmem:[%s42 + $0x300] sm:$0xff]
  %v1195 = vld [vmem:[%s42 + $0x308] sm:$0xff]
  %v1196 = vld [vmem:[%s42 + $0x318] sm:$0xff]
  %v1197 = vld [vmem:[%s42 + $0x320] sm:$0xff]
  %1262 = vrot.lane.b32.xlu0 %v1134, 12
  %v1263 = vpop.permute.xlu0 %1262
  %1264 = vrot.lane.b32.xlu0 %v1135, 12
  %v1265 = vpop.permute.xlu0 %1264
  %1266 = vrot.lane.b32.xlu0 %v1136, 12
  %v1267 = vpop.permute.xlu0 %1266
  %1268 = vrot.lane.b32.xlu0 %v1137, 12
  %v1269 = vpop.permute.xlu0 %1268
  %1270 = vrot.lane.b32.xlu0 %v1138, 12
  %v1271 = vpop.permute.xlu0 %1270
  %1272 = vrot.lane.b32.xlu0 %v1139, 12
  %v1273 = vpop.permute.xlu0 %1272
  %1274 = vrot.lane.b32.xlu0 %v1140, 12
  %v1275 = vpop.permute.xlu0 %1274
  %1276 = vrot.lane.b32.xlu0 %v1141, 12
  %v1277 = vpop.permute.xlu0 %1276
  %1278 = vrot.lane.b32.xlu0 %v1142, 12
  %v1279 = vpop.permute.xlu0 %1278
  %1280 = vrot.lane.b32.xlu0 %v1143, 12
  %v1281 = vpop.permute.xlu0 %1280
  %1282 = vrot.lane.b32.xlu0 %v1144, 12
  %v1283 = vpop.permute.xlu0 %1282
  %1284 = vrot.lane.b32.xlu0 %v1145, 12
  %v1285 = vpop.permute.xlu0 %1284
  %1286 = vrot.lane.b32.xlu0 %v1146, 12
  %v1287 = vpop.permute.xlu0 %1286
  %1288 = vrot.lane.b32.xlu0 %v1147, 12
  %v1289 = vpop.permute.xlu0 %1288
  %1290 = vrot.lane.b32.xlu0 %v1148, 12
  %v1291 = vpop.permute.xlu0 %1290
  %1292 = vrot.lane.b32.xlu0 %v1149, 12
  %v1293 = vpop.permute.xlu0 %1292
  %1294 = vrot.lane.b32.xlu0 %v1150, 12
  %v1295 = vpop.permute.xlu0 %1294
  %1296 = vrot.lane.b32.xlu0 %v1151, 12
  %v1297 = vpop.permute.xlu0 %1296
  %1298 = vrot.lane.b32.xlu0 %v1152, 12
  %v1299 = vpop.permute.xlu0 %1298
  %1300 = vrot.lane.b32.xlu0 %v1153, 12
  %v1301 = vpop.permute.xlu0 %1300
  %1302 = vrot.lane.b32.xlu0 %v1154, 12
  %v1303 = vpop.permute.xlu0 %1302
  %1304 = vrot.lane.b32.xlu0 %v1155, 12
  %v1305 = vpop.permute.xlu0 %1304
  %1306 = vrot.lane.b32.xlu0 %v1156, 12
  %v1307 = vpop.permute.xlu0 %1306
  %1308 = vrot.lane.b32.xlu0 %v1157, 12
  %v1309 = vpop.permute.xlu0 %1308
  %1310 = vrot.lane.b32.xlu0 %v1158, 12
  %v1311 = vpop.permute.xlu0 %1310
  %1312 = vrot.lane.b32.xlu0 %v1159, 12
  %v1313 = vpop.permute.xlu0 %1312
  %1314 = vrot.lane.b32.xlu0 %v1160, 12
  %v1315 = vpop.permute.xlu0 %1314
  %1316 = vrot.lane.b32.xlu0 %v1161, 12
  %v1317 = vpop.permute.xlu0 %1316
  %1318 = vrot.lane.b32.xlu0 %v1162, 12
  %v1319 = vpop.permute.xlu0 %1318
  %1320 = vrot.lane.b32.xlu0 %v1163, 12
  %v1321 = vpop.permute.xlu0 %1320
  %1322 = vrot.lane.b32.xlu0 %v1164, 12
  %v1323 = vpop.permute.xlu0 %1322
  %1324 = vrot.lane.b32.xlu0 %v1165, 12
  %v1325 = vpop.permute.xlu0 %1324
  %1326 = vrot.lane.b32.xlu0 %v1166, 12
  %v1327 = vpop.permute.xlu0 %1326
  %1328 = vrot.lane.b32.xlu0 %v1167, 12
  %v1329 = vpop.permute.xlu0 %1328
  %1330 = vrot.lane.b32.xlu0 %v1168, 12
  %v1331 = vpop.permute.xlu0 %1330
  %1332 = vrot.lane.b32.xlu0 %v1169, 12
  %v1333 = vpop.permute.xlu0 %1332
  %1334 = vrot.lane.b32.xlu0 %v1170, 12
  %v1335 = vpop.permute.xlu0 %1334
  %1336 = vrot.lane.b32.xlu0 %v1171, 12
  %v1337 = vpop.permute.xlu0 %1336
  %1338 = vrot.lane.b32.xlu0 %v1172, 12
  %v1339 = vpop.permute.xlu0 %1338
  %1340 = vrot.lane.b32.xlu0 %v1173, 12
  %v1341 = vpop.permute.xlu0 %1340
  %1342 = vrot.lane.b32.xlu0 %v1174, 12
  %v1343 = vpop.permute.xlu0 %1342
  %1344 = vrot.lane.b32.xlu0 %v1175, 12
  %v1345 = vpop.permute.xlu0 %1344
  %1346 = vrot.lane.b32.xlu0 %v1176, 12
  %v1347 = vpop.permute.xlu0 %1346
  %1348 = vrot.lane.b32.xlu0 %v1177, 12
  %v1349 = vpop.permute.xlu0 %1348
  %1350 = vrot.lane.b32.xlu0 %v1178, 12
  %v1351 = vpop.permute.xlu0 %1350
  %1352 = vrot.lane.b32.xlu0 %v1179, 12
  %v1353 = vpop.permute.xlu0 %1352
  %1354 = vrot.lane.b32.xlu0 %v1180, 12
  %v1355 = vpop.permute.xlu0 %1354
  %1356 = vrot.lane.b32.xlu0 %v1181, 12
  %v1357 = vpop.permute.xlu0 %1356
  %1358 = vrot.lane.b32.xlu0 %v1182, 12
  %v1359 = vpop.permute.xlu0 %1358
  %1360 = vrot.lane.b32.xlu0 %v1183, 12
  %v1361 = vpop.permute.xlu0 %1360
  %1362 = vrot.lane.b32.xlu0 %v1184, 12
  %v1363 = vpop.permute.xlu0 %1362
  %1364 = vrot.lane.b32.xlu0 %v1185, 12
  %v1365 = vpop.permute.xlu0 %1364
  %1366 = vrot.lane.b32.xlu0 %v1186, 12
  %v1367 = vpop.permute.xlu0 %1366
  %1368 = vrot.lane.b32.xlu0 %v1187, 12
  %v1369 = vpop.permute.xlu0 %1368
  %1370 = vrot.lane.b32.xlu0 %v1188, 12
  %v1371 = vpop.permute.xlu0 %1370
  %1372 = vrot.lane.b32.xlu0 %v1189, 12
  %v1373 = vpop.permute.xlu0 %1372
  %1374 = vrot.lane.b32.xlu0 %v1190, 12
  %v1375 = vpop.permute.xlu0 %1374
  %1376 = vrot.lane.b32.xlu0 %v1191, 12
  %v1377 = vpop.permute.xlu0 %1376
  %1378 = vrot.lane.b32.xlu0 %v1192, 12
  %v1379 = vpop.permute.xlu0 %1378
  %1380 = vrot.lane.b32.xlu0 %v1193, 12
  %v1381 = vpop.permute.xlu0 %1380
  %1382 = vrot.lane.b32.xlu0 %v1194, 12
  %v1383 = vpop.permute.xlu0 %1382
  %1384 = vrot.lane.b32.xlu0 %v1195, 12
  %v1385 = vpop.permute.xlu0 %1384
  %1386 = vrot.lane.b32.xlu0 %v1196, 12
  %v1387 = vpop.permute.xlu0 %1386
  %1388 = vrot.lane.b32.xlu0 %v1197, 12
  %v1389 = vpop.permute.xlu0 %1388
  %vm1454 = vcmask 130144
  %1455 = vst.msk [vmem:[#allocation3] sm:$0xff] %vm1454, %v1263
  %1456 = vst.msk [vmem:[#allocation3 + $0x8] sm:$0xff] %vm1454, %v1265
  %1457 = vst.msk [vmem:[#allocation3 + $0x10] sm:$0xff] %vm1454, %v1267
  %1458 = vst.msk [vmem:[#allocation3 + $0x18] sm:$0xff] %vm1454, %v1269
  %1459 = vst.msk [vmem:[#allocation3 + $0x20] sm:$0xff] %vm1454, %v1271
  %1460 = vst.msk [vmem:[#allocation3 + $0x28] sm:$0xff] %vm1454, %v1273
  %1461 = vst.msk [vmem:[#allocation3 + $0x30] sm:$0xff] %vm1454, %v1275
  %1462 = vst.msk [vmem:[#allocation3 + $0x38] sm:$0xff] %vm1454, %v1277
  %1463 = vst.msk [vmem:[#allocation3 + $0x40] sm:$0xff] %vm1454, %v1279
  %1464 = vst.msk [vmem:[#allocation3 + $0x48] sm:$0xff] %vm1454, %v1281
  %1465 = vst.msk [vmem:[#allocation3 + $0x50] sm:$0xff] %vm1454, %v1283
  %1466 = vst.msk [vmem:[#allocation3 + $0x58] sm:$0xff] %vm1454, %v1285
  %1467 = vst.msk [vmem:[#allocation3 + $0x60] sm:$0xff] %vm1454, %v1287
  %1468 = vst.msk [vmem:[#allocation3 + $0x68] sm:$0xff] %vm1454, %v1289
  %1469 = vst.msk [vmem:[#allocation3 + $0x70] sm:$0xff] %vm1454, %v1291
  %1470 = vst.msk [vmem:[#allocation3 + $0x78] sm:$0xff] %vm1454, %v1293
  %1471 = vst.msk [vmem:[#allocation3 + $0x80] sm:$0xff] %vm1454, %v1295
  %1472 = vst.msk [vmem:[#allocation3 + $0x88] sm:$0xff] %vm1454, %v1297
  %1473 = vst.msk [vmem:[#allocation3 + $0x90] sm:$0xff] %vm1454, %v1299
  %1474 = vst.msk [vmem:[#allocation3 + $0x98] sm:$0xff] %vm1454, %v1301
  %1475 = vst.msk [vmem:[#allocation3 + $0xa0] sm:$0xff] %vm1454, %v1303
  %1476 = vst.msk [vmem:[#allocation3 + $0xa8] sm:$0xff] %vm1454, %v1305
  %1477 = vst.msk [vmem:[#allocation3 + $0xb0] sm:$0xff] %vm1454, %v1307
  %1478 = vst.msk [vmem:[#allocation3 + $0xb8] sm:$0xff] %vm1454, %v1309
  %1479 = vst.msk [vmem:[#allocation3 + $0xc0] sm:$0xff] %vm1454, %v1311
  %1480 = vst.msk [vmem:[#allocation3 + $0xc8] sm:$0xff] %vm1454, %v1313
  %1481 = vst.msk [vmem:[#allocation3 + $0xd0] sm:$0xff] %vm1454, %v1315
  %1482 = vst.msk [vmem:[#allocation3 + $0xd8] sm:$0xff] %vm1454, %v1317
  %1483 = vst.msk [vmem:[#allocation3 + $0xe0] sm:$0xff] %vm1454, %v1319
  %1484 = vst.msk [vmem:[#allocation3 + $0xe8] sm:$0xff] %vm1454, %v1321
  %1485 = vst.msk [vmem:[#allocation3 + $0xf0] sm:$0xff] %vm1454, %v1323
  %1486 = vst.msk [vmem:[#allocation3 + $0xf8] sm:$0xff] %vm1454, %v1325
  %1487 = vst.msk [vmem:[#allocation3 + $0x100] sm:$0xff] %vm1454, %v1327
  %1488 = vst.msk [vmem:[#allocation3 + $0x108] sm:$0xff] %vm1454, %v1329
  %1489 = vst.msk [vmem:[#allocation3 + $0x110] sm:$0xff] %vm1454, %v1331
  %1490 = vst.msk [vmem:[#allocation3 + $0x118] sm:$0xff] %vm1454, %v1333
  %1491 = vst.msk [vmem:[#allocation3 + $0x120] sm:$0xff] %vm1454, %v1335
  %1492 = vst.msk [vmem:[#allocation3 + $0x128] sm:$0xff] %vm1454, %v1337
  %1493 = vst.msk [vmem:[#allocation3 + $0x130] sm:$0xff] %vm1454, %v1339
  %1494 = vst.msk [vmem:[#allocation3 + $0x138] sm:$0xff] %vm1454, %v1341
  %1495 = vst.msk [vmem:[#allocation3 + $0x140] sm:$0xff] %vm1454, %v1343
  %1496 = vst.msk [vmem:[#allocation3 + $0x148] sm:$0xff] %vm1454, %v1345
  %1497 = vst.msk [vmem:[#allocation3 + $0x150] sm:$0xff] %vm1454, %v1347
  %1498 = vst.msk [vmem:[#allocation3 + $0x158] sm:$0xff] %vm1454, %v1349
  %1499 = vst.msk [vmem:[#allocation3 + $0x160] sm:$0xff] %vm1454, %v1351
  %1500 = vst.msk [vmem:[#allocation3 + $0x168] sm:$0xff] %vm1454, %v1353
  %1501 = vst.msk [vmem:[#allocation3 + $0x170] sm:$0xff] %vm1454, %v1355
  %1502 = vst.msk [vmem:[#allocation3 + $0x178] sm:$0xff] %vm1454, %v1357
  %1503 = vst.msk [vmem:[#allocation3 + $0x180] sm:$0xff] %vm1454, %v1359
  %1504 = vst.msk [vmem:[#allocation3 + $0x188] sm:$0xff] %vm1454, %v1361
  %1505 = vst.msk [vmem:[#allocation3 + $0x190] sm:$0xff] %vm1454, %v1363
  %1506 = vst.msk [vmem:[#allocation3 + $0x198] sm:$0xff] %vm1454, %v1365
  %1507 = vst.msk [vmem:[#allocation3 + $0x1a0] sm:$0xff] %vm1454, %v1367
  %1508 = vst.msk [vmem:[#allocation3 + $0x1a8] sm:$0xff] %vm1454, %v1369
  %1509 = vst.msk [vmem:[#allocation3 + $0x1b0] sm:$0xff] %vm1454, %v1371
  %1510 = vst.msk [vmem:[#allocation3 + $0x1b8] sm:$0xff] %vm1454, %v1373
  %1511 = vst.msk [vmem:[#allocation3 + $0x1c0] sm:$0xff] %vm1454, %v1375
  %1512 = vst.msk [vmem:[#allocation3 + $0x1c8] sm:$0xff] %vm1454, %v1377
  %1513 = vst.msk [vmem:[#allocation3 + $0x1d0] sm:$0xff] %vm1454, %v1379
  %1514 = vst.msk [vmem:[#allocation3 + $0x1d8] sm:$0xff] %vm1454, %v1381
  %1515 = vst.msk [vmem:[#allocation3 + $0x1e0] sm:$0xff] %vm1454, %v1383
  %1516 = vst.msk [vmem:[#allocation3 + $0x1e8] sm:$0xff] %vm1454, %v1385
  %1517 = vst.msk [vmem:[#allocation3 + $0x1f0] sm:$0xff] %vm1454, %v1387
  %1518 = vst.msk [vmem:[#allocation3 + $0x1f8] sm:$0xff] %vm1454, %v1389
  %v1519 = vld [vmem:[%s42 + $0x1] sm:$0xff]
  %v1520 = vld [vmem:[%s42 + $0x9] sm:$0xff]
  %v1521 = vld [vmem:[%s42 + $0x19] sm:$0xff]
  %v1522 = vld [vmem:[%s42 + $0x21] sm:$0xff]
  %v1523 = vld [vmem:[%s42 + $0x31] sm:$0xff]
  %v1524 = vld [vmem:[%s42 + $0x39] sm:$0xff]
  %v1525 = vld [vmem:[%s42 + $0x49] sm:$0xff]
  %v1526 = vld [vmem:[%s42 + $0x51] sm:$0xff]
  %v1527 = vld [vmem:[%s42 + $0x61] sm:$0xff]
  %v1528 = vld [vmem:[%s42 + $0x69] sm:$0xff]
  %v1529 = vld [vmem:[%s42 + $0x79] sm:$0xff]
  %v1530 = vld [vmem:[%s42 + $0x81] sm:$0xff]
  %v1531 = vld [vmem:[%s42 + $0x91] sm:$0xff]
  %v1532 = vld [vmem:[%s42 + $0x99] sm:$0xff]
  %v1533 = vld [vmem:[%s42 + $0xa9] sm:$0xff]
  %v1534 = vld [vmem:[%s42 + $0xb1] sm:$0xff]
  %v1535 = vld [vmem:[%s42 + $0xc1] sm:$0xff]
  %v1536 = vld [vmem:[%s42 + $0xc9] sm:$0xff]
  %v1537 = vld [vmem:[%s42 + $0xd9] sm:$0xff]
  %v1538 = vld [vmem:[%s42 + $0xe1] sm:$0xff]
  %v1539 = vld [vmem:[%s42 + $0xf1] sm:$0xff]
  %v1540 = vld [vmem:[%s42 + $0xf9] sm:$0xff]
  %v1541 = vld [vmem:[%s42 + $0x109] sm:$0xff]
  %v1542 = vld [vmem:[%s42 + $0x111] sm:$0xff]
  %v1543 = vld [vmem:[%s42 + $0x121] sm:$0xff]
  %v1544 = vld [vmem:[%s42 + $0x129] sm:$0xff]
  %v1545 = vld [vmem:[%s42 + $0x139] sm:$0xff]
  %v1546 = vld [vmem:[%s42 + $0x141] sm:$0xff]
  %v1547 = vld [vmem:[%s42 + $0x151] sm:$0xff]
  %v1548 = vld [vmem:[%s42 + $0x159] sm:$0xff]
  %v1549 = vld [vmem:[%s42 + $0x169] sm:$0xff]
  %v1550 = vld [vmem:[%s42 + $0x171] sm:$0xff]
  %v1551 = vld [vmem:[%s42 + $0x1b1] sm:$0xff]
  %v1552 = vld [vmem:[%s42 + $0x1b9] sm:$0xff]
  %v1553 = vld [vmem:[%s42 + $0x1c9] sm:$0xff]
  %v1554 = vld [vmem:[%s42 + $0x1d1] sm:$0xff]
  %v1555 = vld [vmem:[%s42 + $0x1e1] sm:$0xff]
  %v1556 = vld [vmem:[%s42 + $0x1e9] sm:$0xff]
  %v1557 = vld [vmem:[%s42 + $0x1f9] sm:$0xff]
  %v1558 = vld [vmem:[%s42 + $0x201] sm:$0xff]
  %v1559 = vld [vmem:[%s42 + $0x211] sm:$0xff]
  %v1560 = vld [vmem:[%s42 + $0x219] sm:$0xff]
  %v1561 = vld [vmem:[%s42 + $0x229] sm:$0xff]
  %v1562 = vld [vmem:[%s42 + $0x231] sm:$0xff]
  %v1563 = vld [vmem:[%s42 + $0x241] sm:$0xff]
  %v1564 = vld [vmem:[%s42 + $0x249] sm:$0xff]
  %v1565 = vld [vmem:[%s42 + $0x259] sm:$0xff]
  %v1566 = vld [vmem:[%s42 + $0x261] sm:$0xff]
  %v1567 = vld [vmem:[%s42 + $0x271] sm:$0xff]
  %v1568 = vld [vmem:[%s42 + $0x279] sm:$0xff]
  %v1569 = vld [vmem:[%s42 + $0x289] sm:$0xff]
  %v1570 = vld [vmem:[%s42 + $0x291] sm:$0xff]
  %v1571 = vld [vmem:[%s42 + $0x2a1] sm:$0xff]
  %v1572 = vld [vmem:[%s42 + $0x2a9] sm:$0xff]
  %v1573 = vld [vmem:[%s42 + $0x2b9] sm:$0xff]
  %v1574 = vld [vmem:[%s42 + $0x2c1] sm:$0xff]
  %v1575 = vld [vmem:[%s42 + $0x2d1] sm:$0xff]
  %v1576 = vld [vmem:[%s42 + $0x2d9] sm:$0xff]
  %v1577 = vld [vmem:[%s42 + $0x2e9] sm:$0xff]
  %v1578 = vld [vmem:[%s42 + $0x2f1] sm:$0xff]
  %v1579 = vld [vmem:[%s42 + $0x301] sm:$0xff]
  %v1580 = vld [vmem:[%s42 + $0x309] sm:$0xff]
  %v1581 = vld [vmem:[%s42 + $0x319] sm:$0xff]
  %v1582 = vld [vmem:[%s42 + $0x321] sm:$0xff]
  %1647 = vrot.lane.b32.xlu0 %v1519, 16
  %v1648 = vpop.permute.xlu0 %1647
  %1649 = vrot.lane.b32.xlu0 %v1520, 16
  %v1650 = vpop.permute.xlu0 %1649
  %1651 = vrot.lane.b32.xlu0 %v1521, 16
  %v1652 = vpop.permute.xlu0 %1651
  %1653 = vrot.lane.b32.xlu0 %v1522, 16
  %v1654 = vpop.permute.xlu0 %1653
  %1655 = vrot.lane.b32.xlu0 %v1523, 16
  %v1656 = vpop.permute.xlu0 %1655
  %1657 = vrot.lane.b32.xlu0 %v1524, 16
  %v1658 = vpop.permute.xlu0 %1657
  %1659 = vrot.lane.b32.xlu0 %v1525, 16
  %v1660 = vpop.permute.xlu0 %1659
  %1661 = vrot.lane.b32.xlu0 %v1526, 16
  %v1662 = vpop.permute.xlu0 %1661
  %1663 = vrot.lane.b32.xlu0 %v1527, 16
  %v1664 = vpop.permute.xlu0 %1663
  %1665 = vrot.lane.b32.xlu0 %v1528, 16
  %v1666 = vpop.permute.xlu0 %1665
  %1667 = vrot.lane.b32.xlu0 %v1529, 16
  %v1668 = vpop.permute.xlu0 %1667
  %1669 = vrot.lane.b32.xlu0 %v1530, 16
  %v1670 = vpop.permute.xlu0 %1669
  %1671 = vrot.lane.b32.xlu0 %v1531, 16
  %v1672 = vpop.permute.xlu0 %1671
  %1673 = vrot.lane.b32.xlu0 %v1532, 16
  %v1674 = vpop.permute.xlu0 %1673
  %1675 = vrot.lane.b32.xlu0 %v1533, 16
  %v1676 = vpop.permute.xlu0 %1675
  %1677 = vrot.lane.b32.xlu0 %v1534, 16
  %v1678 = vpop.permute.xlu0 %1677
  %1679 = vrot.lane.b32.xlu0 %v1535, 16
  %v1680 = vpop.permute.xlu0 %1679
  %1681 = vrot.lane.b32.xlu0 %v1536, 16
  %v1682 = vpop.permute.xlu0 %1681
  %1683 = vrot.lane.b32.xlu0 %v1537, 16
  %v1684 = vpop.permute.xlu0 %1683
  %1685 = vrot.lane.b32.xlu0 %v1538, 16
  %v1686 = vpop.permute.xlu0 %1685
  %1687 = vrot.lane.b32.xlu0 %v1539, 16
  %v1688 = vpop.permute.xlu0 %1687
  %1689 = vrot.lane.b32.xlu0 %v1540, 16
  %v1690 = vpop.permute.xlu0 %1689
  %1691 = vrot.lane.b32.xlu0 %v1541, 16
  %v1692 = vpop.permute.xlu0 %1691
  %1693 = vrot.lane.b32.xlu0 %v1542, 16
  %v1694 = vpop.permute.xlu0 %1693
  %1695 = vrot.lane.b32.xlu0 %v1543, 16
  %v1696 = vpop.permute.xlu0 %1695
  %1697 = vrot.lane.b32.xlu0 %v1544, 16
  %v1698 = vpop.permute.xlu0 %1697
  %1699 = vrot.lane.b32.xlu0 %v1545, 16
  %v1700 = vpop.permute.xlu0 %1699
  %1701 = vrot.lane.b32.xlu0 %v1546, 16
  %v1702 = vpop.permute.xlu0 %1701
  %1703 = vrot.lane.b32.xlu0 %v1547, 16
  %v1704 = vpop.permute.xlu0 %1703
  %1705 = vrot.lane.b32.xlu0 %v1548, 16
  %v1706 = vpop.permute.xlu0 %1705
  %1707 = vrot.lane.b32.xlu0 %v1549, 16
  %v1708 = vpop.permute.xlu0 %1707
  %1709 = vrot.lane.b32.xlu0 %v1550, 16
  %v1710 = vpop.permute.xlu0 %1709
  %1711 = vrot.lane.b32.xlu0 %v1551, 16
  %v1712 = vpop.permute.xlu0 %1711
  %1713 = vrot.lane.b32.xlu0 %v1552, 16
  %v1714 = vpop.permute.xlu0 %1713
  %1715 = vrot.lane.b32.xlu0 %v1553, 16
  %v1716 = vpop.permute.xlu0 %1715
  %1717 = vrot.lane.b32.xlu0 %v1554, 16
  %v1718 = vpop.permute.xlu0 %1717
  %1719 = vrot.lane.b32.xlu0 %v1555, 16
  %v1720 = vpop.permute.xlu0 %1719
  %1721 = vrot.lane.b32.xlu0 %v1556, 16
  %v1722 = vpop.permute.xlu0 %1721
  %1723 = vrot.lane.b32.xlu0 %v1557, 16
  %v1724 = vpop.permute.xlu0 %1723
  %1725 = vrot.lane.b32.xlu0 %v1558, 16
  %v1726 = vpop.permute.xlu0 %1725
  %1727 = vrot.lane.b32.xlu0 %v1559, 16
  %v1728 = vpop.permute.xlu0 %1727
  %1729 = vrot.lane.b32.xlu0 %v1560, 16
  %v1730 = vpop.permute.xlu0 %1729
  %1731 = vrot.lane.b32.xlu0 %v1561, 16
  %v1732 = vpop.permute.xlu0 %1731
  %1733 = vrot.lane.b32.xlu0 %v1562, 16
  %v1734 = vpop.permute.xlu0 %1733
  %1735 = vrot.lane.b32.xlu0 %v1563, 16
  %v1736 = vpop.permute.xlu0 %1735
  %1737 = vrot.lane.b32.xlu0 %v1564, 16
  %v1738 = vpop.permute.xlu0 %1737
  %1739 = vrot.lane.b32.xlu0 %v1565, 16
  %v1740 = vpop.permute.xlu0 %1739
  %1741 = vrot.lane.b32.xlu0 %v1566, 16
  %v1742 = vpop.permute.xlu0 %1741
  %1743 = vrot.lane.b32.xlu0 %v1567, 16
  %v1744 = vpop.permute.xlu0 %1743
  %1745 = vrot.lane.b32.xlu0 %v1568, 16
  %v1746 = vpop.permute.xlu0 %1745
  %1747 = vrot.lane.b32.xlu0 %v1569, 16
  %v1748 = vpop.permute.xlu0 %1747
  %1749 = vrot.lane.b32.xlu0 %v1570, 16
  %v1750 = vpop.permute.xlu0 %1749
  %1751 = vrot.lane.b32.xlu0 %v1571, 16
  %v1752 = vpop.permute.xlu0 %1751
  %1753 = vrot.lane.b32.xlu0 %v1572, 16
  %v1754 = vpop.permute.xlu0 %1753
  %1755 = vrot.lane.b32.xlu0 %v1573, 16
  %v1756 = vpop.permute.xlu0 %1755
  %1757 = vrot.lane.b32.xlu0 %v1574, 16
  %v1758 = vpop.permute.xlu0 %1757
  %1759 = vrot.lane.b32.xlu0 %v1575, 16
  %v1760 = vpop.permute.xlu0 %1759
  %1761 = vrot.lane.b32.xlu0 %v1576, 16
  %v1762 = vpop.permute.xlu0 %1761
  %1763 = vrot.lane.b32.xlu0 %v1577, 16
  %v1764 = vpop.permute.xlu0 %1763
  %1765 = vrot.lane.b32.xlu0 %v1578, 16
  %v1766 = vpop.permute.xlu0 %1765
  %1767 = vrot.lane.b32.xlu0 %v1579, 16
  %v1768 = vpop.permute.xlu0 %1767
  %1769 = vrot.lane.b32.xlu0 %v1580, 16
  %v1770 = vpop.permute.xlu0 %1769
  %1771 = vrot.lane.b32.xlu0 %v1581, 16
  %v1772 = vpop.permute.xlu0 %1771
  %1773 = vrot.lane.b32.xlu0 %v1582, 16
  %v1774 = vpop.permute.xlu0 %1773
  %vm1839 = vcmask 162944
  %1840 = vst.msk [vmem:[#allocation3] sm:$0xff] %vm1839, %v1648
  %1841 = vst.msk [vmem:[#allocation3 + $0x8] sm:$0xff] %vm1839, %v1650
  %1842 = vst.msk [vmem:[#allocation3 + $0x10] sm:$0xff] %vm1839, %v1652
  %1843 = vst.msk [vmem:[#allocation3 + $0x18] sm:$0xff] %vm1839, %v1654
  %1844 = vst.msk [vmem:[#allocation3 + $0x20] sm:$0xff] %vm1839, %v1656
  %1845 = vst.msk [vmem:[#allocation3 + $0x28] sm:$0xff] %vm1839, %v1658
  %1846 = vst.msk [vmem:[#allocation3 + $0x30] sm:$0xff] %vm1839, %v1660
  %1847 = vst.msk [vmem:[#allocation3 + $0x38] sm:$0xff] %vm1839, %v1662
  %1848 = vst.msk [vmem:[#allocation3 + $0x40] sm:$0xff] %vm1839, %v1664
  %1849 = vst.msk [vmem:[#allocation3 + $0x48] sm:$0xff] %vm1839, %v1666
  %1850 = vst.msk [vmem:[#allocation3 + $0x50] sm:$0xff] %vm1839, %v1668
  %1851 = vst.msk [vmem:[#allocation3 + $0x58] sm:$0xff] %vm1839, %v1670
  %1852 = vst.msk [vmem:[#allocation3 + $0x60] sm:$0xff] %vm1839, %v1672
  %1853 = vst.msk [vmem:[#allocation3 + $0x68] sm:$0xff] %vm1839, %v1674
  %1854 = vst.msk [vmem:[#allocation3 + $0x70] sm:$0xff] %vm1839, %v1676
  %1855 = vst.msk [vmem:[#allocation3 + $0x78] sm:$0xff] %vm1839, %v1678
  %1856 = vst.msk [vmem:[#allocation3 + $0x80] sm:$0xff] %vm1839, %v1680
  %1857 = vst.msk [vmem:[#allocation3 + $0x88] sm:$0xff] %vm1839, %v1682
  %1858 = vst.msk [vmem:[#allocation3 + $0x90] sm:$0xff] %vm1839, %v1684
  %1859 = vst.msk [vmem:[#allocation3 + $0x98] sm:$0xff] %vm1839, %v1686
  %1860 = vst.msk [vmem:[#allocation3 + $0xa0] sm:$0xff] %vm1839, %v1688
  %1861 = vst.msk [vmem:[#allocation3 + $0xa8] sm:$0xff] %vm1839, %v1690
  %1862 = vst.msk [vmem:[#allocation3 + $0xb0] sm:$0xff] %vm1839, %v1692
  %1863 = vst.msk [vmem:[#allocation3 + $0xb8] sm:$0xff] %vm1839, %v1694
  %1864 = vst.msk [vmem:[#allocation3 + $0xc0] sm:$0xff] %vm1839, %v1696
  %1865 = vst.msk [vmem:[#allocation3 + $0xc8] sm:$0xff] %vm1839, %v1698
  %1866 = vst.msk [vmem:[#allocation3 + $0xd0] sm:$0xff] %vm1839, %v1700
  %1867 = vst.msk [vmem:[#allocation3 + $0xd8] sm:$0xff] %vm1839, %v1702
  %1868 = vst.msk [vmem:[#allocation3 + $0xe0] sm:$0xff] %vm1839, %v1704
  %1869 = vst.msk [vmem:[#allocation3 + $0xe8] sm:$0xff] %vm1839, %v1706
  %1870 = vst.msk [vmem:[#allocation3 + $0xf0] sm:$0xff] %vm1839, %v1708
  %1871 = vst.msk [vmem:[#allocation3 + $0xf8] sm:$0xff] %vm1839, %v1710
  %1872 = vst.msk [vmem:[#allocation3 + $0x100] sm:$0xff] %vm1839, %v1712
  %1873 = vst.msk [vmem:[#allocation3 + $0x108] sm:$0xff] %vm1839, %v1714
  %1874 = vst.msk [vmem:[#allocation3 + $0x110] sm:$0xff] %vm1839, %v1716
  %1875 = vst.msk [vmem:[#allocation3 + $0x118] sm:$0xff] %vm1839, %v1718
  %1876 = vst.msk [vmem:[#allocation3 + $0x120] sm:$0xff] %vm1839, %v1720
  %1877 = vst.msk [vmem:[#allocation3 + $0x128] sm:$0xff] %vm1839, %v1722
  %1878 = vst.msk [vmem:[#allocation3 + $0x130] sm:$0xff] %vm1839, %v1724
  %1879 = vst.msk [vmem:[#allocation3 + $0x138] sm:$0xff] %vm1839, %v1726
  %1880 = vst.msk [vmem:[#allocation3 + $0x140] sm:$0xff] %vm1839, %v1728
  %1881 = vst.msk [vmem:[#allocation3 + $0x148] sm:$0xff] %vm1839, %v1730
  %1882 = vst.msk [vmem:[#allocation3 + $0x150] sm:$0xff] %vm1839, %v1732
  %1883 = vst.msk [vmem:[#allocation3 + $0x158] sm:$0xff] %vm1839, %v1734
  %1884 = vst.msk [vmem:[#allocation3 + $0x160] sm:$0xff] %vm1839, %v1736
  %1885 = vst.msk [vmem:[#allocation3 + $0x168] sm:$0xff] %vm1839, %v1738
  %1886 = vst.msk [vmem:[#allocation3 + $0x170] sm:$0xff] %vm1839, %v1740
  %1887 = vst.msk [vmem:[#allocation3 + $0x178] sm:$0xff] %vm1839, %v1742
  %1888 = vst.msk [vmem:[#allocation3 + $0x180] sm:$0xff] %vm1839, %v1744
  %1889 = vst.msk [vmem:[#allocation3 + $0x188] sm:$0xff] %vm1839, %v1746
  %1890 = vst.msk [vmem:[#allocation3 + $0x190] sm:$0xff] %vm1839, %v1748
  %1891 = vst.msk [vmem:[#allocation3 + $0x198] sm:$0xff] %vm1839, %v1750
  %1892 = vst.msk [vmem:[#allocation3 + $0x1a0] sm:$0xff] %vm1839, %v1752
  %1893 = vst.msk [vmem:[#allocation3 + $0x1a8] sm:$0xff] %vm1839, %v1754
  %1894 = vst.msk [vmem:[#allocation3 + $0x1b0] sm:$0xff] %vm1839, %v1756
  %1895 = vst.msk [vmem:[#allocation3 + $0x1b8] sm:$0xff] %vm1839, %v1758
  %1896 = vst.msk [vmem:[#allocation3 + $0x1c0] sm:$0xff] %vm1839, %v1760
  %1897 = vst.msk [vmem:[#allocation3 + $0x1c8] sm:$0xff] %vm1839, %v1762
  %1898 = vst.msk [vmem:[#allocation3 + $0x1d0] sm:$0xff] %vm1839, %v1764
  %1899 = vst.msk [vmem:[#allocation3 + $0x1d8] sm:$0xff] %vm1839, %v1766
  %1900 = vst.msk [vmem:[#allocation3 + $0x1e0] sm:$0xff] %vm1839, %v1768
  %1901 = vst.msk [vmem:[#allocation3 + $0x1e8] sm:$0xff] %vm1839, %v1770
  %1902 = vst.msk [vmem:[#allocation3 + $0x1f0] sm:$0xff] %vm1839, %v1772
  %1903 = vst.msk [vmem:[#allocation3 + $0x1f8] sm:$0xff] %vm1839, %v1774
  %v1904 = vld [vmem:[%s42 + $0x2] sm:$0xff]
  %v1905 = vld [vmem:[%s42 + $0xa] sm:$0xff]
  %v1906 = vld [vmem:[%s42 + $0x1a] sm:$0xff]
  %v1907 = vld [vmem:[%s42 + $0x22] sm:$0xff]
  %v1908 = vld [vmem:[%s42 + $0x32] sm:$0xff]
  %v1909 = vld [vmem:[%s42 + $0x3a] sm:$0xff]
  %v1910 = vld [vmem:[%s42 + $0x4a] sm:$0xff]
  %v1911 = vld [vmem:[%s42 + $0x52] sm:$0xff]
  %v1912 = vld [vmem:[%s42 + $0x62] sm:$0xff]
  %v1913 = vld [vmem:[%s42 + $0x6a] sm:$0xff]
  %v1914 = vld [vmem:[%s42 + $0x7a] sm:$0xff]
  %v1915 = vld [vmem:[%s42 + $0x82] sm:$0xff]
  %v1916 = vld [vmem:[%s42 + $0x92] sm:$0xff]
  %v1917 = vld [vmem:[%s42 + $0x9a] sm:$0xff]
  %v1918 = vld [vmem:[%s42 + $0xaa] sm:$0xff]
  %v1919 = vld [vmem:[%s42 + $0xb2] sm:$0xff]
  %v1920 = vld [vmem:[%s42 + $0xc2] sm:$0xff]
  %v1921 = vld [vmem:[%s42 + $0xca] sm:$0xff]
  %v1922 = vld [vmem:[%s42 + $0xda] sm:$0xff]
  %v1923 = vld [vmem:[%s42 + $0xe2] sm:$0xff]
  %v1924 = vld [vmem:[%s42 + $0xf2] sm:$0xff]
  %v1925 = vld [vmem:[%s42 + $0xfa] sm:$0xff]
  %v1926 = vld [vmem:[%s42 + $0x10a] sm:$0xff]
  %v1927 = vld [vmem:[%s42 + $0x112] sm:$0xff]
  %v1928 = vld [vmem:[%s42 + $0x122] sm:$0xff]
  %v1929 = vld [vmem:[%s42 + $0x12a] sm:$0xff]
  %v1930 = vld [vmem:[%s42 + $0x13a] sm:$0xff]
  %v1931 = vld [vmem:[%s42 + $0x142] sm:$0xff]
  %v1932 = vld [vmem:[%s42 + $0x152] sm:$0xff]
  %v1933 = vld [vmem:[%s42 + $0x15a] sm:$0xff]
  %v1934 = vld [vmem:[%s42 + $0x16a] sm:$0xff]
  %v1935 = vld [vmem:[%s42 + $0x172] sm:$0xff]
  %v1936 = vld [vmem:[%s42 + $0x1b2] sm:$0xff]
  %v1937 = vld [vmem:[%s42 + $0x1ba] sm:$0xff]
  %v1938 = vld [vmem:[%s42 + $0x1ca] sm:$0xff]
  %v1939 = vld [vmem:[%s42 + $0x1d2] sm:$0xff]
  %v1940 = vld [vmem:[%s42 + $0x1e2] sm:$0xff]
  %v1941 = vld [vmem:[%s42 + $0x1ea] sm:$0xff]
  %v1942 = vld [vmem:[%s42 + $0x1fa] sm:$0xff]
  %v1943 = vld [vmem:[%s42 + $0x202] sm:$0xff]
  %v1944 = vld [vmem:[%s42 + $0x212] sm:$0xff]
  %v1945 = vld [vmem:[%s42 + $0x21a] sm:$0xff]
  %v1946 = vld [vmem:[%s42 + $0x22a] sm:$0xff]
  %v1947 = vld [vmem:[%s42 + $0x232] sm:$0xff]
  %v1948 = vld [vmem:[%s42 + $0x242] sm:$0xff]
  %v1949 = vld [vmem:[%s42 + $0x24a] sm:$0xff]
  %v1950 = vld [vmem:[%s42 + $0x25a] sm:$0xff]
  %v1951 = vld [vmem:[%s42 + $0x262] sm:$0xff]
  %v1952 = vld [vmem:[%s42 + $0x272] sm:$0xff]
  %v1953 = vld [vmem:[%s42 + $0x27a] sm:$0xff]
  %v1954 = vld [vmem:[%s42 + $0x28a] sm:$0xff]
  %v1955 = vld [vmem:[%s42 + $0x292] sm:$0xff]
  %v1956 = vld [vmem:[%s42 + $0x2a2] sm:$0xff]
  %v1957 = vld [vmem:[%s42 + $0x2aa] sm:$0xff]
  %v1958 = vld [vmem:[%s42 + $0x2ba] sm:$0xff]
  %v1959 = vld [vmem:[%s42 + $0x2c2] sm:$0xff]
  %v1960 = vld [vmem:[%s42 + $0x2d2] sm:$0xff]
  %v1961 = vld [vmem:[%s42 + $0x2da] sm:$0xff]
  %v1962 = vld [vmem:[%s42 + $0x2ea] sm:$0xff]
  %v1963 = vld [vmem:[%s42 + $0x2f2] sm:$0xff]
  %v1964 = vld [vmem:[%s42 + $0x302] sm:$0xff]
  %v1965 = vld [vmem:[%s42 + $0x30a] sm:$0xff]
  %v1966 = vld [vmem:[%s42 + $0x31a] sm:$0xff]
  %v1967 = vld [vmem:[%s42 + $0x322] sm:$0xff]
  %2032 = vrot.lane.b32.xlu0 %v1904, 20
  %v2033 = vpop.permute.xlu0 %2032
  %2034 = vrot.lane.b32.xlu0 %v1905, 20
  %v2035 = vpop.permute.xlu0 %2034
  %2036 = vrot.lane.b32.xlu0 %v1906, 20
  %v2037 = vpop.permute.xlu0 %2036
  %2038 = vrot.lane.b32.xlu0 %v1907, 20
  %v2039 = vpop.permute.xlu0 %2038
  %2040 = vrot.lane.b32.xlu0 %v1908, 20
  %v2041 = vpop.permute.xlu0 %2040
  %2042 = vrot.lane.b32.xlu0 %v1909, 20
  %v2043 = vpop.permute.xlu0 %2042
  %2044 = vrot.lane.b32.xlu0 %v1910, 20
  %v2045 = vpop.permute.xlu0 %2044
  %2046 = vrot.lane.b32.xlu0 %v1911, 20
  %v2047 = vpop.permute.xlu0 %2046
  %2048 = vrot.lane.b32.xlu0 %v1912, 20
  %v2049 = vpop.permute.xlu0 %2048
  %2050 = vrot.lane.b32.xlu0 %v1913, 20
  %v2051 = vpop.permute.xlu0 %2050
  %2052 = vrot.lane.b32.xlu0 %v1914, 20
  %v2053 = vpop.permute.xlu0 %2052
  %2054 = vrot.lane.b32.xlu0 %v1915, 20
  %v2055 = vpop.permute.xlu0 %2054
  %2056 = vrot.lane.b32.xlu0 %v1916, 20
  %v2057 = vpop.permute.xlu0 %2056
  %2058 = vrot.lane.b32.xlu0 %v1917, 20
  %v2059 = vpop.permute.xlu0 %2058
  %2060 = vrot.lane.b32.xlu0 %v1918, 20
  %v2061 = vpop.permute.xlu0 %2060
  %2062 = vrot.lane.b32.xlu0 %v1919, 20
  %v2063 = vpop.permute.xlu0 %2062
  %2064 = vrot.lane.b32.xlu0 %v1920, 20
  %v2065 = vpop.permute.xlu0 %2064
  %2066 = vrot.lane.b32.xlu0 %v1921, 20
  %v2067 = vpop.permute.xlu0 %2066
  %2068 = vrot.lane.b32.xlu0 %v1922, 20
  %v2069 = vpop.permute.xlu0 %2068
  %2070 = vrot.lane.b32.xlu0 %v1923, 20
  %v2071 = vpop.permute.xlu0 %2070
  %2072 = vrot.lane.b32.xlu0 %v1924, 20
  %v2073 = vpop.permute.xlu0 %2072
  %2074 = vrot.lane.b32.xlu0 %v1925, 20
  %v2075 = vpop.permute.xlu0 %2074
  %2076 = vrot.lane.b32.xlu0 %v1926, 20
  %v2077 = vpop.permute.xlu0 %2076
  %2078 = vrot.lane.b32.xlu0 %v1927, 20
  %v2079 = vpop.permute.xlu0 %2078
  %2080 = vrot.lane.b32.xlu0 %v1928, 20
  %v2081 = vpop.permute.xlu0 %2080
  %2082 = vrot.lane.b32.xlu0 %v1929, 20
  %v2083 = vpop.permute.xlu0 %2082
  %2084 = vrot.lane.b32.xlu0 %v1930, 20
  %v2085 = vpop.permute.xlu0 %2084
  %2086 = vrot.lane.b32.xlu0 %v1931, 20
  %v2087 = vpop.permute.xlu0 %2086
  %2088 = vrot.lane.b32.xlu0 %v1932, 20
  %v2089 = vpop.permute.xlu0 %2088
  %2090 = vrot.lane.b32.xlu0 %v1933, 20
  %v2091 = vpop.permute.xlu0 %2090
  %2092 = vrot.lane.b32.xlu0 %v1934, 20
  %v2093 = vpop.permute.xlu0 %2092
  %2094 = vrot.lane.b32.xlu0 %v1935, 20
  %v2095 = vpop.permute.xlu0 %2094
  %2096 = vrot.lane.b32.xlu0 %v1936, 20
  %v2097 = vpop.permute.xlu0 %2096
  %2098 = vrot.lane.b32.xlu0 %v1937, 20
  %v2099 = vpop.permute.xlu0 %2098
  %2100 = vrot.lane.b32.xlu0 %v1938, 20
  %v2101 = vpop.permute.xlu0 %2100
  %2102 = vrot.lane.b32.xlu0 %v1939, 20
  %v2103 = vpop.permute.xlu0 %2102
  %2104 = vrot.lane.b32.xlu0 %v1940, 20
  %v2105 = vpop.permute.xlu0 %2104
  %2106 = vrot.lane.b32.xlu0 %v1941, 20
  %v2107 = vpop.permute.xlu0 %2106
  %2108 = vrot.lane.b32.xlu0 %v1942, 20
  %v2109 = vpop.permute.xlu0 %2108
  %2110 = vrot.lane.b32.xlu0 %v1943, 20
  %v2111 = vpop.permute.xlu0 %2110
  %2112 = vrot.lane.b32.xlu0 %v1944, 20
  %v2113 = vpop.permute.xlu0 %2112
  %2114 = vrot.lane.b32.xlu0 %v1945, 20
  %v2115 = vpop.permute.xlu0 %2114
  %2116 = vrot.lane.b32.xlu0 %v1946, 20
  %v2117 = vpop.permute.xlu0 %2116
  %2118 = vrot.lane.b32.xlu0 %v1947, 20
  %v2119 = vpop.permute.xlu0 %2118
  %2120 = vrot.lane.b32.xlu0 %v1948, 20
  %v2121 = vpop.permute.xlu0 %2120
  %2122 = vrot.lane.b32.xlu0 %v1949, 20
  %v2123 = vpop.permute.xlu0 %2122
  %2124 = vrot.lane.b32.xlu0 %v1950, 20
  %v2125 = vpop.permute.xlu0 %2124
  %2126 = vrot.lane.b32.xlu0 %v1951, 20
  %v2127 = vpop.permute.xlu0 %2126
  %2128 = vrot.lane.b32.xlu0 %v1952, 20
  %v2129 = vpop.permute.xlu0 %2128
  %2130 = vrot.lane.b32.xlu0 %v1953, 20
  %v2131 = vpop.permute.xlu0 %2130
  %2132 = vrot.lane.b32.xlu0 %v1954, 20
  %v2133 = vpop.permute.xlu0 %2132
  %2134 = vrot.lane.b32.xlu0 %v1955, 20
  %v2135 = vpop.permute.xlu0 %2134
  %2136 = vrot.lane.b32.xlu0 %v1956, 20
  %v2137 = vpop.permute.xlu0 %2136
  %2138 = vrot.lane.b32.xlu0 %v1957, 20
  %v2139 = vpop.permute.xlu0 %2138
  %2140 = vrot.lane.b32.xlu0 %v1958, 20
  %v2141 = vpop.permute.xlu0 %2140
  %2142 = vrot.lane.b32.xlu0 %v1959, 20
  %v2143 = vpop.permute.xlu0 %2142
  %2144 = vrot.lane.b32.xlu0 %v1960, 20
  %v2145 = vpop.permute.xlu0 %2144
  %2146 = vrot.lane.b32.xlu0 %v1961, 20
  %v2147 = vpop.permute.xlu0 %2146
  %2148 = vrot.lane.b32.xlu0 %v1962, 20
  %v2149 = vpop.permute.xlu0 %2148
  %2150 = vrot.lane.b32.xlu0 %v1963, 20
  %v2151 = vpop.permute.xlu0 %2150
  %2152 = vrot.lane.b32.xlu0 %v1964, 20
  %v2153 = vpop.permute.xlu0 %2152
  %2154 = vrot.lane.b32.xlu0 %v1965, 20
  %v2155 = vpop.permute.xlu0 %2154
  %2156 = vrot.lane.b32.xlu0 %v1966, 20
  %v2157 = vpop.permute.xlu0 %2156
  %2158 = vrot.lane.b32.xlu0 %v1967, 20
  %v2159 = vpop.permute.xlu0 %2158
  %vm2224 = vcmask 195744
  %2225 = vst.msk [vmem:[#allocation3] sm:$0xff] %vm2224, %v2033
  %2226 = vst.msk [vmem:[#allocation3 + $0x8] sm:$0xff] %vm2224, %v2035
  %2227 = vst.msk [vmem:[#allocation3 + $0x10] sm:$0xff] %vm2224, %v2037
  %2228 = vst.msk [vmem:[#allocation3 + $0x18] sm:$0xff] %vm2224, %v2039
  %2229 = vst.msk [vmem:[#allocation3 + $0x20] sm:$0xff] %vm2224, %v2041
  %2230 = vst.msk [vmem:[#allocation3 + $0x28] sm:$0xff] %vm2224, %v2043
  %2231 = vst.msk [vmem:[#allocation3 + $0x30] sm:$0xff] %vm2224, %v2045
  %2232 = vst.msk [vmem:[#allocation3 + $0x38] sm:$0xff] %vm2224, %v2047
  %2233 = vst.msk [vmem:[#allocation3 + $0x40] sm:$0xff] %vm2224, %v2049
  %2234 = vst.msk [vmem:[#allocation3 + $0x48] sm:$0xff] %vm2224, %v2051
  %2235 = vst.msk [vmem:[#allocation3 + $0x50] sm:$0xff] %vm2224, %v2053
  %2236 = vst.msk [vmem:[#allocation3 + $0x58] sm:$0xff] %vm2224, %v2055
  %2237 = vst.msk [vmem:[#allocation3 + $0x60] sm:$0xff] %vm2224, %v2057
  %2238 = vst.msk [vmem:[#allocation3 + $0x68] sm:$0xff] %vm2224, %v2059
  %2239 = vst.msk [vmem:[#allocation3 + $0x70] sm:$0xff] %vm2224, %v2061
  %2240 = vst.msk [vmem:[#allocation3 + $0x78] sm:$0xff] %vm2224, %v2063
  %2241 = vst.msk [vmem:[#allocation3 + $0x80] sm:$0xff] %vm2224, %v2065
  %2242 = vst.msk [vmem:[#allocation3 + $0x88] sm:$0xff] %vm2224, %v2067
  %2243 = vst.msk [vmem:[#allocation3 + $0x90] sm:$0xff] %vm2224, %v2069
  %2244 = vst.msk [vmem:[#allocation3 + $0x98] sm:$0xff] %vm2224, %v2071
  %2245 = vst.msk [vmem:[#allocation3 + $0xa0] sm:$0xff] %vm2224, %v2073
  %2246 = vst.msk [vmem:[#allocation3 + $0xa8] sm:$0xff] %vm2224, %v2075
  %2247 = vst.msk [vmem:[#allocation3 + $0xb0] sm:$0xff] %vm2224, %v2077
  %2248 = vst.msk [vmem:[#allocation3 + $0xb8] sm:$0xff] %vm2224, %v2079
  %2249 = vst.msk [vmem:[#allocation3 + $0xc0] sm:$0xff] %vm2224, %v2081
  %2250 = vst.msk [vmem:[#allocation3 + $0xc8] sm:$0xff] %vm2224, %v2083
  %2251 = vst.msk [vmem:[#allocation3 + $0xd0] sm:$0xff] %vm2224, %v2085
  %2252 = vst.msk [vmem:[#allocation3 + $0xd8] sm:$0xff] %vm2224, %v2087
  %2253 = vst.msk [vmem:[#allocation3 + $0xe0] sm:$0xff] %vm2224, %v2089
  %2254 = vst.msk [vmem:[#allocation3 + $0xe8] sm:$0xff] %vm2224, %v2091
  %2255 = vst.msk [vmem:[#allocation3 + $0xf0] sm:$0xff] %vm2224, %v2093
  %2256 = vst.msk [vmem:[#allocation3 + $0xf8] sm:$0xff] %vm2224, %v2095
  %2257 = vst.msk [vmem:[#allocation3 + $0x100] sm:$0xff] %vm2224, %v2097
  %2258 = vst.msk [vmem:[#allocation3 + $0x108] sm:$0xff] %vm2224, %v2099
  %2259 = vst.msk [vmem:[#allocation3 + $0x110] sm:$0xff] %vm2224, %v2101
  %2260 = vst.msk [vmem:[#allocation3 + $0x118] sm:$0xff] %vm2224, %v2103
  %2261 = vst.msk [vmem:[#allocation3 + $0x120] sm:$0xff] %vm2224, %v2105
  %2262 = vst.msk [vmem:[#allocation3 + $0x128] sm:$0xff] %vm2224, %v2107
  %2263 = vst.msk [vmem:[#allocation3 + $0x130] sm:$0xff] %vm2224, %v2109
  %2264 = vst.msk [vmem:[#allocation3 + $0x138] sm:$0xff] %vm2224, %v2111
  %2265 = vst.msk [vmem:[#allocation3 + $0x140] sm:$0xff] %vm2224, %v2113
  %2266 = vst.msk [vmem:[#allocation3 + $0x148] sm:$0xff] %vm2224, %v2115
  %2267 = vst.msk [vmem:[#allocation3 + $0x150] sm:$0xff] %vm2224, %v2117
  %2268 = vst.msk [vmem:[#allocation3 + $0x158] sm:$0xff] %vm2224, %v2119
  %2269 = vst.msk [vmem:[#allocation3 + $0x160] sm:$0xff] %vm2224, %v2121
  %2270 = vst.msk [vmem:[#allocation3 + $0x168] sm:$0xff] %vm2224, %v2123
  %2271 = vst.msk [vmem:[#allocation3 + $0x170] sm:$0xff] %vm2224, %v2125
  %2272 = vst.msk [vmem:[#allocation3 + $0x178] sm:$0xff] %vm2224, %v2127
  %2273 = vst.msk [vmem:[#allocation3 + $0x180] sm:$0xff] %vm2224, %v2129
  %2274 = vst.msk [vmem:[#allocation3 + $0x188] sm:$0xff] %vm2224, %v2131
  %2275 = vst.msk [vmem:[#allocation3 + $0x190] sm:$0xff] %vm2224, %v2133
  %2276 = vst.msk [vmem:[#allocation3 + $0x198] sm:$0xff] %vm2224, %v2135
  %2277 = vst.msk [vmem:[#allocation3 + $0x1a0] sm:$0xff] %vm2224, %v2137
  %2278 = vst.msk [vmem:[#allocation3 + $0x1a8] sm:$0xff] %vm2224, %v2139
  %2279 = vst.msk [vmem:[#allocation3 + $0x1b0] sm:$0xff] %vm2224, %v2141
  %2280 = vst.msk [vmem:[#allocation3 + $0x1b8] sm:$0xff] %vm2224, %v2143
  %2281 = vst.msk [vmem:[#allocation3 + $0x1c0] sm:$0xff] %vm2224, %v2145
  %2282 = vst.msk [vmem:[#allocation3 + $0x1c8] sm:$0xff] %vm2224, %v2147
  %2283 = vst.msk [vmem:[#allocation3 + $0x1d0] sm:$0xff] %vm2224, %v2149
  %2284 = vst.msk [vmem:[#allocation3 + $0x1d8] sm:$0xff] %vm2224, %v2151
  %2285 = vst.msk [vmem:[#allocation3 + $0x1e0] sm:$0xff] %vm2224, %v2153
  %2286 = vst.msk [vmem:[#allocation3 + $0x1e8] sm:$0xff] %vm2224, %v2155
  %2287 = vst.msk [vmem:[#allocation3 + $0x1f0] sm:$0xff] %vm2224, %v2157
  %2288 = vst.msk [vmem:[#allocation3 + $0x1f8] sm:$0xff] %vm2224, %v2159
  %s2289 = scalar_lea.vmem [#allocation2], 48
  %v2290 = vld [vmem:[%s2289] sm:$0xff]
  %v2291 = vld [vmem:[%s2289 + $0x8] sm:$0xff]
  %v2292 = vld [vmem:[%s2289 + $0x18] sm:$0xff]
  %v2293 = vld [vmem:[%s2289 + $0x20] sm:$0xff]
  %v2294 = vld [vmem:[%s2289 + $0x30] sm:$0xff]
  %v2295 = vld [vmem:[%s2289 + $0x38] sm:$0xff]
  %v2296 = vld [vmem:[%s2289 + $0x48] sm:$0xff]
  %v2297 = vld [vmem:[%s2289 + $0x50] sm:$0xff]
  %v2298 = vld [vmem:[%s2289 + $0x60] sm:$0xff]
  %v2299 = vld [vmem:[%s2289 + $0x68] sm:$0xff]
  %v2300 = vld [vmem:[%s2289 + $0x78] sm:$0xff]
  %v2301 = vld [vmem:[%s2289 + $0x80] sm:$0xff]
  %v2302 = vld [vmem:[%s2289 + $0x90] sm:$0xff]
  %v2303 = vld [vmem:[%s2289 + $0x98] sm:$0xff]
  %v2304 = vld [vmem:[%s2289 + $0xa8] sm:$0xff]
  %v2305 = vld [vmem:[%s2289 + $0xb0] sm:$0xff]
  %v2306 = vld [vmem:[%s2289 + $0xc0] sm:$0xff]
  %v2307 = vld [vmem:[%s2289 + $0xc8] sm:$0xff]
  %v2308 = vld [vmem:[%s2289 + $0xd8] sm:$0xff]
  %v2309 = vld [vmem:[%s2289 + $0xe0] sm:$0xff]
  %v2310 = vld [vmem:[%s2289 + $0xf0] sm:$0xff]
  %v2311 = vld [vmem:[%s2289 + $0xf8] sm:$0xff]
  %v2312 = vld [vmem:[%s2289 + $0x108] sm:$0xff]
  %v2313 = vld [vmem:[%s2289 + $0x110] sm:$0xff]
  %v2314 = vld [vmem:[%s2289 + $0x120] sm:$0xff]
  %v2315 = vld [vmem:[%s2289 + $0x128] sm:$0xff]
  %v2316 = vld [vmem:[%s2289 + $0x138] sm:$0xff]
  %v2317 = vld [vmem:[%s2289 + $0x140] sm:$0xff]
  %v2318 = vld [vmem:[%s2289 + $0x150] sm:$0xff]
  %v2319 = vld [vmem:[%s2289 + $0x158] sm:$0xff]
  %v2320 = vld [vmem:[%s2289 + $0x168] sm:$0xff]
  %v2321 = vld [vmem:[%s2289 + $0x170] sm:$0xff]
  %v2322 = vld [vmem:[%s2289 + $0x1b0] sm:$0xff]
  %v2323 = vld [vmem:[%s2289 + $0x1b8] sm:$0xff]
  %v2324 = vld [vmem:[%s2289 + $0x1c8] sm:$0xff]
  %v2325 = vld [vmem:[%s2289 + $0x1d0] sm:$0xff]
  %v2326 = vld [vmem:[%s2289 + $0x1e0] sm:$0xff]
  %v2327 = vld [vmem:[%s2289 + $0x1e8] sm:$0xff]
  %v2328 = vld [vmem:[%s2289 + $0x1f8] sm:$0xff]
  %v2329 = vld [vmem:[%s2289 + $0x200] sm:$0xff]
  %v2330 = vld [vmem:[%s2289 + $0x210] sm:$0xff]
  %v2331 = vld [vmem:[%s2289 + $0x218] sm:$0xff]
  %v2332 = vld [vmem:[%s2289 + $0x228] sm:$0xff]
  %v2333 = vld [vmem:[%s2289 + $0x230] sm:$0xff]
  %v2334 = vld [vmem:[%s2289 + $0x240] sm:$0xff]
  %v2335 = vld [vmem:[%s2289 + $0x248] sm:$0xff]
  %v2336 = vld [vmem:[%s2289 + $0x258] sm:$0xff]
  %v2337 = vld [vmem:[%s2289 + $0x260] sm:$0xff]
  %v2338 = vld [vmem:[%s2289 + $0x270] sm:$0xff]
  %v2339 = vld [vmem:[%s2289 + $0x278] sm:$0xff]
  %v2340 = vld [vmem:[%s2289 + $0x288] sm:$0xff]
  %v2341 = vld [vmem:[%s2289 + $0x290] sm:$0xff]
  %v2342 = vld [vmem:[%s2289 + $0x2a0] sm:$0xff]
  %v2343 = vld [vmem:[%s2289 + $0x2a8] sm:$0xff]
  %v2344 = vld [vmem:[%s2289 + $0x2b8] sm:$0xff]
  %v2345 = vld [vmem:[%s2289 + $0x2c0] sm:$0xff]
  %v2346 = vld [vmem:[%s2289 + $0x2d0] sm:$0xff]
  %v2347 = vld [vmem:[%s2289 + $0x2d8] sm:$0xff]
  %v2348 = vld [vmem:[%s2289 + $0x2e8] sm:$0xff]
  %v2349 = vld [vmem:[%s2289 + $0x2f0] sm:$0xff]
  %v2350 = vld [vmem:[%s2289 + $0x300] sm:$0xff]
  %v2351 = vld [vmem:[%s2289 + $0x308] sm:$0xff]
  %v2352 = vld [vmem:[%s2289 + $0x318] sm:$0xff]
  %v2353 = vld [vmem:[%s2289 + $0x320] sm:$0xff]
  %2418 = vrot.lane.b32.xlu0 %v2290, 24
  %v2419 = vpop.permute.xlu0 %2418
  %2420 = vrot.lane.b32.xlu0 %v2291, 24
  %v2421 = vpop.permute.xlu0 %2420
  %2422 = vrot.lane.b32.xlu0 %v2292, 24
  %v2423 = vpop.permute.xlu0 %2422
  %2424 = vrot.lane.b32.xlu0 %v2293, 24
  %v2425 = vpop.permute.xlu0 %2424
  %2426 = vrot.lane.b32.xlu0 %v2294, 24
  %v2427 = vpop.permute.xlu0 %2426
  %2428 = vrot.lane.b32.xlu0 %v2295, 24
  %v2429 = vpop.permute.xlu0 %2428
  %2430 = vrot.lane.b32.xlu0 %v2296, 24
  %v2431 = vpop.permute.xlu0 %2430
  %2432 = vrot.lane.b32.xlu0 %v2297, 24
  %v2433 = vpop.permute.xlu0 %2432
  %2434 = vrot.lane.b32.xlu0 %v2298, 24
  %v2435 = vpop.permute.xlu0 %2434
  %2436 = vrot.lane.b32.xlu0 %v2299, 24
  %v2437 = vpop.permute.xlu0 %2436
  %2438 = vrot.lane.b32.xlu0 %v2300, 24
  %v2439 = vpop.permute.xlu0 %2438
  %2440 = vrot.lane.b32.xlu0 %v2301, 24
  %v2441 = vpop.permute.xlu0 %2440
  %2442 = vrot.lane.b32.xlu0 %v2302, 24
  %v2443 = vpop.permute.xlu0 %2442
  %2444 = vrot.lane.b32.xlu0 %v2303, 24
  %v2445 = vpop.permute.xlu0 %2444
  %2446 = vrot.lane.b32.xlu0 %v2304, 24
  %v2447 = vpop.permute.xlu0 %2446
  %2448 = vrot.lane.b32.xlu0 %v2305, 24
  %v2449 = vpop.permute.xlu0 %2448
  %2450 = vrot.lane.b32.xlu0 %v2306, 24
  %v2451 = vpop.permute.xlu0 %2450
  %2452 = vrot.lane.b32.xlu0 %v2307, 24
  %v2453 = vpop.permute.xlu0 %2452
  %2454 = vrot.lane.b32.xlu0 %v2308, 24
  %v2455 = vpop.permute.xlu0 %2454
  %2456 = vrot.lane.b32.xlu0 %v2309, 24
  %v2457 = vpop.permute.xlu0 %2456
  %2458 = vrot.lane.b32.xlu0 %v2310, 24
  %v2459 = vpop.permute.xlu0 %2458
  %2460 = vrot.lane.b32.xlu0 %v2311, 24
  %v2461 = vpop.permute.xlu0 %2460
  %2462 = vrot.lane.b32.xlu0 %v2312, 24
  %v2463 = vpop.permute.xlu0 %2462
  %2464 = vrot.lane.b32.xlu0 %v2313, 24
  %v2465 = vpop.permute.xlu0 %2464
  %2466 = vrot.lane.b32.xlu0 %v2314, 24
  %v2467 = vpop.permute.xlu0 %2466
  %2468 = vrot.lane.b32.xlu0 %v2315, 24
  %v2469 = vpop.permute.xlu0 %2468
  %2470 = vrot.lane.b32.xlu0 %v2316, 24
  %v2471 = vpop.permute.xlu0 %2470
  %2472 = vrot.lane.b32.xlu0 %v2317, 24
  %v2473 = vpop.permute.xlu0 %2472
  %2474 = vrot.lane.b32.xlu0 %v2318, 24
  %v2475 = vpop.permute.xlu0 %2474
  %2476 = vrot.lane.b32.xlu0 %v2319, 24
  %v2477 = vpop.permute.xlu0 %2476
  %2478 = vrot.lane.b32.xlu0 %v2320, 24
  %v2479 = vpop.permute.xlu0 %2478
  %2480 = vrot.lane.b32.xlu0 %v2321, 24
  %v2481 = vpop.permute.xlu0 %2480
  %2482 = vrot.lane.b32.xlu0 %v2322, 24
  %v2483 = vpop.permute.xlu0 %2482
  %2484 = vrot.lane.b32.xlu0 %v2323, 24
  %v2485 = vpop.permute.xlu0 %2484
  %2486 = vrot.lane.b32.xlu0 %v2324, 24
  %v2487 = vpop.permute.xlu0 %2486
  %2488 = vrot.lane.b32.xlu0 %v2325, 24
  %v2489 = vpop.permute.xlu0 %2488
  %2490 = vrot.lane.b32.xlu0 %v2326, 24
  %v2491 = vpop.permute.xlu0 %2490
  %2492 = vrot.lane.b32.xlu0 %v2327, 24
  %v2493 = vpop.permute.xlu0 %2492
  %2494 = vrot.lane.b32.xlu0 %v2328, 24
  %v2495 = vpop.permute.xlu0 %2494
  %2496 = vrot.lane.b32.xlu0 %v2329, 24
  %v2497 = vpop.permute.xlu0 %2496
  %2498 = vrot.lane.b32.xlu0 %v2330, 24
  %v2499 = vpop.permute.xlu0 %2498
  %2500 = vrot.lane.b32.xlu0 %v2331, 24
  %v2501 = vpop.permute.xlu0 %2500
  %2502 = vrot.lane.b32.xlu0 %v2332, 24
  %v2503 = vpop.permute.xlu0 %2502
  %2504 = vrot.lane.b32.xlu0 %v2333, 24
  %v2505 = vpop.permute.xlu0 %2504
  %2506 = vrot.lane.b32.xlu0 %v2334, 24
  %v2507 = vpop.permute.xlu0 %2506
  %2508 = vrot.lane.b32.xlu0 %v2335, 24
  %v2509 = vpop.permute.xlu0 %2508
  %2510 = vrot.lane.b32.xlu0 %v2336, 24
  %v2511 = vpop.permute.xlu0 %2510
  %2512 = vrot.lane.b32.xlu0 %v2337, 24
  %v2513 = vpop.permute.xlu0 %2512
  %2514 = vrot.lane.b32.xlu0 %v2338, 24
  %v2515 = vpop.permute.xlu0 %2514
  %2516 = vrot.lane.b32.xlu0 %v2339, 24
  %v2517 = vpop.permute.xlu0 %2516
  %2518 = vrot.lane.b32.xlu0 %v2340, 24
  %v2519 = vpop.permute.xlu0 %2518
  %2520 = vrot.lane.b32.xlu0 %v2341, 24
  %v2521 = vpop.permute.xlu0 %2520
  %2522 = vrot.lane.b32.xlu0 %v2342, 24
  %v2523 = vpop.permute.xlu0 %2522
  %2524 = vrot.lane.b32.xlu0 %v2343, 24
  %v2525 = vpop.permute.xlu0 %2524
  %2526 = vrot.lane.b32.xlu0 %v2344, 24
  %v2527 = vpop.permute.xlu0 %2526
  %2528 = vrot.lane.b32.xlu0 %v2345, 24
  %v2529 = vpop.permute.xlu0 %2528
  %2530 = vrot.lane.b32.xlu0 %v2346, 24
  %v2531 = vpop.permute.xlu0 %2530
  %2532 = vrot.lane.b32.xlu0 %v2347, 24
  %v2533 = vpop.permute.xlu0 %2532
  %2534 = vrot.lane.b32.xlu0 %v2348, 24
  %v2535 = vpop.permute.xlu0 %2534
  %2536 = vrot.lane.b32.xlu0 %v2349, 24
  %v2537 = vpop.permute.xlu0 %2536
  %2538 = vrot.lane.b32.xlu0 %v2350, 24
  %v2539 = vpop.permute.xlu0 %2538
  %2540 = vrot.lane.b32.xlu0 %v2351, 24
  %v2541 = vpop.permute.xlu0 %2540
  %2542 = vrot.lane.b32.xlu0 %v2352, 24
  %v2543 = vpop.permute.xlu0 %2542
  %2544 = vrot.lane.b32.xlu0 %v2353, 24
  %v2545 = vpop.permute.xlu0 %2544
  %vm2610 = vcmask 228544
  %2611 = vst.msk [vmem:[#allocation3] sm:$0xff] %vm2610, %v2419
  %2612 = vst.msk [vmem:[#allocation3 + $0x8] sm:$0xff] %vm2610, %v2421
  %2613 = vst.msk [vmem:[#allocation3 + $0x10] sm:$0xff] %vm2610, %v2423
  %2614 = vst.msk [vmem:[#allocation3 + $0x18] sm:$0xff] %vm2610, %v2425
  %2615 = vst.msk [vmem:[#allocation3 + $0x20] sm:$0xff] %vm2610, %v2427
  %2616 = vst.msk [vmem:[#allocation3 + $0x28] sm:$0xff] %vm2610, %v2429
  %2617 = vst.msk [vmem:[#allocation3 + $0x30] sm:$0xff] %vm2610, %v2431
  %2618 = vst.msk [vmem:[#allocation3 + $0x38] sm:$0xff] %vm2610, %v2433
  %2619 = vst.msk [vmem:[#allocation3 + $0x40] sm:$0xff] %vm2610, %v2435
  %2620 = vst.msk [vmem:[#allocation3 + $0x48] sm:$0xff] %vm2610, %v2437
  %2621 = vst.msk [vmem:[#allocation3 + $0x50] sm:$0xff] %vm2610, %v2439
  %2622 = vst.msk [vmem:[#allocation3 + $0x58] sm:$0xff] %vm2610, %v2441
  %2623 = vst.msk [vmem:[#allocation3 + $0x60] sm:$0xff] %vm2610, %v2443
  %2624 = vst.msk [vmem:[#allocation3 + $0x68] sm:$0xff] %vm2610, %v2445
  %2625 = vst.msk [vmem:[#allocation3 + $0x70] sm:$0xff] %vm2610, %v2447
  %2626 = vst.msk [vmem:[#allocation3 + $0x78] sm:$0xff] %vm2610, %v2449
  %2627 = vst.msk [vmem:[#allocation3 + $0x80] sm:$0xff] %vm2610, %v2451
  %2628 = vst.msk [vmem:[#allocation3 + $0x88] sm:$0xff] %vm2610, %v2453
  %2629 = vst.msk [vmem:[#allocation3 + $0x90] sm:$0xff] %vm2610, %v2455
  %2630 = vst.msk [vmem:[#allocation3 + $0x98] sm:$0xff] %vm2610, %v2457
  %2631 = vst.msk [vmem:[#allocation3 + $0xa0] sm:$0xff] %vm2610, %v2459
  %2632 = vst.msk [vmem:[#allocation3 + $0xa8] sm:$0xff] %vm2610, %v2461
  %2633 = vst.msk [vmem:[#allocation3 + $0xb0] sm:$0xff] %vm2610, %v2463
  %2634 = vst.msk [vmem:[#allocation3 + $0xb8] sm:$0xff] %vm2610, %v2465
  %2635 = vst.msk [vmem:[#allocation3 + $0xc0] sm:$0xff] %vm2610, %v2467
  %2636 = vst.msk [vmem:[#allocation3 + $0xc8] sm:$0xff] %vm2610, %v2469
  %2637 = vst.msk [vmem:[#allocation3 + $0xd0] sm:$0xff] %vm2610, %v2471
  %2638 = vst.msk [vmem:[#allocation3 + $0xd8] sm:$0xff] %vm2610, %v2473
  %2639 = vst.msk [vmem:[#allocation3 + $0xe0] sm:$0xff] %vm2610, %v2475
  %2640 = vst.msk [vmem:[#allocation3 + $0xe8] sm:$0xff] %vm2610, %v2477
  %2641 = vst.msk [vmem:[#allocation3 + $0xf0] sm:$0xff] %vm2610, %v2479
  %2642 = vst.msk [vmem:[#allocation3 + $0xf8] sm:$0xff] %vm2610, %v2481
  %2643 = vst.msk [vmem:[#allocation3 + $0x100] sm:$0xff] %vm2610, %v2483
  %2644 = vst.msk [vmem:[#allocation3 + $0x108] sm:$0xff] %vm2610, %v2485
  %2645 = vst.msk [vmem:[#allocation3 + $0x110] sm:$0xff] %vm2610, %v2487
  %2646 = vst.msk [vmem:[#allocation3 + $0x118] sm:$0xff] %vm2610, %v2489
  %2647 = vst.msk [vmem:[#allocation3 + $0x120] sm:$0xff] %vm2610, %v2491
  %2648 = vst.msk [vmem:[#allocation3 + $0x128] sm:$0xff] %vm2610, %v2493
  %2649 = vst.msk [vmem:[#allocation3 + $0x130] sm:$0xff] %vm2610, %v2495
  %2650 = vst.msk [vmem:[#allocation3 + $0x138] sm:$0xff] %vm2610, %v2497
  %2651 = vst.msk [vmem:[#allocation3 + $0x140] sm:$0xff] %vm2610, %v2499
  %2652 = vst.msk [vmem:[#allocation3 + $0x148] sm:$0xff] %vm2610, %v2501
  %2653 = vst.msk [vmem:[#allocation3 + $0x150] sm:$0xff] %vm2610, %v2503
  %2654 = vst.msk [vmem:[#allocation3 + $0x158] sm:$0xff] %vm2610, %v2505
  %2655 = vst.msk [vmem:[#allocation3 + $0x160] sm:$0xff] %vm2610, %v2507
  %2656 = vst.msk [vmem:[#allocation3 + $0x168] sm:$0xff] %vm2610, %v2509
  %2657 = vst.msk [vmem:[#allocation3 + $0x170] sm:$0xff] %vm2610, %v2511
  %2658 = vst.msk [vmem:[#allocation3 + $0x178] sm:$0xff] %vm2610, %v2513
  %2659 = vst.msk [vmem:[#allocation3 + $0x180] sm:$0xff] %vm2610, %v2515
  %2660 = vst.msk [vmem:[#allocation3 + $0x188] sm:$0xff] %vm2610, %v2517
  %2661 = vst.msk [vmem:[#allocation3 + $0x190] sm:$0xff] %vm2610, %v2519
  %2662 = vst.msk [vmem:[#allocation3 + $0x198] sm:$0xff] %vm2610, %v2521
  %2663 = vst.msk [vmem:[#allocation3 + $0x1a0] sm:$0xff] %vm2610, %v2523
  %2664 = vst.msk [vmem:[#allocation3 + $0x1a8] sm:$0xff] %vm2610, %v2525
  %2665 = vst.msk [vmem:[#allocation3 + $0x1b0] sm:$0xff] %vm2610, %v2527
  %2666 = vst.msk [vmem:[#allocation3 + $0x1b8] sm:$0xff] %vm2610, %v2529
  %2667 = vst.msk [vmem:[#allocation3 + $0x1c0] sm:$0xff] %vm2610, %v2531
  %2668 = vst.msk [vmem:[#allocation3 + $0x1c8] sm:$0xff] %vm2610, %v2533
  %2669 = vst.msk [vmem:[#allocation3 + $0x1d0] sm:$0xff] %vm2610, %v2535
  %2670 = vst.msk [vmem:[#allocation3 + $0x1d8] sm:$0xff] %vm2610, %v2537
  %2671 = vst.msk [vmem:[#allocation3 + $0x1e0] sm:$0xff] %vm2610, %v2539
  %2672 = vst.msk [vmem:[#allocation3 + $0x1e8] sm:$0xff] %vm2610, %v2541
  %2673 = vst.msk [vmem:[#allocation3 + $0x1f0] sm:$0xff] %vm2610, %v2543
  %2674 = vst.msk [vmem:[#allocation3 + $0x1f8] sm:$0xff] %vm2610, %v2545
  %v2675 = vld [vmem:[%s2289 + $0x1] sm:$0xff]
  %v2676 = vld [vmem:[%s2289 + $0x9] sm:$0xff]
  %v2677 = vld [vmem:[%s2289 + $0x19] sm:$0xff]
  %v2678 = vld [vmem:[%s2289 + $0x21] sm:$0xff]
  %v2679 = vld [vmem:[%s2289 + $0x31] sm:$0xff]
  %v2680 = vld [vmem:[%s2289 + $0x39] sm:$0xff]
  %v2681 = vld [vmem:[%s2289 + $0x49] sm:$0xff]
  %v2682 = vld [vmem:[%s2289 + $0x51] sm:$0xff]
  %v2683 = vld [vmem:[%s2289 + $0x61] sm:$0xff]
  %v2684 = vld [vmem:[%s2289 + $0x69] sm:$0xff]
  %v2685 = vld [vmem:[%s2289 + $0x79] sm:$0xff]
  %v2686 = vld [vmem:[%s2289 + $0x81] sm:$0xff]
  %v2687 = vld [vmem:[%s2289 + $0x91] sm:$0xff]
  %v2688 = vld [vmem:[%s2289 + $0x99] sm:$0xff]
  %v2689 = vld [vmem:[%s2289 + $0xa9] sm:$0xff]
  %v2690 = vld [vmem:[%s2289 + $0xb1] sm:$0xff]
  %v2691 = vld [vmem:[%s2289 + $0xc1] sm:$0xff]
  %v2692 = vld [vmem:[%s2289 + $0xc9] sm:$0xff]
  %v2693 = vld [vmem:[%s2289 + $0xd9] sm:$0xff]
  %v2694 = vld [vmem:[%s2289 + $0xe1] sm:$0xff]
  %v2695 = vld [vmem:[%s2289 + $0xf1] sm:$0xff]
  %v2696 = vld [vmem:[%s2289 + $0xf9] sm:$0xff]
  %v2697 = vld [vmem:[%s2289 + $0x109] sm:$0xff]
  %v2698 = vld [vmem:[%s2289 + $0x111] sm:$0xff]
  %v2699 = vld [vmem:[%s2289 + $0x121] sm:$0xff]
  %v2700 = vld [vmem:[%s2289 + $0x129] sm:$0xff]
  %v2701 = vld [vmem:[%s2289 + $0x139] sm:$0xff]
  %v2702 = vld [vmem:[%s2289 + $0x141] sm:$0xff]
  %v2703 = vld [vmem:[%s2289 + $0x151] sm:$0xff]
  %v2704 = vld [vmem:[%s2289 + $0x159] sm:$0xff]
  %v2705 = vld [vmem:[%s2289 + $0x169] sm:$0xff]
  %v2706 = vld [vmem:[%s2289 + $0x171] sm:$0xff]
  %v2707 = vld [vmem:[%s2289 + $0x1b1] sm:$0xff]
  %v2708 = vld [vmem:[%s2289 + $0x1b9] sm:$0xff]
  %v2709 = vld [vmem:[%s2289 + $0x1c9] sm:$0xff]
  %v2710 = vld [vmem:[%s2289 + $0x1d1] sm:$0xff]
  %v2711 = vld [vmem:[%s2289 + $0x1e1] sm:$0xff]
  %v2712 = vld [vmem:[%s2289 + $0x1e9] sm:$0xff]
  %v2713 = vld [vmem:[%s2289 + $0x1f9] sm:$0xff]
  %v2714 = vld [vmem:[%s2289 + $0x201] sm:$0xff]
  %v2715 = vld [vmem:[%s2289 + $0x211] sm:$0xff]
  %v2716 = vld [vmem:[%s2289 + $0x219] sm:$0xff]
  %v2717 = vld [vmem:[%s2289 + $0x229] sm:$0xff]
  %v2718 = vld [vmem:[%s2289 + $0x231] sm:$0xff]
  %v2719 = vld [vmem:[%s2289 + $0x241] sm:$0xff]
  %v2720 = vld [vmem:[%s2289 + $0x249] sm:$0xff]
  %v2721 = vld [vmem:[%s2289 + $0x259] sm:$0xff]
  %v2722 = vld [vmem:[%s2289 + $0x261] sm:$0xff]
  %v2723 = vld [vmem:[%s2289 + $0x271] sm:$0xff]
  %v2724 = vld [vmem:[%s2289 + $0x279] sm:$0xff]
  %v2725 = vld [vmem:[%s2289 + $0x289] sm:$0xff]
  %v2726 = vld [vmem:[%s2289 + $0x291] sm:$0xff]
  %v2727 = vld [vmem:[%s2289 + $0x2a1] sm:$0xff]
  %v2728 = vld [vmem:[%s2289 + $0x2a9] sm:$0xff]
  %v2729 = vld [vmem:[%s2289 + $0x2b9] sm:$0xff]
  %v2730 = vld [vmem:[%s2289 + $0x2c1] sm:$0xff]
  %v2731 = vld [vmem:[%s2289 + $0x2d1] sm:$0xff]
  %v2732 = vld [vmem:[%s2289 + $0x2d9] sm:$0xff]
  %v2733 = vld [vmem:[%s2289 + $0x2e9] sm:$0xff]
  %v2734 = vld [vmem:[%s2289 + $0x2f1] sm:$0xff]
  %v2735 = vld [vmem:[%s2289 + $0x301] sm:$0xff]
  %v2736 = vld [vmem:[%s2289 + $0x309] sm:$0xff]
  %v2737 = vld [vmem:[%s2289 + $0x319] sm:$0xff]
  %v2738 = vld [vmem:[%s2289 + $0x321] sm:$0xff]
  %2803 = vrot.lane.b32.xlu0 %v2675, 28
  %v2804 = vpop.permute.xlu0 %2803
  %2805 = vrot.lane.b32.xlu0 %v2676, 28
  %v2806 = vpop.permute.xlu0 %2805
  %2807 = vrot.lane.b32.xlu0 %v2677, 28
  %v2808 = vpop.permute.xlu0 %2807
  %2809 = vrot.lane.b32.xlu0 %v2678, 28
  %v2810 = vpop.permute.xlu0 %2809
  %2811 = vrot.lane.b32.xlu0 %v2679, 28
  %v2812 = vpop.permute.xlu0 %2811
  %2813 = vrot.lane.b32.xlu0 %v2680, 28
  %v2814 = vpop.permute.xlu0 %2813
  %2815 = vrot.lane.b32.xlu0 %v2681, 28
  %v2816 = vpop.permute.xlu0 %2815
  %2817 = vrot.lane.b32.xlu0 %v2682, 28
  %v2818 = vpop.permute.xlu0 %2817
  %2819 = vrot.lane.b32.xlu0 %v2683, 28
  %v2820 = vpop.permute.xlu0 %2819
  %2821 = vrot.lane.b32.xlu0 %v2684, 28
  %v2822 = vpop.permute.xlu0 %2821
  %2823 = vrot.lane.b32.xlu0 %v2685, 28
  %v2824 = vpop.permute.xlu0 %2823
  %2825 = vrot.lane.b32.xlu0 %v2686, 28
  %v2826 = vpop.permute.xlu0 %2825
  %2827 = vrot.lane.b32.xlu0 %v2687, 28
  %v2828 = vpop.permute.xlu0 %2827
  %2829 = vrot.lane.b32.xlu0 %v2688, 28
  %v2830 = vpop.permute.xlu0 %2829
  %2831 = vrot.lane.b32.xlu0 %v2689, 28
  %v2832 = vpop.permute.xlu0 %2831
  %2833 = vrot.lane.b32.xlu0 %v2690, 28
  %v2834 = vpop.permute.xlu0 %2833
  %2835 = vrot.lane.b32.xlu0 %v2691, 28
  %v2836 = vpop.permute.xlu0 %2835
  %2837 = vrot.lane.b32.xlu0 %v2692, 28
  %v2838 = vpop.permute.xlu0 %2837
  %2839 = vrot.lane.b32.xlu0 %v2693, 28
  %v2840 = vpop.permute.xlu0 %2839
  %2841 = vrot.lane.b32.xlu0 %v2694, 28
  %v2842 = vpop.permute.xlu0 %2841
  %2843 = vrot.lane.b32.xlu0 %v2695, 28
  %v2844 = vpop.permute.xlu0 %2843
  %2845 = vrot.lane.b32.xlu0 %v2696, 28
  %v2846 = vpop.permute.xlu0 %2845
  %2847 = vrot.lane.b32.xlu0 %v2697, 28
  %v2848 = vpop.permute.xlu0 %2847
  %2849 = vrot.lane.b32.xlu0 %v2698, 28
  %v2850 = vpop.permute.xlu0 %2849
  %2851 = vrot.lane.b32.xlu0 %v2699, 28
  %v2852 = vpop.permute.xlu0 %2851
  %2853 = vrot.lane.b32.xlu0 %v2700, 28
  %v2854 = vpop.permute.xlu0 %2853
  %2855 = vrot.lane.b32.xlu0 %v2701, 28
  %v2856 = vpop.permute.xlu0 %2855
  %2857 = vrot.lane.b32.xlu0 %v2702, 28
  %v2858 = vpop.permute.xlu0 %2857
  %2859 = vrot.lane.b32.xlu0 %v2703, 28
  %v2860 = vpop.permute.xlu0 %2859
  %2861 = vrot.lane.b32.xlu0 %v2704, 28
  %v2862 = vpop.permute.xlu0 %2861
  %2863 = vrot.lane.b32.xlu0 %v2705, 28
  %v2864 = vpop.permute.xlu0 %2863
  %2865 = vrot.lane.b32.xlu0 %v2706, 28
  %v2866 = vpop.permute.xlu0 %2865
  %2867 = vrot.lane.b32.xlu0 %v2707, 28
  %v2868 = vpop.permute.xlu0 %2867
  %2869 = vrot.lane.b32.xlu0 %v2708, 28
  %v2870 = vpop.permute.xlu0 %2869
  %2871 = vrot.lane.b32.xlu0 %v2709, 28
  %v2872 = vpop.permute.xlu0 %2871
  %2873 = vrot.lane.b32.xlu0 %v2710, 28
  %v2874 = vpop.permute.xlu0 %2873
  %2875 = vrot.lane.b32.xlu0 %v2711, 28
  %v2876 = vpop.permute.xlu0 %2875
  %2877 = vrot.lane.b32.xlu0 %v2712, 28
  %v2878 = vpop.permute.xlu0 %2877
  %2879 = vrot.lane.b32.xlu0 %v2713, 28
  %v2880 = vpop.permute.xlu0 %2879
  %2881 = vrot.lane.b32.xlu0 %v2714, 28
  %v2882 = vpop.permute.xlu0 %2881
  %2883 = vrot.lane.b32.xlu0 %v2715, 28
  %v2884 = vpop.permute.xlu0 %2883
  %2885 = vrot.lane.b32.xlu0 %v2716, 28
  %v2886 = vpop.permute.xlu0 %2885
  %2887 = vrot.lane.b32.xlu0 %v2717, 28
  %v2888 = vpop.permute.xlu0 %2887
  %2889 = vrot.lane.b32.xlu0 %v2718, 28
  %v2890 = vpop.permute.xlu0 %2889
  %2891 = vrot.lane.b32.xlu0 %v2719, 28
  %v2892 = vpop.permute.xlu0 %2891
  %2893 = vrot.lane.b32.xlu0 %v2720, 28
  %v2894 = vpop.permute.xlu0 %2893
  %2895 = vrot.lane.b32.xlu0 %v2721, 28
  %v2896 = vpop.permute.xlu0 %2895
  %2897 = vrot.lane.b32.xlu0 %v2722, 28
  %v2898 = vpop.permute.xlu0 %2897
  %2899 = vrot.lane.b32.xlu0 %v2723, 28
  %v2900 = vpop.permute.xlu0 %2899
  %2901 = vrot.lane.b32.xlu0 %v2724, 28
  %v2902 = vpop.permute.xlu0 %2901
  %2903 = vrot.lane.b32.xlu0 %v2725, 28
  %v2904 = vpop.permute.xlu0 %2903
  %2905 = vrot.lane.b32.xlu0 %v2726, 28
  %v2906 = vpop.permute.xlu0 %2905
  %2907 = vrot.lane.b32.xlu0 %v2727, 28
  %v2908 = vpop.permute.xlu0 %2907
  %2909 = vrot.lane.b32.xlu0 %v2728, 28
  %v2910 = vpop.permute.xlu0 %2909
  %2911 = vrot.lane.b32.xlu0 %v2729, 28
  %v2912 = vpop.permute.xlu0 %2911
  %2913 = vrot.lane.b32.xlu0 %v2730, 28
  %v2914 = vpop.permute.xlu0 %2913
  %2915 = vrot.lane.b32.xlu0 %v2731, 28
  %v2916 = vpop.permute.xlu0 %2915
  %2917 = vrot.lane.b32.xlu0 %v2732, 28
  %v2918 = vpop.permute.xlu0 %2917
  %2919 = vrot.lane.b32.xlu0 %v2733, 28
  %v2920 = vpop.permute.xlu0 %2919
  %2921 = vrot.lane.b32.xlu0 %v2734, 28
  %v2922 = vpop.permute.xlu0 %2921
  %2923 = vrot.lane.b32.xlu0 %v2735, 28
  %v2924 = vpop.permute.xlu0 %2923
  %2925 = vrot.lane.b32.xlu0 %v2736, 28
  %v2926 = vpop.permute.xlu0 %2925
  %2927 = vrot.lane.b32.xlu0 %v2737, 28
  %v2928 = vpop.permute.xlu0 %2927
  %2929 = vrot.lane.b32.xlu0 %v2738, 28
  %v2930 = vpop.permute.xlu0 %2929
  %vm2995 = vcmask 261344
  %2996 = vst.msk [vmem:[#allocation3] sm:$0xff] %vm2995, %v2804
  %2997 = vst.msk [vmem:[#allocation3 + $0x8] sm:$0xff] %vm2995, %v2806
  %2998 = vst.msk [vmem:[#allocation3 + $0x10] sm:$0xff] %vm2995, %v2808
  %2999 = vst.msk [vmem:[#allocation3 + $0x18] sm:$0xff] %vm2995, %v2810
  %3000 = vst.msk [vmem:[#allocation3 + $0x20] sm:$0xff] %vm2995, %v2812
  %3001 = vst.msk [vmem:[#allocation3 + $0x28] sm:$0xff] %vm2995, %v2814
  %3002 = vst.msk [vmem:[#allocation3 + $0x30] sm:$0xff] %vm2995, %v2816
  %3003 = vst.msk [vmem:[#allocation3 + $0x38] sm:$0xff] %vm2995, %v2818
  %3004 = vst.msk [vmem:[#allocation3 + $0x40] sm:$0xff] %vm2995, %v2820
  %3005 = vst.msk [vmem:[#allocation3 + $0x48] sm:$0xff] %vm2995, %v2822
  %3006 = vst.msk [vmem:[#allocation3 + $0x50] sm:$0xff] %vm2995, %v2824
  %3007 = vst.msk [vmem:[#allocation3 + $0x58] sm:$0xff] %vm2995, %v2826
  %3008 = vst.msk [vmem:[#allocation3 + $0x60] sm:$0xff] %vm2995, %v2828
  %3009 = vst.msk [vmem:[#allocation3 + $0x68] sm:$0xff] %vm2995, %v2830
  %3010 = vst.msk [vmem:[#allocation3 + $0x70] sm:$0xff] %vm2995, %v2832
  %3011 = vst.msk [vmem:[#allocation3 + $0x78] sm:$0xff] %vm2995, %v2834
  %3012 = vst.msk [vmem:[#allocation3 + $0x80] sm:$0xff] %vm2995, %v2836
  %3013 = vst.msk [vmem:[#allocation3 + $0x88] sm:$0xff] %vm2995, %v2838
  %3014 = vst.msk [vmem:[#allocation3 + $0x90] sm:$0xff] %vm2995, %v2840
  %3015 = vst.msk [vmem:[#allocation3 + $0x98] sm:$0xff] %vm2995, %v2842
  %3016 = vst.msk [vmem:[#allocation3 + $0xa0] sm:$0xff] %vm2995, %v2844
  %3017 = vst.msk [vmem:[#allocation3 + $0xa8] sm:$0xff] %vm2995, %v2846
  %3018 = vst.msk [vmem:[#allocation3 + $0xb0] sm:$0xff] %vm2995, %v2848
  %3019 = vst.msk [vmem:[#allocation3 + $0xb8] sm:$0xff] %vm2995, %v2850
  %3020 = vst.msk [vmem:[#allocation3 + $0xc0] sm:$0xff] %vm2995, %v2852
  %3021 = vst.msk [vmem:[#allocation3 + $0xc8] sm:$0xff] %vm2995, %v2854
  %3022 = vst.msk [vmem:[#allocation3 + $0xd0] sm:$0xff] %vm2995, %v2856
  %3023 = vst.msk [vmem:[#allocation3 + $0xd8] sm:$0xff] %vm2995, %v2858
  %3024 = vst.msk [vmem:[#allocation3 + $0xe0] sm:$0xff] %vm2995, %v2860
  %3025 = vst.msk [vmem:[#allocation3 + $0xe8] sm:$0xff] %vm2995, %v2862
  %3026 = vst.msk [vmem:[#allocation3 + $0xf0] sm:$0xff] %vm2995, %v2864
  %3027 = vst.msk [vmem:[#allocation3 + $0xf8] sm:$0xff] %vm2995, %v2866
  %3028 = vst.msk [vmem:[#allocation3 + $0x100] sm:$0xff] %vm2995, %v2868
  %3029 = vst.msk [vmem:[#allocation3 + $0x108] sm:$0xff] %vm2995, %v2870
  %3030 = vst.msk [vmem:[#allocation3 + $0x110] sm:$0xff] %vm2995, %v2872
  %3031 = vst.msk [vmem:[#allocation3 + $0x118] sm:$0xff] %vm2995, %v2874
  %3032 = vst.msk [vmem:[#allocation3 + $0x120] sm:$0xff] %vm2995, %v2876
  %3033 = vst.msk [vmem:[#allocation3 + $0x128] sm:$0xff] %vm2995, %v2878
  %3034 = vst.msk [vmem:[#allocation3 + $0x130] sm:$0xff] %vm2995, %v2880
  %3035 = vst.msk [vmem:[#allocation3 + $0x138] sm:$0xff] %vm2995, %v2882
  %3036 = vst.msk [vmem:[#allocation3 + $0x140] sm:$0xff] %vm2995, %v2884
  %3037 = vst.msk [vmem:[#allocation3 + $0x148] sm:$0xff] %vm2995, %v2886
  %3038 = vst.msk [vmem:[#allocation3 + $0x150] sm:$0xff] %vm2995, %v2888
  %3039 = vst.msk [vmem:[#allocation3 + $0x158] sm:$0xff] %vm2995, %v2890
  %3040 = vst.msk [vmem:[#allocation3 + $0x160] sm:$0xff] %vm2995, %v2892
  %3041 = vst.msk [vmem:[#allocation3 + $0x168] sm:$0xff] %vm2995, %v2894
  %3042 = vst.msk [vmem:[#allocation3 + $0x170] sm:$0xff] %vm2995, %v2896
  %3043 = vst.msk [vmem:[#allocation3 + $0x178] sm:$0xff] %vm2995, %v2898
  %3044 = vst.msk [vmem:[#allocation3 + $0x180] sm:$0xff] %vm2995, %v2900
  %3045 = vst.msk [vmem:[#allocation3 + $0x188] sm:$0xff] %vm2995, %v2902
  %3046 = vst.msk [vmem:[#allocation3 + $0x190] sm:$0xff] %vm2995, %v2904
  %3047 = vst.msk [vmem:[#allocation3 + $0x198] sm:$0xff] %vm2995, %v2906
  %3048 = vst.msk [vmem:[#allocation3 + $0x1a0] sm:$0xff] %vm2995, %v2908
  %3049 = vst.msk [vmem:[#allocation3 + $0x1a8] sm:$0xff] %vm2995, %v2910
  %3050 = vst.msk [vmem:[#allocation3 + $0x1b0] sm:$0xff] %vm2995, %v2912
  %3051 = vst.msk [vmem:[#allocation3 + $0x1b8] sm:$0xff] %vm2995, %v2914
  %3052 = vst.msk [vmem:[#allocation3 + $0x1c0] sm:$0xff] %vm2995, %v2916
  %3053 = vst.msk [vmem:[#allocation3 + $0x1c8] sm:$0xff] %vm2995, %v2918
  %3054 = vst.msk [vmem:[#allocation3 + $0x1d0] sm:$0xff] %vm2995, %v2920
  %3055 = vst.msk [vmem:[#allocation3 + $0x1d8] sm:$0xff] %vm2995, %v2922
  %3056 = vst.msk [vmem:[#allocation3 + $0x1e0] sm:$0xff] %vm2995, %v2924
  %3057 = vst.msk [vmem:[#allocation3 + $0x1e8] sm:$0xff] %vm2995, %v2926
  %3058 = vst.msk [vmem:[#allocation3 + $0x1f0] sm:$0xff] %vm2995, %v2928
  %3059 = vst.msk [vmem:[#allocation3 + $0x1f8] sm:$0xff] %vm2995, %v2930
  %v3060 = vld [vmem:[%s2289 + $0x2] sm:$0xff]
  %v3061 = vld [vmem:[%s2289 + $0xa] sm:$0xff]
  %v3062 = vld [vmem:[%s2289 + $0x1a] sm:$0xff]
  %v3063 = vld [vmem:[%s2289 + $0x22] sm:$0xff]
  %v3064 = vld [vmem:[%s2289 + $0x32] sm:$0xff]
  %v3065 = vld [vmem:[%s2289 + $0x3a] sm:$0xff]
  %v3066 = vld [vmem:[%s2289 + $0x4a] sm:$0xff]
  %v3067 = vld [vmem:[%s2289 + $0x52] sm:$0xff]
  %v3068 = vld [vmem:[%s2289 + $0x62] sm:$0xff]
  %v3069 = vld [vmem:[%s2289 + $0x6a] sm:$0xff]
  %v3070 = vld [vmem:[%s2289 + $0x7a] sm:$0xff]
  %v3071 = vld [vmem:[%s2289 + $0x82] sm:$0xff]
  %v3072 = vld [vmem:[%s2289 + $0x92] sm:$0xff]
  %v3073 = vld [vmem:[%s2289 + $0x9a] sm:$0xff]
  %v3074 = vld [vmem:[%s2289 + $0xaa] sm:$0xff]
  %v3075 = vld [vmem:[%s2289 + $0xb2] sm:$0xff]
  %v3076 = vld [vmem:[%s2289 + $0xc2] sm:$0xff]
  %v3077 = vld [vmem:[%s2289 + $0xca] sm:$0xff]
  %v3078 = vld [vmem:[%s2289 + $0xda] sm:$0xff]
  %v3079 = vld [vmem:[%s2289 + $0xe2] sm:$0xff]
  %v3080 = vld [vmem:[%s2289 + $0xf2] sm:$0xff]
  %v3081 = vld [vmem:[%s2289 + $0xfa] sm:$0xff]
  %v3082 = vld [vmem:[%s2289 + $0x10a] sm:$0xff]
  %v3083 = vld [vmem:[%s2289 + $0x112] sm:$0xff]
  %v3084 = vld [vmem:[%s2289 + $0x122] sm:$0xff]
  %v3085 = vld [vmem:[%s2289 + $0x12a] sm:$0xff]
  %v3086 = vld [vmem:[%s2289 + $0x13a] sm:$0xff]
  %v3087 = vld [vmem:[%s2289 + $0x142] sm:$0xff]
  %v3088 = vld [vmem:[%s2289 + $0x152] sm:$0xff]
  %v3089 = vld [vmem:[%s2289 + $0x15a] sm:$0xff]
  %v3090 = vld [vmem:[%s2289 + $0x16a] sm:$0xff]
  %v3091 = vld [vmem:[%s2289 + $0x172] sm:$0xff]
  %v3092 = vld [vmem:[%s2289 + $0x1b2] sm:$0xff]
  %v3093 = vld [vmem:[%s2289 + $0x1ba] sm:$0xff]
  %v3094 = vld [vmem:[%s2289 + $0x1ca] sm:$0xff]
  %v3095 = vld [vmem:[%s2289 + $0x1d2] sm:$0xff]
  %v3096 = vld [vmem:[%s2289 + $0x1e2] sm:$0xff]
  %v3097 = vld [vmem:[%s2289 + $0x1ea] sm:$0xff]
  %v3098 = vld [vmem:[%s2289 + $0x1fa] sm:$0xff]
  %v3099 = vld [vmem:[%s2289 + $0x202] sm:$0xff]
  %v3100 = vld [vmem:[%s2289 + $0x212] sm:$0xff]
  %v3101 = vld [vmem:[%s2289 + $0x21a] sm:$0xff]
  %v3102 = vld [vmem:[%s2289 + $0x22a] sm:$0xff]
  %v3103 = vld [vmem:[%s2289 + $0x232] sm:$0xff]
  %v3104 = vld [vmem:[%s2289 + $0x242] sm:$0xff]
  %v3105 = vld [vmem:[%s2289 + $0x24a] sm:$0xff]
  %v3106 = vld [vmem:[%s2289 + $0x25a] sm:$0xff]
  %v3107 = vld [vmem:[%s2289 + $0x262] sm:$0xff]
  %v3108 = vld [vmem:[%s2289 + $0x272] sm:$0xff]
  %v3109 = vld [vmem:[%s2289 + $0x27a] sm:$0xff]
  %v3110 = vld [vmem:[%s2289 + $0x28a] sm:$0xff]
  %v3111 = vld [vmem:[%s2289 + $0x292] sm:$0xff]
  %v3112 = vld [vmem:[%s2289 + $0x2a2] sm:$0xff]
  %v3113 = vld [vmem:[%s2289 + $0x2aa] sm:$0xff]
  %v3114 = vld [vmem:[%s2289 + $0x2ba] sm:$0xff]
  %v3115 = vld [vmem:[%s2289 + $0x2c2] sm:$0xff]
  %v3116 = vld [vmem:[%s2289 + $0x2d2] sm:$0xff]
  %v3117 = vld [vmem:[%s2289 + $0x2da] sm:$0xff]
  %v3118 = vld [vmem:[%s2289 + $0x2ea] sm:$0xff]
  %v3119 = vld [vmem:[%s2289 + $0x2f2] sm:$0xff]
  %v3120 = vld [vmem:[%s2289 + $0x302] sm:$0xff]
  %v3121 = vld [vmem:[%s2289 + $0x30a] sm:$0xff]
  %v3122 = vld [vmem:[%s2289 + $0x31a] sm:$0xff]
  %v3123 = vld [vmem:[%s2289 + $0x322] sm:$0xff]
  %3188 = vrot.lane.b32.xlu0 %v3060, 32
  %v3189 = vpop.permute.xlu0 %3188
  %3190 = vrot.lane.b32.xlu0 %v3061, 32
  %v3191 = vpop.permute.xlu0 %3190
  %3192 = vrot.lane.b32.xlu0 %v3062, 32
  %v3193 = vpop.permute.xlu0 %3192
  %3194 = vrot.lane.b32.xlu0 %v3063, 32
  %v3195 = vpop.permute.xlu0 %3194
  %3196 = vrot.lane.b32.xlu0 %v3064, 32
  %v3197 = vpop.permute.xlu0 %3196
  %3198 = vrot.lane.b32.xlu0 %v3065, 32
  %v3199 = vpop.permute.xlu0 %3198
  %3200 = vrot.lane.b32.xlu0 %v3066, 32
  %v3201 = vpop.permute.xlu0 %3200
  %3202 = vrot.lane.b32.xlu0 %v3067, 32
  %v3203 = vpop.permute.xlu0 %3202
  %3204 = vrot.lane.b32.xlu0 %v3068, 32
  %v3205 = vpop.permute.xlu0 %3204
  %3206 = vrot.lane.b32.xlu0 %v3069, 32
  %v3207 = vpop.permute.xlu0 %3206
  %3208 = vrot.lane.b32.xlu0 %v3070, 32
  %v3209 = vpop.permute.xlu0 %3208
  %3210 = vrot.lane.b32.xlu0 %v3071, 32
  %v3211 = vpop.permute.xlu0 %3210
  %3212 = vrot.lane.b32.xlu0 %v3072, 32
  %v3213 = vpop.permute.xlu0 %3212
  %3214 = vrot.lane.b32.xlu0 %v3073, 32
  %v3215 = vpop.permute.xlu0 %3214
  %3216 = vrot.lane.b32.xlu0 %v3074, 32
  %v3217 = vpop.permute.xlu0 %3216
  %3218 = vrot.lane.b32.xlu0 %v3075, 32
  %v3219 = vpop.permute.xlu0 %3218
  %3220 = vrot.lane.b32.xlu0 %v3076, 32
  %v3221 = vpop.permute.xlu0 %3220
  %3222 = vrot.lane.b32.xlu0 %v3077, 32
  %v3223 = vpop.permute.xlu0 %3222
  %3224 = vrot.lane.b32.xlu0 %v3078, 32
  %v3225 = vpop.permute.xlu0 %3224
  %3226 = vrot.lane.b32.xlu0 %v3079, 32
  %v3227 = vpop.permute.xlu0 %3226
  %3228 = vrot.lane.b32.xlu0 %v3080, 32
  %v3229 = vpop.permute.xlu0 %3228
  %3230 = vrot.lane.b32.xlu0 %v3081, 32
  %v3231 = vpop.permute.xlu0 %3230
  %3232 = vrot.lane.b32.xlu0 %v3082, 32
  %v3233 = vpop.permute.xlu0 %3232
  %3234 = vrot.lane.b32.xlu0 %v3083, 32
  %v3235 = vpop.permute.xlu0 %3234
  %3236 = vrot.lane.b32.xlu0 %v3084, 32
  %v3237 = vpop.permute.xlu0 %3236
  %3238 = vrot.lane.b32.xlu0 %v3085, 32
  %v3239 = vpop.permute.xlu0 %3238
  %3240 = vrot.lane.b32.xlu0 %v3086, 32
  %v3241 = vpop.permute.xlu0 %3240
  %3242 = vrot.lane.b32.xlu0 %v3087, 32
  %v3243 = vpop.permute.xlu0 %3242
  %3244 = vrot.lane.b32.xlu0 %v3088, 32
  %v3245 = vpop.permute.xlu0 %3244
  %3246 = vrot.lane.b32.xlu0 %v3089, 32
  %v3247 = vpop.permute.xlu0 %3246
  %3248 = vrot.lane.b32.xlu0 %v3090, 32
  %v3249 = vpop.permute.xlu0 %3248
  %3250 = vrot.lane.b32.xlu0 %v3091, 32
  %v3251 = vpop.permute.xlu0 %3250
  %3252 = vrot.lane.b32.xlu0 %v3092, 32
  %v3253 = vpop.permute.xlu0 %3252
  %3254 = vrot.lane.b32.xlu0 %v3093, 32
  %v3255 = vpop.permute.xlu0 %3254
  %3256 = vrot.lane.b32.xlu0 %v3094, 32
  %v3257 = vpop.permute.xlu0 %3256
  %3258 = vrot.lane.b32.xlu0 %v3095, 32
  %v3259 = vpop.permute.xlu0 %3258
  %3260 = vrot.lane.b32.xlu0 %v3096, 32
  %v3261 = vpop.permute.xlu0 %3260
  %3262 = vrot.lane.b32.xlu0 %v3097, 32
  %v3263 = vpop.permute.xlu0 %3262
  %3264 = vrot.lane.b32.xlu0 %v3098, 32
  %v3265 = vpop.permute.xlu0 %3264
  %3266 = vrot.lane.b32.xlu0 %v3099, 32
  %v3267 = vpop.permute.xlu0 %3266
  %3268 = vrot.lane.b32.xlu0 %v3100, 32
  %v3269 = vpop.permute.xlu0 %3268
  %3270 = vrot.lane.b32.xlu0 %v3101, 32
  %v3271 = vpop.permute.xlu0 %3270
  %3272 = vrot.lane.b32.xlu0 %v3102, 32
  %v3273 = vpop.permute.xlu0 %3272
  %3274 = vrot.lane.b32.xlu0 %v3103, 32
  %v3275 = vpop.permute.xlu0 %3274
  %3276 = vrot.lane.b32.xlu0 %v3104, 32
  %v3277 = vpop.permute.xlu0 %3276
  %3278 = vrot.lane.b32.xlu0 %v3105, 32
  %v3279 = vpop.permute.xlu0 %3278
  %3280 = vrot.lane.b32.xlu0 %v3106, 32
  %v3281 = vpop.permute.xlu0 %3280
  %3282 = vrot.lane.b32.xlu0 %v3107, 32
  %v3283 = vpop.permute.xlu0 %3282
  %3284 = vrot.lane.b32.xlu0 %v3108, 32
  %v3285 = vpop.permute.xlu0 %3284
  %3286 = vrot.lane.b32.xlu0 %v3109, 32
  %v3287 = vpop.permute.xlu0 %3286
  %3288 = vrot.lane.b32.xlu0 %v3110, 32
  %v3289 = vpop.permute.xlu0 %3288
  %3290 = vrot.lane.b32.xlu0 %v3111, 32
  %v3291 = vpop.permute.xlu0 %3290
  %3292 = vrot.lane.b32.xlu0 %v3112, 32
  %v3293 = vpop.permute.xlu0 %3292
  %3294 = vrot.lane.b32.xlu0 %v3113, 32
  %v3295 = vpop.permute.xlu0 %3294
  %3296 = vrot.lane.b32.xlu0 %v3114, 32
  %v3297 = vpop.permute.xlu0 %3296
  %3298 = vrot.lane.b32.xlu0 %v3115, 32
  %v3299 = vpop.permute.xlu0 %3298
  %3300 = vrot.lane.b32.xlu0 %v3116, 32
  %v3301 = vpop.permute.xlu0 %3300
  %3302 = vrot.lane.b32.xlu0 %v3117, 32
  %v3303 = vpop.permute.xlu0 %3302
  %3304 = vrot.lane.b32.xlu0 %v3118, 32
  %v3305 = vpop.permute.xlu0 %3304
  %3306 = vrot.lane.b32.xlu0 %v3119, 32
  %v3307 = vpop.permute.xlu0 %3306
  %3308 = vrot.lane.b32.xlu0 %v3120, 32
  %v3309 = vpop.permute.xlu0 %3308
  %3310 = vrot.lane.b32.xlu0 %v3121, 32
  %v3311 = vpop.permute.xlu0 %3310
  %3312 = vrot.lane.b32.xlu0 %v3122, 32
  %v3313 = vpop.permute.xlu0 %3312
  %3314 = vrot.lane.b32.xlu0 %v3123, 32
  %v3315 = vpop.permute.xlu0 %3314
  %vm3380 = vcmask 294144
  %3381 = vst.msk [vmem:[#allocation3] sm:$0xff] %vm3380, %v3189
  %3382 = vst.msk [vmem:[#allocation3 + $0x8] sm:$0xff] %vm3380, %v3191
  %3383 = vst.msk [vmem:[#allocation3 + $0x10] sm:$0xff] %vm3380, %v3193
  %3384 = vst.msk [vmem:[#allocation3 + $0x18] sm:$0xff] %vm3380, %v3195
  %3385 = vst.msk [vmem:[#allocation3 + $0x20] sm:$0xff] %vm3380, %v3197
  %3386 = vst.msk [vmem:[#allocation3 + $0x28] sm:$0xff] %vm3380, %v3199
  %3387 = vst.msk [vmem:[#allocation3 + $0x30] sm:$0xff] %vm3380, %v3201
  %3388 = vst.msk [vmem:[#allocation3 + $0x38] sm:$0xff] %vm3380, %v3203
  %3389 = vst.msk [vmem:[#allocation3 + $0x40] sm:$0xff] %vm3380, %v3205
  %3390 = vst.msk [vmem:[#allocation3 + $0x48] sm:$0xff] %vm3380, %v3207
  %3391 = vst.msk [vmem:[#allocation3 + $0x50] sm:$0xff] %vm3380, %v3209
  %3392 = vst.msk [vmem:[#allocation3 + $0x58] sm:$0xff] %vm3380, %v3211
  %3393 = vst.msk [vmem:[#allocation3 + $0x60] sm:$0xff] %vm3380, %v3213
  %3394 = vst.msk [vmem:[#allocation3 + $0x68] sm:$0xff] %vm3380, %v3215
  %3395 = vst.msk [vmem:[#allocation3 + $0x70] sm:$0xff] %vm3380, %v3217
  %3396 = vst.msk [vmem:[#allocation3 + $0x78] sm:$0xff] %vm3380, %v3219
  %3397 = vst.msk [vmem:[#allocation3 + $0x80] sm:$0xff] %vm3380, %v3221
  %3398 = vst.msk [vmem:[#allocation3 + $0x88] sm:$0xff] %vm3380, %v3223
  %3399 = vst.msk [vmem:[#allocation3 + $0x90] sm:$0xff] %vm3380, %v3225
  %3400 = vst.msk [vmem:[#allocation3 + $0x98] sm:$0xff] %vm3380, %v3227
  %3401 = vst.msk [vmem:[#allocation3 + $0xa0] sm:$0xff] %vm3380, %v3229
  %3402 = vst.msk [vmem:[#allocation3 + $0xa8] sm:$0xff] %vm3380, %v3231
  %3403 = vst.msk [vmem:[#allocation3 + $0xb0] sm:$0xff] %vm3380, %v3233
  %3404 = vst.msk [vmem:[#allocation3 + $0xb8] sm:$0xff] %vm3380, %v3235
  %3405 = vst.msk [vmem:[#allocation3 + $0xc0] sm:$0xff] %vm3380, %v3237
  %3406 = vst.msk [vmem:[#allocation3 + $0xc8] sm:$0xff] %vm3380, %v3239
  %3407 = vst.msk [vmem:[#allocation3 + $0xd0] sm:$0xff] %vm3380, %v3241
  %3408 = vst.msk [vmem:[#allocation3 + $0xd8] sm:$0xff] %vm3380, %v3243
  %3409 = vst.msk [vmem:[#allocation3 + $0xe0] sm:$0xff] %vm3380, %v3245
  %3410 = vst.msk [vmem:[#allocation3 + $0xe8] sm:$0xff] %vm3380, %v3247
  %3411 = vst.msk [vmem:[#allocation3 + $0xf0] sm:$0xff] %vm3380, %v3249
  %3412 = vst.msk [vmem:[#allocation3 + $0xf8] sm:$0xff] %vm3380, %v3251
  %3413 = vst.msk [vmem:[#allocation3 + $0x100] sm:$0xff] %vm3380, %v3253
  %3414 = vst.msk [vmem:[#allocation3 + $0x108] sm:$0xff] %vm3380, %v3255
  %3415 = vst.msk [vmem:[#allocation3 + $0x110] sm:$0xff] %vm3380, %v3257
  %3416 = vst.msk [vmem:[#allocation3 + $0x118] sm:$0xff] %vm3380, %v3259
  %3417 = vst.msk [vmem:[#allocation3 + $0x120] sm:$0xff] %vm3380, %v3261
  %3418 = vst.msk [vmem:[#allocation3 + $0x128] sm:$0xff] %vm3380, %v3263
  %3419 = vst.msk [vmem:[#allocation3 + $0x130] sm:$0xff] %vm3380, %v3265
  %3420 = vst.msk [vmem:[#allocation3 + $0x138] sm:$0xff] %vm3380, %v3267
  %3421 = vst.msk [vmem:[#allocation3 + $0x140] sm:$0xff] %vm3380, %v3269
  %3422 = vst.msk [vmem:[#allocation3 + $0x148] sm:$0xff] %vm3380, %v3271
  %3423 = vst.msk [vmem:[#allocation3 + $0x150] sm:$0xff] %vm3380, %v3273
  %3424 = vst.msk [vmem:[#allocation3 + $0x158] sm:$0xff] %vm3380, %v3275
  %3425 = vst.msk [vmem:[#allocation3 + $0x160] sm:$0xff] %vm3380, %v3277
  %3426 = vst.msk [vmem:[#allocation3 + $0x168] sm:$0xff] %vm3380, %v3279
  %3427 = vst.msk [vmem:[#allocation3 + $0x170] sm:$0xff] %vm3380, %v3281
  %3428 = vst.msk [vmem:[#allocation3 + $0x178] sm:$0xff] %vm3380, %v3283
  %3429 = vst.msk [vmem:[#allocation3 + $0x180] sm:$0xff] %vm3380, %v3285
  %3430 = vst.msk [vmem:[#allocation3 + $0x188] sm:$0xff] %vm3380, %v3287
  %3431 = vst.msk [vmem:[#allocation3 + $0x190] sm:$0xff] %vm3380, %v3289
  %3432 = vst.msk [vmem:[#allocation3 + $0x198] sm:$0xff] %vm3380, %v3291
  %3433 = vst.msk [vmem:[#allocation3 + $0x1a0] sm:$0xff] %vm3380, %v3293
  %3434 = vst.msk [vmem:[#allocation3 + $0x1a8] sm:$0xff] %vm3380, %v3295
  %3435 = vst.msk [vmem:[#allocation3 + $0x1b0] sm:$0xff] %vm3380, %v3297
  %3436 = vst.msk [vmem:[#allocation3 + $0x1b8] sm:$0xff] %vm3380, %v3299
  %3437 = vst.msk [vmem:[#allocation3 + $0x1c0] sm:$0xff] %vm3380, %v3301
  %3438 = vst.msk [vmem:[#allocation3 + $0x1c8] sm:$0xff] %vm3380, %v3303
  %3439 = vst.msk [vmem:[#allocation3 + $0x1d0] sm:$0xff] %vm3380, %v3305
  %3440 = vst.msk [vmem:[#allocation3 + $0x1d8] sm:$0xff] %vm3380, %v3307
  %3441 = vst.msk [vmem:[#allocation3 + $0x1e0] sm:$0xff] %vm3380, %v3309
  %3442 = vst.msk [vmem:[#allocation3 + $0x1e8] sm:$0xff] %vm3380, %v3311
  %3443 = vst.msk [vmem:[#allocation3 + $0x1f0] sm:$0xff] %vm3380, %v3313
  %3444 = vst.msk [vmem:[#allocation3 + $0x1f8] sm:$0xff] %vm3380, %v3315
  %v3445 = vld [vmem:[#allocation3] sm:$0xff]
  %v3446 = vld [vmem:[#allocation3 + $0x8] sm:$0xff]
  %v3447 = vld [vmem:[#allocation3 + $0x10] sm:$0xff]
  %v3448 = vld [vmem:[#allocation3 + $0x18] sm:$0xff]
  %v3449 = vld [vmem:[#allocation3 + $0x20] sm:$0xff]
  %v3450 = vld [vmem:[#allocation3 + $0x28] sm:$0xff]
  %v3451 = vld [vmem:[#allocation3 + $0x30] sm:$0xff]
  %v3452 = vld [vmem:[#allocation3 + $0x38] sm:$0xff]
  %v3453 = vld [vmem:[#allocation3 + $0x40] sm:$0xff]
  %v3454 = vld [vmem:[#allocation3 + $0x48] sm:$0xff]
  %v3455 = vld [vmem:[#allocation3 + $0x50] sm:$0xff]
  %v3456 = vld [vmem:[#allocation3 + $0x58] sm:$0xff]
  %v3457 = vld [vmem:[#allocation3 + $0x60] sm:$0xff]
  %v3458 = vld [vmem:[#allocation3 + $0x68] sm:$0xff]
  %v3459 = vld [vmem:[#allocation3 + $0x70] sm:$0xff]
  %v3460 = vld [vmem:[#allocation3 + $0x78] sm:$0xff]
  %v3461 = vld [vmem:[#allocation3 + $0x80] sm:$0xff]
  %v3462 = vld [vmem:[#allocation3 + $0x88] sm:$0xff]
  %v3463 = vld [vmem:[#allocation3 + $0x90] sm:$0xff]
  %v3464 = vld [vmem:[#allocation3 + $0x98] sm:$0xff]
  %v3465 = vld [vmem:[#allocation3 + $0xa0] sm:$0xff]
  %v3466 = vld [vmem:[#allocation3 + $0xa8] sm:$0xff]
  %v3467 = vld [vmem:[#allocation3 + $0xb0] sm:$0xff]
  %v3468 = vld [vmem:[#allocation3 + $0xb8] sm:$0xff]
  %v3469 = vld [vmem:[#allocation3 + $0xc0] sm:$0xff]
  %v3470 = vld [vmem:[#allocation3 + $0xc8] sm:$0xff]
  %v3471 = vld [vmem:[#allocation3 + $0xd0] sm:$0xff]
  %v3472 = vld [vmem:[#allocation3 + $0xd8] sm:$0xff]
  %v3473 = vld [vmem:[#allocation3 + $0xe0] sm:$0xff]
  %v3474 = vld [vmem:[#allocation3 + $0xe8] sm:$0xff]
  %v3475 = vld [vmem:[#allocation3 + $0xf0] sm:$0xff]
  %v3476 = vld [vmem:[#allocation3 + $0xf8] sm:$0xff]
  %v3477 = vld [vmem:[#allocation3 + $0x100] sm:$0xff]
  %v3478 = vld [vmem:[#allocation3 + $0x108] sm:$0xff]
  %v3479 = vld [vmem:[#allocation3 + $0x110] sm:$0xff]
  %v3480 = vld [vmem:[#allocation3 + $0x118] sm:$0xff]
  %v3481 = vld [vmem:[#allocation3 + $0x120] sm:$0xff]
  %v3482 = vld [vmem:[#allocation3 + $0x128] sm:$0xff]
  %v3483 = vld [vmem:[#allocation3 + $0x130] sm:$0xff]
  %v3484 = vld [vmem:[#allocation3 + $0x138] sm:$0xff]
  %v3485 = vld [vmem:[#allocation3 + $0x140] sm:$0xff]
  %v3486 = vld [vmem:[#allocation3 + $0x148] sm:$0xff]
  %v3487 = vld [vmem:[#allocation3 + $0x150] sm:$0xff]
  %v3488 = vld [vmem:[#allocation3 + $0x158] sm:$0xff]
  %v3489 = vld [vmem:[#allocation3 + $0x160] sm:$0xff]
  %v3490 = vld [vmem:[#allocation3 + $0x168] sm:$0xff]
  %v3491 = vld [vmem:[#allocation3 + $0x170] sm:$0xff]
  %v3492 = vld [vmem:[#allocation3 + $0x178] sm:$0xff]
  %v3493 = vld [vmem:[#allocation3 + $0x180] sm:$0xff]
  %v3494 = vld [vmem:[#allocation3 + $0x188] sm:$0xff]
  %v3495 = vld [vmem:[#allocation3 + $0x190] sm:$0xff]
  %v3496 = vld [vmem:[#allocation3 + $0x198] sm:$0xff]
  %v3497 = vld [vmem:[#allocation3 + $0x1a0] sm:$0xff]
  %v3498 = vld [vmem:[#allocation3 + $0x1a8] sm:$0xff]
  %v3499 = vld [vmem:[#allocation3 + $0x1b0] sm:$0xff]
  %v3500 = vld [vmem:[#allocation3 + $0x1b8] sm:$0xff]
  %v3501 = vld [vmem:[#allocation3 + $0x1c0] sm:$0xff]
  %v3502 = vld [vmem:[#allocation3 + $0x1c8] sm:$0xff]
  %v3503 = vld [vmem:[#allocation3 + $0x1d0] sm:$0xff]
  %v3504 = vld [vmem:[#allocation3 + $0x1d8] sm:$0xff]
  %v3505 = vld [vmem:[#allocation3 + $0x1e0] sm:$0xff]
  %v3506 = vld [vmem:[#allocation3 + $0x1e8] sm:$0xff]
  %v3507 = vld [vmem:[#allocation3 + $0x1f0] sm:$0xff]
  %v3508 = vld [vmem:[#allocation3 + $0x1f8] sm:$0xff]
  %v3509 = vpack.c.bf16 %v3446, %v3445
  %v3510 = vpack.c.bf16 %v3448, %v3447
  %v3511 = vpack.c.bf16 %v3450, %v3449
  %v3512 = vpack.c.bf16 %v3452, %v3451
  %v3513 = vpack.c.bf16 %v3454, %v3453
  %v3514 = vpack.c.bf16 %v3456, %v3455
  %v3515 = vpack.c.bf16 %v3458, %v3457
  %v3516 = vpack.c.bf16 %v3460, %v3459
  %v3517 = vpack.c.bf16 %v3462, %v3461
  %v3518 = vpack.c.bf16 %v3464, %v3463
  %v3519 = vpack.c.bf16 %v3466, %v3465
  %v3520 = vpack.c.bf16 %v3468, %v3467
  %v3521 = vpack.c.bf16 %v3470, %v3469
  %v3522 = vpack.c.bf16 %v3472, %v3471
  %v3523 = vpack.c.bf16 %v3474, %v3473
  %v3524 = vpack.c.bf16 %v3476, %v3475
  %v3525 = vpack.c.bf16 %v3478, %v3477
  %v3526 = vpack.c.bf16 %v3480, %v3479
  %v3527 = vpack.c.bf16 %v3482, %v3481
  %v3528 = vpack.c.bf16 %v3484, %v3483
  %v3529 = vpack.c.bf16 %v3486, %v3485
  %v3530 = vpack.c.bf16 %v3488, %v3487
  %v3531 = vpack.c.bf16 %v3490, %v3489
  %v3532 = vpack.c.bf16 %v3492, %v3491
  %v3533 = vpack.c.bf16 %v3494, %v3493
  %v3534 = vpack.c.bf16 %v3496, %v3495
  %v3535 = vpack.c.bf16 %v3498, %v3497
  %v3536 = vpack.c.bf16 %v3500, %v3499
  %v3537 = vpack.c.bf16 %v3502, %v3501
  %v3538 = vpack.c.bf16 %v3504, %v3503
  %v3539 = vpack.c.bf16 %v3506, %v3505
  %v3540 = vpack.c.bf16 %v3508, %v3507
  %v3541 = vld [vmem:[%s1] sm:$0xf]
  %v3542 = vld [vmem:[%s1 + $0x4] sm:$0xf]
  %v3543 = vld [vmem:[%s1 + $0x8] sm:$0xf]
  %v3544 = vld [vmem:[%s1 + $0xc] sm:$0xf]
  %v3545 = vld [vmem:[%s1 + $0x10] sm:$0x3]
  %v3551 = vunpack.c.l.b16 %v3541
  %v3552 = vunpack.c.l.b16 %v3542
  %v3553 = vunpack.c.l.b16 %v3543
  %v3554 = vunpack.c.l.b16 %v3544
  %v3555 = vunpack.c.l.b16 %v3545
  %v3556 = vpack.c.b16 %v3552, %v3551
  %v3557 = vpack.c.b16 %v3554, %v3553
  %v3558 = vpack.c.b16 %v3555, %v3555
  %vm3561 = vcmask 293888
  %v3563 = vsel %vm3561, %v3509, 0
  %v3566 = vsel %vm3561, %v3510, 0
  %v3569 = vsel %vm3561, %v3511, 0
  %v3572 = vsel %vm3561, %v3512, 0
  %v3575 = vsel %vm3561, %v3513, 0
  %v3578 = vsel %vm3561, %v3514, 0
  %v3581 = vsel %vm3561, %v3515, 0
  %v3584 = vsel %vm3561, %v3516, 0
  %v3587 = vsel %vm3561, %v3517, 0
  %v3590 = vsel %vm3561, %v3518, 0
  %v3593 = vsel %vm3561, %v3519, 0
  %v3596 = vsel %vm3561, %v3520, 0
  %v3599 = vsel %vm3561, %v3521, 0
  %v3602 = vsel %vm3561, %v3522, 0
  %v3605 = vsel %vm3561, %v3523, 0
  %v3608 = vsel %vm3561, %v3524, 0
  %v3611 = vsel %vm3561, %v3525, 0
  %v3614 = vsel %vm3561, %v3526, 0
  %v3617 = vsel %vm3561, %v3527, 0
  %v3620 = vsel %vm3561, %v3528, 0
  %v3623 = vsel %vm3561, %v3529, 0
  %v3626 = vsel %vm3561, %v3530, 0
  %v3629 = vsel %vm3561, %v3531, 0
  %v3632 = vsel %vm3561, %v3532, 0
  %v3635 = vsel %vm3561, %v3533, 0
  %v3638 = vsel %vm3561, %v3534, 0
  %v3641 = vsel %vm3561, %v3535, 0
  %v3644 = vsel %vm3561, %v3536, 0
  %v3647 = vsel %vm3561, %v3537, 0
  %v3650 = vsel %vm3561, %v3538, 0
  %v3653 = vsel %vm3561, %v3539, 0
  %v3656 = vsel %vm3561, %v3540, 0
  %vm3658 = vcmask 1041408
  %v3660 = vsel %vm3658, %v3558, 0
  %3662 = vmatprep.subr.bf16.mxu0 0
  %3663 = vmatpush1.bf16.msra.mxu0 %v3556
  %3664 = vmatprep.subr.bf16.mxu0 0
  %3665 = vmatpush1.bf16.msra.mxu0 %v3557
  %3666 = vmatprep.subr.bf16.mxu0 0
  %3667 = vmatpush1.bf16.msra.mxu0 %v3660
  %3668 = vmatprep.subr.bf16.mxu0 0
  %3669 = vmatpush1.bf16.msra.mxu0 0
  %3670 = vmatprep.subr.bf16.mxu0 0
  %3671 = vmatpush1.bf16.msra.mxu0 0
  %3672 = vmatprep.subr.bf16.mxu0 0
  %3673 = vmatpush1.bf16.msra.mxu0 0
  %3674 = vmatprep.subr.bf16.mxu0 0
  %3675 = vmatpush1.bf16.msra.mxu0 0
  %3676 = vmatprep.subr.bf16.mxu0 0
  %3677 = vmatpush1.bf16.msra.mxu0 0
  %3678 = vmatprep.subr.bf16.mxu0 0
  %3679 = vmatpush1.bf16.msra.mxu0 0
  %3680 = vmatprep.subr.bf16.mxu0 0
  %3681 = vmatpush1.bf16.msra.mxu0 0
  %3682 = vmatprep.subr.bf16.mxu0 0
  %3683 = vmatpush1.bf16.msra.mxu0 0
  %3684 = vmatprep.subr.bf16.mxu0 0
  %3685 = vmatpush1.bf16.msra.mxu0 0
  %3686 = vmatprep.subr.bf16.mxu0 0
  %3687 = vmatpush1.bf16.msra.mxu0 0
  %3688 = vmatprep.subr.bf16.mxu0 0
  %3689 = vmatpush1.bf16.msra.mxu0 0
  %3690 = vmatprep.subr.bf16.mxu0 0
  %3691 = vmatpush1.bf16.msra.mxu0 0
  %3692 = vmatprep.subr.bf16.mxu0 0
  %3693 = vmatpush1.bf16.msra.mxu0 0
  %3694 = vmatprep.mubr.bf16.mxu0 0
  %3695 = vmatmul.mubr.bf16.gmra.mrb[0].mxu0 %v3563
  %v3696 = vpop.f32.mrb[0].mxu0
  %v3697 = vadd.f32 0.0, %v3696
  %v3698 = vpop.f32.mrb[0].mxu0
  %v3699 = vpop.f32.mrb[0].mxu0
  %v3700 = vadd.f32 0.0, %v3699
  %v3701 = vpop.f32.mrb[0].mxu0
  %3702 = vmatprep.mubr.bf16.mxu0 0
  %3703 = vmatmul.mubr.bf16.gmra.mrb[0].mxu0 %v3566
  %v3704 = vpop.f32.mrb[0].mxu0
  %v3705 = vadd.f32 0.0, %v3704
  %v3706 = vpop.f32.mrb[0].mxu0
  %v3707 = vpop.f32.mrb[0].mxu0
  %v3708 = vadd.f32 0.0, %v3707
  %v3709 = vpop.f32.mrb[0].mxu0
  %3710 = vmatprep.mubr.bf16.mxu0 0
  %3711 = vmatmul.mubr.bf16.gmra.mrb[0].mxu0 %v3569
  %v3712 = vpop.f32.mrb[0].mxu0
  %v3713 = vadd.f32 0.0, %v3712
  %v3714 = vpop.f32.mrb[0].mxu0
  %v3715 = vpop.f32.mrb[0].mxu0
  %v3716 = vadd.f32 0.0, %v3715
  %v3717 = vpop.f32.mrb[0].mxu0
  %3718 = vmatprep.mubr.bf16.mxu0 0
  %3719 = vmatmul.mubr.bf16.gmra.mrb[0].mxu0 %v3572
  %v3720 = vpop.f32.mrb[0].mxu0
  %v3721 = vadd.f32 0.0, %v3720
  %v3722 = vpop.f32.mrb[0].mxu0
  %v3723 = vpop.f32.mrb[0].mxu0
  %v3724 = vadd.f32 0.0, %v3723
  %v3725 = vpop.f32.mrb[0].mxu0
  %3726 = vmatprep.mubr.bf16.mxu0 0
  %3727 = vmatmul.mubr.bf16.gmra.mrb[0].mxu0 %v3575
  %v3728 = vpop.f32.mrb[0].mxu0
  %v3729 = vadd.f32 0.0, %v3728
  %v3730 = vpop.f32.mrb[0].mxu0
  %v3731 = vpop.f32.mrb[0].mxu0
  %v3732 = vadd.f32 0.0, %v3731
  %v3733 = vpop.f32.mrb[0].mxu0
  %3734 = vmatprep.mubr.bf16.mxu0 0
  %3735 = vmatmul.mubr.bf16.gmra.mrb[0].mxu0 %v3578
  %v3736 = vpop.f32.mrb[0].mxu0
  %v3737 = vadd.f32 0.0, %v3736
  %v3738 = vpop.f32.mrb[0].mxu0
  %v3739 = vpop.f32.mrb[0].mxu0
  %v3740 = vadd.f32 0.0, %v3739
  %v3741 = vpop.f32.mrb[0].mxu0
  %3742 = vmatprep.mubr.bf16.mxu0 0
  %3743 = vmatmul.mubr.bf16.gmra.mrb[0].mxu0 %v3581
  %v3744 = vpop.f32.mrb[0].mxu0
  %v3745 = vadd.f32 0.0, %v3744
  %v3746 = vpop.f32.mrb[0].mxu0
  %v3747 = vpop.f32.mrb[0].mxu0
  %v3748 = vadd.f32 0.0, %v3747
  %v3749 = vpop.f32.mrb[0].mxu0
  %3750 = vmatprep.mubr.bf16.mxu0 0
  %3751 = vmatmul.mubr.bf16.gmra.mrb[0].mxu0 %v3584
  %v3752 = vpop.f32.mrb[0].mxu0
  %v3753 = vadd.f32 0.0, %v3752
  %v3754 = vpop.f32.mrb[0].mxu0
  %v3755 = vpop.f32.mrb[0].mxu0
  %v3756 = vadd.f32 0.0, %v3755
  %v3757 = vpop.f32.mrb[0].mxu0
  %3758 = vmatprep.mubr.bf16.mxu0 0
  %3759 = vmatmul.mubr.bf16.gmra.mrb[0].mxu0 %v3587
  %v3760 = vpop.f32.mrb[0].mxu0
  %v3761 = vadd.f32 0.0, %v3760
  %v3762 = vpop.f32.mrb[0].mxu0
  %v3763 = vpop.f32.mrb[0].mxu0
  %v3764 = vadd.f32 0.0, %v3763
  %v3765 = vpop.f32.mrb[0].mxu0
  %3766 = vmatprep.mubr.bf16.mxu0 0
  %3767 = vmatmul.mubr.bf16.gmra.mrb[0].mxu0 %v3590
  %v3768 = vpop.f32.mrb[0].mxu0
  %v3769 = vadd.f32 0.0, %v3768
  %v3770 = vpop.f32.mrb[0].mxu0
  %v3771 = vpop.f32.mrb[0].mxu0
  %v3772 = vadd.f32 0.0, %v3771
  %v3773 = vpop.f32.mrb[0].mxu0
  %3774 = vmatprep.mubr.bf16.mxu0 0
  %3775 = vmatmul.mubr.bf16.gmra.mrb[0].mxu0 %v3593
  %v3776 = vpop.f32.mrb[0].mxu0
  %v3777 = vadd.f32 0.0, %v3776
  %v3778 = vpop.f32.mrb[0].mxu0
  %v3779 = vpop.f32.mrb[0].mxu0
  %v3780 = vadd.f32 0.0, %v3779
  %v3781 = vpop.f32.mrb[0].mxu0
  %3782 = vmatprep.mubr.bf16.mxu0 0
  %3783 = vmatmul.mubr.bf16.gmra.mrb[0].mxu0 %v3596
  %v3784 = vpop.f32.mrb[0].mxu0
  %v3785 = vadd.f32 0.0, %v3784
  %v3786 = vpop.f32.mrb[0].mxu0
  %v3787 = vpop.f32.mrb[0].mxu0
  %v3788 = vadd.f32 0.0, %v3787
  %v3789 = vpop.f32.mrb[0].mxu0
  %3790 = vmatprep.mubr.bf16.mxu0 0
  %3791 = vmatmul.mubr.bf16.gmra.mrb[0].mxu0 %v3599
  %v3792 = vpop.f32.mrb[0].mxu0
  %v3793 = vadd.f32 0.0, %v3792
  %v3794 = vpop.f32.mrb[0].mxu0
  %v3795 = vpop.f32.mrb[0].mxu0
  %v3796 = vadd.f32 0.0, %v3795
  %v3797 = vpop.f32.mrb[0].mxu0
  %3798 = vmatprep.mubr.bf16.mxu0 0
  %3799 = vmatmul.mubr.bf16.gmra.mrb[0].mxu0 %v3602
  %v3800 = vpop.f32.mrb[0].mxu0
  %v3801 = vadd.f32 0.0, %v3800
  %v3802 = vpop.f32.mrb[0].mxu0
  %v3803 = vpop.f32.mrb[0].mxu0
  %v3804 = vadd.f32 0.0, %v3803
  %v3805 = vpop.f32.mrb[0].mxu0
  %3806 = vmatprep.mubr.bf16.mxu0 0
  %3807 = vmatmul.mubr.bf16.gmra.mrb[0].mxu0 %v3605
  %v3808 = vpop.f32.mrb[0].mxu0
  %v3809 = vadd.f32 0.0, %v3808
  %v3810 = vpop.f32.mrb[0].mxu0
  %v3811 = vpop.f32.mrb[0].mxu0
  %v3812 = vadd.f32 0.0, %v3811
  %v3813 = vpop.f32.mrb[0].mxu0
  %3814 = vmatprep.mubr.bf16.mxu0 0
  %3815 = vmatmul.mubr.bf16.gmra.mrb[0].mxu0 %v3608
  %v3816 = vpop.f32.mrb[0].mxu0
  %v3817 = vadd.f32 0.0, %v3816
  %v3818 = vpop.f32.mrb[0].mxu0
  %v3819 = vpop.f32.mrb[0].mxu0
  %v3820 = vadd.f32 0.0, %v3819
  %v3821 = vpop.f32.mrb[0].mxu0
  %3822 = vmatprep.mubr.bf16.mxu0 0
  %3823 = vmatmul.mubr.bf16.gmra.mrb[0].mxu0 %v3611
  %v3824 = vpop.f32.mrb[0].mxu0
  %v3825 = vadd.f32 0.0, %v3824
  %v3826 = vpop.f32.mrb[0].mxu0
  %v3827 = vpop.f32.mrb[0].mxu0
  %v3828 = vadd.f32 0.0, %v3827
  %v3829 = vpop.f32.mrb[0].mxu0
  %3830 = vmatprep.mubr.bf16.mxu0 0
  %3831 = vmatmul.mubr.bf16.gmra.mrb[0].mxu0 %v3614
  %v3832 = vpop.f32.mrb[0].mxu0
  %v3833 = vadd.f32 0.0, %v3832
  %v3834 = vpop.f32.mrb[0].mxu0
  %v3835 = vpop.f32.mrb[0].mxu0
  %v3836 = vadd.f32 0.0, %v3835
  %v3837 = vpop.f32.mrb[0].mxu0
  %3838 = vmatprep.mubr.bf16.mxu0 0
  %3839 = vmatmul.mubr.bf16.gmra.mrb[0].mxu0 %v3617
  %v3840 = vpop.f32.mrb[0].mxu0
  %v3841 = vadd.f32 0.0, %v3840
  %v3842 = vpop.f32.mrb[0].mxu0
  %v3843 = vpop.f32.mrb[0].mxu0
  %v3844 = vadd.f32 0.0, %v3843
  %v3845 = vpop.f32.mrb[0].mxu0
  %3846 = vmatprep.mubr.bf16.mxu0 0
  %3847 = vmatmul.mubr.bf16.gmra.mrb[0].mxu0 %v3620
  %v3848 = vpop.f32.mrb[0].mxu0
  %v3849 = vadd.f32 0.0, %v3848
  %v3850 = vpop.f32.mrb[0].mxu0
  %v3851 = vpop.f32.mrb[0].mxu0
  %v3852 = vadd.f32 0.0, %v3851
  %v3853 = vpop.f32.mrb[0].mxu0
  %3854 = vmatprep.mubr.bf16.mxu0 0
  %3855 = vmatmul.mubr.bf16.gmra.mrb[0].mxu0 %v3623
  %v3856 = vpop.f32.mrb[0].mxu0
  %v3857 = vadd.f32 0.0, %v3856
  %v3858 = vpop.f32.mrb[0].mxu0
  %v3859 = vpop.f32.mrb[0].mxu0
  %v3860 = vadd.f32 0.0, %v3859
  %v3861 = vpop.f32.mrb[0].mxu0
  %3862 = vmatprep.mubr.bf16.mxu0 0
  %3863 = vmatmul.mubr.bf16.gmra.mrb[0].mxu0 %v3626
  %v3864 = vpop.f32.mrb[0].mxu0
  %v3865 = vadd.f32 0.0, %v3864
  %v3866 = vpop.f32.mrb[0].mxu0
  %v3867 = vpop.f32.mrb[0].mxu0
  %v3868 = vadd.f32 0.0, %v3867
  %v3869 = vpop.f32.mrb[0].mxu0
  %3870 = vmatprep.mubr.bf16.mxu0 0
  %3871 = vmatmul.mubr.bf16.gmra.mrb[0].mxu0 %v3629
  %v3872 = vpop.f32.mrb[0].mxu0
  %v3873 = vadd.f32 0.0, %v3872
  %v3874 = vpop.f32.mrb[0].mxu0
  %v3875 = vpop.f32.mrb[0].mxu0
  %v3876 = vadd.f32 0.0, %v3875
  %v3877 = vpop.f32.mrb[0].mxu0
  %3878 = vmatprep.mubr.bf16.mxu0 0
  %3879 = vmatmul.mubr.bf16.gmra.mrb[0].mxu0 %v3632
  %v3880 = vpop.f32.mrb[0].mxu0
  %v3881 = vadd.f32 0.0, %v3880
  %v3882 = vpop.f32.mrb[0].mxu0
  %v3883 = vpop.f32.mrb[0].mxu0
  %v3884 = vadd.f32 0.0, %v3883
  %v3885 = vpop.f32.mrb[0].mxu0
  %3886 = vmatprep.mubr.bf16.mxu0 0
  %3887 = vmatmul.mubr.bf16.gmra.mrb[0].mxu0 %v3635
  %v3888 = vpop.f32.mrb[0].mxu0
  %v3889 = vadd.f32 0.0, %v3888
  %v3890 = vpop.f32.mrb[0].mxu0
  %v3891 = vpop.f32.mrb[0].mxu0
  %v3892 = vadd.f32 0.0, %v3891
  %v3893 = vpop.f32.mrb[0].mxu0
  %3894 = vmatprep.mubr.bf16.mxu0 0
  %3895 = vmatmul.mubr.bf16.gmra.mrb[0].mxu0 %v3638
  %v3896 = vpop.f32.mrb[0].mxu0
  %v3897 = vadd.f32 0.0, %v3896
  %v3898 = vpop.f32.mrb[0].mxu0
  %v3899 = vpop.f32.mrb[0].mxu0
  %v3900 = vadd.f32 0.0, %v3899
  %v3901 = vpop.f32.mrb[0].mxu0
  %3902 = vmatprep.mubr.bf16.mxu0 0
  %3903 = vmatmul.mubr.bf16.gmra.mrb[0].mxu0 %v3641
  %v3904 = vpop.f32.mrb[0].mxu0
  %v3905 = vadd.f32 0.0, %v3904
  %v3906 = vpop.f32.mrb[0].mxu0
  %v3907 = vpop.f32.mrb[0].mxu0
  %v3908 = vadd.f32 0.0, %v3907
  %v3909 = vpop.f32.mrb[0].mxu0
  %3910 = vmatprep.mubr.bf16.mxu0 0
  %3911 = vmatmul.mubr.bf16.gmra.mrb[0].mxu0 %v3644
  %v3912 = vpop.f32.mrb[0].mxu0
  %v3913 = vadd.f32 0.0, %v3912
  %v3914 = vpop.f32.mrb[0].mxu0
  %v3915 = vpop.f32.mrb[0].mxu0
  %v3916 = vadd.f32 0.0, %v3915
  %v3917 = vpop.f32.mrb[0].mxu0
  %3918 = vmatprep.mubr.bf16.mxu0 0
  %3919 = vmatmul.mubr.bf16.gmra.mrb[0].mxu0 %v3647
  %v3920 = vpop.f32.mrb[0].mxu0
  %v3921 = vadd.f32 0.0, %v3920
  %v3922 = vpop.f32.mrb[0].mxu0
  %v3923 = vpop.f32.mrb[0].mxu0
  %v3924 = vadd.f32 0.0, %v3923
  %v3925 = vpop.f32.mrb[0].mxu0
  %3926 = vmatprep.mubr.bf16.mxu0 0
  %3927 = vmatmul.mubr.bf16.gmra.mrb[0].mxu0 %v3650
  %v3928 = vpop.f32.mrb[0].mxu0
  %v3929 = vadd.f32 0.0, %v3928
  %v3930 = vpop.f32.mrb[0].mxu0
  %v3931 = vpop.f32.mrb[0].mxu0
  %v3932 = vadd.f32 0.0, %v3931
  %v3933 = vpop.f32.mrb[0].mxu0
  %3934 = vmatprep.mubr.bf16.mxu0 0
  %3935 = vmatmul.mubr.bf16.gmra.mrb[0].mxu0 %v3653
  %v3936 = vpop.f32.mrb[0].mxu0
  %v3937 = vadd.f32 0.0, %v3936
  %v3938 = vpop.f32.mrb[0].mxu0
  %v3939 = vpop.f32.mrb[0].mxu0
  %v3940 = vadd.f32 0.0, %v3939
  %v3941 = vpop.f32.mrb[0].mxu0
  %3942 = vmatprep.mubr.bf16.mxu0 0
  %3943 = vmatmul.mubr.bf16.gmra.mrb[0].mxu0 %v3656
  %v3944 = vpop.f32.mrb[0].mxu0
  %v3945 = vadd.f32 0.0, %v3944
  %v3946 = vpop.f32.mrb[0].mxu0
  %v3947 = vpop.f32.mrb[0].mxu0
  %v3948 = vadd.f32 0.0, %v3947
  %v3949 = vpop.f32.mrb[0].mxu0
  %3950 = vdwg.mxu0
  %v3951 = vsel %vm27, %v3697, 0.0
  %v3952 = vsel %vm27, %v3700, 0.0
  %v3953 = vadd.f32 %v3951, %v3952
  %v3954 = vsel %vm27, %v3705, 0.0
  %v3955 = vadd.f32 %v3953, %v3954
  %v3956 = vsel %vm27, %v3708, 0.0
  %v3957 = vadd.f32 %v3955, %v3956
  %v3958 = vsel %vm27, %v3713, 0.0
  %v3959 = vadd.f32 %v3957, %v3958
  %v3960 = vsel %vm27, %v3716, 0.0
  %v3961 = vadd.f32 %v3959, %v3960
  %v3962 = vsel %vm27, %v3721, 0.0
  %v3963 = vadd.f32 %v3961, %v3962
  %v3964 = vsel %vm27, %v3724, 0.0
  %v3965 = vadd.f32 %v3963, %v3964
  %v3966 = vsel %vm27, %v3729, 0.0
  %v3967 = vadd.f32 %v3965, %v3966
  %v3968 = vsel %vm27, %v3732, 0.0
  %v3969 = vadd.f32 %v3967, %v3968
  %v3970 = vsel %vm27, %v3737, 0.0
  %v3971 = vadd.f32 %v3969, %v3970
  %v3972 = vsel %vm27, %v3740, 0.0
  %v3973 = vadd.f32 %v3971, %v3972
  %v3974 = vsel %vm27, %v3745, 0.0
  %v3975 = vadd.f32 %v3973, %v3974
  %v3976 = vsel %vm27, %v3748, 0.0
  %v3977 = vadd.f32 %v3975, %v3976
  %v3978 = vsel %vm27, %v3753, 0.0
  %v3979 = vadd.f32 %v3977, %v3978
  %v3980 = vsel %vm27, %v3756, 0.0
  %v3981 = vadd.f32 %v3979, %v3980
  %v3982 = vsel %vm27, %v3761, 0.0
  %v3983 = vadd.f32 %v3981, %v3982
  %v3984 = vsel %vm27, %v3764, 0.0
  %v3985 = vadd.f32 %v3983, %v3984
  %v3986 = vsel %vm27, %v3769, 0.0
  %v3987 = vadd.f32 %v3985, %v3986
  %v3988 = vsel %vm27, %v3772, 0.0
  %v3989 = vadd.f32 %v3987, %v3988
  %v3990 = vsel %vm27, %v3777, 0.0
  %v3991 = vadd.f32 %v3989, %v3990
  %v3992 = vsel %vm27, %v3780, 0.0
  %v3993 = vadd.f32 %v3991, %v3992
  %v3994 = vsel %vm27, %v3785, 0.0
  %v3995 = vadd.f32 %v3993, %v3994
  %v3996 = vsel %vm27, %v3788, 0.0
  %v3997 = vadd.f32 %v3995, %v3996
  %v3998 = vsel %vm27, %v3793, 0.0
  %v3999 = vadd.f32 %v3997, %v3998
  %v4000 = vsel %vm27, %v3796, 0.0
  %v4001 = vadd.f32 %v3999, %v4000
  %v4002 = vsel %vm27, %v3801, 0.0
  %v4003 = vadd.f32 %v4001, %v4002
  %v4004 = vsel %vm27, %v3804, 0.0
  %v4005 = vadd.f32 %v4003, %v4004
  %v4006 = vsel %vm27, %v3809, 0.0
  %v4007 = vadd.f32 %v4005, %v4006
  %v4008 = vsel %vm27, %v3812, 0.0
  %v4009 = vadd.f32 %v4007, %v4008
  %v4010 = vsel %vm27, %v3817, 0.0
  %v4011 = vadd.f32 %v4009, %v4010
  %v4012 = vsel %vm27, %v3820, 0.0
  %v4013 = vadd.f32 %v4011, %v4012
  %v4014 = vsel %vm27, %v3825, 0.0
  %v4015 = vadd.f32 %v4013, %v4014
  %v4016 = vsel %vm27, %v3828, 0.0
  %v4017 = vadd.f32 %v4015, %v4016
  %v4018 = vsel %vm27, %v3833, 0.0
  %v4019 = vadd.f32 %v4017, %v4018
  %v4020 = vsel %vm27, %v3836, 0.0
  %v4021 = vadd.f32 %v4019, %v4020
  %v4022 = vsel %vm27, %v3841, 0.0
  %v4023 = vadd.f32 %v4021, %v4022
  %v4024 = vsel %vm27, %v3844, 0.0
  %v4025 = vadd.f32 %v4023, %v4024
  %v4026 = vsel %vm27, %v3849, 0.0
  %v4027 = vadd.f32 %v4025, %v4026
  %v4028 = vsel %vm27, %v3852, 0.0
  %v4029 = vadd.f32 %v4027, %v4028
  %v4030 = vsel %vm27, %v3857, 0.0
  %v4031 = vadd.f32 %v4029, %v4030
  %v4032 = vsel %vm27, %v3860, 0.0
  %v4033 = vadd.f32 %v4031, %v4032
  %v4034 = vsel %vm27, %v3865, 0.0
  %v4035 = vadd.f32 %v4033, %v4034
  %v4036 = vsel %vm27, %v3868, 0.0
  %v4037 = vadd.f32 %v4035, %v4036
  %v4038 = vsel %vm27, %v3873, 0.0
  %v4039 = vadd.f32 %v4037, %v4038
  %v4040 = vsel %vm27, %v3876, 0.0
  %v4041 = vadd.f32 %v4039, %v4040
  %v4042 = vsel %vm27, %v3881, 0.0
  %v4043 = vadd.f32 %v4041, %v4042
  %v4044 = vsel %vm27, %v3884, 0.0
  %v4045 = vadd.f32 %v4043, %v4044
  %v4046 = vsel %vm27, %v3889, 0.0
  %v4047 = vadd.f32 %v4045, %v4046
  %v4048 = vsel %vm27, %v3892, 0.0
  %v4049 = vadd.f32 %v4047, %v4048
  %v4050 = vsel %vm27, %v3897, 0.0
  %v4051 = vadd.f32 %v4049, %v4050
  %v4052 = vsel %vm27, %v3900, 0.0
  %v4053 = vadd.f32 %v4051, %v4052
  %v4054 = vsel %vm27, %v3905, 0.0
  %v4055 = vadd.f32 %v4053, %v4054
  %v4056 = vsel %vm27, %v3908, 0.0
  %v4057 = vadd.f32 %v4055, %v4056
  %v4058 = vsel %vm27, %v3913, 0.0
  %v4059 = vadd.f32 %v4057, %v4058
  %v4060 = vsel %vm27, %v3916, 0.0
  %v4061 = vadd.f32 %v4059, %v4060
  %v4062 = vsel %vm27, %v3921, 0.0
  %v4063 = vadd.f32 %v4061, %v4062
  %v4064 = vsel %vm27, %v3924, 0.0
  %v4065 = vadd.f32 %v4063, %v4064
  %v4066 = vsel %vm27, %v3929, 0.0
  %v4067 = vadd.f32 %v4065, %v4066
  %v4068 = vsel %vm27, %v3932, 0.0
  %v4069 = vadd.f32 %v4067, %v4068
  %v4070 = vsel %vm27, %v3937, 0.0
  %v4071 = vadd.f32 %v4069, %v4070
  %v4072 = vsel %vm27, %v3940, 0.0
  %v4073 = vadd.f32 %v4071, %v4072
  %v4074 = vsel %vm27, %v3945, 0.0
  %v4075 = vadd.f32 %v4073, %v4074
  %v4076 = vsel %vm27, %v3948, 0.0
  %v4077 = vadd.f32 %v4075, %v4076
  %v4078 = vrot.slane %v4077, 4
  %v4079 = vadd.f32 %v4077, %v4078
  %v4080 = vrot.slane %v4079, 2
  %v4081 = vadd.f32 %v4079, %v4080
  %v4082 = vrot.slane %v4081, 1
  %v4083 = vadd.f32 %v4081, %v4082
  %v4084 = vmul.f32 %v4083, 0.001953125
  %v4085 = vmul.f32 %v3697, %v3697
  %v4086 = vmul.f32 %v3700, %v3700
  %v4087 = vmul.f32 %v3705, %v3705
  %v4088 = vmul.f32 %v3708, %v3708
  %v4089 = vmul.f32 %v3713, %v3713
  %v4090 = vmul.f32 %v3716, %v3716
  %v4091 = vmul.f32 %v3721, %v3721
  %v4092 = vmul.f32 %v3724, %v3724
  %v4093 = vmul.f32 %v3729, %v3729
  %v4094 = vmul.f32 %v3732, %v3732
  %v4095 = vmul.f32 %v3737, %v3737
  %v4096 = vmul.f32 %v3740, %v3740
  %v4097 = vmul.f32 %v3745, %v3745
  %v4098 = vmul.f32 %v3748, %v3748
  %v4099 = vmul.f32 %v3753, %v3753
  %v4100 = vmul.f32 %v3756, %v3756
  %v4101 = vmul.f32 %v3761, %v3761
  %v4102 = vmul.f32 %v3764, %v3764
  %v4103 = vmul.f32 %v3769, %v3769
  %v4104 = vmul.f32 %v3772, %v3772
  %v4105 = vmul.f32 %v3777, %v3777
  %v4106 = vmul.f32 %v3780, %v3780
  %v4107 = vmul.f32 %v3785, %v3785
  %v4108 = vmul.f32 %v3788, %v3788
  %v4109 = vmul.f32 %v3793, %v3793
  %v4110 = vmul.f32 %v3796, %v3796
  %v4111 = vmul.f32 %v3801, %v3801
  %v4112 = vmul.f32 %v3804, %v3804
  %v4113 = vmul.f32 %v3809, %v3809
  %v4114 = vmul.f32 %v3812, %v3812
  %v4115 = vmul.f32 %v3817, %v3817
  %v4116 = vmul.f32 %v3820, %v3820
  %v4117 = vmul.f32 %v3825, %v3825
  %v4118 = vmul.f32 %v3828, %v3828
  %v4119 = vmul.f32 %v3833, %v3833
  %v4120 = vmul.f32 %v3836, %v3836
  %v4121 = vmul.f32 %v3841, %v3841
  %v4122 = vmul.f32 %v3844, %v3844
  %v4123 = vmul.f32 %v3849, %v3849
  %v4124 = vmul.f32 %v3852, %v3852
  %v4125 = vmul.f32 %v3857, %v3857
  %v4126 = vmul.f32 %v3860, %v3860
  %v4127 = vmul.f32 %v3865, %v3865
  %v4128 = vmul.f32 %v3868, %v3868
  %v4129 = vmul.f32 %v3873, %v3873
  %v4130 = vmul.f32 %v3876, %v3876
  %v4131 = vmul.f32 %v3881, %v3881
  %v4132 = vmul.f32 %v3884, %v3884
  %v4133 = vmul.f32 %v3889, %v3889
  %v4134 = vmul.f32 %v3892, %v3892
  %v4135 = vmul.f32 %v3897, %v3897
  %v4136 = vmul.f32 %v3900, %v3900
  %v4137 = vmul.f32 %v3905, %v3905
  %v4138 = vmul.f32 %v3908, %v3908
  %v4139 = vmul.f32 %v3913, %v3913
  %v4140 = vmul.f32 %v3916, %v3916
  %v4141 = vmul.f32 %v3921, %v3921
  %v4142 = vmul.f32 %v3924, %v3924
  %v4143 = vmul.f32 %v3929, %v3929
  %v4144 = vmul.f32 %v3932, %v3932
  %v4145 = vmul.f32 %v3937, %v3937
  %v4146 = vmul.f32 %v3940, %v3940
  %v4147 = vmul.f32 %v3945, %v3945
  %v4148 = vmul.f32 %v3948, %v3948
  %v4149 = vsel %vm27, %v4085, 0.0
  %v4150 = vsel %vm27, %v4086, 0.0
  %v4151 = vadd.f32 %v4149, %v4150
  %v4152 = vsel %vm27, %v4087, 0.0
  %v4153 = vadd.f32 %v4151, %v4152
  %v4154 = vsel %vm27, %v4088, 0.0
  %v4155 = vadd.f32 %v4153, %v4154
  %v4156 = vsel %vm27, %v4089, 0.0
  %v4157 = vadd.f32 %v4155, %v4156
  %v4158 = vsel %vm27, %v4090, 0.0
  %v4159 = vadd.f32 %v4157, %v4158
  %v4160 = vsel %vm27, %v4091, 0.0
  %v4161 = vadd.f32 %v4159, %v4160
  %v4162 = vsel %vm27, %v4092, 0.0
  %v4163 = vadd.f32 %v4161, %v4162
  %v4164 = vsel %vm27, %v4093, 0.0
  %v4165 = vadd.f32 %v4163, %v4164
  %v4166 = vsel %vm27, %v4094, 0.0
  %v4167 = vadd.f32 %v4165, %v4166
  %v4168 = vsel %vm27, %v4095, 0.0
  %v4169 = vadd.f32 %v4167, %v4168
  %v4170 = vsel %vm27, %v4096, 0.0
  %v4171 = vadd.f32 %v4169, %v4170
  %v4172 = vsel %vm27, %v4097, 0.0
  %v4173 = vadd.f32 %v4171, %v4172
  %v4174 = vsel %vm27, %v4098, 0.0
  %v4175 = vadd.f32 %v4173, %v4174
  %v4176 = vsel %vm27, %v4099, 0.0
  %v4177 = vadd.f32 %v4175, %v4176
  %v4178 = vsel %vm27, %v4100, 0.0
  %v4179 = vadd.f32 %v4177, %v4178
  %v4180 = vsel %vm27, %v4101, 0.0
  %v4181 = vadd.f32 %v4179, %v4180
  %v4182 = vsel %vm27, %v4102, 0.0
  %v4183 = vadd.f32 %v4181, %v4182
  %v4184 = vsel %vm27, %v4103, 0.0
  %v4185 = vadd.f32 %v4183, %v4184
  %v4186 = vsel %vm27, %v4104, 0.0
  %v4187 = vadd.f32 %v4185, %v4186
  %v4188 = vsel %vm27, %v4105, 0.0
  %v4189 = vadd.f32 %v4187, %v4188
  %v4190 = vsel %vm27, %v4106, 0.0
  %v4191 = vadd.f32 %v4189, %v4190
  %v4192 = vsel %vm27, %v4107, 0.0
  %v4193 = vadd.f32 %v4191, %v4192
  %v4194 = vsel %vm27, %v4108, 0.0
  %v4195 = vadd.f32 %v4193, %v4194
  %v4196 = vsel %vm27, %v4109, 0.0
  %v4197 = vadd.f32 %v4195, %v4196
  %v4198 = vsel %vm27, %v4110, 0.0
  %v4199 = vadd.f32 %v4197, %v4198
  %v4200 = vsel %vm27, %v4111, 0.0
  %v4201 = vadd.f32 %v4199, %v4200
  %v4202 = vsel %vm27, %v4112, 0.0
  %v4203 = vadd.f32 %v4201, %v4202
  %v4204 = vsel %vm27, %v4113, 0.0
  %v4205 = vadd.f32 %v4203, %v4204
  %v4206 = vsel %vm27, %v4114, 0.0
  %v4207 = vadd.f32 %v4205, %v4206
  %v4208 = vsel %vm27, %v4115, 0.0
  %v4209 = vadd.f32 %v4207, %v4208
  %v4210 = vsel %vm27, %v4116, 0.0
  %v4211 = vadd.f32 %v4209, %v4210
  %v4212 = vsel %vm27, %v4117, 0.0
  %v4213 = vadd.f32 %v4211, %v4212
  %v4214 = vsel %vm27, %v4118, 0.0
  %v4215 = vadd.f32 %v4213, %v4214
  %v4216 = vsel %vm27, %v4119, 0.0
  %v4217 = vadd.f32 %v4215, %v4216
  %v4218 = vsel %vm27, %v4120, 0.0
  %v4219 = vadd.f32 %v4217, %v4218
  %v4220 = vsel %vm27, %v4121, 0.0
  %v4221 = vadd.f32 %v4219, %v4220
  %v4222 = vsel %vm27, %v4122, 0.0
  %v4223 = vadd.f32 %v4221, %v4222
  %v4224 = vsel %vm27, %v4123, 0.0
  %v4225 = vadd.f32 %v4223, %v4224
  %v4226 = vsel %vm27, %v4124, 0.0
  %v4227 = vadd.f32 %v4225, %v4226
  %v4228 = vsel %vm27, %v4125, 0.0
  %v4229 = vadd.f32 %v4227, %v4228
  %v4230 = vsel %vm27, %v4126, 0.0
  %v4231 = vadd.f32 %v4229, %v4230
  %v4232 = vsel %vm27, %v4127, 0.0
  %v4233 = vadd.f32 %v4231, %v4232
  %v4234 = vsel %vm27, %v4128, 0.0
  %v4235 = vadd.f32 %v4233, %v4234
  %v4236 = vsel %vm27, %v4129, 0.0
  %v4237 = vadd.f32 %v4235, %v4236
  %v4238 = vsel %vm27, %v4130, 0.0
  %v4239 = vadd.f32 %v4237, %v4238
  %v4240 = vsel %vm27, %v4131, 0.0
  %v4241 = vadd.f32 %v4239, %v4240
  %v4242 = vsel %vm27, %v4132, 0.0
  %v4243 = vadd.f32 %v4241, %v4242
  %v4244 = vsel %vm27, %v4133, 0.0
  %v4245 = vadd.f32 %v4243, %v4244
  %v4246 = vsel %vm27, %v4134, 0.0
  %v4247 = vadd.f32 %v4245, %v4246
  %v4248 = vsel %vm27, %v4135, 0.0
  %v4249 = vadd.f32 %v4247, %v4248
  %v4250 = vsel %vm27, %v4136, 0.0
  %v4251 = vadd.f32 %v4249, %v4250
  %v4252 = vsel %vm27, %v4137, 0.0
  %v4253 = vadd.f32 %v4251, %v4252
  %v4254 = vsel %vm27, %v4138, 0.0
  %v4255 = vadd.f32 %v4253, %v4254
  %v4256 = vsel %vm27, %v4139, 0.0
  %v4257 = vadd.f32 %v4255, %v4256
  %v4258 = vsel %vm27, %v4140, 0.0
  %v4259 = vadd.f32 %v4257, %v4258
  %v4260 = vsel %vm27, %v4141, 0.0
  %v4261 = vadd.f32 %v4259, %v4260
  %v4262 = vsel %vm27, %v4142, 0.0
  %v4263 = vadd.f32 %v4261, %v4262
  %v4264 = vsel %vm27, %v4143, 0.0
  %v4265 = vadd.f32 %v4263, %v4264
  %v4266 = vsel %vm27, %v4144, 0.0
  %v4267 = vadd.f32 %v4265, %v4266
  %v4268 = vsel %vm27, %v4145, 0.0
  %v4269 = vadd.f32 %v4267, %v4268
  %v4270 = vsel %vm27, %v4146, 0.0
  %v4271 = vadd.f32 %v4269, %v4270
  %v4272 = vsel %vm27, %v4147, 0.0
  %v4273 = vadd.f32 %v4271, %v4272
  %v4274 = vsel %vm27, %v4148, 0.0
  %v4275 = vadd.f32 %v4273, %v4274
  %v4276 = vrot.slane %v4275, 4
  %v4277 = vadd.f32 %v4275, %v4276
  %v4278 = vrot.slane %v4277, 2
  %v4279 = vadd.f32 %v4277, %v4278
  %v4280 = vrot.slane %v4279, 1
  %v4281 = vadd.f32 %v4279, %v4280
  %v4282 = vmul.f32 %v4281, 0.001953125
  %v4283 = vmul.f32 %v4084, %v4084
  %v4284 = vsub.f32 %v4282, %v4283
  %v4285 = vld [vmem:[%s2] sm:$0x1]
  %v4286 = vadd.f32 %v4284, 1e-05
  %v4287 = vrsqrt.pop %v4286
  %v4288 = vmul.f32 %v4285, %v4287
  %v4289 = vld [vmem:[%s3] sm:$0x1]
  %v4290 = vmul.f32 %v4084, %v4288
  %v4291 = vsub.f32 %v4289, %v4290
  %v4293 = vlaneseq
  %v4294 = vshrl.u32 %v4293, 7
  %v4295 = vsub.s32 0, %v4294
  %v4296 = vrot.slane %v4288, %v4295
  %v4298 = vmul.f32 %v3697, %v4296
  %v4299 = vmul.f32 %v3700, %v4296
  %v4300 = vmul.f32 %v3705, %v4296
  %v4301 = vmul.f32 %v3708, %v4296
  %v4302 = vmul.f32 %v3713, %v4296
  %v4303 = vmul.f32 %v3716, %v4296
  %v4304 = vmul.f32 %v3721, %v4296
  %v4305 = vmul.f32 %v3724, %v4296
  %v4306 = vmul.f32 %v3729, %v4296
  %v4307 = vmul.f32 %v3732, %v4296
  %v4308 = vmul.f32 %v3737, %v4296
  %v4309 = vmul.f32 %v3740, %v4296
  %v4310 = vmul.f32 %v3745, %v4296
  %v4311 = vmul.f32 %v3748, %v4296
  %v4312 = vmul.f32 %v3753, %v4296
  %v4313 = vmul.f32 %v3756, %v4296
  %v4314 = vmul.f32 %v3761, %v4296
  %v4315 = vmul.f32 %v3764, %v4296
  %v4316 = vmul.f32 %v3769, %v4296
  %v4317 = vmul.f32 %v3772, %v4296
  %v4318 = vmul.f32 %v3777, %v4296
  %v4319 = vmul.f32 %v3780, %v4296
  %v4320 = vmul.f32 %v3785, %v4296
  %v4321 = vmul.f32 %v3788, %v4296
  %v4322 = vmul.f32 %v3793, %v4296
  %v4323 = vmul.f32 %v3796, %v4296
  %v4324 = vmul.f32 %v3801, %v4296
  %v4325 = vmul.f32 %v3804, %v4296
  %v4326 = vmul.f32 %v3809, %v4296
  %v4327 = vmul.f32 %v3812, %v4296
  %v4328 = vmul.f32 %v3817, %v4296
  %v4329 = vmul.f32 %v3820, %v4296
  %v4330 = vmul.f32 %v3825, %v4296
  %v4331 = vmul.f32 %v3828, %v4296
  %v4332 = vmul.f32 %v3833, %v4296
  %v4333 = vmul.f32 %v3836, %v4296
  %v4334 = vmul.f32 %v3841, %v4296
  %v4335 = vmul.f32 %v3844, %v4296
  %v4336 = vmul.f32 %v3849, %v4296
  %v4337 = vmul.f32 %v3852, %v4296
  %v4338 = vmul.f32 %v3857, %v4296
  %v4339 = vmul.f32 %v3860, %v4296
  %v4340 = vmul.f32 %v3865, %v4296
  %v4341 = vmul.f32 %v3868, %v4296
  %v4342 = vmul.f32 %v3873, %v4296
  %v4343 = vmul.f32 %v3876, %v4296
  %v4344 = vmul.f32 %v3881, %v4296
  %v4345 = vmul.f32 %v3884, %v4296
  %v4346 = vmul.f32 %v3889, %v4296
  %v4347 = vmul.f32 %v3892, %v4296
  %v4348 = vmul.f32 %v3897, %v4296
  %v4349 = vmul.f32 %v3900, %v4296
  %v4350 = vmul.f32 %v3905, %v4296
  %v4351 = vmul.f32 %v3908, %v4296
  %v4352 = vmul.f32 %v3913, %v4296
  %v4353 = vmul.f32 %v3916, %v4296
  %v4354 = vmul.f32 %v3921, %v4296
  %v4355 = vmul.f32 %v3924, %v4296
  %v4356 = vmul.f32 %v3929, %v4296
  %v4357 = vmul.f32 %v3932, %v4296
  %v4358 = vmul.f32 %v3937, %v4296
  %v4359 = vmul.f32 %v3940, %v4296
  %v4360 = vmul.f32 %v3945, %v4296
  %v4361 = vmul.f32 %v3948, %v4296
  %v4363 = vlaneseq
  %v4364 = vshrl.u32 %v4363, 7
  %v4365 = vsub.s32 0, %v4364
  %v4366 = vrot.slane %v4291, %v4365
  %v4368 = vadd.f32 %v4298, %v4366
  %v4369 = vadd.f32 %v4299, %v4366
  %v4370 = vadd.f32 %v4300, %v4366
  %v4371 = vadd.f32 %v4301, %v4366
  %v4372 = vadd.f32 %v4302, %v4366
  %v4373 = vadd.f32 %v4303, %v4366
  %v4374 = vadd.f32 %v4304, %v4366
  %v4375 = vadd.f32 %v4305, %v4366
  %v4376 = vadd.f32 %v4306, %v4366
  %v4377 = vadd.f32 %v4307, %v4366
  %v4378 = vadd.f32 %v4308, %v4366
  %v4379 = vadd.f32 %v4309, %v4366
  %v4380 = vadd.f32 %v4310, %v4366
  %v4381 = vadd.f32 %v4311, %v4366
  %v4382 = vadd.f32 %v4312, %v4366
  %v4383 = vadd.f32 %v4313, %v4366
  %v4384 = vadd.f32 %v4314, %v4366
  %v4385 = vadd.f32 %v4315, %v4366
  %v4386 = vadd.f32 %v4316, %v4366
  %v4387 = vadd.f32 %v4317, %v4366
  %v4388 = vadd.f32 %v4318, %v4366
  %v4389 = vadd.f32 %v4319, %v4366
  %v4390 = vadd.f32 %v4320, %v4366
  %v4391 = vadd.f32 %v4321, %v4366
  %v4392 = vadd.f32 %v4322, %v4366
  %v4393 = vadd.f32 %v4323, %v4366
  %v4394 = vadd.f32 %v4324, %v4366
  %v4395 = vadd.f32 %v4325, %v4366
  %v4396 = vadd.f32 %v4326, %v4366
  %v4397 = vadd.f32 %v4327, %v4366
  %v4398 = vadd.f32 %v4328, %v4366
  %v4399 = vadd.f32 %v4329, %v4366
  %v4400 = vadd.f32 %v4330, %v4366
  %v4401 = vadd.f32 %v4331, %v4366
  %v4402 = vadd.f32 %v4332, %v4366
  %v4403 = vadd.f32 %v4333, %v4366
  %v4404 = vadd.f32 %v4334, %v4366
  %v4405 = vadd.f32 %v4335, %v4366
  %v4406 = vadd.f32 %v4336, %v4366
  %v4407 = vadd.f32 %v4337, %v4366
  %v4408 = vadd.f32 %v4338, %v4366
  %v4409 = vadd.f32 %v4339, %v4366
  %v4410 = vadd.f32 %v4340, %v4366
  %v4411 = vadd.f32 %v4341, %v4366
  %v4412 = vadd.f32 %v4342, %v4366
  %v4413 = vadd.f32 %v4343, %v4366
  %v4414 = vadd.f32 %v4344, %v4366
  %v4415 = vadd.f32 %v4345, %v4366
  %v4416 = vadd.f32 %v4346, %v4366
  %v4417 = vadd.f32 %v4347, %v4366
  %v4418 = vadd.f32 %v4348, %v4366
  %v4419 = vadd.f32 %v4349, %v4366
  %v4420 = vadd.f32 %v4350, %v4366
  %v4421 = vadd.f32 %v4351, %v4366
  %v4422 = vadd.f32 %v4352, %v4366
  %v4423 = vadd.f32 %v4353, %v4366
  %v4424 = vadd.f32 %v4354, %v4366
  %v4425 = vadd.f32 %v4355, %v4366
  %v4426 = vadd.f32 %v4356, %v4366
  %v4427 = vadd.f32 %v4357, %v4366
  %v4428 = vadd.f32 %v4358, %v4366
  %v4429 = vadd.f32 %v4359, %v4366
  %v4430 = vadd.f32 %v4360, %v4366
  %v4431 = vadd.f32 %v4361, %v4366
  %v4432 = vmax.f32 %v4368, 0.0
  %v4433 = vmax.f32 %v4369, 0.0
  %v4434 = vmax.f32 %v4370, 0.0
  %v4435 = vmax.f32 %v4371, 0.0
  %v4436 = vmax.f32 %v4372, 0.0
  %v4437 = vmax.f32 %v4373, 0.0
  %v4438 = vmax.f32 %v4374, 0.0
  %v4439 = vmax.f32 %v4375, 0.0
  %v4440 = vmax.f32 %v4376, 0.0
  %v4441 = vmax.f32 %v4377, 0.0
  %v4442 = vmax.f32 %v4378, 0.0
  %v4443 = vmax.f32 %v4379, 0.0
  %v4444 = vmax.f32 %v4380, 0.0
  %v4445 = vmax.f32 %v4381, 0.0
  %v4446 = vmax.f32 %v4382, 0.0
  %v4447 = vmax.f32 %v4383, 0.0
  %v4448 = vmax.f32 %v4384, 0.0
  %v4449 = vmax.f32 %v4385, 0.0
  %v4450 = vmax.f32 %v4386, 0.0
  %v4451 = vmax.f32 %v4387, 0.0
  %v4452 = vmax.f32 %v4388, 0.0
  %v4453 = vmax.f32 %v4389, 0.0
  %v4454 = vmax.f32 %v4390, 0.0
  %v4455 = vmax.f32 %v4391, 0.0
  %v4456 = vmax.f32 %v4392, 0.0
  %v4457 = vmax.f32 %v4393, 0.0
  %v4458 = vmax.f32 %v4394, 0.0
  %v4459 = vmax.f32 %v4395, 0.0
  %v4460 = vmax.f32 %v4396, 0.0
  %v4461 = vmax.f32 %v4397, 0.0
  %v4462 = vmax.f32 %v4398, 0.0
  %v4463 = vmax.f32 %v4399, 0.0
  %v4464 = vmax.f32 %v4400, 0.0
  %v4465 = vmax.f32 %v4401, 0.0
  %v4466 = vmax.f32 %v4402, 0.0
  %v4467 = vmax.f32 %v4403, 0.0
  %v4468 = vmax.f32 %v4404, 0.0
  %v4469 = vmax.f32 %v4405, 0.0
  %v4470 = vmax.f32 %v4406, 0.0
  %v4471 = vmax.f32 %v4407, 0.0
  %v4472 = vmax.f32 %v4408, 0.0
  %v4473 = vmax.f32 %v4409, 0.0
  %v4474 = vmax.f32 %v4410, 0.0
  %v4475 = vmax.f32 %v4411, 0.0
  %v4476 = vmax.f32 %v4412, 0.0
  %v4477 = vmax.f32 %v4413, 0.0
  %v4478 = vmax.f32 %v4414, 0.0
  %v4479 = vmax.f32 %v4415, 0.0
  %v4480 = vmax.f32 %v4416, 0.0
  %v4481 = vmax.f32 %v4417, 0.0
  %v4482 = vmax.f32 %v4418, 0.0
  %v4483 = vmax.f32 %v4419, 0.0
  %v4484 = vmax.f32 %v4420, 0.0
  %v4485 = vmax.f32 %v4421, 0.0
  %v4486 = vmax.f32 %v4422, 0.0
  %v4487 = vmax.f32 %v4423, 0.0
  %v4488 = vmax.f32 %v4424, 0.0
  %v4489 = vmax.f32 %v4425, 0.0
  %v4490 = vmax.f32 %v4426, 0.0
  %v4491 = vmax.f32 %v4427, 0.0
  %v4492 = vmax.f32 %v4428, 0.0
  %v4493 = vmax.f32 %v4429, 0.0
  %v4494 = vmax.f32 %v4430, 0.0
  %v4495 = vmax.f32 %v4431, 0.0
  %4496 = vst.msk [vmem:[%s42 + $0x1] sm:$0xff] %vm27, %v4432
  %4497 = vst.msk [vmem:[%s42 + $0x9] sm:$0xff] %vm27, %v4433
  %4498 = vst.msk [vmem:[%s42 + $0x19] sm:$0xff] %vm27, %v4434
  %4499 = vst.msk [vmem:[%s42 + $0x21] sm:$0xff] %vm27, %v4435
  %4500 = vst.msk [vmem:[%s42 + $0x31] sm:$0xff] %vm27, %v4436
  %4501 = vst.msk [vmem:[%s42 + $0x39] sm:$0xff] %vm27, %v4437
  %4502 = vst.msk [vmem:[%s42 + $0x49] sm:$0xff] %vm27, %v4438
  %4503 = vst.msk [vmem:[%s42 + $0x51] sm:$0xff] %vm27, %v4439
  %4504 = vst.msk [vmem:[%s42 + $0x61] sm:$0xff] %vm27, %v4440
  %4505 = vst.msk [vmem:[%s42 + $0x69] sm:$0xff] %vm27, %v4441
  %4506 = vst.msk [vmem:[%s42 + $0x79] sm:$0xff] %vm27, %v4442
  %4507 = vst.msk [vmem:[%s42 + $0x81] sm:$0xff] %vm27, %v4443
  %4508 = vst.msk [vmem:[%s42 + $0x91] sm:$0xff] %vm27, %v4444
  %4509 = vst.msk [vmem:[%s42 + $0x99] sm:$0xff] %vm27, %v4445
  %4510 = vst.msk [vmem:[%s42 + $0xa9] sm:$0xff] %vm27, %v4446
  %4511 = vst.msk [vmem:[%s42 + $0xb1] sm:$0xff] %vm27, %v4447
  %4512 = vst.msk [vmem:[%s42 + $0xc1] sm:$0xff] %vm27, %v4448
  %4513 = vst.msk [vmem:[%s42 + $0xc9] sm:$0xff] %vm27, %v4449
  %4514 = vst.msk [vmem:[%s42 + $0xd9] sm:$0xff] %vm27, %v4450
  %4515 = vst.msk [vmem:[%s42 + $0xe1] sm:$0xff] %vm27, %v4451
  %4516 = vst.msk [vmem:[%s42 + $0xf1] sm:$0xff] %vm27, %v4452
  %4517 = vst.msk [vmem:[%s42 + $0xf9] sm:$0xff] %vm27, %v4453
  %4518 = vst.msk [vmem:[%s42 + $0x109] sm:$0xff] %vm27, %v4454
  %4519 = vst.msk [vmem:[%s42 + $0x111] sm:$0xff] %vm27, %v4455
  %4520 = vst.msk [vmem:[%s42 + $0x121] sm:$0xff] %vm27, %v4456
  %4521 = vst.msk [vmem:[%s42 + $0x129] sm:$0xff] %vm27, %v4457
  %4522 = vst.msk [vmem:[%s42 + $0x139] sm:$0xff] %vm27, %v4458
  %4523 = vst.msk [vmem:[%s42 + $0x141] sm:$0xff] %vm27, %v4459
  %4524 = vst.msk [vmem:[%s42 + $0x151] sm:$0xff] %vm27, %v4460
  %4525 = vst.msk [vmem:[%s42 + $0x159] sm:$0xff] %vm27, %v4461
  %4526 = vst.msk [vmem:[%s42 + $0x169] sm:$0xff] %vm27, %v4462
  %4527 = vst.msk [vmem:[%s42 + $0x171] sm:$0xff] %vm27, %v4463
  %4528 = vst.msk [vmem:[%s42 + $0x1b1] sm:$0xff] %vm27, %v4464
  %4529 = vst.msk [vmem:[%s42 + $0x1b9] sm:$0xff] %vm27, %v4465
  %4530 = vst.msk [vmem:[%s42 + $0x1c9] sm:$0xff] %vm27, %v4466
  %4531 = vst.msk [vmem:[%s42 + $0x1d1] sm:$0xff] %vm27, %v4467
  %4532 = vst.msk [vmem:[%s42 + $0x1e1] sm:$0xff] %vm27, %v4468
  %4533 = vst.msk [vmem:[%s42 + $0x1e9] sm:$0xff] %vm27, %v4469
  %4534 = vst.msk [vmem:[%s42 + $0x1f9] sm:$0xff] %vm27, %v4470
  %4535 = vst.msk [vmem:[%s42 + $0x201] sm:$0xff] %vm27, %v4471
  %4536 = vst.msk [vmem:[%s42 + $0x211] sm:$0xff] %vm27, %v4472
  %4537 = vst.msk [vmem:[%s42 + $0x219] sm:$0xff] %vm27, %v4473
  %4538 = vst.msk [vmem:[%s42 + $0x229] sm:$0xff] %vm27, %v4474
  %4539 = vst.msk [vmem:[%s42 + $0x231] sm:$0xff] %vm27, %v4475
  %4540 = vst.msk [vmem:[%s42 + $0x241] sm:$0xff] %vm27, %v4476
  %4541 = vst.msk [vmem:[%s42 + $0x249] sm:$0xff] %vm27, %v4477
  %4542 = vst.msk [vmem:[%s42 + $0x259] sm:$0xff] %vm27, %v4478
  %4543 = vst.msk [vmem:[%s42 + $0x261] sm:$0xff] %vm27, %v4479
  %4544 = vst.msk [vmem:[%s42 + $0x271] sm:$0xff] %vm27, %v4480
  %4545 = vst.msk [vmem:[%s42 + $0x279] sm:$0xff] %vm27, %v4481
  %4546 = vst.msk [vmem:[%s42 + $0x289] sm:$0xff] %vm27, %v4482
  %4547 = vst.msk [vmem:[%s42 + $0x291] sm:$0xff] %vm27, %v4483
  %4548 = vst.msk [vmem:[%s42 + $0x2a1] sm:$0xff] %vm27, %v4484
  %4549 = vst.msk [vmem:[%s42 + $0x2a9] sm:$0xff] %vm27, %v4485
  %4550 = vst.msk [vmem:[%s42 + $0x2b9] sm:$0xff] %vm27, %v4486
  %4551 = vst.msk [vmem:[%s42 + $0x2c1] sm:$0xff] %vm27, %v4487
  %4552 = vst.msk [vmem:[%s42 + $0x2d1] sm:$0xff] %vm27, %v4488
  %4553 = vst.msk [vmem:[%s42 + $0x2d9] sm:$0xff] %vm27, %v4489
  %4554 = vst.msk [vmem:[%s42 + $0x2e9] sm:$0xff] %vm27, %v4490
  %4555 = vst.msk [vmem:[%s42 + $0x2f1] sm:$0xff] %vm27, %v4491
  %4556 = vst.msk [vmem:[%s42 + $0x301] sm:$0xff] %vm27, %v4492
  %4557 = vst.msk [vmem:[%s42 + $0x309] sm:$0xff] %vm27, %v4493
  %4558 = vst.msk [vmem:[%s42 + $0x319] sm:$0xff] %vm27, %v4494
  %4559 = vst.msk [vmem:[%s42 + $0x321] sm:$0xff] %vm27, %v4495
  %v4560 = vld [vmem:[#allocation2] sm:$0xff]
  %v4561 = vld [vmem:[#allocation2 + $0x8] sm:$0xff]
  %v4562 = vld [vmem:[#allocation2 + $0x18] sm:$0xff]
  %v4563 = vld [vmem:[#allocation2 + $0x20] sm:$0xff]
  %v4564 = vld [vmem:[#allocation2 + $0x30] sm:$0xff]
  %v4565 = vld [vmem:[#allocation2 + $0x38] sm:$0xff]
  %v4566 = vld [vmem:[#allocation2 + $0x48] sm:$0xff]
  %v4567 = vld [vmem:[#allocation2 + $0x50] sm:$0xff]
  %v4568 = vld [vmem:[#allocation2 + $0x60] sm:$0xff]
  %v4569 = vld [vmem:[#allocation2 + $0x68] sm:$0xff]
  %v4570 = vld [vmem:[#allocation2 + $0x78] sm:$0xff]
  %v4571 = vld [vmem:[#allocation2 + $0x80] sm:$0xff]
  %v4572 = vld [vmem:[#allocation2 + $0x90] sm:$0xff]
  %v4573 = vld [vmem:[#allocation2 + $0x98] sm:$0xff]
  %v4574 = vld [vmem:[#allocation2 + $0xa8] sm:$0xff]
  %v4575 = vld [vmem:[#allocation2 + $0xb0] sm:$0xff]
  %v4576 = vld [vmem:[#allocation2 + $0xc0] sm:$0xff]
  %v4577 = vld [vmem:[#allocation2 + $0xc8] sm:$0xff]
  %v4578 = vld [vmem:[#allocation2 + $0xd8] sm:$0xff]
  %v4579 = vld [vmem:[#allocation2 + $0xe0] sm:$0xff]
  %v4580 = vld [vmem:[#allocation2 + $0xf0] sm:$0xff]
  %v4581 = vld [vmem:[#allocation2 + $0xf8] sm:$0xff]
  %v4582 = vld [vmem:[#allocation2 + $0x108] sm:$0xff]
  %v4583 = vld [vmem:[#allocation2 + $0x110] sm:$0xff]
  %v4584 = vld [vmem:[#allocation2 + $0x120] sm:$0xff]
  %v4585 = vld [vmem:[#allocation2 + $0x128] sm:$0xff]
  %v4586 = vld [vmem:[#allocation2 + $0x138] sm:$0xff]
  %v4587 = vld [vmem:[#allocation2 + $0x140] sm:$0xff]
  %v4588 = vld [vmem:[#allocation2 + $0x150] sm:$0xff]
  %v4589 = vld [vmem:[#allocation2 + $0x158] sm:$0xff]
  %v4590 = vld [vmem:[#allocation2 + $0x168] sm:$0xff]
  %v4591 = vld [vmem:[#allocation2 + $0x170] sm:$0xff]
  %v4592 = vld [vmem:[#allocation2 + $0x1b0] sm:$0xff]
  %v4593 = vld [vmem:[#allocation2 + $0x1b8] sm:$0xff]
  %v4594 = vld [vmem:[#allocation2 + $0x1c8] sm:$0xff]
  %v4595 = vld [vmem:[#allocation2 + $0x1d0] sm:$0xff]
  %v4596 = vld [vmem:[#allocation2 + $0x1e0] sm:$0xff]
  %v4597 = vld [vmem:[#allocation2 + $0x1e8] sm:$0xff]
  %v4598 = vld [vmem:[#allocation2 + $0x1f8] sm:$0xff]
  %v4599 = vld [vmem:[#allocation2 + $0x200] sm:$0xff]
  %v4600 = vld [vmem:[#allocation2 + $0x210] sm:$0xff]
  %v4601 = vld [vmem:[#allocation2 + $0x218] sm:$0xff]
  %v4602 = vld [vmem:[#allocation2 + $0x228] sm:$0xff]
  %v4603 = vld [vmem:[#allocation2 + $0x230] sm:$0xff]
  %v4604 = vld [vmem:[#allocation2 + $0x240] sm:$0xff]
  %v4605 = vld [vmem:[#allocation2 + $0x248] sm:$0xff]
  %v4606 = vld [vmem:[#allocation2 + $0x258] sm:$0xff]
  %v4607 = vld [vmem:[#allocation2 + $0x260] sm:$0xff]
  %v4608 = vld [vmem:[#allocation2 + $0x270] sm:$0xff]
  %v4609 = vld [vmem:[#allocation2 + $0x278] sm:$0xff]
  %v4610 = vld [vmem:[#allocation2 + $0x288] sm:$0xff]
  %v4611 = vld [vmem:[#allocation2 + $0x290] sm:$0xff]
  %v4612 = vld [vmem:[#allocation2 + $0x2a0] sm:$0xff]
  %v4613 = vld [vmem:[#allocation2 + $0x2a8] sm:$0xff]
  %v4614 = vld [vmem:[#allocation2 + $0x2b8] sm:$0xff]
  %v4615 = vld [vmem:[#allocation2 + $0x2c0] sm:$0xff]
  %v4616 = vld [vmem:[#allocation2 + $0x2d0] sm:$0xff]
  %v4617 = vld [vmem:[#allocation2 + $0x2d8] sm:$0xff]
  %v4618 = vld [vmem:[#allocation2 + $0x2e8] sm:$0xff]
  %v4619 = vld [vmem:[#allocation2 + $0x2f0] sm:$0xff]
  %v4620 = vld [vmem:[#allocation2 + $0x300] sm:$0xff]
  %v4621 = vld [vmem:[#allocation2 + $0x308] sm:$0xff]
  %v4622 = vld [vmem:[#allocation2 + $0x318] sm:$0xff]
  %v4623 = vld [vmem:[#allocation2 + $0x320] sm:$0xff]
  %4624 = vst.msk [vmem:[#allocation3] sm:$0xff] %vm27, %v4560
  %4625 = vst.msk [vmem:[#allocation3 + $0x8] sm:$0xff] %vm27, %v4561
  %4626 = vst.msk [vmem:[#allocation3 + $0x10] sm:$0xff] %vm27, %v4562
  %4627 = vst.msk [vmem:[#allocation3 + $0x18] sm:$0xff] %vm27, %v4563
  %4628 = vst.msk [vmem:[#allocation3 + $0x20] sm:$0xff] %vm27, %v4564
  %4629 = vst.msk [vmem:[#allocation3 + $0x28] sm:$0xff] %vm27, %v4565
  %4630 = vst.msk [vmem:[#allocation3 + $0x30] sm:$0xff] %vm27, %v4566
  %4631 = vst.msk [vmem:[#allocation3 + $0x38] sm:$0xff] %vm27, %v4567
  %4632 = vst.msk [vmem:[#allocation3 + $0x40] sm:$0xff] %vm27, %v4568
  %4633 = vst.msk [vmem:[#allocation3 + $0x48] sm:$0xff] %vm27, %v4569
  %4634 = vst.msk [vmem:[#allocation3 + $0x50] sm:$0xff] %vm27, %v4570
  %4635 = vst.msk [vmem:[#allocation3 + $0x58] sm:$0xff] %vm27, %v4571
  %4636 = vst.msk [vmem:[#allocation3 + $0x60] sm:$0xff] %vm27, %v4572
  %4637 = vst.msk [vmem:[#allocation3 + $0x68] sm:$0xff] %vm27, %v4573
  %4638 = vst.msk [vmem:[#allocation3 + $0x70] sm:$0xff] %vm27, %v4574
  %4639 = vst.msk [vmem:[#allocation3 + $0x78] sm:$0xff] %vm27, %v4575
  %4640 = vst.msk [vmem:[#allocation3 + $0x80] sm:$0xff] %vm27, %v4576
  %4641 = vst.msk [vmem:[#allocation3 + $0x88] sm:$0xff] %vm27, %v4577
  %4642 = vst.msk [vmem:[#allocation3 + $0x90] sm:$0xff] %vm27, %v4578
  %4643 = vst.msk [vmem:[#allocation3 + $0x98] sm:$0xff] %vm27, %v4579
  %4644 = vst.msk [vmem:[#allocation3 + $0xa0] sm:$0xff] %vm27, %v4580
  %4645 = vst.msk [vmem:[#allocation3 + $0xa8] sm:$0xff] %vm27, %v4581
  %4646 = vst.msk [vmem:[#allocation3 + $0xb0] sm:$0xff] %vm27, %v4582
  %4647 = vst.msk [vmem:[#allocation3 + $0xb8] sm:$0xff] %vm27, %v4583
  %4648 = vst.msk [vmem:[#allocation3 + $0xc0] sm:$0xff] %vm27, %v4584
  %4649 = vst.msk [vmem:[#allocation3 + $0xc8] sm:$0xff] %vm27, %v4585
  %4650 = vst.msk [vmem:[#allocation3 + $0xd0] sm:$0xff] %vm27, %v4586
  %4651 = vst.msk [vmem:[#allocation3 + $0xd8] sm:$0xff] %vm27, %v4587
  %4652 = vst.msk [vmem:[#allocation3 + $0xe0] sm:$0xff] %vm27, %v4588
  %4653 = vst.msk [vmem:[#allocation3 + $0xe8] sm:$0xff] %vm27, %v4589
  %4654 = vst.msk [vmem:[#allocation3 + $0xf0] sm:$0xff] %vm27, %v4590
  %4655 = vst.msk [vmem:[#allocation3 + $0xf8] sm:$0xff] %vm27, %v4591
  %4656 = vst.msk [vmem:[#allocation3 + $0x100] sm:$0xff] %vm27, %v4592
  %4657 = vst.msk [vmem:[#allocation3 + $0x108] sm:$0xff] %vm27, %v4593
  %4658 = vst.msk [vmem:[#allocation3 + $0x110] sm:$0xff] %vm27, %v4594
  %4659 = vst.msk [vmem:[#allocation3 + $0x118] sm:$0xff] %vm27, %v4595
  %4660 = vst.msk [vmem:[#allocation3 + $0x120] sm:$0xff] %vm27, %v4596
  %4661 = vst.msk [vmem:[#allocation3 + $0x128] sm:$0xff] %vm27, %v4597
  %4662 = vst.msk [vmem:[#allocation3 + $0x130] sm:$0xff] %vm27, %v4598
  %4663 = vst.msk [vmem:[#allocation3 + $0x138] sm:$0xff] %vm27, %v4599
  %4664 = vst.msk [vmem:[#allocation3 + $0x140] sm:$0xff] %vm27, %v4600
  %4665 = vst.msk [vmem:[#allocation3 + $0x148] sm:$0xff] %vm27, %v4601
  %4666 = vst.msk [vmem:[#allocation3 + $0x150] sm:$0xff] %vm27, %v4602
  %4667 = vst.msk [vmem:[#allocation3 + $0x158] sm:$0xff] %vm27, %v4603
  %4668 = vst.msk [vmem:[#allocation3 + $0x160] sm:$0xff] %vm27, %v4604
  %4669 = vst.msk [vmem:[#allocation3 + $0x168] sm:$0xff] %vm27, %v4605
  %4670 = vst.msk [vmem:[#allocation3 + $0x170] sm:$0xff] %vm27, %v4606
  %4671 = vst.msk [vmem:[#allocation3 + $0x178] sm:$0xff] %vm27, %v4607
  %4672 = vst.msk [vmem:[#allocation3 + $0x180] sm:$0xff] %vm27, %v4608
  %4673 = vst.msk [vmem:[#allocation3 + $0x188] sm:$0xff] %vm27, %v4609
  %4674 = vst.msk [vmem:[#allocation3 + $0x190] sm:$0xff] %vm27, %v4610
  %4675 = vst.msk [vmem:[#allocation3 + $0x198] sm:$0xff] %vm27, %v4611
  %4676 = vst.msk [vmem:[#allocation3 + $0x1a0] sm:$0xff] %vm27, %v4612
  %4677 = vst.msk [vmem:[#allocation3 + $0x1a8] sm:$0xff] %vm27, %v4613
  %4678 = vst.msk [vmem:[#allocation3 + $0x1b0] sm:$0xff] %vm27, %v4614
  %4679 = vst.msk [vmem:[#allocation3 + $0x1b8] sm:$0xff] %vm27, %v4615
  %4680 = vst.msk [vmem:[#allocation3 + $0x1c0] sm:$0xff] %vm27, %v4616
  %4681 = vst.msk [vmem:[#allocation3 + $0x1c8] sm:$0xff] %vm27, %v4617
  %4682 = vst.msk [vmem:[#allocation3 + $0x1d0] sm:$0xff] %vm27, %v4618
  %4683 = vst.msk [vmem:[#allocation3 + $0x1d8] sm:$0xff] %vm27, %v4619
  %4684 = vst.msk [vmem:[#allocation3 + $0x1e0] sm:$0xff] %vm27, %v4620
  %4685 = vst.msk [vmem:[#allocation3 + $0x1e8] sm:$0xff] %vm27, %v4621
  %4686 = vst.msk [vmem:[#allocation3 + $0x1f0] sm:$0xff] %vm27, %v4622
  %4687 = vst.msk [vmem:[#allocation3 + $0x1f8] sm:$0xff] %vm27, %v4623
  %v4688 = vld [vmem:[#allocation2 + $0x1] sm:$0xff]
  %v4689 = vld [vmem:[#allocation2 + $0x9] sm:$0xff]
  %v4690 = vld [vmem:[#allocation2 + $0x19] sm:$0xff]
  %v4691 = vld [vmem:[#allocation2 + $0x21] sm:$0xff]
  %v4692 = vld [vmem:[#allocation2 + $0x31] sm:$0xff]
  %v4693 = vld [vmem:[#allocation2 + $0x39] sm:$0xff]
  %v4694 = vld [vmem:[#allocation2 + $0x49] sm:$0xff]
  %v4695 = vld [vmem:[#allocation2 + $0x51] sm:$0xff]
  %v4696 = vld [vmem:[#allocation2 + $0x61] sm:$0xff]
  %v4697 = vld [vmem:[#allocation2 + $0x69] sm:$0xff]
  %v4698 = vld [vmem:[#allocation2 + $0x79] sm:$0xff]
  %v4699 = vld [vmem:[#allocation2 + $0x81] sm:$0xff]
  %v4700 = vld [vmem:[#allocation2 + $0x91] sm:$0xff]
  %v4701 = vld [vmem:[#allocation2 + $0x99] sm:$0xff]
  %v4702 = vld [vmem:[#allocation2 + $0xa9] sm:$0xff]
  %v4703 = vld [vmem:[#allocation2 + $0xb1] sm:$0xff]
  %v4704 = vld [vmem:[#allocation2 + $0xc1] sm:$0xff]
  %v4705 = vld [vmem:[#allocation2 + $0xc9] sm:$0xff]
  %v4706 = vld [vmem:[#allocation2 + $0xd9] sm:$0xff]
  %v4707 = vld [vmem:[#allocation2 + $0xe1] sm:$0xff]
  %v4708 = vld [vmem:[#allocation2 + $0xf1] sm:$0xff]
  %v4709 = vld [vmem:[#allocation2 + $0xf9] sm:$0xff]
  %v4710 = vld [vmem:[#allocation2 + $0x109] sm:$0xff]
  %v4711 = vld [vmem:[#allocation2 + $0x111] sm:$0xff]
  %v4712 = vld [vmem:[#allocation2 + $0x121] sm:$0xff]
  %v4713 = vld [vmem:[#allocation2 + $0x129] sm:$0xff]
  %v4714 = vld [vmem:[#allocation2 + $0x139] sm:$0xff]
  %v4715 = vld [vmem:[#allocation2 + $0x141] sm:$0xff]
  %v4716 = vld [vmem:[#allocation2 + $0x151] sm:$0xff]
  %v4717 = vld [vmem:[#allocation2 + $0x159] sm:$0xff]
  %v4718 = vld [vmem:[#allocation2 + $0x169] sm:$0xff]
  %v4719 = vld [vmem:[#allocation2 + $0x171] sm:$0xff]
  %v4720 = vld [vmem:[#allocation2 + $0x1b1] sm:$0xff]
  %v4721 = vld [vmem:[#allocation2 + $0x1b9] sm:$0xff]
  %v4722 = vld [vmem:[#allocation2 + $0x1c9] sm:$0xff]
  %v4723 = vld [vmem:[#allocation2 + $0x1d1] sm:$0xff]
  %v4724 = vld [vmem:[#allocation2 + $0x1e1] sm:$0xff]
  %v4725 = vld [vmem:[#allocation2 + $0x1e9] sm:$0xff]
  %v4726 = vld [vmem:[#allocation2 + $0x1f9] sm:$0xff]
  %v4727 = vld [vmem:[#allocation2 + $0x201] sm:$0xff]
  %v4728 = vld [vmem:[#allocation2 + $0x211] sm:$0xff]
  %v4729 = vld [vmem:[#allocation2 + $0x219] sm:$0xff]
  %v4730 = vld [vmem:[#allocation2 + $0x229] sm:$0xff]
  %v4731 = vld [vmem:[#allocation2 + $0x231] sm:$0xff]
  %v4732 = vld [vmem:[#allocation2 + $0x241] sm:$0xff]
  %v4733 = vld [vmem:[#allocation2 + $0x249] sm:$0xff]
  %v4734 = vld [vmem:[#allocation2 + $0x259] sm:$0xff]
  %v4735 = vld [vmem:[#allocation2 + $0x261] sm:$0xff]
  %v4736 = vld [vmem:[#allocation2 + $0x271] sm:$0xff]
  %v4737 = vld [vmem:[#allocation2 + $0x279] sm:$0xff]
  %v4738 = vld [vmem:[#allocation2 + $0x289] sm:$0xff]
  %v4739 = vld [vmem:[#allocation2 + $0x291] sm:$0xff]
  %v4740 = vld [vmem:[#allocation2 + $0x2a1] sm:$0xff]
  %v4741 = vld [vmem:[#allocation2 + $0x2a9] sm:$0xff]
  %v4742 = vld [vmem:[#allocation2 + $0x2b9] sm:$0xff]
  %v4743 = vld [vmem:[#allocation2 + $0x2c1] sm:$0xff]
  %v4744 = vld [vmem:[#allocation2 + $0x2d1] sm:$0xff]
  %v4745 = vld [vmem:[#allocation2 + $0x2d9] sm:$0xff]
  %v4746 = vld [vmem:[#allocation2 + $0x2e9] sm:$0xff]
  %v4747 = vld [vmem:[#allocation2 + $0x2f1] sm:$0xff]
  %v4748 = vld [vmem:[#allocation2 + $0x301] sm:$0xff]
  %v4749 = vld [vmem:[#allocation2 + $0x309] sm:$0xff]
  %v4750 = vld [vmem:[#allocation2 + $0x319] sm:$0xff]
  %v4751 = vld [vmem:[#allocation2 + $0x321] sm:$0xff]
  %4816 = vrot.lane.b32.xlu0 %v4688, 4
  %v4817 = vpop.permute.xlu0 %4816
  %4818 = vrot.lane.b32.xlu0 %v4689, 4
  %v4819 = vpop.permute.xlu0 %4818
  %4820 = vrot.lane.b32.xlu0 %v4690, 4
  %v4821 = vpop.permute.xlu0 %4820
  %4822 = vrot.lane.b32.xlu0 %v4691, 4
  %v4823 = vpop.permute.xlu0 %4822
  %4824 = vrot.lane.b32.xlu0 %v4692, 4
  %v4825 = vpop.permute.xlu0 %4824
  %4826 = vrot.lane.b32.xlu0 %v4693, 4
  %v4827 = vpop.permute.xlu0 %4826
  %4828 = vrot.lane.b32.xlu0 %v4694, 4
  %v4829 = vpop.permute.xlu0 %4828
  %4830 = vrot.lane.b32.xlu0 %v4695, 4
  %v4831 = vpop.permute.xlu0 %4830
  %4832 = vrot.lane.b32.xlu0 %v4696, 4
  %v4833 = vpop.permute.xlu0 %4832
  %4834 = vrot.lane.b32.xlu0 %v4697, 4
  %v4835 = vpop.permute.xlu0 %4834
  %4836 = vrot.lane.b32.xlu0 %v4698, 4
  %v4837 = vpop.permute.xlu0 %4836
  %4838 = vrot.lane.b32.xlu0 %v4699, 4
  %v4839 = vpop.permute.xlu0 %4838
  %4840 = vrot.lane.b32.xlu0 %v4700, 4
  %v4841 = vpop.permute.xlu0 %4840
  %4842 = vrot.lane.b32.xlu0 %v4701, 4
  %v4843 = vpop.permute.xlu0 %4842
  %4844 = vrot.lane.b32.xlu0 %v4702, 4
  %v4845 = vpop.permute.xlu0 %4844
  %4846 = vrot.lane.b32.xlu0 %v4703, 4
  %v4847 = vpop.permute.xlu0 %4846
  %4848 = vrot.lane.b32.xlu0 %v4704, 4
  %v4849 = vpop.permute.xlu0 %4848
  %4850 = vrot.lane.b32.xlu0 %v4705, 4
  %v4851 = vpop.permute.xlu0 %4850
  %4852 = vrot.lane.b32.xlu0 %v4706, 4
  %v4853 = vpop.permute.xlu0 %4852
  %4854 = vrot.lane.b32.xlu0 %v4707, 4
  %v4855 = vpop.permute.xlu0 %4854
  %4856 = vrot.lane.b32.xlu0 %v4708, 4
  %v4857 = vpop.permute.xlu0 %4856
  %4858 = vrot.lane.b32.xlu0 %v4709, 4
  %v4859 = vpop.permute.xlu0 %4858
  %4860 = vrot.lane.b32.xlu0 %v4710, 4
  %v4861 = vpop.permute.xlu0 %4860
  %4862 = vrot.lane.b32.xlu0 %v4711, 4
  %v4863 = vpop.permute.xlu0 %4862
  %4864 = vrot.lane.b32.xlu0 %v4712, 4
  %v4865 = vpop.permute.xlu0 %4864
  %4866 = vrot.lane.b32.xlu0 %v4713, 4
  %v4867 = vpop.permute.xlu0 %4866
  %4868 = vrot.lane.b32.xlu0 %v4714, 4
  %v4869 = vpop.permute.xlu0 %4868
  %4870 = vrot.lane.b32.xlu0 %v4715, 4
  %v4871 = vpop.permute.xlu0 %4870
  %4872 = vrot.lane.b32.xlu0 %v4716, 4
  %v4873 = vpop.permute.xlu0 %4872
  %4874 = vrot.lane.b32.xlu0 %v4717, 4
  %v4875 = vpop.permute.xlu0 %4874
  %4876 = vrot.lane.b32.xlu0 %v4718, 4
  %v4877 = vpop.permute.xlu0 %4876
  %4878 = vrot.lane.b32.xlu0 %v4719, 4
  %v4879 = vpop.permute.xlu0 %4878
  %4880 = vrot.lane.b32.xlu0 %v4720, 4
  %v4881 = vpop.permute.xlu0 %4880
  %4882 = vrot.lane.b32.xlu0 %v4721, 4
  %v4883 = vpop.permute.xlu0 %4882
  %4884 = vrot.lane.b32.xlu0 %v4722, 4
  %v4885 = vpop.permute.xlu0 %4884
  %4886 = vrot.lane.b32.xlu0 %v4723, 4
  %v4887 = vpop.permute.xlu0 %4886
  %4888 = vrot.lane.b32.xlu0 %v4724, 4
  %v4889 = vpop.permute.xlu0 %4888
  %4890 = vrot.lane.b32.xlu0 %v4725, 4
  %v4891 = vpop.permute.xlu0 %4890
  %4892 = vrot.lane.b32.xlu0 %v4726, 4
  %v4893 = vpop.permute.xlu0 %4892
  %4894 = vrot.lane.b32.xlu0 %v4727, 4
  %v4895 = vpop.permute.xlu0 %4894
  %4896 = vrot.lane.b32.xlu0 %v4728, 4
  %v4897 = vpop.permute.xlu0 %4896
  %4898 = vrot.lane.b32.xlu0 %v4729, 4
  %v4899 = vpop.permute.xlu0 %4898
  %4900 = vrot.lane.b32.xlu0 %v4730, 4
  %v4901 = vpop.permute.xlu0 %4900
  %4902 = vrot.lane.b32.xlu0 %v4731, 4
  %v4903 = vpop.permute.xlu0 %4902
  %4904 = vrot.lane.b32.xlu0 %v4732, 4
  %v4905 = vpop.permute.xlu0 %4904
  %4906 = vrot.lane.b32.xlu0 %v4733, 4
  %v4907 = vpop.permute.xlu0 %4906
  %4908 = vrot.lane.b32.xlu0 %v4734, 4
  %v4909 = vpop.permute.xlu0 %4908
  %4910 = vrot.lane.b32.xlu0 %v4735, 4
  %v4911 = vpop.permute.xlu0 %4910
  %4912 = vrot.lane.b32.xlu0 %v4736, 4
  %v4913 = vpop.permute.xlu0 %4912
  %4914 = vrot.lane.b32.xlu0 %v4737, 4
  %v4915 = vpop.permute.xlu0 %4914
  %4916 = vrot.lane.b32.xlu0 %v4738, 4
  %v4917 = vpop.permute.xlu0 %4916
  %4918 = vrot.lane.b32.xlu0 %v4739, 4
  %v4919 = vpop.permute.xlu0 %4918
  %4920 = vrot.lane.b32.xlu0 %v4740, 4
  %v4921 = vpop.permute.xlu0 %4920
  %4922 = vrot.lane.b32.xlu0 %v4741, 4
  %v4923 = vpop.permute.xlu0 %4922
  %4924 = vrot.lane.b32.xlu0 %v4742, 4
  %v4925 = vpop.permute.xlu0 %4924
  %4926 = vrot.lane.b32.xlu0 %v4743, 4
  %v4927 = vpop.permute.xlu0 %4926
  %4928 = vrot.lane.b32.xlu0 %v4744, 4
  %v4929 = vpop.permute.xlu0 %4928
  %4930 = vrot.lane.b32.xlu0 %v4745, 4
  %v4931 = vpop.permute.xlu0 %4930
  %4932 = vrot.lane.b32.xlu0 %v4746, 4
  %v4933 = vpop.permute.xlu0 %4932
  %4934 = vrot.lane.b32.xlu0 %v4747, 4
  %v4935 = vpop.permute.xlu0 %4934
  %4936 = vrot.lane.b32.xlu0 %v4748, 4
  %v4937 = vpop.permute.xlu0 %4936
  %4938 = vrot.lane.b32.xlu0 %v4749, 4
  %v4939 = vpop.permute.xlu0 %4938
  %4940 = vrot.lane.b32.xlu0 %v4750, 4
  %v4941 = vpop.permute.xlu0 %4940
  %4942 = vrot.lane.b32.xlu0 %v4751, 4
  %v4943 = vpop.permute.xlu0 %4942
  %5008 = vst.msk [vmem:[#allocation3] sm:$0xff] %vm684, %v4817
  %5009 = vst.msk [vmem:[#allocation3 + $0x8] sm:$0xff] %vm684, %v4819
  %5010 = vst.msk [vmem:[#allocation3 + $0x10] sm:$0xff] %vm684, %v4821
  %5011 = vst.msk [vmem:[#allocation3 + $0x18] sm:$0xff] %vm684, %v4823
  %5012 = vst.msk [vmem:[#allocation3 + $0x20] sm:$0xff] %vm684, %v4825
  %5013 = vst.msk [vmem:[#allocation3 + $0x28] sm:$0xff] %vm684, %v4827
  %5014 = vst.msk [vmem:[#allocation3 + $0x30] sm:$0xff] %vm684, %v4829
  %5015 = vst.msk [vmem:[#allocation3 + $0x38] sm:$0xff] %vm684, %v4831
  %5016 = vst.msk [vmem:[#allocation3 + $0x40] sm:$0xff] %vm684, %v4833
  %5017 = vst.msk [vmem:[#allocation3 + $0x48] sm:$0xff] %vm684, %v4835
  %5018 = vst.msk [vmem:[#allocation3 + $0x50] sm:$0xff] %vm684, %v4837
  %5019 = vst.msk [vmem:[#allocation3 + $0x58] sm:$0xff] %vm684, %v4839
  %5020 = vst.msk [vmem:[#allocation3 + $0x60] sm:$0xff] %vm684, %v4841
  %5021 = vst.msk [vmem:[#allocation3 + $0x68] sm:$0xff] %vm684, %v4843
  %5022 = vst.msk [vmem:[#allocation3 + $0x70] sm:$0xff] %vm684, %v4845
  %5023 = vst.msk [vmem:[#allocation3 + $0x78] sm:$0xff] %vm684, %v4847
  %5024 = vst.msk [vmem:[#allocation3 + $0x80] sm:$0xff] %vm684, %v4849
  %5025 = vst.msk [vmem:[#allocation3 + $0x88] sm:$0xff] %vm684, %v4851
  %5026 = vst.msk [vmem:[#allocation3 + $0x90] sm:$0xff] %vm684, %v4853
  %5027 = vst.msk [vmem:[#allocation3 + $0x98] sm:$0xff] %vm684, %v4855
  %5028 = vst.msk [vmem:[#allocation3 + $0xa0] sm:$0xff] %vm684, %v4857
  %5029 = vst.msk [vmem:[#allocation3 + $0xa8] sm:$0xff] %vm684, %v4859
  %5030 = vst.msk [vmem:[#allocation3 + $0xb0] sm:$0xff] %vm684, %v4861
  %5031 = vst.msk [vmem:[#allocation3 + $0xb8] sm:$0xff] %vm684, %v4863
  %5032 = vst.msk [vmem:[#allocation3 + $0xc0] sm:$0xff] %vm684, %v4865
  %5033 = vst.msk [vmem:[#allocation3 + $0xc8] sm:$0xff] %vm684, %v4867
  %5034 = vst.msk [vmem:[#allocation3 + $0xd0] sm:$0xff] %vm684, %v4869
  %5035 = vst.msk [vmem:[#allocation3 + $0xd8] sm:$0xff] %vm684, %v4871
  %5036 = vst.msk [vmem:[#allocation3 + $0xe0] sm:$0xff] %vm684, %v4873
  %5037 = vst.msk [vmem:[#allocation3 + $0xe8] sm:$0xff] %vm684, %v4875
  %5038 = vst.msk [vmem:[#allocation3 + $0xf0] sm:$0xff] %vm684, %v4877
  %5039 = vst.msk [vmem:[#allocation3 + $0xf8] sm:$0xff] %vm684, %v4879
  %5040 = vst.msk [vmem:[#allocation3 + $0x100] sm:$0xff] %vm684, %v4881
  %5041 = vst.msk [vmem:[#allocation3 + $0x108] sm:$0xff] %vm684, %v4883
  %5042 = vst.msk [vmem:[#allocation3 + $0x110] sm:$0xff] %vm684, %v4885
  %5043 = vst.msk [vmem:[#allocation3 + $0x118] sm:$0xff] %vm684, %v4887
  %5044 = vst.msk [vmem:[#allocation3 + $0x120] sm:$0xff] %vm684, %v4889
  %5045 = vst.msk [vmem:[#allocation3 + $0x128] sm:$0xff] %vm684, %v4891
  %5046 = vst.msk [vmem:[#allocation3 + $0x130] sm:$0xff] %vm684, %v4893
  %5047 = vst.msk [vmem:[#allocation3 + $0x138] sm:$0xff] %vm684, %v4895
  %5048 = vst.msk [vmem:[#allocation3 + $0x140] sm:$0xff] %vm684, %v4897
  %5049 = vst.msk [vmem:[#allocation3 + $0x148] sm:$0xff] %vm684, %v4899
  %5050 = vst.msk [vmem:[#allocation3 + $0x150] sm:$0xff] %vm684, %v4901
  %5051 = vst.msk [vmem:[#allocation3 + $0x158] sm:$0xff] %vm684, %v4903
  %5052 = vst.msk [vmem:[#allocation3 + $0x160] sm:$0xff] %vm684, %v4905
  %5053 = vst.msk [vmem:[#allocation3 + $0x168] sm:$0xff] %vm684, %v4907
  %5054 = vst.msk [vmem:[#allocation3 + $0x170] sm:$0xff] %vm684, %v4909
  %5055 = vst.msk [vmem:[#allocation3 + $0x178] sm:$0xff] %vm684, %v4911
  %5056 = vst.msk [vmem:[#allocation3 + $0x180] sm:$0xff] %vm684, %v4913
  %5057 = vst.msk [vmem:[#allocation3 + $0x188] sm:$0xff] %vm684, %v4915
  %5058 = vst.msk [vmem:[#allocation3 + $0x190] sm:$0xff] %vm684, %v4917
  %5059 = vst.msk [vmem:[#allocation3 + $0x198] sm:$0xff] %vm684, %v4919
  %5060 = vst.msk [vmem:[#allocation3 + $0x1a0] sm:$0xff] %vm684, %v4921
  %5061 = vst.msk [vmem:[#allocation3 + $0x1a8] sm:$0xff] %vm684, %v4923
  %5062 = vst.msk [vmem:[#allocation3 + $0x1b0] sm:$0xff] %vm684, %v4925
  %5063 = vst.msk [vmem:[#allocation3 + $0x1b8] sm:$0xff] %vm684, %v4927
  %5064 = vst.msk [vmem:[#allocation3 + $0x1c0] sm:$0xff] %vm684, %v4929
  %5065 = vst.msk [vmem:[#allocation3 + $0x1c8] sm:$0xff] %vm684, %v4931
  %5066 = vst.msk [vmem:[#allocation3 + $0x1d0] sm:$0xff] %vm684, %v4933
  %5067 = vst.msk [vmem:[#allocation3 + $0x1d8] sm:$0xff] %vm684, %v4935
  %5068 = vst.msk [vmem:[#allocation3 + $0x1e0] sm:$0xff] %vm684, %v4937
  %5069 = vst.msk [vmem:[#allocation3 + $0x1e8] sm:$0xff] %vm684, %v4939
  %5070 = vst.msk [vmem:[#allocation3 + $0x1f0] sm:$0xff] %vm684, %v4941
  %5071 = vst.msk [vmem:[#allocation3 + $0x1f8] sm:$0xff] %vm684, %v4943
  %v5072 = vld [vmem:[#allocation2 + $0x2] sm:$0xff]
  %v5073 = vld [vmem:[#allocation2 + $0xa] sm:$0xff]
  %v5074 = vld [vmem:[#allocation2 + $0x1a] sm:$0xff]
  %v5075 = vld [vmem:[#allocation2 + $0x22] sm:$0xff]
  %v5076 = vld [vmem:[#allocation2 + $0x32] sm:$0xff]
  %v5077 = vld [vmem:[#allocation2 + $0x3a] sm:$0xff]
  %v5078 = vld [vmem:[#allocation2 + $0x4a] sm:$0xff]
  %v5079 = vld [vmem:[#allocation2 + $0x52] sm:$0xff]
  %v5080 = vld [vmem:[#allocation2 + $0x62] sm:$0xff]
  %v5081 = vld [vmem:[#allocation2 + $0x6a] sm:$0xff]
  %v5082 = vld [vmem:[#allocation2 + $0x7a] sm:$0xff]
  %v5083 = vld [vmem:[#allocation2 + $0x82] sm:$0xff]
  %v5084 = vld [vmem:[#allocation2 + $0x92] sm:$0xff]
  %v5085 = vld [vmem:[#allocation2 + $0x9a] sm:$0xff]
  %v5086 = vld [vmem:[#allocation2 + $0xaa] sm:$0xff]
  %v5087 = vld [vmem:[#allocation2 + $0xb2] sm:$0xff]
  %v5088 = vld [vmem:[#allocation2 + $0xc2] sm:$0xff]
  %v5089 = vld [vmem:[#allocation2 + $0xca] sm:$0xff]
  %v5090 = vld [vmem:[#allocation2 + $0xda] sm:$0xff]
  %v5091 = vld [vmem:[#allocation2 + $0xe2] sm:$0xff]
  %v5092 = vld [vmem:[#allocation2 + $0xf2] sm:$0xff]
  %v5093 = vld [vmem:[#allocation2 + $0xfa] sm:$0xff]
  %v5094 = vld [vmem:[#allocation2 + $0x10a] sm:$0xff]
  %v5095 = vld [vmem:[#allocation2 + $0x112] sm:$0xff]
  %v5096 = vld [vmem:[#allocation2 + $0x122] sm:$0xff]
  %v5097 = vld [vmem:[#allocation2 + $0x12a] sm:$0xff]
  %v5098 = vld [vmem:[#allocation2 + $0x13a] sm:$0xff]
  %v5099 = vld [vmem:[#allocation2 + $0x142] sm:$0xff]
  %v5100 = vld [vmem:[#allocation2 + $0x152] sm:$0xff]
  %v5101 = vld [vmem:[#allocation2 + $0x15a] sm:$0xff]
  %v5102 = vld [vmem:[#allocation2 + $0x16a] sm:$0xff]
  %v5103 = vld [vmem:[#allocation2 + $0x172] sm:$0xff]
  %v5104 = vld [vmem:[#allocation2 + $0x1b2] sm:$0xff]
  %v5105 = vld [vmem:[#allocation2 + $0x1ba] sm:$0xff]
  %v5106 = vld [vmem:[#allocation2 + $0x1ca] sm:$0xff]
  %v5107 = vld [vmem:[#allocation2 + $0x1d2] sm:$0xff]
  %v5108 = vld [vmem:[#allocation2 + $0x1e2] sm:$0xff]
  %v5109 = vld [vmem:[#allocation2 + $0x1ea] sm:$0xff]
  %v5110 = vld [vmem:[#allocation2 + $0x1fa] sm:$0xff]
  %v5111 = vld [vmem:[#allocation2 + $0x202] sm:$0xff]
  %v5112 = vld [vmem:[#allocation2 + $0x212] sm:$0xff]
  %v5113 = vld [vmem:[#allocation2 + $0x21a] sm:$0xff]
  %v5114 = vld [vmem:[#allocation2 + $0x22a] sm:$0xff]
  %v5115 = vld [vmem:[#allocation2 + $0x232] sm:$0xff]
  %v5116 = vld [vmem:[#allocation2 + $0x242] sm:$0xff]
  %v5117 = vld [vmem:[#allocation2 + $0x24a] sm:$0xff]
  %v5118 = vld [vmem:[#allocation2 + $0x25a] sm:$0xff]
  %v5119 = vld [vmem:[#allocation2 + $0x262] sm:$0xff]
  %v5120 = vld [vmem:[#allocation2 + $0x272] sm:$0xff]
  %v5121 = vld [vmem:[#allocation2 + $0x27a] sm:$0xff]
  %v5122 = vld [vmem:[#allocation2 + $0x28a] sm:$0xff]
  %v5123 = vld [vmem:[#allocation2 + $0x292] sm:$0xff]
  %v5124 = vld [vmem:[#allocation2 + $0x2a2] sm:$0xff]
  %v5125 = vld [vmem:[#allocation2 + $0x2aa] sm:$0xff]
  %v5126 = vld [vmem:[#allocation2 + $0x2ba] sm:$0xff]
  %v5127 = vld [vmem:[#allocation2 + $0x2c2] sm:$0xff]
  %v5128 = vld [vmem:[#allocation2 + $0x2d2] sm:$0xff]
  %v5129 = vld [vmem:[#allocation2 + $0x2da] sm:$0xff]
  %v5130 = vld [vmem:[#allocation2 + $0x2ea] sm:$0xff]
  %v5131 = vld [vmem:[#allocation2 + $0x2f2] sm:$0xff]
  %v5132 = vld [vmem:[#allocation2 + $0x302] sm:$0xff]
  %v5133 = vld [vmem:[#allocation2 + $0x30a] sm:$0xff]
  %v5134 = vld [vmem:[#allocation2 + $0x31a] sm:$0xff]
  %v5135 = vld [vmem:[#allocation2 + $0x322] sm:$0xff]
  %5200 = vrot.lane.b32.xlu0 %v5072, 8
  %v5201 = vpop.permute.xlu0 %5200
  %5202 = vrot.lane.b32.xlu0 %v5073, 8
  %v5203 = vpop.permute.xlu0 %5202
  %5204 = vrot.lane.b32.xlu0 %v5074, 8
  %v5205 = vpop.permute.xlu0 %5204
  %5206 = vrot.lane.b32.xlu0 %v5075, 8
  %v5207 = vpop.permute.xlu0 %5206
  %5208 = vrot.lane.b32.xlu0 %v5076, 8
  %v5209 = vpop.permute.xlu0 %5208
  %5210 = vrot.lane.b32.xlu0 %v5077, 8
  %v5211 = vpop.permute.xlu0 %5210
  %5212 = vrot.lane.b32.xlu0 %v5078, 8
  %v5213 = vpop.permute.xlu0 %5212
  %5214 = vrot.lane.b32.xlu0 %v5079, 8
  %v5215 = vpop.permute.xlu0 %5214
  %5216 = vrot.lane.b32.xlu0 %v5080, 8
  %v5217 = vpop.permute.xlu0 %5216
  %5218 = vrot.lane.b32.xlu0 %v5081, 8
  %v5219 = vpop.permute.xlu0 %5218
  %5220 = vrot.lane.b32.xlu0 %v5082, 8
  %v5221 = vpop.permute.xlu0 %5220
  %5222 = vrot.lane.b32.xlu0 %v5083, 8
  %v5223 = vpop.permute.xlu0 %5222
  %5224 = vrot.lane.b32.xlu0 %v5084, 8
  %v5225 = vpop.permute.xlu0 %5224
  %5226 = vrot.lane.b32.xlu0 %v5085, 8
  %v5227 = vpop.permute.xlu0 %5226
  %5228 = vrot.lane.b32.xlu0 %v5086, 8
  %v5229 = vpop.permute.xlu0 %5228
  %5230 = vrot.lane.b32.xlu0 %v5087, 8
  %v5231 = vpop.permute.xlu0 %5230
  %5232 = vrot.lane.b32.xlu0 %v5088, 8
  %v5233 = vpop.permute.xlu0 %5232
  %5234 = vrot.lane.b32.xlu0 %v5089, 8
  %v5235 = vpop.permute.xlu0 %5234
  %5236 = vrot.lane.b32.xlu0 %v5090, 8
  %v5237 = vpop.permute.xlu0 %5236
  %5238 = vrot.lane.b32.xlu0 %v5091, 8
  %v5239 = vpop.permute.xlu0 %5238
  %5240 = vrot.lane.b32.xlu0 %v5092, 8
  %v5241 = vpop.permute.xlu0 %5240
  %5242 = vrot.lane.b32.xlu0 %v5093, 8
  %v5243 = vpop.permute.xlu0 %5242
  %5244 = vrot.lane.b32.xlu0 %v5094, 8
  %v5245 = vpop.permute.xlu0 %5244
  %5246 = vrot.lane.b32.xlu0 %v5095, 8
  %v5247 = vpop.permute.xlu0 %5246
  %5248 = vrot.lane.b32.xlu0 %v5096, 8
  %v5249 = vpop.permute.xlu0 %5248
  %5250 = vrot.lane.b32.xlu0 %v5097, 8
  %v5251 = vpop.permute.xlu0 %5250
  %5252 = vrot.lane.b32.xlu0 %v5098, 8
  %v5253 = vpop.permute.xlu0 %5252
  %5254 = vrot.lane.b32.xlu0 %v5099, 8
  %v5255 = vpop.permute.xlu0 %5254
  %5256 = vrot.lane.b32.xlu0 %v5100, 8
  %v5257 = vpop.permute.xlu0 %5256
  %5258 = vrot.lane.b32.xlu0 %v5101, 8
  %v5259 = vpop.permute.xlu0 %5258
  %5260 = vrot.lane.b32.xlu0 %v5102, 8
  %v5261 = vpop.permute.xlu0 %5260
  %5262 = vrot.lane.b32.xlu0 %v5103, 8
  %v5263 = vpop.permute.xlu0 %5262
  %5264 = vrot.lane.b32.xlu0 %v5104, 8
  %v5265 = vpop.permute.xlu0 %5264
  %5266 = vrot.lane.b32.xlu0 %v5105, 8
  %v5267 = vpop.permute.xlu0 %5266
  %5268 = vrot.lane.b32.xlu0 %v5106, 8
  %v5269 = vpop.permute.xlu0 %5268
  %5270 = vrot.lane.b32.xlu0 %v5107, 8
  %v5271 = vpop.permute.xlu0 %5270
  %5272 = vrot.lane.b32.xlu0 %v5108, 8
  %v5273 = vpop.permute.xlu0 %5272
  %5274 = vrot.lane.b32.xlu0 %v5109, 8
  %v5275 = vpop.permute.xlu0 %5274
  %5276 = vrot.lane.b32.xlu0 %v5110, 8
  %v5277 = vpop.permute.xlu0 %5276
  %5278 = vrot.lane.b32.xlu0 %v5111, 8
  %v5279 = vpop.permute.xlu0 %5278
  %5280 = vrot.lane.b32.xlu0 %v5112, 8
  %v5281 = vpop.permute.xlu0 %5280
  %5282 = vrot.lane.b32.xlu0 %v5113, 8
  %v5283 = vpop.permute.xlu0 %5282
  %5284 = vrot.lane.b32.xlu0 %v5114, 8
  %v5285 = vpop.permute.xlu0 %5284
  %5286 = vrot.lane.b32.xlu0 %v5115, 8
  %v5287 = vpop.permute.xlu0 %5286
  %5288 = vrot.lane.b32.xlu0 %v5116, 8
  %v5289 = vpop.permute.xlu0 %5288
  %5290 = vrot.lane.b32.xlu0 %v5117, 8
  %v5291 = vpop.permute.xlu0 %5290
  %5292 = vrot.lane.b32.xlu0 %v5118, 8
  %v5293 = vpop.permute.xlu0 %5292
  %5294 = vrot.lane.b32.xlu0 %v5119, 8
  %v5295 = vpop.permute.xlu0 %5294
  %5296 = vrot.lane.b32.xlu0 %v5120, 8
  %v5297 = vpop.permute.xlu0 %5296
  %5298 = vrot.lane.b32.xlu0 %v5121, 8
  %v5299 = vpop.permute.xlu0 %5298
  %5300 = vrot.lane.b32.xlu0 %v5122, 8
  %v5301 = vpop.permute.xlu0 %5300
  %5302 = vrot.lane.b32.xlu0 %v5123, 8
  %v5303 = vpop.permute.xlu0 %5302
  %5304 = vrot.lane.b32.xlu0 %v5124, 8
  %v5305 = vpop.permute.xlu0 %5304
  %5306 = vrot.lane.b32.xlu0 %v5125, 8
  %v5307 = vpop.permute.xlu0 %5306
  %5308 = vrot.lane.b32.xlu0 %v5126, 8
  %v5309 = vpop.permute.xlu0 %5308
  %5310 = vrot.lane.b32.xlu0 %v5127, 8
  %v5311 = vpop.permute.xlu0 %5310
  %5312 = vrot.lane.b32.xlu0 %v5128, 8
  %v5313 = vpop.permute.xlu0 %5312
  %5314 = vrot.lane.b32.xlu0 %v5129, 8
  %v5315 = vpop.permute.xlu0 %5314
  %5316 = vrot.lane.b32.xlu0 %v5130, 8
  %v5317 = vpop.permute.xlu0 %5316
  %5318 = vrot.lane.b32.xlu0 %v5131, 8
  %v5319 = vpop.permute.xlu0 %5318
  %5320 = vrot.lane.b32.xlu0 %v5132, 8
  %v5321 = vpop.permute.xlu0 %5320
  %5322 = vrot.lane.b32.xlu0 %v5133, 8
  %v5323 = vpop.permute.xlu0 %5322
  %5324 = vrot.lane.b32.xlu0 %v5134, 8
  %v5325 = vpop.permute.xlu0 %5324
  %5326 = vrot.lane.b32.xlu0 %v5135, 8
  %v5327 = vpop.permute.xlu0 %5326
  %5392 = vst.msk [vmem:[#allocation3] sm:$0xff] %vm1069, %v5201
  %5393 = vst.msk [vmem:[#allocation3 + $0x8] sm:$0xff] %vm1069, %v5203
  %5394 = vst.msk [vmem:[#allocation3 + $0x10] sm:$0xff] %vm1069, %v5205
  %5395 = vst.msk [vmem:[#allocation3 + $0x18] sm:$0xff] %vm1069, %v5207
  %5396 = vst.msk [vmem:[#allocation3 + $0x20] sm:$0xff] %vm1069, %v5209
  %5397 = vst.msk [vmem:[#allocation3 + $0x28] sm:$0xff] %vm1069, %v5211
  %5398 = vst.msk [vmem:[#allocation3 + $0x30] sm:$0xff] %vm1069, %v5213
  %5399 = vst.msk [vmem:[#allocation3 + $0x38] sm:$0xff] %vm1069, %v5215
  %5400 = vst.msk [vmem:[#allocation3 + $0x40] sm:$0xff] %vm1069, %v5217
  %5401 = vst.msk [vmem:[#allocation3 + $0x48] sm:$0xff] %vm1069, %v5219
  %5402 = vst.msk [vmem:[#allocation3 + $0x50] sm:$0xff] %vm1069, %v5221
  %5403 = vst.msk [vmem:[#allocation3 + $0x58] sm:$0xff] %vm1069, %v5223
  %5404 = vst.msk [vmem:[#allocation3 + $0x60] sm:$0xff] %vm1069, %v5225
  %5405 = vst.msk [vmem:[#allocation3 + $0x68] sm:$0xff] %vm1069, %v5227
  %5406 = vst.msk [vmem:[#allocation3 + $0x70] sm:$0xff] %vm1069, %v5229
  %5407 = vst.msk [vmem:[#allocation3 + $0x78] sm:$0xff] %vm1069, %v5231
  %5408 = vst.msk [vmem:[#allocation3 + $0x80] sm:$0xff] %vm1069, %v5233
  %5409 = vst.msk [vmem:[#allocation3 + $0x88] sm:$0xff] %vm1069, %v5235
  %5410 = vst.msk [vmem:[#allocation3 + $0x90] sm:$0xff] %vm1069, %v5237
  %5411 = vst.msk [vmem:[#allocation3 + $0x98] sm:$0xff] %vm1069, %v5239
  %5412 = vst.msk [vmem:[#allocation3 + $0xa0] sm:$0xff] %vm1069, %v5241
  %5413 = vst.msk [vmem:[#allocation3 + $0xa8] sm:$0xff] %vm1069, %v5243
  %5414 = vst.msk [vmem:[#allocation3 + $0xb0] sm:$0xff] %vm1069, %v5245
  %5415 = vst.msk [vmem:[#allocation3 + $0xb8] sm:$0xff] %vm1069, %v5247
  %5416 = vst.msk [vmem:[#allocation3 + $0xc0] sm:$0xff] %vm1069, %v5249
  %5417 = vst.msk [vmem:[#allocation3 + $0xc8] sm:$0xff] %vm1069, %v5251
  %5418 = vst.msk [vmem:[#allocation3 + $0xd0] sm:$0xff] %vm1069, %v5253
  %5419 = vst.msk [vmem:[#allocation3 + $0xd8] sm:$0xff] %vm1069, %v5255
  %5420 = vst.msk [vmem:[#allocation3 + $0xe0] sm:$0xff] %vm1069, %v5257
  %5421 = vst.msk [vmem:[#allocation3 + $0xe8] sm:$0xff] %vm1069, %v5259
  %5422 = vst.msk [vmem:[#allocation3 + $0xf0] sm:$0xff] %vm1069, %v5261
  %5423 = vst.msk [vmem:[#allocation3 + $0xf8] sm:$0xff] %vm1069, %v5263
  %5424 = vst.msk [vmem:[#allocation3 + $0x100] sm:$0xff] %vm1069, %v5265
  %5425 = vst.msk [vmem:[#allocation3 + $0x108] sm:$0xff] %vm1069, %v5267
  %5426 = vst.msk [vmem:[#allocation3 + $0x110] sm:$0xff] %vm1069, %v5269
  %5427 = vst.msk [vmem:[#allocation3 + $0x118] sm:$0xff] %vm1069, %v5271
  %5428 = vst.msk [vmem:[#allocation3 + $0x120] sm:$0xff] %vm1069, %v5273
  %5429 = vst.msk [vmem:[#allocation3 + $0x128] sm:$0xff] %vm1069, %v5275
  %5430 = vst.msk [vmem:[#allocation3 + $0x130] sm:$0xff] %vm1069, %v5277
  %5431 = vst.msk [vmem:[#allocation3 + $0x138] sm:$0xff] %vm1069, %v5279
  %5432 = vst.msk [vmem:[#allocation3 + $0x140] sm:$0xff] %vm1069, %v5281
  %5433 = vst.msk [vmem:[#allocation3 + $0x148] sm:$0xff] %vm1069, %v5283
  %5434 = vst.msk [vmem:[#allocation3 + $0x150] sm:$0xff] %vm1069, %v5285
  %5435 = vst.msk [vmem:[#allocation3 + $0x158] sm:$0xff] %vm1069, %v5287
  %5436 = vst.msk [vmem:[#allocation3 + $0x160] sm:$0xff] %vm1069, %v5289
  %5437 = vst.msk [vmem:[#allocation3 + $0x168] sm:$0xff] %vm1069, %v5291
  %5438 = vst.msk [vmem:[#allocation3 + $0x170] sm:$0xff] %vm1069, %v5293
  %5439 = vst.msk [vmem:[#allocation3 + $0x178] sm:$0xff] %vm1069, %v5295
  %5440 = vst.msk [vmem:[#allocation3 + $0x180] sm:$0xff] %vm1069, %v5297
  %5441 = vst.msk [vmem:[#allocation3 + $0x188] sm:$0xff] %vm1069, %v5299
  %5442 = vst.msk [vmem:[#allocation3 + $0x190] sm:$0xff] %vm1069, %v5301
  %5443 = vst.msk [vmem:[#allocation3 + $0x198] sm:$0xff] %vm1069, %v5303
  %5444 = vst.msk [vmem:[#allocation3 + $0x1a0] sm:$0xff] %vm1069, %v5305
  %5445 = vst.msk [vmem:[#allocation3 + $0x1a8] sm:$0xff] %vm1069, %v5307
  %5446 = vst.msk [vmem:[#allocation3 + $0x1b0] sm:$0xff] %vm1069, %v5309
  %5447 = vst.msk [vmem:[#allocation3 + $0x1b8] sm:$0xff] %vm1069, %v5311
  %5448 = vst.msk [vmem:[#allocation3 + $0x1c0] sm:$0xff] %vm1069, %v5313
  %5449 = vst.msk [vmem:[#allocation3 + $0x1c8] sm:$0xff] %vm1069, %v5315
  %5450 = vst.msk [vmem:[#allocation3 + $0x1d0] sm:$0xff] %vm1069, %v5317
  %5451 = vst.msk [vmem:[#allocation3 + $0x1d8] sm:$0xff] %vm1069, %v5319
  %5452 = vst.msk [vmem:[#allocation3 + $0x1e0] sm:$0xff] %vm1069, %v5321
  %5453 = vst.msk [vmem:[#allocation3 + $0x1e8] sm:$0xff] %vm1069, %v5323
  %5454 = vst.msk [vmem:[#allocation3 + $0x1f0] sm:$0xff] %vm1069, %v5325
  %5455 = vst.msk [vmem:[#allocation3 + $0x1f8] sm:$0xff] %vm1069, %v5327
  %v5456 = vld [vmem:[%s42] sm:$0xff]
  %v5457 = vld [vmem:[%s42 + $0x8] sm:$0xff]
  %v5458 = vld [vmem:[%s42 + $0x18] sm:$0xff]
  %v5459 = vld [vmem:[%s42 + $0x20] sm:$0xff]
  %v5460 = vld [vmem:[%s42 + $0x30] sm:$0xff]
  %v5461 = vld [vmem:[%s42 + $0x38] sm:$0xff]
  %v5462 = vld [vmem:[%s42 + $0x48] sm:$0xff]
  %v5463 = vld [vmem:[%s42 + $0x50] sm:$0xff]
  %v5464 = vld [vmem:[%s42 + $0x60] sm:$0xff]
  %v5465 = vld [vmem:[%s42 + $0x68] sm:$0xff]
  %v5466 = vld [vmem:[%s42 + $0x78] sm:$0xff]
  %v5467 = vld [vmem:[%s42 + $0x80] sm:$0xff]
  %v5468 = vld [vmem:[%s42 + $0x90] sm:$0xff]
  %v5469 = vld [vmem:[%s42 + $0x98] sm:$0xff]
  %v5470 = vld [vmem:[%s42 + $0xa8] sm:$0xff]
  %v5471 = vld [vmem:[%s42 + $0xb0] sm:$0xff]
  %v5472 = vld [vmem:[%s42 + $0xc0] sm:$0xff]
  %v5473 = vld [vmem:[%s42 + $0xc8] sm:$0xff]
  %v5474 = vld [vmem:[%s42 + $0xd8] sm:$0xff]
  %v5475 = vld [vmem:[%s42 + $0xe0] sm:$0xff]
  %v5476 = vld [vmem:[%s42 + $0xf0] sm:$0xff]
  %v5477 = vld [vmem:[%s42 + $0xf8] sm:$0xff]
  %v5478 = vld [vmem:[%s42 + $0x108] sm:$0xff]
  %v5479 = vld [vmem:[%s42 + $0x110] sm:$0xff]
  %v5480 = vld [vmem:[%s42 + $0x120] sm:$0xff]
  %v5481 = vld [vmem:[%s42 + $0x128] sm:$0xff]
  %v5482 = vld [vmem:[%s42 + $0x138] sm:$0xff]
  %v5483 = vld [vmem:[%s42 + $0x140] sm:$0xff]
  %v5484 = vld [vmem:[%s42 + $0x150] sm:$0xff]
  %v5485 = vld [vmem:[%s42 + $0x158] sm:$0xff]
  %v5486 = vld [vmem:[%s42 + $0x168] sm:$0xff]
  %v5487 = vld [vmem:[%s42 + $0x170] sm:$0xff]
  %v5488 = vld [vmem:[%s42 + $0x1b0] sm:$0xff]
  %v5489 = vld [vmem:[%s42 + $0x1b8] sm:$0xff]
  %v5490 = vld [vmem:[%s42 + $0x1c8] sm:$0xff]
  %v5491 = vld [vmem:[%s42 + $0x1d0] sm:$0xff]
  %v5492 = vld [vmem:[%s42 + $0x1e0] sm:$0xff]
  %v5493 = vld [vmem:[%s42 + $0x1e8] sm:$0xff]
  %v5494 = vld [vmem:[%s42 + $0x1f8] sm:$0xff]
  %v5495 = vld [vmem:[%s42 + $0x200] sm:$0xff]
  %v5496 = vld [vmem:[%s42 + $0x210] sm:$0xff]
  %v5497 = vld [vmem:[%s42 + $0x218] sm:$0xff]
  %v5498 = vld [vmem:[%s42 + $0x228] sm:$0xff]
  %v5499 = vld [vmem:[%s42 + $0x230] sm:$0xff]
  %v5500 = vld [vmem:[%s42 + $0x240] sm:$0xff]
  %v5501 = vld [vmem:[%s42 + $0x248] sm:$0xff]
  %v5502 = vld [vmem:[%s42 + $0x258] sm:$0xff]
  %v5503 = vld [vmem:[%s42 + $0x260] sm:$0xff]
  %v5504 = vld [vmem:[%s42 + $0x270] sm:$0xff]
  %v5505 = vld [vmem:[%s42 + $0x278] sm:$0xff]
  %v5506 = vld [vmem:[%s42 + $0x288] sm:$0xff]
  %v5507 = vld [vmem:[%s42 + $0x290] sm:$0xff]
  %v5508 = vld [vmem:[%s42 + $0x2a0] sm:$0xff]
  %v5509 = vld [vmem:[%s42 + $0x2a8] sm:$0xff]
  %v5510 = vld [vmem:[%s42 + $0x2b8] sm:$0xff]
  %v5511 = vld [vmem:[%s42 + $0x2c0] sm:$0xff]
  %v5512 = vld [vmem:[%s42 + $0x2d0] sm:$0xff]
  %v5513 = vld [vmem:[%s42 + $0x2d8] sm:$0xff]
  %v5514 = vld [vmem:[%s42 + $0x2e8] sm:$0xff]
  %v5515 = vld [vmem:[%s42 + $0x2f0] sm:$0xff]
  %v5516 = vld [vmem:[%s42 + $0x300] sm:$0xff]
  %v5517 = vld [vmem:[%s42 + $0x308] sm:$0xff]
  %v5518 = vld [vmem:[%s42 + $0x318] sm:$0xff]
  %v5519 = vld [vmem:[%s42 + $0x320] sm:$0xff]
  %5584 = vrot.lane.b32.xlu0 %v5456, 12
  %v5585 = vpop.permute.xlu0 %5584
  %5586 = vrot.lane.b32.xlu0 %v5457, 12
  %v5587 = vpop.permute.xlu0 %5586
  %5588 = vrot.lane.b32.xlu0 %v5458, 12
  %v5589 = vpop.permute.xlu0 %5588
  %5590 = vrot.lane.b32.xlu0 %v5459, 12
  %v5591 = vpop.permute.xlu0 %5590
  %5592 = vrot.lane.b32.xlu0 %v5460, 12
  %v5593 = vpop.permute.xlu0 %5592
  %5594 = vrot.lane.b32.xlu0 %v5461, 12
  %v5595 = vpop.permute.xlu0 %5594
  %5596 = vrot.lane.b32.xlu0 %v5462, 12
  %v5597 = vpop.permute.xlu0 %5596
  %5598 = vrot.lane.b32.xlu0 %v5463, 12
  %v5599 = vpop.permute.xlu0 %5598
  %5600 = vrot.lane.b32.xlu0 %v5464, 12
  %v5601 = vpop.permute.xlu0 %5600
  %5602 = vrot.lane.b32.xlu0 %v5465, 12
  %v5603 = vpop.permute.xlu0 %5602
  %5604 = vrot.lane.b32.xlu0 %v5466, 12
  %v5605 = vpop.permute.xlu0 %5604
  %5606 = vrot.lane.b32.xlu0 %v5467, 12
  %v5607 = vpop.permute.xlu0 %5606
  %5608 = vrot.lane.b32.xlu0 %v5468, 12
  %v5609 = vpop.permute.xlu0 %5608
  %5610 = vrot.lane.b32.xlu0 %v5469, 12
  %v5611 = vpop.permute.xlu0 %5610
  %5612 = vrot.lane.b32.xlu0 %v5470, 12
  %v5613 = vpop.permute.xlu0 %5612
  %5614 = vrot.lane.b32.xlu0 %v5471, 12
  %v5615 = vpop.permute.xlu0 %5614
  %5616 = vrot.lane.b32.xlu0 %v5472, 12
  %v5617 = vpop.permute.xlu0 %5616
  %5618 = vrot.lane.b32.xlu0 %v5473, 12
  %v5619 = vpop.permute.xlu0 %5618
  %5620 = vrot.lane.b32.xlu0 %v5474, 12
  %v5621 = vpop.permute.xlu0 %5620
  %5622 = vrot.lane.b32.xlu0 %v5475, 12
  %v5623 = vpop.permute.xlu0 %5622
  %5624 = vrot.lane.b32.xlu0 %v5476, 12
  %v5625 = vpop.permute.xlu0 %5624
  %5626 = vrot.lane.b32.xlu0 %v5477, 12
  %v5627 = vpop.permute.xlu0 %5626
  %5628 = vrot.lane.b32.xlu0 %v5478, 12
  %v5629 = vpop.permute.xlu0 %5628
  %5630 = vrot.lane.b32.xlu0 %v5479, 12
  %v5631 = vpop.permute.xlu0 %5630
  %5632 = vrot.lane.b32.xlu0 %v5480, 12
  %v5633 = vpop.permute.xlu0 %5632
  %5634 = vrot.lane.b32.xlu0 %v5481, 12
  %v5635 = vpop.permute.xlu0 %5634
  %5636 = vrot.lane.b32.xlu0 %v5482, 12
  %v5637 = vpop.permute.xlu0 %5636
  %5638 = vrot.lane.b32.xlu0 %v5483, 12
  %v5639 = vpop.permute.xlu0 %5638
  %5640 = vrot.lane.b32.xlu0 %v5484, 12
  %v5641 = vpop.permute.xlu0 %5640
  %5642 = vrot.lane.b32.xlu0 %v5485, 12
  %v5643 = vpop.permute.xlu0 %5642
  %5644 = vrot.lane.b32.xlu0 %v5486, 12
  %v5645 = vpop.permute.xlu0 %5644
  %5646 = vrot.lane.b32.xlu0 %v5487, 12
  %v5647 = vpop.permute.xlu0 %5646
  %5648 = vrot.lane.b32.xlu0 %v5488, 12
  %v5649 = vpop.permute.xlu0 %5648
  %5650 = vrot.lane.b32.xlu0 %v5489, 12
  %v5651 = vpop.permute.xlu0 %5650
  %5652 = vrot.lane.b32.xlu0 %v5490, 12
  %v5653 = vpop.permute.xlu0 %5652
  %5654 = vrot.lane.b32.xlu0 %v5491, 12
  %v5655 = vpop.permute.xlu0 %5654
  %5656 = vrot.lane.b32.xlu0 %v5492, 12
  %v5657 = vpop.permute.xlu0 %5656
  %5658 = vrot.lane.b32.xlu0 %v5493, 12
  %v5659 = vpop.permute.xlu0 %5658
  %5660 = vrot.lane.b32.xlu0 %v5494, 12
  %v5661 = vpop.permute.xlu0 %5660
  %5662 = vrot.lane.b32.xlu0 %v5495, 12
  %v5663 = vpop.permute.xlu0 %5662
  %5664 = vrot.lane.b32.xlu0 %v5496, 12
  %v5665 = vpop.permute.xlu0 %5664
  %5666 = vrot.lane.b32.xlu0 %v5497, 12
  %v5667 = vpop.permute.xlu0 %5666
  %5668 = vrot.lane.b32.xlu0 %v5498, 12
  %v5669 = vpop.permute.xlu0 %5668
  %5670 = vrot.lane.b32.xlu0 %v5499, 12
  %v5671 = vpop.permute.xlu0 %5670
  %5672 = vrot.lane.b32.xlu0 %v5500, 12
  %v5673 = vpop.permute.xlu0 %5672
  %5674 = vrot.lane.b32.xlu0 %v5501, 12
  %v5675 = vpop.permute.xlu0 %5674
  %5676 = vrot.lane.b32.xlu0 %v5502, 12
  %v5677 = vpop.permute.xlu0 %5676
  %5678 = vrot.lane.b32.xlu0 %v5503, 12
  %v5679 = vpop.permute.xlu0 %5678
  %5680 = vrot.lane.b32.xlu0 %v5504, 12
  %v5681 = vpop.permute.xlu0 %5680
  %5682 = vrot.lane.b32.xlu0 %v5505, 12
  %v5683 = vpop.permute.xlu0 %5682
  %5684 = vrot.lane.b32.xlu0 %v5506, 12
  %v5685 = vpop.permute.xlu0 %5684
  %5686 = vrot.lane.b32.xlu0 %v5507, 12
  %v5687 = vpop.permute.xlu0 %5686
  %5688 = vrot.lane.b32.xlu0 %v5508, 12
  %v5689 = vpop.permute.xlu0 %5688
  %5690 = vrot.lane.b32.xlu0 %v5509, 12
  %v5691 = vpop.permute.xlu0 %5690
  %5692 = vrot.lane.b32.xlu0 %v5510, 12
  %v5693 = vpop.permute.xlu0 %5692
  %5694 = vrot.lane.b32.xlu0 %v5511, 12
  %v5695 = vpop.permute.xlu0 %5694
  %5696 = vrot.lane.b32.xlu0 %v5512, 12
  %v5697 = vpop.permute.xlu0 %5696
  %5698 = vrot.lane.b32.xlu0 %v5513, 12
  %v5699 = vpop.permute.xlu0 %5698
  %5700 = vrot.lane.b32.xlu0 %v5514, 12
  %v5701 = vpop.permute.xlu0 %5700
  %5702 = vrot.lane.b32.xlu0 %v5515, 12
  %v5703 = vpop.permute.xlu0 %5702
  %5704 = vrot.lane.b32.xlu0 %v5516, 12
  %v5705 = vpop.permute.xlu0 %5704
  %5706 = vrot.lane.b32.xlu0 %v5517, 12
  %v5707 = vpop.permute.xlu0 %5706
  %5708 = vrot.lane.b32.xlu0 %v5518, 12
  %v5709 = vpop.permute.xlu0 %5708
  %5710 = vrot.lane.b32.xlu0 %v5519, 12
  %v5711 = vpop.permute.xlu0 %5710
  %5776 = vst.msk [vmem:[#allocation3] sm:$0xff] %vm1454, %v5585
  %5777 = vst.msk [vmem:[#allocation3 + $0x8] sm:$0xff] %vm1454, %v5587
  %5778 = vst.msk [vmem:[#allocation3 + $0x10] sm:$0xff] %vm1454, %v5589
  %5779 = vst.msk [vmem:[#allocation3 + $0x18] sm:$0xff] %vm1454, %v5591
  %5780 = vst.msk [vmem:[#allocation3 + $0x20] sm:$0xff] %vm1454, %v5593
  %5781 = vst.msk [vmem:[#allocation3 + $0x28] sm:$0xff] %vm1454, %v5595
  %5782 = vst.msk [vmem:[#allocation3 + $0x30] sm:$0xff] %vm1454, %v5597
  %5783 = vst.msk [vmem:[#allocation3 + $0x38] sm:$0xff] %vm1454, %v5599
  %5784 = vst.msk [vmem:[#allocation3 + $0x40] sm:$0xff] %vm1454, %v5601
  %5785 = vst.msk [vmem:[#allocation3 + $0x48] sm:$0xff] %vm1454, %v5603
  %5786 = vst.msk [vmem:[#allocation3 + $0x50] sm:$0xff] %vm1454, %v5605
  %5787 = vst.msk [vmem:[#allocation3 + $0x58] sm:$0xff] %vm1454, %v5607
  %5788 = vst.msk [vmem:[#allocation3 + $0x60] sm:$0xff] %vm1454, %v5609
  %5789 = vst.msk [vmem:[#allocation3 + $0x68] sm:$0xff] %vm1454, %v5611
  %5790 = vst.msk [vmem:[#allocation3 + $0x70] sm:$0xff] %vm1454, %v5613
  %5791 = vst.msk [vmem:[#allocation3 + $0x78] sm:$0xff] %vm1454, %v5615
  %5792 = vst.msk [vmem:[#allocation3 + $0x80] sm:$0xff] %vm1454, %v5617
  %5793 = vst.msk [vmem:[#allocation3 + $0x88] sm:$0xff] %vm1454, %v5619
  %5794 = vst.msk [vmem:[#allocation3 + $0x90] sm:$0xff] %vm1454, %v5621
  %5795 = vst.msk [vmem:[#allocation3 + $0x98] sm:$0xff] %vm1454, %v5623
  %5796 = vst.msk [vmem:[#allocation3 + $0xa0] sm:$0xff] %vm1454, %v5625
  %5797 = vst.msk [vmem:[#allocation3 + $0xa8] sm:$0xff] %vm1454, %v5627
  %5798 = vst.msk [vmem:[#allocation3 + $0xb0] sm:$0xff] %vm1454, %v5629
  %5799 = vst.msk [vmem:[#allocation3 + $0xb8] sm:$0xff] %vm1454, %v5631
  %5800 = vst.msk [vmem:[#allocation3 + $0xc0] sm:$0xff] %vm1454, %v5633
  %5801 = vst.msk [vmem:[#allocation3 + $0xc8] sm:$0xff] %vm1454, %v5635
  %5802 = vst.msk [vmem:[#allocation3 + $0xd0] sm:$0xff] %vm1454, %v5637
  %5803 = vst.msk [vmem:[#allocation3 + $0xd8] sm:$0xff] %vm1454, %v5639
  %5804 = vst.msk [vmem:[#allocation3 + $0xe0] sm:$0xff] %vm1454, %v5641
  %5805 = vst.msk [vmem:[#allocation3 + $0xe8] sm:$0xff] %vm1454, %v5643
  %5806 = vst.msk [vmem:[#allocation3 + $0xf0] sm:$0xff] %vm1454, %v5645
  %5807 = vst.msk [vmem:[#allocation3 + $0xf8] sm:$0xff] %vm1454, %v5647
  %5808 = vst.msk [vmem:[#allocation3 + $0x100] sm:$0xff] %vm1454, %v5649
  %5809 = vst.msk [vmem:[#allocation3 + $0x108] sm:$0xff] %vm1454, %v5651
  %5810 = vst.msk [vmem:[#allocation3 + $0x110] sm:$0xff] %vm1454, %v5653
  %5811 = vst.msk [vmem:[#allocation3 + $0x118] sm:$0xff] %vm1454, %v5655
  %5812 = vst.msk [vmem:[#allocation3 + $0x120] sm:$0xff] %vm1454, %v5657
  %5813 = vst.msk [vmem:[#allocation3 + $0x128] sm:$0xff] %vm1454, %v5659
  %5814 = vst.msk [vmem:[#allocation3 + $0x130] sm:$0xff] %vm1454, %v5661
  %5815 = vst.msk [vmem:[#allocation3 + $0x138] sm:$0xff] %vm1454, %v5663
  %5816 = vst.msk [vmem:[#allocation3 + $0x140] sm:$0xff] %vm1454, %v5665
  %5817 = vst.msk [vmem:[#allocation3 + $0x148] sm:$0xff] %vm1454, %v5667
  %5818 = vst.msk [vmem:[#allocation3 + $0x150] sm:$0xff] %vm1454, %v5669
  %5819 = vst.msk [vmem:[#allocation3 + $0x158] sm:$0xff] %vm1454, %v5671
  %5820 = vst.msk [vmem:[#allocation3 + $0x160] sm:$0xff] %vm1454, %v5673
  %5821 = vst.msk [vmem:[#allocation3 + $0x168] sm:$0xff] %vm1454, %v5675
  %5822 = vst.msk [vmem:[#allocation3 + $0x170] sm:$0xff] %vm1454, %v5677
  %5823 = vst.msk [vmem:[#allocation3 + $0x178] sm:$0xff] %vm1454, %v5679
  %5824 = vst.msk [vmem:[#allocation3 + $0x180] sm:$0xff] %vm1454, %v5681
  %5825 = vst.msk [vmem:[#allocation3 + $0x188] sm:$0xff] %vm1454, %v5683
  %5826 = vst.msk [vmem:[#allocation3 + $0x190] sm:$0xff] %vm1454, %v5685
  %5827 = vst.msk [vmem:[#allocation3 + $0x198] sm:$0xff] %vm1454, %v5687
  %5828 = vst.msk [vmem:[#allocation3 + $0x1a0] sm:$0xff] %vm1454, %v5689
  %5829 = vst.msk [vmem:[#allocation3 + $0x1a8] sm:$0xff] %vm1454, %v5691
  %5830 = vst.msk [vmem:[#allocation3 + $0x1b0] sm:$0xff] %vm1454, %v5693
  %5831 = vst.msk [vmem:[#allocation3 + $0x1b8] sm:$0xff] %vm1454, %v5695
  %5832 = vst.msk [vmem:[#allocation3 + $0x1c0] sm:$0xff] %vm1454, %v5697
  %5833 = vst.msk [vmem:[#allocation3 + $0x1c8] sm:$0xff] %vm1454, %v5699
  %5834 = vst.msk [vmem:[#allocation3 + $0x1d0] sm:$0xff] %vm1454, %v5701
  %5835 = vst.msk [vmem:[#allocation3 + $0x1d8] sm:$0xff] %vm1454, %v5703
  %5836 = vst.msk [vmem:[#allocation3 + $0x1e0] sm:$0xff] %vm1454, %v5705
  %5837 = vst.msk [vmem:[#allocation3 + $0x1e8] sm:$0xff] %vm1454, %v5707
  %5838 = vst.msk [vmem:[#allocation3 + $0x1f0] sm:$0xff] %vm1454, %v5709
  %5839 = vst.msk [vmem:[#allocation3 + $0x1f8] sm:$0xff] %vm1454, %v5711
  %v5840 = vld [vmem:[%s42 + $0x1] sm:$0xff]
  %v5841 = vld [vmem:[%s42 + $0x9] sm:$0xff]
  %v5842 = vld [vmem:[%s42 + $0x19] sm:$0xff]
  %v5843 = vld [vmem:[%s42 + $0x21] sm:$0xff]
  %v5844 = vld [vmem:[%s42 + $0x31] sm:$0xff]
  %v5845 = vld [vmem:[%s42 + $0x39] sm:$0xff]
  %v5846 = vld [vmem:[%s42 + $0x49] sm:$0xff]
  %v5847 = vld [vmem:[%s42 + $0x51] sm:$0xff]
  %v5848 = vld [vmem:[%s42 + $0x61] sm:$0xff]
  %v5849 = vld [vmem:[%s42 + $0x69] sm:$0xff]
  %v5850 = vld [vmem:[%s42 + $0x79] sm:$0xff]
  %v5851 = vld [vmem:[%s42 + $0x81] sm:$0xff]
  %v5852 = vld [vmem:[%s42 + $0x91] sm:$0xff]
  %v5853 = vld [vmem:[%s42 + $0x99] sm:$0xff]
  %v5854 = vld [vmem:[%s42 + $0xa9] sm:$0xff]
  %v5855 = vld [vmem:[%s42 + $0xb1] sm:$0xff]
  %v5856 = vld [vmem:[%s42 + $0xc1] sm:$0xff]
  %v5857 = vld [vmem:[%s42 + $0xc9] sm:$0xff]
  %v5858 = vld [vmem:[%s42 + $0xd9] sm:$0xff]
  %v5859 = vld [vmem:[%s42 + $0xe1] sm:$0xff]
  %v5860 = vld [vmem:[%s42 + $0xf1] sm:$0xff]
  %v5861 = vld [vmem:[%s42 + $0xf9] sm:$0xff]
  %v5862 = vld [vmem:[%s42 + $0x109] sm:$0xff]
  %v5863 = vld [vmem:[%s42 + $0x111] sm:$0xff]
  %v5864 = vld [vmem:[%s42 + $0x121] sm:$0xff]
  %v5865 = vld [vmem:[%s42 + $0x129] sm:$0xff]
  %v5866 = vld [vmem:[%s42 + $0x139] sm:$0xff]
  %v5867 = vld [vmem:[%s42 + $0x141] sm:$0xff]
  %v5868 = vld [vmem:[%s42 + $0x151] sm:$0xff]
  %v5869 = vld [vmem:[%s42 + $0x159] sm:$0xff]
  %v5870 = vld [vmem:[%s42 + $0x169] sm:$0xff]
  %v5871 = vld [vmem:[%s42 + $0x171] sm:$0xff]
  %v5872 = vld [vmem:[%s42 + $0x1b1] sm:$0xff]
  %v5873 = vld [vmem:[%s42 + $0x1b9] sm:$0xff]
  %v5874 = vld [vmem:[%s42 + $0x1c9] sm:$0xff]
  %v5875 = vld [vmem:[%s42 + $0x1d1] sm:$0xff]
  %v5876 = vld [vmem:[%s42 + $0x1e1] sm:$0xff]
  %v5877 = vld [vmem:[%s42 + $0x1e9] sm:$0xff]
  %v5878 = vld [vmem:[%s42 + $0x1f9] sm:$0xff]
  %v5879 = vld [vmem:[%s42 + $0x201] sm:$0xff]
  %v5880 = vld [vmem:[%s42 + $0x211] sm:$0xff]
  %v5881 = vld [vmem:[%s42 + $0x219] sm:$0xff]
  %v5882 = vld [vmem:[%s42 + $0x229] sm:$0xff]
  %v5883 = vld [vmem:[%s42 + $0x231] sm:$0xff]
  %v5884 = vld [vmem:[%s42 + $0x241] sm:$0xff]
  %v5885 = vld [vmem:[%s42 + $0x249] sm:$0xff]
  %v5886 = vld [vmem:[%s42 + $0x259] sm:$0xff]
  %v5887 = vld [vmem:[%s42 + $0x261] sm:$0xff]
  %v5888 = vld [vmem:[%s42 + $0x271] sm:$0xff]
  %v5889 = vld [vmem:[%s42 + $0x279] sm:$0xff]
  %v5890 = vld [vmem:[%s42 + $0x289] sm:$0xff]
  %v5891 = vld [vmem:[%s42 + $0x291] sm:$0xff]
  %v5892 = vld [vmem:[%s42 + $0x2a1] sm:$0xff]
  %v5893 = vld [vmem:[%s42 + $0x2a9] sm:$0xff]
  %v5894 = vld [vmem:[%s42 + $0x2b9] sm:$0xff]
  %v5895 = vld [vmem:[%s42 + $0x2c1] sm:$0xff]
  %v5896 = vld [vmem:[%s42 + $0x2d1] sm:$0xff]
  %v5897 = vld [vmem:[%s42 + $0x2d9] sm:$0xff]
  %v5898 = vld [vmem:[%s42 + $0x2e9] sm:$0xff]
  %v5899 = vld [vmem:[%s42 + $0x2f1] sm:$0xff]
  %v5900 = vld [vmem:[%s42 + $0x301] sm:$0xff]
  %v5901 = vld [vmem:[%s42 + $0x309] sm:$0xff]
  %v5902 = vld [vmem:[%s42 + $0x319] sm:$0xff]
  %v5903 = vld [vmem:[%s42 + $0x321] sm:$0xff]
  %5968 = vrot.lane.b32.xlu0 %v5840, 16
  %v5969 = vpop.permute.xlu0 %5968
  %5970 = vrot.lane.b32.xlu0 %v5841, 16
  %v5971 = vpop.permute.xlu0 %5970
  %5972 = vrot.lane.b32.xlu0 %v5842, 16
  %v5973 = vpop.permute.xlu0 %5972
  %5974 = vrot.lane.b32.xlu0 %v5843, 16
  %v5975 = vpop.permute.xlu0 %5974
  %5976 = vrot.lane.b32.xlu0 %v5844, 16
  %v5977 = vpop.permute.xlu0 %5976
  %5978 = vrot.lane.b32.xlu0 %v5845, 16
  %v5979 = vpop.permute.xlu0 %5978
  %5980 = vrot.lane.b32.xlu0 %v5846, 16
  %v5981 = vpop.permute.xlu0 %5980
  %5982 = vrot.lane.b32.xlu0 %v5847, 16
  %v5983 = vpop.permute.xlu0 %5982
  %5984 = vrot.lane.b32.xlu0 %v5848, 16
  %v5985 = vpop.permute.xlu0 %5984
  %5986 = vrot.lane.b32.xlu0 %v5849, 16
  %v5987 = vpop.permute.xlu0 %5986
  %5988 = vrot.lane.b32.xlu0 %v5850, 16
  %v5989 = vpop.permute.xlu0 %5988
  %5990 = vrot.lane.b32.xlu0 %v5851, 16
  %v5991 = vpop.permute.xlu0 %5990
  %5992 = vrot.lane.b32.xlu0 %v5852, 16
  %v5993 = vpop.permute.xlu0 %5992
  %5994 = vrot.lane.b32.xlu0 %v5853, 16
  %v5995 = vpop.permute.xlu0 %5994
  %5996 = vrot.lane.b32.xlu0 %v5854, 16
  %v5997 = vpop.permute.xlu0 %5996
  %5998 = vrot.lane.b32.xlu0 %v5855, 16
  %v5999 = vpop.permute.xlu0 %5998
  %6000 = vrot.lane.b32.xlu0 %v5856, 16
  %v6001 = vpop.permute.xlu0 %6000
  %6002 = vrot.lane.b32.xlu0 %v5857, 16
  %v6003 = vpop.permute.xlu0 %6002
  %6004 = vrot.lane.b32.xlu0 %v5858, 16
  %v6005 = vpop.permute.xlu0 %6004
  %6006 = vrot.lane.b32.xlu0 %v5859, 16
  %v6007 = vpop.permute.xlu0 %6006
  %6008 = vrot.lane.b32.xlu0 %v5860, 16
  %v6009 = vpop.permute.xlu0 %6008
  %6010 = vrot.lane.b32.xlu0 %v5861, 16
  %v6011 = vpop.permute.xlu0 %6010
  %6012 = vrot.lane.b32.xlu0 %v5862, 16
  %v6013 = vpop.permute.xlu0 %6012
  %6014 = vrot.lane.b32.xlu0 %v5863, 16
  %v6015 = vpop.permute.xlu0 %6014
  %6016 = vrot.lane.b32.xlu0 %v5864, 16
  %v6017 = vpop.permute.xlu0 %6016
  %6018 = vrot.lane.b32.xlu0 %v5865, 16
  %v6019 = vpop.permute.xlu0 %6018
  %6020 = vrot.lane.b32.xlu0 %v5866, 16
  %v6021 = vpop.permute.xlu0 %6020
  %6022 = vrot.lane.b32.xlu0 %v5867, 16
  %v6023 = vpop.permute.xlu0 %6022
  %6024 = vrot.lane.b32.xlu0 %v5868, 16
  %v6025 = vpop.permute.xlu0 %6024
  %6026 = vrot.lane.b32.xlu0 %v5869, 16
  %v6027 = vpop.permute.xlu0 %6026
  %6028 = vrot.lane.b32.xlu0 %v5870, 16
  %v6029 = vpop.permute.xlu0 %6028
  %6030 = vrot.lane.b32.xlu0 %v5871, 16
  %v6031 = vpop.permute.xlu0 %6030
  %6032 = vrot.lane.b32.xlu0 %v5872, 16
  %v6033 = vpop.permute.xlu0 %6032
  %6034 = vrot.lane.b32.xlu0 %v5873, 16
  %v6035 = vpop.permute.xlu0 %6034
  %6036 = vrot.lane.b32.xlu0 %v5874, 16
  %v6037 = vpop.permute.xlu0 %6036
  %6038 = vrot.lane.b32.xlu0 %v5875, 16
  %v6039 = vpop.permute.xlu0 %6038
  %6040 = vrot.lane.b32.xlu0 %v5876, 16
  %v6041 = vpop.permute.xlu0 %6040
  %6042 = vrot.lane.b32.xlu0 %v5877, 16
  %v6043 = vpop.permute.xlu0 %6042
  %6044 = vrot.lane.b32.xlu0 %v5878, 16
  %v6045 = vpop.permute.xlu0 %6044
  %6046 = vrot.lane.b32.xlu0 %v5879, 16
  %v6047 = vpop.permute.xlu0 %6046
  %6048 = vrot.lane.b32.xlu0 %v5880, 16
  %v6049 = vpop.permute.xlu0 %6048
  %6050 = vrot.lane.b32.xlu0 %v5881, 16
  %v6051 = vpop.permute.xlu0 %6050
  %6052 = vrot.lane.b32.xlu0 %v5882, 16
  %v6053 = vpop.permute.xlu0 %6052
  %6054 = vrot.lane.b32.xlu0 %v5883, 16
  %v6055 = vpop.permute.xlu0 %6054
  %6056 = vrot.lane.b32.xlu0 %v5884, 16
  %v6057 = vpop.permute.xlu0 %6056
  %6058 = vrot.lane.b32.xlu0 %v5885, 16
  %v6059 = vpop.permute.xlu0 %6058
  %6060 = vrot.lane.b32.xlu0 %v5886, 16
  %v6061 = vpop.permute.xlu0 %6060
  %6062 = vrot.lane.b32.xlu0 %v5887, 16
  %v6063 = vpop.permute.xlu0 %6062
  %6064 = vrot.lane.b32.xlu0 %v5888, 16
  %v6065 = vpop.permute.xlu0 %6064
  %6066 = vrot.lane.b32.xlu0 %v5889, 16
  %v6067 = vpop.permute.xlu0 %6066
  %6068 = vrot.lane.b32.xlu0 %v5890, 16
  %v6069 = vpop.permute.xlu0 %6068
  %6070 = vrot.lane.b32.xlu0 %v5891, 16
  %v6071 = vpop.permute.xlu0 %6070
  %6072 = vrot.lane.b32.xlu0 %v5892, 16
  %v6073 = vpop.permute.xlu0 %6072
  %6074 = vrot.lane.b32.xlu0 %v5893, 16
  %v6075 = vpop.permute.xlu0 %6074
  %6076 = vrot.lane.b32.xlu0 %v5894, 16
  %v6077 = vpop.permute.xlu0 %6076
  %6078 = vrot.lane.b32.xlu0 %v5895, 16
  %v6079 = vpop.permute.xlu0 %6078
  %6080 = vrot.lane.b32.xlu0 %v5896, 16
  %v6081 = vpop.permute.xlu0 %6080
  %6082 = vrot.lane.b32.xlu0 %v5897, 16
  %v6083 = vpop.permute.xlu0 %6082
  %6084 = vrot.lane.b32.xlu0 %v5898, 16
  %v6085 = vpop.permute.xlu0 %6084
  %6086 = vrot.lane.b32.xlu0 %v5899, 16
  %v6087 = vpop.permute.xlu0 %6086
  %6088 = vrot.lane.b32.xlu0 %v5900, 16
  %v6089 = vpop.permute.xlu0 %6088
  %6090 = vrot.lane.b32.xlu0 %v5901, 16
  %v6091 = vpop.permute.xlu0 %6090
  %6092 = vrot.lane.b32.xlu0 %v5902, 16
  %v6093 = vpop.permute.xlu0 %6092
  %6094 = vrot.lane.b32.xlu0 %v5903, 16
  %v6095 = vpop.permute.xlu0 %6094
  %6160 = vst.msk [vmem:[#allocation3] sm:$0xff] %vm1839, %v5969
  %6161 = vst.msk [vmem:[#allocation3 + $0x8] sm:$0xff] %vm1839, %v5971
  %6162 = vst.msk [vmem:[#allocation3 + $0x10] sm:$0xff] %vm1839, %v5973
  %6163 = vst.msk [vmem:[#allocation3 + $0x18] sm:$0xff] %vm1839, %v5975
  %6164 = vst.msk [vmem:[#allocation3 + $0x20] sm:$0xff] %vm1839, %v5977
  %6165 = vst.msk [vmem:[#allocation3 + $0x28] sm:$0xff] %vm1839, %v5979
  %6166 = vst.msk [vmem:[#allocation3 + $0x30] sm:$0xff] %vm1839, %v5981
  %6167 = vst.msk [vmem:[#allocation3 + $0x38] sm:$0xff] %vm1839, %v5983
  %6168 = vst.msk [vmem:[#allocation3 + $0x40] sm:$0xff] %vm1839, %v5985
  %6169 = vst.msk [vmem:[#allocation3 + $0x48] sm:$0xff] %vm1839, %v5987
  %6170 = vst.msk [vmem:[#allocation3 + $0x50] sm:$0xff] %vm1839, %v5989
  %6171 = vst.msk [vmem:[#allocation3 + $0x58] sm:$0xff] %vm1839, %v5991
  %6172 = vst.msk [vmem:[#allocation3 + $0x60] sm:$0xff] %vm1839, %v5993
  %6173 = vst.msk [vmem:[#allocation3 + $0x68] sm:$0xff] %vm1839, %v5995
  %6174 = vst.msk [vmem:[#allocation3 + $0x70] sm:$0xff] %vm1839, %v5997
  %6175 = vst.msk [vmem:[#allocation3 + $0x78] sm:$0xff] %vm1839, %v5999
  %6176 = vst.msk [vmem:[#allocation3 + $0x80] sm:$0xff] %vm1839, %v6001
  %6177 = vst.msk [vmem:[#allocation3 + $0x88] sm:$0xff] %vm1839, %v6003
  %6178 = vst.msk [vmem:[#allocation3 + $0x90] sm:$0xff] %vm1839, %v6005
  %6179 = vst.msk [vmem:[#allocation3 + $0x98] sm:$0xff] %vm1839, %v6007
  %6180 = vst.msk [vmem:[#allocation3 + $0xa0] sm:$0xff] %vm1839, %v6009
  %6181 = vst.msk [vmem:[#allocation3 + $0xa8] sm:$0xff] %vm1839, %v6011
  %6182 = vst.msk [vmem:[#allocation3 + $0xb0] sm:$0xff] %vm1839, %v6013
  %6183 = vst.msk [vmem:[#allocation3 + $0xb8] sm:$0xff] %vm1839, %v6015
  %6184 = vst.msk [vmem:[#allocation3 + $0xc0] sm:$0xff] %vm1839, %v6017
  %6185 = vst.msk [vmem:[#allocation3 + $0xc8] sm:$0xff] %vm1839, %v6019
  %6186 = vst.msk [vmem:[#allocation3 + $0xd0] sm:$0xff] %vm1839, %v6021
  %6187 = vst.msk [vmem:[#allocation3 + $0xd8] sm:$0xff] %vm1839, %v6023
  %6188 = vst.msk [vmem:[#allocation3 + $0xe0] sm:$0xff] %vm1839, %v6025
  %6189 = vst.msk [vmem:[#allocation3 + $0xe8] sm:$0xff] %vm1839, %v6027
  %6190 = vst.msk [vmem:[#allocation3 + $0xf0] sm:$0xff] %vm1839, %v6029
  %6191 = vst.msk [vmem:[#allocation3 + $0xf8] sm:$0xff] %vm1839, %v6031
  %6192 = vst.msk [vmem:[#allocation3 + $0x100] sm:$0xff] %vm1839, %v6033
  %6193 = vst.msk [vmem:[#allocation3 + $0x108] sm:$0xff] %vm1839, %v6035
  %6194 = vst.msk [vmem:[#allocation3 + $0x110] sm:$0xff] %vm1839, %v6037
  %6195 = vst.msk [vmem:[#allocation3 + $0x118] sm:$0xff] %vm1839, %v6039
  %6196 = vst.msk [vmem:[#allocation3 + $0x120] sm:$0xff] %vm1839, %v6041
  %6197 = vst.msk [vmem:[#allocation3 + $0x128] sm:$0xff] %vm1839, %v6043
  %6198 = vst.msk [vmem:[#allocation3 + $0x130] sm:$0xff] %vm1839, %v6045
  %6199 = vst.msk [vmem:[#allocation3 + $0x138] sm:$0xff] %vm1839, %v6047
  %6200 = vst.msk [vmem:[#allocation3 + $0x140] sm:$0xff] %vm1839, %v6049
  %6201 = vst.msk [vmem:[#allocation3 + $0x148] sm:$0xff] %vm1839, %v6051
  %6202 = vst.msk [vmem:[#allocation3 + $0x150] sm:$0xff] %vm1839, %v6053
  %6203 = vst.msk [vmem:[#allocation3 + $0x158] sm:$0xff] %vm1839, %v6055
  %6204 = vst.msk [vmem:[#allocation3 + $0x160] sm:$0xff] %vm1839, %v6057
  %6205 = vst.msk [vmem:[#allocation3 + $0x168] sm:$0xff] %vm1839, %v6059
  %6206 = vst.msk [vmem:[#allocation3 + $0x170] sm:$0xff] %vm1839, %v6061
  %6207 = vst.msk [vmem:[#allocation3 + $0x178] sm:$0xff] %vm1839, %v6063
  %6208 = vst.msk [vmem:[#allocation3 + $0x180] sm:$0xff] %vm1839, %v6065
  %6209 = vst.msk [vmem:[#allocation3 + $0x188] sm:$0xff] %vm1839, %v6067
  %6210 = vst.msk [vmem:[#allocation3 + $0x190] sm:$0xff] %vm1839, %v6069
  %6211 = vst.msk [vmem:[#allocation3 + $0x198] sm:$0xff] %vm1839, %v6071
  %6212 = vst.msk [vmem:[#allocation3 + $0x1a0] sm:$0xff] %vm1839, %v6073
  %6213 = vst.msk [vmem:[#allocation3 + $0x1a8] sm:$0xff] %vm1839, %v6075
  %6214 = vst.msk [vmem:[#allocation3 + $0x1b0] sm:$0xff] %vm1839, %v6077
  %6215 = vst.msk [vmem:[#allocation3 + $0x1b8] sm:$0xff] %vm1839, %v6079
  %6216 = vst.msk [vmem:[#allocation3 + $0x1c0] sm:$0xff] %vm1839, %v6081
  %6217 = vst.msk [vmem:[#allocation3 + $0x1c8] sm:$0xff] %vm1839, %v6083
  %6218 = vst.msk [vmem:[#allocation3 + $0x1d0] sm:$0xff] %vm1839, %v6085
  %6219 = vst.msk [vmem:[#allocation3 + $0x1d8] sm:$0xff] %vm1839, %v6087
  %6220 = vst.msk [vmem:[#allocation3 + $0x1e0] sm:$0xff] %vm1839, %v6089
  %6221 = vst.msk [vmem:[#allocation3 + $0x1e8] sm:$0xff] %vm1839, %v6091
  %6222 = vst.msk [vmem:[#allocation3 + $0x1f0] sm:$0xff] %vm1839, %v6093
  %6223 = vst.msk [vmem:[#allocation3 + $0x1f8] sm:$0xff] %vm1839, %v6095
  %v6224 = vld [vmem:[%s42 + $0x2] sm:$0xff]
  %v6225 = vld [vmem:[%s42 + $0xa] sm:$0xff]
  %v6226 = vld [vmem:[%s42 + $0x1a] sm:$0xff]
  %v6227 = vld [vmem:[%s42 + $0x22] sm:$0xff]
  %v6228 = vld [vmem:[%s42 + $0x32] sm:$0xff]
  %v6229 = vld [vmem:[%s42 + $0x3a] sm:$0xff]
  %v6230 = vld [vmem:[%s42 + $0x4a] sm:$0xff]
  %v6231 = vld [vmem:[%s42 + $0x52] sm:$0xff]
  %v6232 = vld [vmem:[%s42 + $0x62] sm:$0xff]
  %v6233 = vld [vmem:[%s42 + $0x6a] sm:$0xff]
  %v6234 = vld [vmem:[%s42 + $0x7a] sm:$0xff]
  %v6235 = vld [vmem:[%s42 + $0x82] sm:$0xff]
  %v6236 = vld [vmem:[%s42 + $0x92] sm:$0xff]
  %v6237 = vld [vmem:[%s42 + $0x9a] sm:$0xff]
  %v6238 = vld [vmem:[%s42 + $0xaa] sm:$0xff]
  %v6239 = vld [vmem:[%s42 + $0xb2] sm:$0xff]
  %v6240 = vld [vmem:[%s42 + $0xc2] sm:$0xff]
  %v6241 = vld [vmem:[%s42 + $0xca] sm:$0xff]
  %v6242 = vld [vmem:[%s42 + $0xda] sm:$0xff]
  %v6243 = vld [vmem:[%s42 + $0xe2] sm:$0xff]
  %v6244 = vld [vmem:[%s42 + $0xf2] sm:$0xff]
  %v6245 = vld [vmem:[%s42 + $0xfa] sm:$0xff]
  %v6246 = vld [vmem:[%s42 + $0x10a] sm:$0xff]
  %v6247 = vld [vmem:[%s42 + $0x112] sm:$0xff]
  %v6248 = vld [vmem:[%s42 + $0x122] sm:$0xff]
  %v6249 = vld [vmem:[%s42 + $0x12a] sm:$0xff]
  %v6250 = vld [vmem:[%s42 + $0x13a] sm:$0xff]
  %v6251 = vld [vmem:[%s42 + $0x142] sm:$0xff]
  %v6252 = vld [vmem:[%s42 + $0x152] sm:$0xff]
  %v6253 = vld [vmem:[%s42 + $0x15a] sm:$0xff]
  %v6254 = vld [vmem:[%s42 + $0x16a] sm:$0xff]
  %v6255 = vld [vmem:[%s42 + $0x172] sm:$0xff]
  %v6256 = vld [vmem:[%s42 + $0x1b2] sm:$0xff]
  %v6257 = vld [vmem:[%s42 + $0x1ba] sm:$0xff]
  %v6258 = vld [vmem:[%s42 + $0x1ca] sm:$0xff]
  %v6259 = vld [vmem:[%s42 + $0x1d2] sm:$0xff]
  %v6260 = vld [vmem:[%s42 + $0x1e2] sm:$0xff]
  %v6261 = vld [vmem:[%s42 + $0x1ea] sm:$0xff]
  %v6262 = vld [vmem:[%s42 + $0x1fa] sm:$0xff]
  %v6263 = vld [vmem:[%s42 + $0x202] sm:$0xff]
  %v6264 = vld [vmem:[%s42 + $0x212] sm:$0xff]
  %v6265 = vld [vmem:[%s42 + $0x21a] sm:$0xff]
  %v6266 = vld [vmem:[%s42 + $0x22a] sm:$0xff]
  %v6267 = vld [vmem:[%s42 + $0x232] sm:$0xff]
  %v6268 = vld [vmem:[%s42 + $0x242] sm:$0xff]
  %v6269 = vld [vmem:[%s42 + $0x24a] sm:$0xff]
  %v6270 = vld [vmem:[%s42 + $0x25a] sm:$0xff]
  %v6271 = vld [vmem:[%s42 + $0x262] sm:$0xff]
  %v6272 = vld [vmem:[%s42 + $0x272] sm:$0xff]
  %v6273 = vld [vmem:[%s42 + $0x27a] sm:$0xff]
  %v6274 = vld [vmem:[%s42 + $0x28a] sm:$0xff]
  %v6275 = vld [vmem:[%s42 + $0x292] sm:$0xff]
  %v6276 = vld [vmem:[%s42 + $0x2a2] sm:$0xff]
  %v6277 = vld [vmem:[%s42 + $0x2aa] sm:$0xff]
  %v6278 = vld [vmem:[%s42 + $0x2ba] sm:$0xff]
  %v6279 = vld [vmem:[%s42 + $0x2c2] sm:$0xff]
  %v6280 = vld [vmem:[%s42 + $0x2d2] sm:$0xff]
  %v6281 = vld [vmem:[%s42 + $0x2da] sm:$0xff]
  %v6282 = vld [vmem:[%s42 + $0x2ea] sm:$0xff]
  %v6283 = vld [vmem:[%s42 + $0x2f2] sm:$0xff]
  %v6284 = vld [vmem:[%s42 + $0x302] sm:$0xff]
  %v6285 = vld [vmem:[%s42 + $0x30a] sm:$0xff]
  %v6286 = vld [vmem:[%s42 + $0x31a] sm:$0xff]
  %v6287 = vld [vmem:[%s42 + $0x322] sm:$0xff]
  %6352 = vrot.lane.b32.xlu0 %v6224, 20
  %v6353 = vpop.permute.xlu0 %6352
  %6354 = vrot.lane.b32.xlu0 %v6225, 20
  %v6355 = vpop.permute.xlu0 %6354
  %6356 = vrot.lane.b32.xlu0 %v6226, 20
  %v6357 = vpop.permute.xlu0 %6356
  %6358 = vrot.lane.b32.xlu0 %v6227, 20
  %v6359 = vpop.permute.xlu0 %6358
  %6360 = vrot.lane.b32.xlu0 %v6228, 20
  %v6361 = vpop.permute.xlu0 %6360
  %6362 = vrot.lane.b32.xlu0 %v6229, 20
  %v6363 = vpop.permute.xlu0 %6362
  %6364 = vrot.lane.b32.xlu0 %v6230, 20
  %v6365 = vpop.permute.xlu0 %6364
  %6366 = vrot.lane.b32.xlu0 %v6231, 20
  %v6367 = vpop.permute.xlu0 %6366
  %6368 = vrot.lane.b32.xlu0 %v6232, 20
  %v6369 = vpop.permute.xlu0 %6368
  %6370 = vrot.lane.b32.xlu0 %v6233, 20
  %v6371 = vpop.permute.xlu0 %6370
  %6372 = vrot.lane.b32.xlu0 %v6234, 20
  %v6373 = vpop.permute.xlu0 %6372
  %6374 = vrot.lane.b32.xlu0 %v6235, 20
  %v6375 = vpop.permute.xlu0 %6374
  %6376 = vrot.lane.b32.xlu0 %v6236, 20
  %v6377 = vpop.permute.xlu0 %6376
  %6378 = vrot.lane.b32.xlu0 %v6237, 20
  %v6379 = vpop.permute.xlu0 %6378
  %6380 = vrot.lane.b32.xlu0 %v6238, 20
  %v6381 = vpop.permute.xlu0 %6380
  %6382 = vrot.lane.b32.xlu0 %v6239, 20
  %v6383 = vpop.permute.xlu0 %6382
  %6384 = vrot.lane.b32.xlu0 %v6240, 20
  %v6385 = vpop.permute.xlu0 %6384
  %6386 = vrot.lane.b32.xlu0 %v6241, 20
  %v6387 = vpop.permute.xlu0 %6386
  %6388 = vrot.lane.b32.xlu0 %v6242, 20
  %v6389 = vpop.permute.xlu0 %6388
  %6390 = vrot.lane.b32.xlu0 %v6243, 20
  %v6391 = vpop.permute.xlu0 %6390
  %6392 = vrot.lane.b32.xlu0 %v6244, 20
  %v6393 = vpop.permute.xlu0 %6392
  %6394 = vrot.lane.b32.xlu0 %v6245, 20
  %v6395 = vpop.permute.xlu0 %6394
  %6396 = vrot.lane.b32.xlu0 %v6246, 20
  %v6397 = vpop.permute.xlu0 %6396
  %6398 = vrot.lane.b32.xlu0 %v6247, 20
  %v6399 = vpop.permute.xlu0 %6398
  %6400 = vrot.lane.b32.xlu0 %v6248, 20
  %v6401 = vpop.permute.xlu0 %6400
  %6402 = vrot.lane.b32.xlu0 %v6249, 20
  %v6403 = vpop.permute.xlu0 %6402
  %6404 = vrot.lane.b32.xlu0 %v6250, 20
  %v6405 = vpop.permute.xlu0 %6404
  %6406 = vrot.lane.b32.xlu0 %v6251, 20
  %v6407 = vpop.permute.xlu0 %6406
  %6408 = vrot.lane.b32.xlu0 %v6252, 20
  %v6409 = vpop.permute.xlu0 %6408
  %6410 = vrot.lane.b32.xlu0 %v6253, 20
  %v6411 = vpop.permute.xlu0 %6410
  %6412 = vrot.lane.b32.xlu0 %v6254, 20
  %v6413 = vpop.permute.xlu0 %6412
  %6414 = vrot.lane.b32.xlu0 %v6255, 20
  %v6415 = vpop.permute.xlu0 %6414
  %6416 = vrot.lane.b32.xlu0 %v6256, 20
  %v6417 = vpop.permute.xlu0 %6416
  %6418 = vrot.lane.b32.xlu0 %v6257, 20
  %v6419 = vpop.permute.xlu0 %6418
  %6420 = vrot.lane.b32.xlu0 %v6258, 20
  %v6421 = vpop.permute.xlu0 %6420
  %6422 = vrot.lane.b32.xlu0 %v6259, 20
  %v6423 = vpop.permute.xlu0 %6422
  %6424 = vrot.lane.b32.xlu0 %v6260, 20
  %v6425 = vpop.permute.xlu0 %6424
  %6426 = vrot.lane.b32.xlu0 %v6261, 20
  %v6427 = vpop.permute.xlu0 %6426
  %6428 = vrot.lane.b32.xlu0 %v6262, 20
  %v6429 = vpop.permute.xlu0 %6428
  %6430 = vrot.lane.b32.xlu0 %v6263, 20
  %v6431 = vpop.permute.xlu0 %6430
  %6432 = vrot.lane.b32.xlu0 %v6264, 20
  %v6433 = vpop.permute.xlu0 %6432
  %6434 = vrot.lane.b32.xlu0 %v6265, 20
  %v6435 = vpop.permute.xlu0 %6434
  %6436 = vrot.lane.b32.xlu0 %v6266, 20
  %v6437 = vpop.permute.xlu0 %6436
  %6438 = vrot.lane.b32.xlu0 %v6267, 20
  %v6439 = vpop.permute.xlu0 %6438
  %6440 = vrot.lane.b32.xlu0 %v6268, 20
  %v6441 = vpop.permute.xlu0 %6440
  %6442 = vrot.lane.b32.xlu0 %v6269, 20
  %v6443 = vpop.permute.xlu0 %6442
  %6444 = vrot.lane.b32.xlu0 %v6270, 20
  %v6445 = vpop.permute.xlu0 %6444
  %6446 = vrot.lane.b32.xlu0 %v6271, 20
  %v6447 = vpop.permute.xlu0 %6446
  %6448 = vrot.lane.b32.xlu0 %v6272, 20
  %v6449 = vpop.permute.xlu0 %6448
  %6450 = vrot.lane.b32.xlu0 %v6273, 20
  %v6451 = vpop.permute.xlu0 %6450
  %6452 = vrot.lane.b32.xlu0 %v6274, 20
  %v6453 = vpop.permute.xlu0 %6452
  %6454 = vrot.lane.b32.xlu0 %v6275, 20
  %v6455 = vpop.permute.xlu0 %6454
  %6456 = vrot.lane.b32.xlu0 %v6276, 20
  %v6457 = vpop.permute.xlu0 %6456
  %6458 = vrot.lane.b32.xlu0 %v6277, 20
  %v6459 = vpop.permute.xlu0 %6458
  %6460 = vrot.lane.b32.xlu0 %v6278, 20
  %v6461 = vpop.permute.xlu0 %6460
  %6462 = vrot.lane.b32.xlu0 %v6279, 20
  %v6463 = vpop.permute.xlu0 %6462
  %6464 = vrot.lane.b32.xlu0 %v6280, 20
  %v6465 = vpop.permute.xlu0 %6464
  %6466 = vrot.lane.b32.xlu0 %v6281, 20
  %v6467 = vpop.permute.xlu0 %6466
  %6468 = vrot.lane.b32.xlu0 %v6282, 20
  %v6469 = vpop.permute.xlu0 %6468
  %6470 = vrot.lane.b32.xlu0 %v6283, 20
  %v6471 = vpop.permute.xlu0 %6470
  %6472 = vrot.lane.b32.xlu0 %v6284, 20
  %v6473 = vpop.permute.xlu0 %6472
  %6474 = vrot.lane.b32.xlu0 %v6285, 20
  %v6475 = vpop.permute.xlu0 %6474
  %6476 = vrot.lane.b32.xlu0 %v6286, 20
  %v6477 = vpop.permute.xlu0 %6476
  %6478 = vrot.lane.b32.xlu0 %v6287, 20
  %v6479 = vpop.permute.xlu0 %6478
  %6544 = vst.msk [vmem:[#allocation3] sm:$0xff] %vm2224, %v6353
  %6545 = vst.msk [vmem:[#allocation3 + $0x8] sm:$0xff] %vm2224, %v6355
  %6546 = vst.msk [vmem:[#allocation3 + $0x10] sm:$0xff] %vm2224, %v6357
  %6547 = vst.msk [vmem:[#allocation3 + $0x18] sm:$0xff] %vm2224, %v6359
  %6548 = vst.msk [vmem:[#allocation3 + $0x20] sm:$0xff] %vm2224, %v6361
  %6549 = vst.msk [vmem:[#allocation3 + $0x28] sm:$0xff] %vm2224, %v6363
  %6550 = vst.msk [vmem:[#allocation3 + $0x30] sm:$0xff] %vm2224, %v6365
  %6551 = vst.msk [vmem:[#allocation3 + $0x38] sm:$0xff] %vm2224, %v6367
  %6552 = vst.msk [vmem:[#allocation3 + $0x40] sm:$0xff] %vm2224, %v6369
  %6553 = vst.msk [vmem:[#allocation3 + $0x48] sm:$0xff] %vm2224, %v6371
  %6554 = vst.msk [vmem:[#allocation3 + $0x50] sm:$0xff] %vm2224, %v6373
  %6555 = vst.msk [vmem:[#allocation3 + $0x58] sm:$0xff] %vm2224, %v6375
  %6556 = vst.msk [vmem:[#allocation3 + $0x60] sm:$0xff] %vm2224, %v6377
  %6557 = vst.msk [vmem:[#allocation3 + $0x68] sm:$0xff] %vm2224, %v6379
  %6558 = vst.msk [vmem:[#allocation3 + $0x70] sm:$0xff] %vm2224, %v6381
  %6559 = vst.msk [vmem:[#allocation3 + $0x78] sm:$0xff] %vm2224, %v6383
  %6560 = vst.msk [vmem:[#allocation3 + $0x80] sm:$0xff] %vm2224, %v6385
  %6561 = vst.msk [vmem:[#allocation3 + $0x88] sm:$0xff] %vm2224, %v6387
  %6562 = vst.msk [vmem:[#allocation3 + $0x90] sm:$0xff] %vm2224, %v6389
  %6563 = vst.msk [vmem:[#allocation3 + $0x98] sm:$0xff] %vm2224, %v6391
  %6564 = vst.msk [vmem:[#allocation3 + $0xa0] sm:$0xff] %vm2224, %v6393
  %6565 = vst.msk [vmem:[#allocation3 + $0xa8] sm:$0xff] %vm2224, %v6395
  %6566 = vst.msk [vmem:[#allocation3 + $0xb0] sm:$0xff] %vm2224, %v6397
  %6567 = vst.msk [vmem:[#allocation3 + $0xb8] sm:$0xff] %vm2224, %v6399
  %6568 = vst.msk [vmem:[#allocation3 + $0xc0] sm:$0xff] %vm2224, %v6401
  %6569 = vst.msk [vmem:[#allocation3 + $0xc8] sm:$0xff] %vm2224, %v6403
  %6570 = vst.msk [vmem:[#allocation3 + $0xd0] sm:$0xff] %vm2224, %v6405
  %6571 = vst.msk [vmem:[#allocation3 + $0xd8] sm:$0xff] %vm2224, %v6407
  %6572 = vst.msk [vmem:[#allocation3 + $0xe0] sm:$0xff] %vm2224, %v6409
  %6573 = vst.msk [vmem:[#allocation3 + $0xe8] sm:$0xff] %vm2224, %v6411
  %6574 = vst.msk [vmem:[#allocation3 + $0xf0] sm:$0xff] %vm2224, %v6413
  %6575 = vst.msk [vmem:[#allocation3 + $0xf8] sm:$0xff] %vm2224, %v6415
  %6576 = vst.msk [vmem:[#allocation3 + $0x100] sm:$0xff] %vm2224, %v6417
  %6577 = vst.msk [vmem:[#allocation3 + $0x108] sm:$0xff] %vm2224, %v6419
  %6578 = vst.msk [vmem:[#allocation3 + $0x110] sm:$0xff] %vm2224, %v6421
  %6579 = vst.msk [vmem:[#allocation3 + $0x118] sm:$0xff] %vm2224, %v6423
  %6580 = vst.msk [vmem:[#allocation3 + $0x120] sm:$0xff] %vm2224, %v6425
  %6581 = vst.msk [vmem:[#allocation3 + $0x128] sm:$0xff] %vm2224, %v6427
  %6582 = vst.msk [vmem:[#allocation3 + $0x130] sm:$0xff] %vm2224, %v6429
  %6583 = vst.msk [vmem:[#allocation3 + $0x138] sm:$0xff] %vm2224, %v6431
  %6584 = vst.msk [vmem:[#allocation3 + $0x140] sm:$0xff] %vm2224, %v6433
  %6585 = vst.msk [vmem:[#allocation3 + $0x148] sm:$0xff] %vm2224, %v6435
  %6586 = vst.msk [vmem:[#allocation3 + $0x150] sm:$0xff] %vm2224, %v6437
  %6587 = vst.msk [vmem:[#allocation3 + $0x158] sm:$0xff] %vm2224, %v6439
  %6588 = vst.msk [vmem:[#allocation3 + $0x160] sm:$0xff] %vm2224, %v6441
  %6589 = vst.msk [vmem:[#allocation3 + $0x168] sm:$0xff] %vm2224, %v6443
  %6590 = vst.msk [vmem:[#allocation3 + $0x170] sm:$0xff] %vm2224, %v6445
  %6591 = vst.msk [vmem:[#allocation3 + $0x178] sm:$0xff] %vm2224, %v6447
  %6592 = vst.msk [vmem:[#allocation3 + $0x180] sm:$0xff] %vm2224, %v6449
  %6593 = vst.msk [vmem:[#allocation3 + $0x188] sm:$0xff] %vm2224, %v6451
  %6594 = vst.msk [vmem:[#allocation3 + $0x190] sm:$0xff] %vm2224, %v6453
  %6595 = vst.msk [vmem:[#allocation3 + $0x198] sm:$0xff] %vm2224, %v6455
  %6596 = vst.msk [vmem:[#allocation3 + $0x1a0] sm:$0xff] %vm2224, %v6457
  %6597 = vst.msk [vmem:[#allocation3 + $0x1a8] sm:$0xff] %vm2224, %v6459
  %6598 = vst.msk [vmem:[#allocation3 + $0x1b0] sm:$0xff] %vm2224, %v6461
  %6599 = vst.msk [vmem:[#allocation3 + $0x1b8] sm:$0xff] %vm2224, %v6463
  %6600 = vst.msk [vmem:[#allocation3 + $0x1c0] sm:$0xff] %vm2224, %v6465
  %6601 = vst.msk [vmem:[#allocation3 + $0x1c8] sm:$0xff] %vm2224, %v6467
  %6602 = vst.msk [vmem:[#allocation3 + $0x1d0] sm:$0xff] %vm2224, %v6469
  %6603 = vst.msk [vmem:[#allocation3 + $0x1d8] sm:$0xff] %vm2224, %v6471
  %6604 = vst.msk [vmem:[#allocation3 + $0x1e0] sm:$0xff] %vm2224, %v6473
  %6605 = vst.msk [vmem:[#allocation3 + $0x1e8] sm:$0xff] %vm2224, %v6475
  %6606 = vst.msk [vmem:[#allocation3 + $0x1f0] sm:$0xff] %vm2224, %v6477
  %6607 = vst.msk [vmem:[#allocation3 + $0x1f8] sm:$0xff] %vm2224, %v6479
  %v6608 = vld [vmem:[%s2289] sm:$0xff]
  %v6609 = vld [vmem:[%s2289 + $0x8] sm:$0xff]
  %v6610 = vld [vmem:[%s2289 + $0x18] sm:$0xff]
  %v6611 = vld [vmem:[%s2289 + $0x20] sm:$0xff]
  %v6612 = vld [vmem:[%s2289 + $0x30] sm:$0xff]
  %v6613 = vld [vmem:[%s2289 + $0x38] sm:$0xff]
  %v6614 = vld [vmem:[%s2289 + $0x48] sm:$0xff]
  %v6615 = vld [vmem:[%s2289 + $0x50] sm:$0xff]
  %v6616 = vld [vmem:[%s2289 + $0x60] sm:$0xff]
  %v6617 = vld [vmem:[%s2289 + $0x68] sm:$0xff]
  %v6618 = vld [vmem:[%s2289 + $0x78] sm:$0xff]
  %v6619 = vld [vmem:[%s2289 + $0x80] sm:$0xff]
  %v6620 = vld [vmem:[%s2289 + $0x90] sm:$0xff]
  %v6621 = vld [vmem:[%s2289 + $0x98] sm:$0xff]
  %v6622 = vld [vmem:[%s2289 + $0xa8] sm:$0xff]
  %v6623 = vld [vmem:[%s2289 + $0xb0] sm:$0xff]
  %v6624 = vld [vmem:[%s2289 + $0xc0] sm:$0xff]
  %v6625 = vld [vmem:[%s2289 + $0xc8] sm:$0xff]
  %v6626 = vld [vmem:[%s2289 + $0xd8] sm:$0xff]
  %v6627 = vld [vmem:[%s2289 + $0xe0] sm:$0xff]
  %v6628 = vld [vmem:[%s2289 + $0xf0] sm:$0xff]
  %v6629 = vld [vmem:[%s2289 + $0xf8] sm:$0xff]
  %v6630 = vld [vmem:[%s2289 + $0x108] sm:$0xff]
  %v6631 = vld [vmem:[%s2289 + $0x110] sm:$0xff]
  %v6632 = vld [vmem:[%s2289 + $0x120] sm:$0xff]
  %v6633 = vld [vmem:[%s2289 + $0x128] sm:$0xff]
  %v6634 = vld [vmem:[%s2289 + $0x138] sm:$0xff]
  %v6635 = vld [vmem:[%s2289 + $0x140] sm:$0xff]
  %v6636 = vld [vmem:[%s2289 + $0x150] sm:$0xff]
  %v6637 = vld [vmem:[%s2289 + $0x158] sm:$0xff]
  %v6638 = vld [vmem:[%s2289 + $0x168] sm:$0xff]
  %v6639 = vld [vmem:[%s2289 + $0x170] sm:$0xff]
  %v6640 = vld [vmem:[%s2289 + $0x1b0] sm:$0xff]
  %v6641 = vld [vmem:[%s2289 + $0x1b8] sm:$0xff]
  %v6642 = vld [vmem:[%s2289 + $0x1c8] sm:$0xff]
  %v6643 = vld [vmem:[%s2289 + $0x1d0] sm:$0xff]
  %v6644 = vld [vmem:[%s2289 + $0x1e0] sm:$0xff]
  %v6645 = vld [vmem:[%s2289 + $0x1e8] sm:$0xff]
  %v6646 = vld [vmem:[%s2289 + $0x1f8] sm:$0xff]
  %v6647 = vld [vmem:[%s2289 + $0x200] sm:$0xff]
  %v6648 = vld [vmem:[%s2289 + $0x210] sm:$0xff]
  %v6649 = vld [vmem:[%s2289 + $0x218] sm:$0xff]
  %v6650 = vld [vmem:[%s2289 + $0x228] sm:$0xff]
  %v6651 = vld [vmem:[%s2289 + $0x230] sm:$0xff]
  %v6652 = vld [vmem:[%s2289 + $0x240] sm:$0xff]
  %v6653 = vld [vmem:[%s2289 + $0x248] sm:$0xff]
  %v6654 = vld [vmem:[%s2289 + $0x258] sm:$0xff]
  %v6655 = vld [vmem:[%s2289 + $0x260] sm:$0xff]
  %v6656 = vld [vmem:[%s2289 + $0x270] sm:$0xff]
  %v6657 = vld [vmem:[%s2289 + $0x278] sm:$0xff]
  %v6658 = vld [vmem:[%s2289 + $0x288] sm:$0xff]
  %v6659 = vld [vmem:[%s2289 + $0x290] sm:$0xff]
  %v6660 = vld [vmem:[%s2289 + $0x2a0] sm:$0xff]
  %v6661 = vld [vmem:[%s2289 + $0x2a8] sm:$0xff]
  %v6662 = vld [vmem:[%s2289 + $0x2b8] sm:$0xff]
  %v6663 = vld [vmem:[%s2289 + $0x2c0] sm:$0xff]
  %v6664 = vld [vmem:[%s2289 + $0x2d0] sm:$0xff]
  %v6665 = vld [vmem:[%s2289 + $0x2d8] sm:$0xff]
  %v6666 = vld [vmem:[%s2289 + $0x2e8] sm:$0xff]
  %v6667 = vld [vmem:[%s2289 + $0x2f0] sm:$0xff]
  %v6668 = vld [vmem:[%s2289 + $0x300] sm:$0xff]
  %v6669 = vld [vmem:[%s2289 + $0x308] sm:$0xff]
  %v6670 = vld [vmem:[%s2289 + $0x318] sm:$0xff]
  %v6671 = vld [vmem:[%s2289 + $0x320] sm:$0xff]
  %6736 = vrot.lane.b32.xlu0 %v6608, 24
  %v6737 = vpop.permute.xlu0 %6736
  %6738 = vrot.lane.b32.xlu0 %v6609, 24
  %v6739 = vpop.permute.xlu0 %6738
  %6740 = vrot.lane.b32.xlu0 %v6610, 24
  %v6741 = vpop.permute.xlu0 %6740
  %6742 = vrot.lane.b32.xlu0 %v6611, 24
  %v6743 = vpop.permute.xlu0 %6742
  %6744 = vrot.lane.b32.xlu0 %v6612, 24
  %v6745 = vpop.permute.xlu0 %6744
  %6746 = vrot.lane.b32.xlu0 %v6613, 24
  %v6747 = vpop.permute.xlu0 %6746
  %6748 = vrot.lane.b32.xlu0 %v6614, 24
  %v6749 = vpop.permute.xlu0 %6748
  %6750 = vrot.lane.b32.xlu0 %v6615, 24
  %v6751 = vpop.permute.xlu0 %6750
  %6752 = vrot.lane.b32.xlu0 %v6616, 24
  %v6753 = vpop.permute.xlu0 %6752
  %6754 = vrot.lane.b32.xlu0 %v6617, 24
  %v6755 = vpop.permute.xlu0 %6754
  %6756 = vrot.lane.b32.xlu0 %v6618, 24
  %v6757 = vpop.permute.xlu0 %6756
  %6758 = vrot.lane.b32.xlu0 %v6619, 24
  %v6759 = vpop.permute.xlu0 %6758
  %6760 = vrot.lane.b32.xlu0 %v6620, 24
  %v6761 = vpop.permute.xlu0 %6760
  %6762 = vrot.lane.b32.xlu0 %v6621, 24
  %v6763 = vpop.permute.xlu0 %6762
  %6764 = vrot.lane.b32.xlu0 %v6622, 24
  %v6765 = vpop.permute.xlu0 %6764
  %6766 = vrot.lane.b32.xlu0 %v6623, 24
  %v6767 = vpop.permute.xlu0 %6766
  %6768 = vrot.lane.b32.xlu0 %v6624, 24
  %v6769 = vpop.permute.xlu0 %6768
  %6770 = vrot.lane.b32.xlu0 %v6625, 24
  %v6771 = vpop.permute.xlu0 %6770
  %6772 = vrot.lane.b32.xlu0 %v6626, 24
  %v6773 = vpop.permute.xlu0 %6772
  %6774 = vrot.lane.b32.xlu0 %v6627, 24
  %v6775 = vpop.permute.xlu0 %6774
  %6776 = vrot.lane.b32.xlu0 %v6628, 24
  %v6777 = vpop.permute.xlu0 %6776
  %6778 = vrot.lane.b32.xlu0 %v6629, 24
  %v6779 = vpop.permute.xlu0 %6778
  %6780 = vrot.lane.b32.xlu0 %v6630, 24
  %v6781 = vpop.permute.xlu0 %6780
  %6782 = vrot.lane.b32.xlu0 %v6631, 24
  %v6783 = vpop.permute.xlu0 %6782
  %6784 = vrot.lane.b32.xlu0 %v6632, 24
  %v6785 = vpop.permute.xlu0 %6784
  %6786 = vrot.lane.b32.xlu0 %v6633, 24
  %v6787 = vpop.permute.xlu0 %6786
  %6788 = vrot.lane.b32.xlu0 %v6634, 24
  %v6789 = vpop.permute.xlu0 %6788
  %6790 = vrot.lane.b32.xlu0 %v6635, 24
  %v6791 = vpop.permute.xlu0 %6790
  %6792 = vrot.lane.b32.xlu0 %v6636, 24
  %v6793 = vpop.permute.xlu0 %6792
  %6794 = vrot.lane.b32.xlu0 %v6637, 24
  %v6795 = vpop.permute.xlu0 %6794
  %6796 = vrot.lane.b32.xlu0 %v6638, 24
  %v6797 = vpop.permute.xlu0 %6796
  %6798 = vrot.lane.b32.xlu0 %v6639, 24
  %v6799 = vpop.permute.xlu0 %6798
  %6800 = vrot.lane.b32.xlu0 %v6640, 24
  %v6801 = vpop.permute.xlu0 %6800
  %6802 = vrot.lane.b32.xlu0 %v6641, 24
  %v6803 = vpop.permute.xlu0 %6802
  %6804 = vrot.lane.b32.xlu0 %v6642, 24
  %v6805 = vpop.permute.xlu0 %6804
  %6806 = vrot.lane.b32.xlu0 %v6643, 24
  %v6807 = vpop.permute.xlu0 %6806
  %6808 = vrot.lane.b32.xlu0 %v6644, 24
  %v6809 = vpop.permute.xlu0 %6808
  %6810 = vrot.lane.b32.xlu0 %v6645, 24
  %v6811 = vpop.permute.xlu0 %6810
  %6812 = vrot.lane.b32.xlu0 %v6646, 24
  %v6813 = vpop.permute.xlu0 %6812
  %6814 = vrot.lane.b32.xlu0 %v6647, 24
  %v6815 = vpop.permute.xlu0 %6814
  %6816 = vrot.lane.b32.xlu0 %v6648, 24
  %v6817 = vpop.permute.xlu0 %6816
  %6818 = vrot.lane.b32.xlu0 %v6649, 24
  %v6819 = vpop.permute.xlu0 %6818
  %6820 = vrot.lane.b32.xlu0 %v6650, 24
  %v6821 = vpop.permute.xlu0 %6820
  %6822 = vrot.lane.b32.xlu0 %v6651, 24
  %v6823 = vpop.permute.xlu0 %6822
  %6824 = vrot.lane.b32.xlu0 %v6652, 24
  %v6825 = vpop.permute.xlu0 %6824
  %6826 = vrot.lane.b32.xlu0 %v6653, 24
  %v6827 = vpop.permute.xlu0 %6826
  %6828 = vrot.lane.b32.xlu0 %v6654, 24
  %v6829 = vpop.permute.xlu0 %6828
  %6830 = vrot.lane.b32.xlu0 %v6655, 24
  %v6831 = vpop.permute.xlu0 %6830
  %6832 = vrot.lane.b32.xlu0 %v6656, 24
  %v6833 = vpop.permute.xlu0 %6832
  %6834 = vrot.lane.b32.xlu0 %v6657, 24
  %v6835 = vpop.permute.xlu0 %6834
  %6836 = vrot.lane.b32.xlu0 %v6658, 24
  %v6837 = vpop.permute.xlu0 %6836
  %6838 = vrot.lane.b32.xlu0 %v6659, 24
  %v6839 = vpop.permute.xlu0 %6838
  %6840 = vrot.lane.b32.xlu0 %v6660, 24
  %v6841 = vpop.permute.xlu0 %6840
  %6842 = vrot.lane.b32.xlu0 %v6661, 24
  %v6843 = vpop.permute.xlu0 %6842
  %6844 = vrot.lane.b32.xlu0 %v6662, 24
  %v6845 = vpop.permute.xlu0 %6844
  %6846 = vrot.lane.b32.xlu0 %v6663, 24
  %v6847 = vpop.permute.xlu0 %6846
  %6848 = vrot.lane.b32.xlu0 %v6664, 24
  %v6849 = vpop.permute.xlu0 %6848
  %6850 = vrot.lane.b32.xlu0 %v6665, 24
  %v6851 = vpop.permute.xlu0 %6850
  %6852 = vrot.lane.b32.xlu0 %v6666, 24
  %v6853 = vpop.permute.xlu0 %6852
  %6854 = vrot.lane.b32.xlu0 %v6667, 24
  %v6855 = vpop.permute.xlu0 %6854
  %6856 = vrot.lane.b32.xlu0 %v6668, 24
  %v6857 = vpop.permute.xlu0 %6856
  %6858 = vrot.lane.b32.xlu0 %v6669, 24
  %v6859 = vpop.permute.xlu0 %6858
  %6860 = vrot.lane.b32.xlu0 %v6670, 24
  %v6861 = vpop.permute.xlu0 %6860
  %6862 = vrot.lane.b32.xlu0 %v6671, 24
  %v6863 = vpop.permute.xlu0 %6862
  %6928 = vst.msk [vmem:[#allocation3] sm:$0xff] %vm2610, %v6737
  %6929 = vst.msk [vmem:[#allocation3 + $0x8] sm:$0xff] %vm2610, %v6739
  %6930 = vst.msk [vmem:[#allocation3 + $0x10] sm:$0xff] %vm2610, %v6741
  %6931 = vst.msk [vmem:[#allocation3 + $0x18] sm:$0xff] %vm2610, %v6743
  %6932 = vst.msk [vmem:[#allocation3 + $0x20] sm:$0xff] %vm2610, %v6745
  %6933 = vst.msk [vmem:[#allocation3 + $0x28] sm:$0xff] %vm2610, %v6747
  %6934 = vst.msk [vmem:[#allocation3 + $0x30] sm:$0xff] %vm2610, %v6749
  %6935 = vst.msk [vmem:[#allocation3 + $0x38] sm:$0xff] %vm2610, %v6751
  %6936 = vst.msk [vmem:[#allocation3 + $0x40] sm:$0xff] %vm2610, %v6753
  %6937 = vst.msk [vmem:[#allocation3 + $0x48] sm:$0xff] %vm2610, %v6755
  %6938 = vst.msk [vmem:[#allocation3 + $0x50] sm:$0xff] %vm2610, %v6757
  %6939 = vst.msk [vmem:[#allocation3 + $0x58] sm:$0xff] %vm2610, %v6759
  %6940 = vst.msk [vmem:[#allocation3 + $0x60] sm:$0xff] %vm2610, %v6761
  %6941 = vst.msk [vmem:[#allocation3 + $0x68] sm:$0xff] %vm2610, %v6763
  %6942 = vst.msk [vmem:[#allocation3 + $0x70] sm:$0xff] %vm2610, %v6765
  %6943 = vst.msk [vmem:[#allocation3 + $0x78] sm:$0xff] %vm2610, %v6767
  %6944 = vst.msk [vmem:[#allocation3 + $0x80] sm:$0xff] %vm2610, %v6769
  %6945 = vst.msk [vmem:[#allocation3 + $0x88] sm:$0xff] %vm2610, %v6771
  %6946 = vst.msk [vmem:[#allocation3 + $0x90] sm:$0xff] %vm2610, %v6773
  %6947 = vst.msk [vmem:[#allocation3 + $0x98] sm:$0xff] %vm2610, %v6775
  %6948 = vst.msk [vmem:[#allocation3 + $0xa0] sm:$0xff] %vm2610, %v6777
  %6949 = vst.msk [vmem:[#allocation3 + $0xa8] sm:$0xff] %vm2610, %v6779
  %6950 = vst.msk [vmem:[#allocation3 + $0xb0] sm:$0xff] %vm2610, %v6781
  %6951 = vst.msk [vmem:[#allocation3 + $0xb8] sm:$0xff] %vm2610, %v6783
  %6952 = vst.msk [vmem:[#allocation3 + $0xc0] sm:$0xff] %vm2610, %v6785
  %6953 = vst.msk [vmem:[#allocation3 + $0xc8] sm:$0xff] %vm2610, %v6787
  %6954 = vst.msk [vmem:[#allocation3 + $0xd0] sm:$0xff] %vm2610, %v6789
  %6955 = vst.msk [vmem:[#allocation3 + $0xd8] sm:$0xff] %vm2610, %v6791
  %6956 = vst.msk [vmem:[#allocation3 + $0xe0] sm:$0xff] %vm2610, %v6793
  %6957 = vst.msk [vmem:[#allocation3 + $0xe8] sm:$0xff] %vm2610, %v6795
  %6958 = vst.msk [vmem:[#allocation3 + $0xf0] sm:$0xff] %vm2610, %v6797
  %6959 = vst.msk [vmem:[#allocation3 + $0xf8] sm:$0xff] %vm2610, %v6799
  %6960 = vst.msk [vmem:[#allocation3 + $0x100] sm:$0xff] %vm2610, %v6801
  %6961 = vst.msk [vmem:[#allocation3 + $0x108] sm:$0xff] %vm2610, %v6803
  %6962 = vst.msk [vmem:[#allocation3 + $0x110] sm:$0xff] %vm2610, %v6805
  %6963 = vst.msk [vmem:[#allocation3 + $0x118] sm:$0xff] %vm2610, %v6807
  %6964 = vst.msk [vmem:[#allocation3 + $0x120] sm:$0xff] %vm2610, %v6809
  %6965 = vst.msk [vmem:[#allocation3 + $0x128] sm:$0xff] %vm2610, %v6811
  %6966 = vst.msk [vmem:[#allocation3 + $0x130] sm:$0xff] %vm2610, %v6813
  %6967 = vst.msk [vmem:[#allocation3 + $0x138] sm:$0xff] %vm2610, %v6815
  %6968 = vst.msk [vmem:[#allocation3 + $0x140] sm:$0xff] %vm2610, %v6817
  %6969 = vst.msk [vmem:[#allocation3 + $0x148] sm:$0xff] %vm2610, %v6819
  %6970 = vst.msk [vmem:[#allocation3 + $0x150] sm:$0xff] %vm2610, %v6821
  %6971 = vst.msk [vmem:[#allocation3 + $0x158] sm:$0xff] %vm2610, %v6823
  %6972 = vst.msk [vmem:[#allocation3 + $0x160] sm:$0xff] %vm2610, %v6825
  %6973 = vst.msk [vmem:[#allocation3 + $0x168] sm:$0xff] %vm2610, %v6827
  %6974 = vst.msk [vmem:[#allocation3 + $0x170] sm:$0xff] %vm2610, %v6829
  %6975 = vst.msk [vmem:[#allocation3 + $0x178] sm:$0xff] %vm2610, %v6831
  %6976 = vst.msk [vmem:[#allocation3 + $0x180] sm:$0xff] %vm2610, %v6833
  %6977 = vst.msk [vmem:[#allocation3 + $0x188] sm:$0xff] %vm2610, %v6835
  %6978 = vst.msk [vmem:[#allocation3 + $0x190] sm:$0xff] %vm2610, %v6837
  %6979 = vst.msk [vmem:[#allocation3 + $0x198] sm:$0xff] %vm2610, %v6839
  %6980 = vst.msk [vmem:[#allocation3 + $0x1a0] sm:$0xff] %vm2610, %v6841
  %6981 = vst.msk [vmem:[#allocation3 + $0x1a8] sm:$0xff] %vm2610, %v6843
  %6982 = vst.msk [vmem:[#allocation3 + $0x1b0] sm:$0xff] %vm2610, %v6845
  %6983 = vst.msk [vmem:[#allocation3 + $0x1b8] sm:$0xff] %vm2610, %v6847
  %6984 = vst.msk [vmem:[#allocation3 + $0x1c0] sm:$0xff] %vm2610, %v6849
  %6985 = vst.msk [vmem:[#allocation3 + $0x1c8] sm:$0xff] %vm2610, %v6851
  %6986 = vst.msk [vmem:[#allocation3 + $0x1d0] sm:$0xff] %vm2610, %v6853
  %6987 = vst.msk [vmem:[#allocation3 + $0x1d8] sm:$0xff] %vm2610, %v6855
  %6988 = vst.msk [vmem:[#allocation3 + $0x1e0] sm:$0xff] %vm2610, %v6857
  %6989 = vst.msk [vmem:[#allocation3 + $0x1e8] sm:$0xff] %vm2610, %v6859
  %6990 = vst.msk [vmem:[#allocation3 + $0x1f0] sm:$0xff] %vm2610, %v6861
  %6991 = vst.msk [vmem:[#allocation3 + $0x1f8] sm:$0xff] %vm2610, %v6863
  %v6992 = vld [vmem:[%s2289 + $0x1] sm:$0xff]
  %v6993 = vld [vmem:[%s2289 + $0x9] sm:$0xff]
  %v6994 = vld [vmem:[%s2289 + $0x19] sm:$0xff]
  %v6995 = vld [vmem:[%s2289 + $0x21] sm:$0xff]
  %v6996 = vld [vmem:[%s2289 + $0x31] sm:$0xff]
  %v6997 = vld [vmem:[%s2289 + $0x39] sm:$0xff]
  %v6998 = vld [vmem:[%s2289 + $0x49] sm:$0xff]
  %v6999 = vld [vmem:[%s2289 + $0x51] sm:$0xff]
  %v7000 = vld [vmem:[%s2289 + $0x61] sm:$0xff]
  %v7001 = vld [vmem:[%s2289 + $0x69] sm:$0xff]
  %v7002 = vld [vmem:[%s2289 + $0x79] sm:$0xff]
  %v7003 = vld [vmem:[%s2289 + $0x81] sm:$0xff]
  %v7004 = vld [vmem:[%s2289 + $0x91] sm:$0xff]
  %v7005 = vld [vmem:[%s2289 + $0x99] sm:$0xff]
  %v7006 = vld [vmem:[%s2289 + $0xa9] sm:$0xff]
  %v7007 = vld [vmem:[%s2289 + $0xb1] sm:$0xff]
  %v7008 = vld [vmem:[%s2289 + $0xc1] sm:$0xff]
  %v7009 = vld [vmem:[%s2289 + $0xc9] sm:$0xff]
  %v7010 = vld [vmem:[%s2289 + $0xd9] sm:$0xff]
  %v7011 = vld [vmem:[%s2289 + $0xe1] sm:$0xff]
  %v7012 = vld [vmem:[%s2289 + $0xf1] sm:$0xff]
  %v7013 = vld [vmem:[%s2289 + $0xf9] sm:$0xff]
  %v7014 = vld [vmem:[%s2289 + $0x109] sm:$0xff]
  %v7015 = vld [vmem:[%s2289 + $0x111] sm:$0xff]
  %v7016 = vld [vmem:[%s2289 + $0x121] sm:$0xff]
  %v7017 = vld [vmem:[%s2289 + $0x129] sm:$0xff]
  %v7018 = vld [vmem:[%s2289 + $0x139] sm:$0xff]
  %v7019 = vld [vmem:[%s2289 + $0x141] sm:$0xff]
  %v7020 = vld [vmem:[%s2289 + $0x151] sm:$0xff]
  %v7021 = vld [vmem:[%s2289 + $0x159] sm:$0xff]
  %v7022 = vld [vmem:[%s2289 + $0x169] sm:$0xff]
  %v7023 = vld [vmem:[%s2289 + $0x171] sm:$0xff]
  %v7024 = vld [vmem:[%s2289 + $0x1b1] sm:$0xff]
  %v7025 = vld [vmem:[%s2289 + $0x1b9] sm:$0xff]
  %v7026 = vld [vmem:[%s2289 + $0x1c9] sm:$0xff]
  %v7027 = vld [vmem:[%s2289 + $0x1d1] sm:$0xff]
  %v7028 = vld [vmem:[%s2289 + $0x1e1] sm:$0xff]
  %v7029 = vld [vmem:[%s2289 + $0x1e9] sm:$0xff]
  %v7030 = vld [vmem:[%s2289 + $0x1f9] sm:$0xff]
  %v7031 = vld [vmem:[%s2289 + $0x201] sm:$0xff]
  %v7032 = vld [vmem:[%s2289 + $0x211] sm:$0xff]
  %v7033 = vld [vmem:[%s2289 + $0x219] sm:$0xff]
  %v7034 = vld [vmem:[%s2289 + $0x229] sm:$0xff]
  %v7035 = vld [vmem:[%s2289 + $0x231] sm:$0xff]
  %v7036 = vld [vmem:[%s2289 + $0x241] sm:$0xff]
  %v7037 = vld [vmem:[%s2289 + $0x249] sm:$0xff]
  %v7038 = vld [vmem:[%s2289 + $0x259] sm:$0xff]
  %v7039 = vld [vmem:[%s2289 + $0x261] sm:$0xff]
  %v7040 = vld [vmem:[%s2289 + $0x271] sm:$0xff]
  %v7041 = vld [vmem:[%s2289 + $0x279] sm:$0xff]
  %v7042 = vld [vmem:[%s2289 + $0x289] sm:$0xff]
  %v7043 = vld [vmem:[%s2289 + $0x291] sm:$0xff]
  %v7044 = vld [vmem:[%s2289 + $0x2a1] sm:$0xff]
  %v7045 = vld [vmem:[%s2289 + $0x2a9] sm:$0xff]
  %v7046 = vld [vmem:[%s2289 + $0x2b9] sm:$0xff]
  %v7047 = vld [vmem:[%s2289 + $0x2c1] sm:$0xff]
  %v7048 = vld [vmem:[%s2289 + $0x2d1] sm:$0xff]
  %v7049 = vld [vmem:[%s2289 + $0x2d9] sm:$0xff]
  %v7050 = vld [vmem:[%s2289 + $0x2e9] sm:$0xff]
  %v7051 = vld [vmem:[%s2289 + $0x2f1] sm:$0xff]
  %v7052 = vld [vmem:[%s2289 + $0x301] sm:$0xff]
  %v7053 = vld [vmem:[%s2289 + $0x309] sm:$0xff]
  %v7054 = vld [vmem:[%s2289 + $0x319] sm:$0xff]
  %v7055 = vld [vmem:[%s2289 + $0x321] sm:$0xff]
  %7120 = vrot.lane.b32.xlu0 %v6992, 28
  %v7121 = vpop.permute.xlu0 %7120
  %7122 = vrot.lane.b32.xlu0 %v6993, 28
  %v7123 = vpop.permute.xlu0 %7122
  %7124 = vrot.lane.b32.xlu0 %v6994, 28
  %v7125 = vpop.permute.xlu0 %7124
  %7126 = vrot.lane.b32.xlu0 %v6995, 28
  %v7127 = vpop.permute.xlu0 %7126
  %7128 = vrot.lane.b32.xlu0 %v6996, 28
  %v7129 = vpop.permute.xlu0 %7128
  %7130 = vrot.lane.b32.xlu0 %v6997, 28
  %v7131 = vpop.permute.xlu0 %7130
  %7132 = vrot.lane.b32.xlu0 %v6998, 28
  %v7133 = vpop.permute.xlu0 %7132
  %7134 = vrot.lane.b32.xlu0 %v6999, 28
  %v7135 = vpop.permute.xlu0 %7134
  %7136 = vrot.lane.b32.xlu0 %v7000, 28
  %v7137 = vpop.permute.xlu0 %7136
  %7138 = vrot.lane.b32.xlu0 %v7001, 28
  %v7139 = vpop.permute.xlu0 %7138
  %7140 = vrot.lane.b32.xlu0 %v7002, 28
  %v7141 = vpop.permute.xlu0 %7140
  %7142 = vrot.lane.b32.xlu0 %v7003, 28
  %v7143 = vpop.permute.xlu0 %7142
  %7144 = vrot.lane.b32.xlu0 %v7004, 28
  %v7145 = vpop.permute.xlu0 %7144
  %7146 = vrot.lane.b32.xlu0 %v7005, 28
  %v7147 = vpop.permute.xlu0 %7146
  %7148 = vrot.lane.b32.xlu0 %v7006, 28
  %v7149 = vpop.permute.xlu0 %7148
  %7150 = vrot.lane.b32.xlu0 %v7007, 28
  %v7151 = vpop.permute.xlu0 %7150
  %7152 = vrot.lane.b32.xlu0 %v7008, 28
  %v7153 = vpop.permute.xlu0 %7152
  %7154 = vrot.lane.b32.xlu0 %v7009, 28
  %v7155 = vpop.permute.xlu0 %7154
  %7156 = vrot.lane.b32.xlu0 %v7010, 28
  %v7157 = vpop.permute.xlu0 %7156
  %7158 = vrot.lane.b32.xlu0 %v7011, 28
  %v7159 = vpop.permute.xlu0 %7158
  %7160 = vrot.lane.b32.xlu0 %v7012, 28
  %v7161 = vpop.permute.xlu0 %7160
  %7162 = vrot.lane.b32.xlu0 %v7013, 28
  %v7163 = vpop.permute.xlu0 %7162
  %7164 = vrot.lane.b32.xlu0 %v7014, 28
  %v7165 = vpop.permute.xlu0 %7164
  %7166 = vrot.lane.b32.xlu0 %v7015, 28
  %v7167 = vpop.permute.xlu0 %7166
  %7168 = vrot.lane.b32.xlu0 %v7016, 28
  %v7169 = vpop.permute.xlu0 %7168
  %7170 = vrot.lane.b32.xlu0 %v7017, 28
  %v7171 = vpop.permute.xlu0 %7170
  %7172 = vrot.lane.b32.xlu0 %v7018, 28
  %v7173 = vpop.permute.xlu0 %7172
  %7174 = vrot.lane.b32.xlu0 %v7019, 28
  %v7175 = vpop.permute.xlu0 %7174
  %7176 = vrot.lane.b32.xlu0 %v7020, 28
  %v7177 = vpop.permute.xlu0 %7176
  %7178 = vrot.lane.b32.xlu0 %v7021, 28
  %v7179 = vpop.permute.xlu0 %7178
  %7180 = vrot.lane.b32.xlu0 %v7022, 28
  %v7181 = vpop.permute.xlu0 %7180
  %7182 = vrot.lane.b32.xlu0 %v7023, 28
  %v7183 = vpop.permute.xlu0 %7182
  %7184 = vrot.lane.b32.xlu0 %v7024, 28
  %v7185 = vpop.permute.xlu0 %7184
  %7186 = vrot.lane.b32.xlu0 %v7025, 28
  %v7187 = vpop.permute.xlu0 %7186
  %7188 = vrot.lane.b32.xlu0 %v7026, 28
  %v7189 = vpop.permute.xlu0 %7188
  %7190 = vrot.lane.b32.xlu0 %v7027, 28
  %v7191 = vpop.permute.xlu0 %7190
  %7192 = vrot.lane.b32.xlu0 %v7028, 28
  %v7193 = vpop.permute.xlu0 %7192
  %7194 = vrot.lane.b32.xlu0 %v7029, 28
  %v7195 = vpop.permute.xlu0 %7194
  %7196 = vrot.lane.b32.xlu0 %v7030, 28
  %v7197 = vpop.permute.xlu0 %7196
  %7198 = vrot.lane.b32.xlu0 %v7031, 28
  %v7199 = vpop.permute.xlu0 %7198
  %7200 = vrot.lane.b32.xlu0 %v7032, 28
  %v7201 = vpop.permute.xlu0 %7200
  %7202 = vrot.lane.b32.xlu0 %v7033, 28
  %v7203 = vpop.permute.xlu0 %7202
  %7204 = vrot.lane.b32.xlu0 %v7034, 28
  %v7205 = vpop.permute.xlu0 %7204
  %7206 = vrot.lane.b32.xlu0 %v7035, 28
  %v7207 = vpop.permute.xlu0 %7206
  %7208 = vrot.lane.b32.xlu0 %v7036, 28
  %v7209 = vpop.permute.xlu0 %7208
  %7210 = vrot.lane.b32.xlu0 %v7037, 28
  %v7211 = vpop.permute.xlu0 %7210
  %7212 = vrot.lane.b32.xlu0 %v7038, 28
  %v7213 = vpop.permute.xlu0 %7212
  %7214 = vrot.lane.b32.xlu0 %v7039, 28
  %v7215 = vpop.permute.xlu0 %7214
  %7216 = vrot.lane.b32.xlu0 %v7040, 28
  %v7217 = vpop.permute.xlu0 %7216
  %7218 = vrot.lane.b32.xlu0 %v7041, 28
  %v7219 = vpop.permute.xlu0 %7218
  %7220 = vrot.lane.b32.xlu0 %v7042, 28
  %v7221 = vpop.permute.xlu0 %7220
  %7222 = vrot.lane.b32.xlu0 %v7043, 28
  %v7223 = vpop.permute.xlu0 %7222
  %7224 = vrot.lane.b32.xlu0 %v7044, 28
  %v7225 = vpop.permute.xlu0 %7224
  %7226 = vrot.lane.b32.xlu0 %v7045, 28
  %v7227 = vpop.permute.xlu0 %7226
  %7228 = vrot.lane.b32.xlu0 %v7046, 28
  %v7229 = vpop.permute.xlu0 %7228
  %7230 = vrot.lane.b32.xlu0 %v7047, 28
  %v7231 = vpop.permute.xlu0 %7230
  %7232 = vrot.lane.b32.xlu0 %v7048, 28
  %v7233 = vpop.permute.xlu0 %7232
  %7234 = vrot.lane.b32.xlu0 %v7049, 28
  %v7235 = vpop.permute.xlu0 %7234
  %7236 = vrot.lane.b32.xlu0 %v7050, 28
  %v7237 = vpop.permute.xlu0 %7236
  %7238 = vrot.lane.b32.xlu0 %v7051, 28
  %v7239 = vpop.permute.xlu0 %7238
  %7240 = vrot.lane.b32.xlu0 %v7052, 28
  %v7241 = vpop.permute.xlu0 %7240
  %7242 = vrot.lane.b32.xlu0 %v7053, 28
  %v7243 = vpop.permute.xlu0 %7242
  %7244 = vrot.lane.b32.xlu0 %v7054, 28
  %v7245 = vpop.permute.xlu0 %7244
  %7246 = vrot.lane.b32.xlu0 %v7055, 28
  %v7247 = vpop.permute.xlu0 %7246
  %7312 = vst.msk [vmem:[#allocation3] sm:$0xff] %vm2995, %v7121
  %7313 = vst.msk [vmem:[#allocation3 + $0x8] sm:$0xff] %vm2995, %v7123
  %7314 = vst.msk [vmem:[#allocation3 + $0x10] sm:$0xff] %vm2995, %v7125
  %7315 = vst.msk [vmem:[#allocation3 + $0x18] sm:$0xff] %vm2995, %v7127
  %7316 = vst.msk [vmem:[#allocation3 + $0x20] sm:$0xff] %vm2995, %v7129
  %7317 = vst.msk [vmem:[#allocation3 + $0x28] sm:$0xff] %vm2995, %v7131
  %7318 = vst.msk [vmem:[#allocation3 + $0x30] sm:$0xff] %vm2995, %v7133
  %7319 = vst.msk [vmem:[#allocation3 + $0x38] sm:$0xff] %vm2995, %v7135
  %7320 = vst.msk [vmem:[#allocation3 + $0x40] sm:$0xff] %vm2995, %v7137
  %7321 = vst.msk [vmem:[#allocation3 + $0x48] sm:$0xff] %vm2995, %v7139
  %7322 = vst.msk [vmem:[#allocation3 + $0x50] sm:$0xff] %vm2995, %v7141
  %7323 = vst.msk [vmem:[#allocation3 + $0x58] sm:$0xff] %vm2995, %v7143
  %7324 = vst.msk [vmem:[#allocation3 + $0x60] sm:$0xff] %vm2995, %v7145
  %7325 = vst.msk [vmem:[#allocation3 + $0x68] sm:$0xff] %vm2995, %v7147
  %7326 = vst.msk [vmem:[#allocation3 + $0x70] sm:$0xff] %vm2995, %v7149
  %7327 = vst.msk [vmem:[#allocation3 + $0x78] sm:$0xff] %vm2995, %v7151
  %7328 = vst.msk [vmem:[#allocation3 + $0x80] sm:$0xff] %vm2995, %v7153
  %7329 = vst.msk [vmem:[#allocation3 + $0x88] sm:$0xff] %vm2995, %v7155
  %7330 = vst.msk [vmem:[#allocation3 + $0x90] sm:$0xff] %vm2995, %v7157
  %7331 = vst.msk [vmem:[#allocation3 + $0x98] sm:$0xff] %vm2995, %v7159
  %7332 = vst.msk [vmem:[#allocation3 + $0xa0] sm:$0xff] %vm2995, %v7161
  %7333 = vst.msk [vmem:[#allocation3 + $0xa8] sm:$0xff] %vm2995, %v7163
  %7334 = vst.msk [vmem:[#allocation3 + $0xb0] sm:$0xff] %vm2995, %v7165
  %7335 = vst.msk [vmem:[#allocation3 + $0xb8] sm:$0xff] %vm2995, %v7167
  %7336 = vst.msk [vmem:[#allocation3 + $0xc0] sm:$0xff] %vm2995, %v7169
  %7337 = vst.msk [vmem:[#allocation3 + $0xc8] sm:$0xff] %vm2995, %v7171
  %7338 = vst.msk [vmem:[#allocation3 + $0xd0] sm:$0xff] %vm2995, %v7173
  %7339 = vst.msk [vmem:[#allocation3 + $0xd8] sm:$0xff] %vm2995, %v7175
  %7340 = vst.msk [vmem:[#allocation3 + $0xe0] sm:$0xff] %vm2995, %v7177
  %7341 = vst.msk [vmem:[#allocation3 + $0xe8] sm:$0xff] %vm2995, %v7179
  %7342 = vst.msk [vmem:[#allocation3 + $0xf0] sm:$0xff] %vm2995, %v7181
  %7343 = vst.msk [vmem:[#allocation3 + $0xf8] sm:$0xff] %vm2995, %v7183
  %7344 = vst.msk [vmem:[#allocation3 + $0x100] sm:$0xff] %vm2995, %v7185
  %7345 = vst.msk [vmem:[#allocation3 + $0x108] sm:$0xff] %vm2995, %v7187
  %7346 = vst.msk [vmem:[#allocation3 + $0x110] sm:$0xff] %vm2995, %v7189
  %7347 = vst.msk [vmem:[#allocation3 + $0x118] sm:$0xff] %vm2995, %v7191
  %7348 = vst.msk [vmem:[#allocation3 + $0x120] sm:$0xff] %vm2995, %v7193
  %7349 = vst.msk [vmem:[#allocation3 + $0x128] sm:$0xff] %vm2995, %v7195
  %7350 = vst.msk [vmem:[#allocation3 + $0x130] sm:$0xff] %vm2995, %v7197
  %7351 = vst.msk [vmem:[#allocation3 + $0x138] sm:$0xff] %vm2995, %v7199
  %7352 = vst.msk [vmem:[#allocation3 + $0x140] sm:$0xff] %vm2995, %v7201
  %7353 = vst.msk [vmem:[#allocation3 + $0x148] sm:$0xff] %vm2995, %v7203
  %7354 = vst.msk [vmem:[#allocation3 + $0x150] sm:$0xff] %vm2995, %v7205
  %7355 = vst.msk [vmem:[#allocation3 + $0x158] sm:$0xff] %vm2995, %v7207
  %7356 = vst.msk [vmem:[#allocation3 + $0x160] sm:$0xff] %vm2995, %v7209
  %7357 = vst.msk [vmem:[#allocation3 + $0x168] sm:$0xff] %vm2995, %v7211
  %7358 = vst.msk [vmem:[#allocation3 + $0x170] sm:$0xff] %vm2995, %v7213
  %7359 = vst.msk [vmem:[#allocation3 + $0x178] sm:$0xff] %vm2995, %v7215
  %7360 = vst.msk [vmem:[#allocation3 + $0x180] sm:$0xff] %vm2995, %v7217
  %7361 = vst.msk [vmem:[#allocation3 + $0x188] sm:$0xff] %vm2995, %v7219
  %7362 = vst.msk [vmem:[#allocation3 + $0x190] sm:$0xff] %vm2995, %v7221
  %7363 = vst.msk [vmem:[#allocation3 + $0x198] sm:$0xff] %vm2995, %v7223
  %7364 = vst.msk [vmem:[#allocation3 + $0x1a0] sm:$0xff] %vm2995, %v7225
  %7365 = vst.msk [vmem:[#allocation3 + $0x1a8] sm:$0xff] %vm2995, %v7227
  %7366 = vst.msk [vmem:[#allocation3 + $0x1b0] sm:$0xff] %vm2995, %v7229
  %7367 = vst.msk [vmem:[#allocation3 + $0x1b8] sm:$0xff] %vm2995, %v7231
  %7368 = vst.msk [vmem:[#allocation3 + $0x1c0] sm:$0xff] %vm2995, %v7233
  %7369 = vst.msk [vmem:[#allocation3 + $0x1c8] sm:$0xff] %vm2995, %v7235
  %7370 = vst.msk [vmem:[#allocation3 + $0x1d0] sm:$0xff] %vm2995, %v7237
  %7371 = vst.msk [vmem:[#allocation3 + $0x1d8] sm:$0xff] %vm2995, %v7239
  %7372 = vst.msk [vmem:[#allocation3 + $0x1e0] sm:$0xff] %vm2995, %v7241
  %7373 = vst.msk [vmem:[#allocation3 + $0x1e8] sm:$0xff] %vm2995, %v7243
  %7374 = vst.msk [vmem:[#allocation3 + $0x1f0] sm:$0xff] %vm2995, %v7245
  %7375 = vst.msk [vmem:[#allocation3 + $0x1f8] sm:$0xff] %vm2995, %v7247
  %v7376 = vld [vmem:[%s2289 + $0x2] sm:$0xff]
  %v7377 = vld [vmem:[%s2289 + $0xa] sm:$0xff]
  %v7378 = vld [vmem:[%s2289 + $0x1a] sm:$0xff]
  %v7379 = vld [vmem:[%s2289 + $0x22] sm:$0xff]
  %v7380 = vld [vmem:[%s2289 + $0x32] sm:$0xff]
  %v7381 = vld [vmem:[%s2289 + $0x3a] sm:$0xff]
  %v7382 = vld [vmem:[%s2289 + $0x4a] sm:$0xff]
  %v7383 = vld [vmem:[%s2289 + $0x52] sm:$0xff]
  %v7384 = vld [vmem:[%s2289 + $0x62] sm:$0xff]
  %v7385 = vld [vmem:[%s2289 + $0x6a] sm:$0xff]
  %v7386 = vld [vmem:[%s2289 + $0x7a] sm:$0xff]
  %v7387 = vld [vmem:[%s2289 + $0x82] sm:$0xff]
  %v7388 = vld [vmem:[%s2289 + $0x92] sm:$0xff]
  %v7389 = vld [vmem:[%s2289 + $0x9a] sm:$0xff]
  %v7390 = vld [vmem:[%s2289 + $0xaa] sm:$0xff]
  %v7391 = vld [vmem:[%s2289 + $0xb2] sm:$0xff]
  %v7392 = vld [vmem:[%s2289 + $0xc2] sm:$0xff]
  %v7393 = vld [vmem:[%s2289 + $0xca] sm:$0xff]
  %v7394 = vld [vmem:[%s2289 + $0xda] sm:$0xff]
  %v7395 = vld [vmem:[%s2289 + $0xe2] sm:$0xff]
  %v7396 = vld [vmem:[%s2289 + $0xf2] sm:$0xff]
  %v7397 = vld [vmem:[%s2289 + $0xfa] sm:$0xff]
  %v7398 = vld [vmem:[%s2289 + $0x10a] sm:$0xff]
  %v7399 = vld [vmem:[%s2289 + $0x112] sm:$0xff]
  %v7400 = vld [vmem:[%s2289 + $0x122] sm:$0xff]
  %v7401 = vld [vmem:[%s2289 + $0x12a] sm:$0xff]
  %v7402 = vld [vmem:[%s2289 + $0x13a] sm:$0xff]
  %v7403 = vld [vmem:[%s2289 + $0x142] sm:$0xff]
  %v7404 = vld [vmem:[%s2289 + $0x152] sm:$0xff]
  %v7405 = vld [vmem:[%s2289 + $0x15a] sm:$0xff]
  %v7406 = vld [vmem:[%s2289 + $0x16a] sm:$0xff]
  %v7407 = vld [vmem:[%s2289 + $0x172] sm:$0xff]
  %v7408 = vld [vmem:[%s2289 + $0x1b2] sm:$0xff]
  %v7409 = vld [vmem:[%s2289 + $0x1ba] sm:$0xff]
  %v7410 = vld [vmem:[%s2289 + $0x1ca] sm:$0xff]
  %v7411 = vld [vmem:[%s2289 + $0x1d2] sm:$0xff]
  %v7412 = vld [vmem:[%s2289 + $0x1e2] sm:$0xff]
  %v7413 = vld [vmem:[%s2289 + $0x1ea] sm:$0xff]
  %v7414 = vld [vmem:[%s2289 + $0x1fa] sm:$0xff]
  %v7415 = vld [vmem:[%s2289 + $0x202] sm:$0xff]
  %v7416 = vld [vmem:[%s2289 + $0x212] sm:$0xff]
  %v7417 = vld [vmem:[%s2289 + $0x21a] sm:$0xff]
  %v7418 = vld [vmem:[%s2289 + $0x22a] sm:$0xff]
  %v7419 = vld [vmem:[%s2289 + $0x232] sm:$0xff]
  %v7420 = vld [vmem:[%s2289 + $0x242] sm:$0xff]
  %v7421 = vld [vmem:[%s2289 + $0x24a] sm:$0xff]
  %v7422 = vld [vmem:[%s2289 + $0x25a] sm:$0xff]
  %v7423 = vld [vmem:[%s2289 + $0x262] sm:$0xff]
  %v7424 = vld [vmem:[%s2289 + $0x272] sm:$0xff]
  %v7425 = vld [vmem:[%s2289 + $0x27a] sm:$0xff]
  %v7426 = vld [vmem:[%s2289 + $0x28a] sm:$0xff]
  %v7427 = vld [vmem:[%s2289 + $0x292] sm:$0xff]
  %v7428 = vld [vmem:[%s2289 + $0x2a2] sm:$0xff]
  %v7429 = vld [vmem:[%s2289 + $0x2aa] sm:$0xff]
  %v7430 = vld [vmem:[%s2289 + $0x2ba] sm:$0xff]
  %v7431 = vld [vmem:[%s2289 + $0x2c2] sm:$0xff]
  %v7432 = vld [vmem:[%s2289 + $0x2d2] sm:$0xff]
  %v7433 = vld [vmem:[%s2289 + $0x2da] sm:$0xff]
  %v7434 = vld [vmem:[%s2289 + $0x2ea] sm:$0xff]
  %v7435 = vld [vmem:[%s2289 + $0x2f2] sm:$0xff]
  %v7436 = vld [vmem:[%s2289 + $0x302] sm:$0xff]
  %v7437 = vld [vmem:[%s2289 + $0x30a] sm:$0xff]
  %v7438 = vld [vmem:[%s2289 + $0x31a] sm:$0xff]
  %v7439 = vld [vmem:[%s2289 + $0x322] sm:$0xff]
  %7504 = vrot.lane.b32.xlu0 %v7376, 32
  %v7505 = vpop.permute.xlu0 %7504
  %7506 = vrot.lane.b32.xlu0 %v7377, 32
  %v7507 = vpop.permute.xlu0 %7506
  %7508 = vrot.lane.b32.xlu0 %v7378, 32
  %v7509 = vpop.permute.xlu0 %7508
  %7510 = vrot.lane.b32.xlu0 %v7379, 32
  %v7511 = vpop.permute.xlu0 %7510
  %7512 = vrot.lane.b32.xlu0 %v7380, 32
  %v7513 = vpop.permute.xlu0 %7512
  %7514 = vrot.lane.b32.xlu0 %v7381, 32
  %v7515 = vpop.permute.xlu0 %7514
  %7516 = vrot.lane.b32.xlu0 %v7382, 32
  %v7517 = vpop.permute.xlu0 %7516
  %7518 = vrot.lane.b32.xlu0 %v7383, 32
  %v7519 = vpop.permute.xlu0 %7518
  %7520 = vrot.lane.b32.xlu0 %v7384, 32
  %v7521 = vpop.permute.xlu0 %7520
  %7522 = vrot.lane.b32.xlu0 %v7385, 32
  %v7523 = vpop.permute.xlu0 %7522
  %7524 = vrot.lane.b32.xlu0 %v7386, 32
  %v7525 = vpop.permute.xlu0 %7524
  %7526 = vrot.lane.b32.xlu0 %v7387, 32
  %v7527 = vpop.permute.xlu0 %7526
  %7528 = vrot.lane.b32.xlu0 %v7388, 32
  %v7529 = vpop.permute.xlu0 %7528
  %7530 = vrot.lane.b32.xlu0 %v7389, 32
  %v7531 = vpop.permute.xlu0 %7530
  %7532 = vrot.lane.b32.xlu0 %v7390, 32
  %v7533 = vpop.permute.xlu0 %7532
  %7534 = vrot.lane.b32.xlu0 %v7391, 32
  %v7535 = vpop.permute.xlu0 %7534
  %7536 = vrot.lane.b32.xlu0 %v7392, 32
  %v7537 = vpop.permute.xlu0 %7536
  %7538 = vrot.lane.b32.xlu0 %v7393, 32
  %v7539 = vpop.permute.xlu0 %7538
  %7540 = vrot.lane.b32.xlu0 %v7394, 32
  %v7541 = vpop.permute.xlu0 %7540
  %7542 = vrot.lane.b32.xlu0 %v7395, 32
  %v7543 = vpop.permute.xlu0 %7542
  %7544 = vrot.lane.b32.xlu0 %v7396, 32
  %v7545 = vpop.permute.xlu0 %7544
  %7546 = vrot.lane.b32.xlu0 %v7397, 32
  %v7547 = vpop.permute.xlu0 %7546
  %7548 = vrot.lane.b32.xlu0 %v7398, 32
  %v7549 = vpop.permute.xlu0 %7548
  %7550 = vrot.lane.b32.xlu0 %v7399, 32
  %v7551 = vpop.permute.xlu0 %7550
  %7552 = vrot.lane.b32.xlu0 %v7400, 32
  %v7553 = vpop.permute.xlu0 %7552
  %7554 = vrot.lane.b32.xlu0 %v7401, 32
  %v7555 = vpop.permute.xlu0 %7554
  %7556 = vrot.lane.b32.xlu0 %v7402, 32
  %v7557 = vpop.permute.xlu0 %7556
  %7558 = vrot.lane.b32.xlu0 %v7403, 32
  %v7559 = vpop.permute.xlu0 %7558
  %7560 = vrot.lane.b32.xlu0 %v7404, 32
  %v7561 = vpop.permute.xlu0 %7560
  %7562 = vrot.lane.b32.xlu0 %v7405, 32
  %v7563 = vpop.permute.xlu0 %7562
  %7564 = vrot.lane.b32.xlu0 %v7406, 32
  %v7565 = vpop.permute.xlu0 %7564
  %7566 = vrot.lane.b32.xlu0 %v7407, 32
  %v7567 = vpop.permute.xlu0 %7566
  %7568 = vrot.lane.b32.xlu0 %v7408, 32
  %v7569 = vpop.permute.xlu0 %7568
  %7570 = vrot.lane.b32.xlu0 %v7409, 32
  %v7571 = vpop.permute.xlu0 %7570
  %7572 = vrot.lane.b32.xlu0 %v7410, 32
  %v7573 = vpop.permute.xlu0 %7572
  %7574 = vrot.lane.b32.xlu0 %v7411, 32
  %v7575 = vpop.permute.xlu0 %7574
  %7576 = vrot.lane.b32.xlu0 %v7412, 32
  %v7577 = vpop.permute.xlu0 %7576
  %7578 = vrot.lane.b32.xlu0 %v7413, 32
  %v7579 = vpop.permute.xlu0 %7578
  %7580 = vrot.lane.b32.xlu0 %v7414, 32
  %v7581 = vpop.permute.xlu0 %7580
  %7582 = vrot.lane.b32.xlu0 %v7415, 32
  %v7583 = vpop.permute.xlu0 %7582
  %7584 = vrot.lane.b32.xlu0 %v7416, 32
  %v7585 = vpop.permute.xlu0 %7584
  %7586 = vrot.lane.b32.xlu0 %v7417, 32
  %v7587 = vpop.permute.xlu0 %7586
  %7588 = vrot.lane.b32.xlu0 %v7418, 32
  %v7589 = vpop.permute.xlu0 %7588
  %7590 = vrot.lane.b32.xlu0 %v7419, 32
  %v7591 = vpop.permute.xlu0 %7590
  %7592 = vrot.lane.b32.xlu0 %v7420, 32
  %v7593 = vpop.permute.xlu0 %7592
  %7594 = vrot.lane.b32.xlu0 %v7421, 32
  %v7595 = vpop.permute.xlu0 %7594
  %7596 = vrot.lane.b32.xlu0 %v7422, 32
  %v7597 = vpop.permute.xlu0 %7596
  %7598 = vrot.lane.b32.xlu0 %v7423, 32
  %v7599 = vpop.permute.xlu0 %7598
  %7600 = vrot.lane.b32.xlu0 %v7424, 32
  %v7601 = vpop.permute.xlu0 %7600
  %7602 = vrot.lane.b32.xlu0 %v7425, 32
  %v7603 = vpop.permute.xlu0 %7602
  %7604 = vrot.lane.b32.xlu0 %v7426, 32
  %v7605 = vpop.permute.xlu0 %7604
  %7606 = vrot.lane.b32.xlu0 %v7427, 32
  %v7607 = vpop.permute.xlu0 %7606
  %7608 = vrot.lane.b32.xlu0 %v7428, 32
  %v7609 = vpop.permute.xlu0 %7608
  %7610 = vrot.lane.b32.xlu0 %v7429, 32
  %v7611 = vpop.permute.xlu0 %7610
  %7612 = vrot.lane.b32.xlu0 %v7430, 32
  %v7613 = vpop.permute.xlu0 %7612
  %7614 = vrot.lane.b32.xlu0 %v7431, 32
  %v7615 = vpop.permute.xlu0 %7614
  %7616 = vrot.lane.b32.xlu0 %v7432, 32
  %v7617 = vpop.permute.xlu0 %7616
  %7618 = vrot.lane.b32.xlu0 %v7433, 32
  %v7619 = vpop.permute.xlu0 %7618
  %7620 = vrot.lane.b32.xlu0 %v7434, 32
  %v7621 = vpop.permute.xlu0 %7620
  %7622 = vrot.lane.b32.xlu0 %v7435, 32
  %v7623 = vpop.permute.xlu0 %7622
  %7624 = vrot.lane.b32.xlu0 %v7436, 32
  %v7625 = vpop.permute.xlu0 %7624
  %7626 = vrot.lane.b32.xlu0 %v7437, 32
  %v7627 = vpop.permute.xlu0 %7626
  %7628 = vrot.lane.b32.xlu0 %v7438, 32
  %v7629 = vpop.permute.xlu0 %7628
  %7630 = vrot.lane.b32.xlu0 %v7439, 32
  %v7631 = vpop.permute.xlu0 %7630
  %7696 = vst.msk [vmem:[#allocation3] sm:$0xff] %vm3380, %v7505
  %7697 = vst.msk [vmem:[#allocation3 + $0x8] sm:$0xff] %vm3380, %v7507
  %7698 = vst.msk [vmem:[#allocation3 + $0x10] sm:$0xff] %vm3380, %v7509
  %7699 = vst.msk [vmem:[#allocation3 + $0x18] sm:$0xff] %vm3380, %v7511
  %7700 = vst.msk [vmem:[#allocation3 + $0x20] sm:$0xff] %vm3380, %v7513
  %7701 = vst.msk [vmem:[#allocation3 + $0x28] sm:$0xff] %vm3380, %v7515
  %7702 = vst.msk [vmem:[#allocation3 + $0x30] sm:$0xff] %vm3380, %v7517
  %7703 = vst.msk [vmem:[#allocation3 + $0x38] sm:$0xff] %vm3380, %v7519
  %7704 = vst.msk [vmem:[#allocation3 + $0x40] sm:$0xff] %vm3380, %v7521
  %7705 = vst.msk [vmem:[#allocation3 + $0x48] sm:$0xff] %vm3380, %v7523
  %7706 = vst.msk [vmem:[#allocation3 + $0x50] sm:$0xff] %vm3380, %v7525
  %7707 = vst.msk [vmem:[#allocation3 + $0x58] sm:$0xff] %vm3380, %v7527
  %7708 = vst.msk [vmem:[#allocation3 + $0x60] sm:$0xff] %vm3380, %v7529
  %7709 = vst.msk [vmem:[#allocation3 + $0x68] sm:$0xff] %vm3380, %v7531
  %7710 = vst.msk [vmem:[#allocation3 + $0x70] sm:$0xff] %vm3380, %v7533
  %7711 = vst.msk [vmem:[#allocation3 + $0x78] sm:$0xff] %vm3380, %v7535
  %7712 = vst.msk [vmem:[#allocation3 + $0x80] sm:$0xff] %vm3380, %v7537
  %7713 = vst.msk [vmem:[#allocation3 + $0x88] sm:$0xff] %vm3380, %v7539
  %7714 = vst.msk [vmem:[#allocation3 + $0x90] sm:$0xff] %vm3380, %v7541
  %7715 = vst.msk [vmem:[#allocation3 + $0x98] sm:$0xff] %vm3380, %v7543
  %7716 = vst.msk [vmem:[#allocation3 + $0xa0] sm:$0xff] %vm3380, %v7545
  %7717 = vst.msk [vmem:[#allocation3 + $0xa8] sm:$0xff] %vm3380, %v7547
  %7718 = vst.msk [vmem:[#allocation3 + $0xb0] sm:$0xff] %vm3380, %v7549
  %7719 = vst.msk [vmem:[#allocation3 + $0xb8] sm:$0xff] %vm3380, %v7551
  %7720 = vst.msk [vmem:[#allocation3 + $0xc0] sm:$0xff] %vm3380, %v7553
  %7721 = vst.msk [vmem:[#allocation3 + $0xc8] sm:$0xff] %vm3380, %v7555
  %7722 = vst.msk [vmem:[#allocation3 + $0xd0] sm:$0xff] %vm3380, %v7557
  %7723 = vst.msk [vmem:[#allocation3 + $0xd8] sm:$0xff] %vm3380, %v7559
  %7724 = vst.msk [vmem:[#allocation3 + $0xe0] sm:$0xff] %vm3380, %v7561
  %7725 = vst.msk [vmem:[#allocation3 + $0xe8] sm:$0xff] %vm3380, %v7563
  %7726 = vst.msk [vmem:[#allocation3 + $0xf0] sm:$0xff] %vm3380, %v7565
  %7727 = vst.msk [vmem:[#allocation3 + $0xf8] sm:$0xff] %vm3380, %v7567
  %7728 = vst.msk [vmem:[#allocation3 + $0x100] sm:$0xff] %vm3380, %v7569
  %7729 = vst.msk [vmem:[#allocation3 + $0x108] sm:$0xff] %vm3380, %v7571
  %7730 = vst.msk [vmem:[#allocation3 + $0x110] sm:$0xff] %vm3380, %v7573
  %7731 = vst.msk [vmem:[#allocation3 + $0x118] sm:$0xff] %vm3380, %v7575
  %7732 = vst.msk [vmem:[#allocation3 + $0x120] sm:$0xff] %vm3380, %v7577
  %7733 = vst.msk [vmem:[#allocation3 + $0x128] sm:$0xff] %vm3380, %v7579
  %7734 = vst.msk [vmem:[#allocation3 + $0x130] sm:$0xff] %vm3380, %v7581
  %7735 = vst.msk [vmem:[#allocation3 + $0x138] sm:$0xff] %vm3380, %v7583
  %7736 = vst.msk [vmem:[#allocation3 + $0x140] sm:$0xff] %vm3380, %v7585
  %7737 = vst.msk [vmem:[#allocation3 + $0x148] sm:$0xff] %vm3380, %v7587
  %7738 = vst.msk [vmem:[#allocation3 + $0x150] sm:$0xff] %vm3380, %v7589
  %7739 = vst.msk [vmem:[#allocation3 + $0x158] sm:$0xff] %vm3380, %v7591
  %7740 = vst.msk [vmem:[#allocation3 + $0x160] sm:$0xff] %vm3380, %v7593
  %7741 = vst.msk [vmem:[#allocation3 + $0x168] sm:$0xff] %vm3380, %v7595
  %7742 = vst.msk [vmem:[#allocation3 + $0x170] sm:$0xff] %vm3380, %v7597
  %7743 = vst.msk [vmem:[#allocation3 + $0x178] sm:$0xff] %vm3380, %v7599
  %7744 = vst.msk [vmem:[#allocation3 + $0x180] sm:$0xff] %vm3380, %v7601
  %7745 = vst.msk [vmem:[#allocation3 + $0x188] sm:$0xff] %vm3380, %v7603
  %7746 = vst.msk [vmem:[#allocation3 + $0x190] sm:$0xff] %vm3380, %v7605
  %7747 = vst.msk [vmem:[#allocation3 + $0x198] sm:$0xff] %vm3380, %v7607
  %7748 = vst.msk [vmem:[#allocation3 + $0x1a0] sm:$0xff] %vm3380, %v7609
  %7749 = vst.msk [vmem:[#allocation3 + $0x1a8] sm:$0xff] %vm3380, %v7611
  %7750 = vst.msk [vmem:[#allocation3 + $0x1b0] sm:$0xff] %vm3380, %v7613
  %7751 = vst.msk [vmem:[#allocation3 + $0x1b8] sm:$0xff] %vm3380, %v7615
  %7752 = vst.msk [vmem:[#allocation3 + $0x1c0] sm:$0xff] %vm3380, %v7617
  %7753 = vst.msk [vmem:[#allocation3 + $0x1c8] sm:$0xff] %vm3380, %v7619
  %7754 = vst.msk [vmem:[#allocation3 + $0x1d0] sm:$0xff] %vm3380, %v7621
  %7755 = vst.msk [vmem:[#allocation3 + $0x1d8] sm:$0xff] %vm3380, %v7623
  %7756 = vst.msk [vmem:[#allocation3 + $0x1e0] sm:$0xff] %vm3380, %v7625
  %7757 = vst.msk [vmem:[#allocation3 + $0x1e8] sm:$0xff] %vm3380, %v7627
  %7758 = vst.msk [vmem:[#allocation3 + $0x1f0] sm:$0xff] %vm3380, %v7629
  %7759 = vst.msk [vmem:[#allocation3 + $0x1f8] sm:$0xff] %vm3380, %v7631
  %v7760 = vld [vmem:[#allocation3] sm:$0xff]
  %v7761 = vld [vmem:[#allocation3 + $0x8] sm:$0xff]
  %v7762 = vld [vmem:[#allocation3 + $0x10] sm:$0xff]
  %v7763 = vld [vmem:[#allocation3 + $0x18] sm:$0xff]
  %v7764 = vld [vmem:[#allocation3 + $0x20] sm:$0xff]
  %v7765 = vld [vmem:[#allocation3 + $0x28] sm:$0xff]
  %v7766 = vld [vmem:[#allocation3 + $0x30] sm:$0xff]
  %v7767 = vld [vmem:[#allocation3 + $0x38] sm:$0xff]
  %v7768 = vld [vmem:[#allocation3 + $0x40] sm:$0xff]
  %v7769 = vld [vmem:[#allocation3 + $0x48] sm:$0xff]
  %v7770 = vld [vmem:[#allocation3 + $0x50] sm:$0xff]
  %v7771 = vld [vmem:[#allocation3 + $0x58] sm:$0xff]
  %v7772 = vld [vmem:[#allocation3 + $0x60] sm:$0xff]
  %v7773 = vld [vmem:[#allocation3 + $0x68] sm:$0xff]
  %v7774 = vld [vmem:[#allocation3 + $0x70] sm:$0xff]
  %v7775 = vld [vmem:[#allocation3 + $0x78] sm:$0xff]
  %v7776 = vld [vmem:[#allocation3 + $0x80] sm:$0xff]
  %v7777 = vld [vmem:[#allocation3 + $0x88] sm:$0xff]
  %v7778 = vld [vmem:[#allocation3 + $0x90] sm:$0xff]
  %v7779 = vld [vmem:[#allocation3 + $0x98] sm:$0xff]
  %v7780 = vld [vmem:[#allocation3 + $0xa0] sm:$0xff]
  %v7781 = vld [vmem:[#allocation3 + $0xa8] sm:$0xff]
  %v7782 = vld [vmem:[#allocation3 + $0xb0] sm:$0xff]
  %v7783 = vld [vmem:[#allocation3 + $0xb8] sm:$0xff]
  %v7784 = vld [vmem:[#allocation3 + $0xc0] sm:$0xff]
  %v7785 = vld [vmem:[#allocation3 + $0xc8] sm:$0xff]
  %v7786 = vld [vmem:[#allocation3 + $0xd0] sm:$0xff]
  %v7787 = vld [vmem:[#allocation3 + $0xd8] sm:$0xff]
  %v7788 = vld [vmem:[#allocation3 + $0xe0] sm:$0xff]
  %v7789 = vld [vmem:[#allocation3 + $0xe8] sm:$0xff]
  %v7790 = vld [vmem:[#allocation3 + $0xf0] sm:$0xff]
  %v7791 = vld [vmem:[#allocation3 + $0xf8] sm:$0xff]
  %v7792 = vld [vmem:[#allocation3 + $0x100] sm:$0xff]
  %v7793 = vld [vmem:[#allocation3 + $0x108] sm:$0xff]
  %v7794 = vld [vmem:[#allocation3 + $0x110] sm:$0xff]
  %v7795 = vld [vmem:[#allocation3 + $0x118] sm:$0xff]
  %v7796 = vld [vmem:[#allocation3 + $0x120] sm:$0xff]
  %v7797 = vld [vmem:[#allocation3 + $0x128] sm:$0xff]
  %v7798 = vld [vmem:[#allocation3 + $0x130] sm:$0xff]
  %v7799 = vld [vmem:[#allocation3 + $0x138] sm:$0xff]
  %v7800 = vld [vmem:[#allocation3 + $0x140] sm:$0xff]
  %v7801 = vld [vmem:[#allocation3 + $0x148] sm:$0xff]
  %v7802 = vld [vmem:[#allocation3 + $0x150] sm:$0xff]
  %v7803 = vld [vmem:[#allocation3 + $0x158] sm:$0xff]
  %v7804 = vld [vmem:[#allocation3 + $0x160] sm:$0xff]
  %v7805 = vld [vmem:[#allocation3 + $0x168] sm:$0xff]
  %v7806 = vld [vmem:[#allocation3 + $0x170] sm:$0xff]
  %v7807 = vld [vmem:[#allocation3 + $0x178] sm:$0xff]
  %v7808 = vld [vmem:[#allocation3 + $0x180] sm:$0xff]
  %v7809 = vld [vmem:[#allocation3 + $0x188] sm:$0xff]
  %v7810 = vld [vmem:[#allocation3 + $0x190] sm:$0xff]
  %v7811 = vld [vmem:[#allocation3 + $0x198] sm:$0xff]
  %v7812 = vld [vmem:[#allocation3 + $0x1a0] sm:$0xff]
  %v7813 = vld [vmem:[#allocation3 + $0x1a8] sm:$0xff]
  %v7814 = vld [vmem:[#allocation3 + $0x1b0] sm:$0xff]
  %v7815 = vld [vmem:[#allocation3 + $0x1b8] sm:$0xff]
  %v7816 = vld [vmem:[#allocation3 + $0x1c0] sm:$0xff]
  %v7817 = vld [vmem:[#allocation3 + $0x1c8] sm:$0xff]
  %v7818 = vld [vmem:[#allocation3 + $0x1d0] sm:$0xff]
  %v7819 = vld [vmem:[#allocation3 + $0x1d8] sm:$0xff]
  %v7820 = vld [vmem:[#allocation3 + $0x1e0] sm:$0xff]
  %v7821 = vld [vmem:[#allocation3 + $0x1e8] sm:$0xff]
  %v7822 = vld [vmem:[#allocation3 + $0x1f0] sm:$0xff]
  %v7823 = vld [vmem:[#allocation3 + $0x1f8] sm:$0xff]
  %v7824 = vpack.c.bf16 %v7761, %v7760
  %v7825 = vpack.c.bf16 %v7763, %v7762
  %v7826 = vpack.c.bf16 %v7765, %v7764
  %v7827 = vpack.c.bf16 %v7767, %v7766
  %v7828 = vpack.c.bf16 %v7769, %v7768
  %v7829 = vpack.c.bf16 %v7771, %v7770
  %v7830 = vpack.c.bf16 %v7773, %v7772
  %v7831 = vpack.c.bf16 %v7775, %v7774
  %v7832 = vpack.c.bf16 %v7777, %v7776
  %v7833 = vpack.c.bf16 %v7779, %v7778
  %v7834 = vpack.c.bf16 %v7781, %v7780
  %v7835 = vpack.c.bf16 %v7783, %v7782
  %v7836 = vpack.c.bf16 %v7785, %v7784
  %v7837 = vpack.c.bf16 %v7787, %v7786
  %v7838 = vpack.c.bf16 %v7789, %v7788
  %v7839 = vpack.c.bf16 %v7791, %v7790
  %v7840 = vpack.c.bf16 %v7793, %v7792
  %v7841 = vpack.c.bf16 %v7795, %v7794
  %v7842 = vpack.c.bf16 %v7797, %v7796
  %v7843 = vpack.c.bf16 %v7799, %v7798
  %v7844 = vpack.c.bf16 %v7801, %v7800
  %v7845 = vpack.c.bf16 %v7803, %v7802
  %v7846 = vpack.c.bf16 %v7805, %v7804
  %v7847 = vpack.c.bf16 %v7807, %v7806
  %v7848 = vpack.c.bf16 %v7809, %v7808
  %v7849 = vpack.c.bf16 %v7811, %v7810
  %v7850 = vpack.c.bf16 %v7813, %v7812
  %v7851 = vpack.c.bf16 %v7815, %v7814
  %v7852 = vpack.c.bf16 %v7817, %v7816
  %v7853 = vpack.c.bf16 %v7819, %v7818
  %v7854 = vpack.c.bf16 %v7821, %v7820
  %v7855 = vpack.c.bf16 %v7823, %v7822
  %v7856 = vld [vmem:[%s4] sm:$0xf]
  %v7857 = vld [vmem:[%s4 + $0x4] sm:$0xf]
  %v7858 = vld [vmem:[%s4 + $0x8] sm:$0xf]
  %v7859 = vld [vmem:[%s4 + $0xc] sm:$0xf]
  %v7860 = vld [vmem:[%s4 + $0x10] sm:$0x3]
  %v7866 = vunpack.c.l.b16 %v7856
  %v7867 = vunpack.c.l.b16 %v7857
  %v7868 = vunpack.c.l.b16 %v7858
  %v7869 = vunpack.c.l.b16 %v7859
  %v7870 = vunpack.c.l.b16 %v7860
  %v7871 = vpack.c.b16 %v7867, %v7866
  %v7872 = vpack.c.b16 %v7869, %v7868
  %v7873 = vpack.c.b16 %v7870, %v7870
  %v7877 = vsel %vm3561, %v7824, 0
  %v7880 = vsel %vm3561, %v7825, 0
  %v7883 = vsel %vm3561, %v7826, 0
  %v7886 = vsel %vm3561, %v7827, 0
  %v7889 = vsel %vm3561, %v7828, 0
  %v7892 = vsel %vm3561, %v7829, 0
  %v7895 = vsel %vm3561, %v7830, 0
  %v7898 = vsel %vm3561, %v7831, 0
  %v7901 = vsel %vm3561, %v7832, 0
  %v7904 = vsel %vm3561, %v7833, 0
  %v7907 = vsel %vm3561, %v7834, 0
  %v7910 = vsel %vm3561, %v7835, 0
  %v7913 = vsel %vm3561, %v7836, 0
  %v7916 = vsel %vm3561, %v7837, 0
  %v7919 = vsel %vm3561, %v7838, 0
  %v7922 = vsel %vm3561, %v7839, 0
  %v7925 = vsel %vm3561, %v7840, 0
  %v7928 = vsel %vm3561, %v7841, 0
  %v7931 = vsel %vm3561, %v7842, 0
  %v7934 = vsel %vm3561, %v7843, 0
  %v7937 = vsel %vm3561, %v7844, 0
  %v7940 = vsel %vm3561, %v7845, 0
  %v7943 = vsel %vm3561, %v7846, 0
  %v7946 = vsel %vm3561, %v7847, 0
  %v7949 = vsel %vm3561, %v7848, 0
  %v7952 = vsel %vm3561, %v7849, 0
  %v7955 = vsel %vm3561, %v7850, 0
  %v7958 = vsel %vm3561, %v7851, 0
  %v7961 = vsel %vm3561, %v7852, 0
  %v7964 = vsel %vm3561, %v7853, 0
  %v7967 = vsel %vm3561, %v7854, 0
  %v7970 = vsel %vm3561, %v7855, 0
  %v7973 = vsel %vm3658, %v7873, 0
  %7975 = vmatprep.subr.bf16.mxu0 0
  %7976 = vmatpush1.bf16.msra.mxu0 %v7871
  %7977 = vmatprep.subr.bf16.mxu0 0
  %7978 = vmatpush1.bf16.msra.mxu0 %v7872
  %7979 = vmatprep.subr.bf16.mxu0 0
  %7980 = vmatpush1.bf16.msra.mxu0 %v7973
  %7981 = vmatprep.subr.bf16.mxu0 0
  %7982 = vmatpush1.bf16.msra.mxu0 0
  %7983 = vmatprep.subr.bf16.mxu0 0
  %7984 = vmatpush1.bf16.msra.mxu0 0
  %7985 = vmatprep.subr.bf16.mxu0 0
  %7986 = vmatpush1.bf16.msra.mxu0 0
  %7987 = vmatprep.subr.bf16.mxu0 0
  %7988 = vmatpush1.bf16.msra.mxu0 0
  %7989 = vmatprep.subr.bf16.mxu0 0
  %7990 = vmatpush1.bf16.msra.mxu0 0
  %7991 = vmatprep.subr.bf16.mxu0 0
  %7992 = vmatpush1.bf16.msra.mxu0 0
  %7993 = vmatprep.subr.bf16.mxu0 0
  %7994 = vmatpush1.bf16.msra.mxu0 0
  %7995 = vmatprep.subr.bf16.mxu0 0
  %7996 = vmatpush1.bf16.msra.mxu0 0
  %7997 = vmatprep.subr.bf16.mxu0 0
  %7998 = vmatpush1.bf16.msra.mxu0 0
  %7999 = vmatprep.subr.bf16.mxu0 0
  %8000 = vmatpush1.bf16.msra.mxu0 0
  %8001 = vmatprep.subr.bf16.mxu0 0
  %8002 = vmatpush1.bf16.msra.mxu0 0
  %8003 = vmatprep.subr.bf16.mxu0 0
  %8004 = vmatpush1.bf16.msra.mxu0 0
  %8005 = vmatprep.subr.bf16.mxu0 0
  %8006 = vmatpush1.bf16.msra.mxu0 0
  %8007 = vmatprep.mubr.bf16.mxu0 0
  %8008 = vmatmul.mubr.bf16.gmra.mrb[0].mxu0 %v7877
  %v8009 = vpop.f32.mrb[0].mxu0
  %v8010 = vadd.f32 0.0, %v8009
  %v8011 = vpop.f32.mrb[0].mxu0
  %v8012 = vpop.f32.mrb[0].mxu0
  %v8013 = vadd.f32 0.0, %v8012
  %v8014 = vpop.f32.mrb[0].mxu0
  %8015 = vmatprep.mubr.bf16.mxu0 0
  %8016 = vmatmul.mubr.bf16.gmra.mrb[0].mxu0 %v7880
  %v8017 = vpop.f32.mrb[0].mxu0
  %v8018 = vadd.f32 0.0, %v8017
  %v8019 = vpop.f32.mrb[0].mxu0
  %v8020 = vpop.f32.mrb[0].mxu0
  %v8021 = vadd.f32 0.0, %v8020
  %v8022 = vpop.f32.mrb[0].mxu0
  %8023 = vmatprep.mubr.bf16.mxu0 0
  %8024 = vmatmul.mubr.bf16.gmra.mrb[0].mxu0 %v7883
  %v8025 = vpop.f32.mrb[0].mxu0
  %v8026 = vadd.f32 0.0, %v8025
  %v8027 = vpop.f32.mrb[0].mxu0
  %v8028 = vpop.f32.mrb[0].mxu0
  %v8029 = vadd.f32 0.0, %v8028
  %v8030 = vpop.f32.mrb[0].mxu0
  %8031 = vmatprep.mubr.bf16.mxu0 0
  %8032 = vmatmul.mubr.bf16.gmra.mrb[0].mxu0 %v7886
  %v8033 = vpop.f32.mrb[0].mxu0
  %v8034 = vadd.f32 0.0, %v8033
  %v8035 = vpop.f32.mrb[0].mxu0
  %v8036 = vpop.f32.mrb[0].mxu0
  %v8037 = vadd.f32 0.0, %v8036
  %v8038 = vpop.f32.mrb[0].mxu0
  %8039 = vmatprep.mubr.bf16.mxu0 0
  %8040 = vmatmul.mubr.bf16.gmra.mrb[0].mxu0 %v7889
  %v8041 = vpop.f32.mrb[0].mxu0
  %v8042 = vadd.f32 0.0, %v8041
  %v8043 = vpop.f32.mrb[0].mxu0
  %v8044 = vpop.f32.mrb[0].mxu0
  %v8045 = vadd.f32 0.0, %v8044
  %v8046 = vpop.f32.mrb[0].mxu0
  %8047 = vmatprep.mubr.bf16.mxu0 0
  %8048 = vmatmul.mubr.bf16.gmra.mrb[0].mxu0 %v7892
  %v8049 = vpop.f32.mrb[0].mxu0
  %v8050 = vadd.f32 0.0, %v8049
  %v8051 = vpop.f32.mrb[0].mxu0
  %v8052 = vpop.f32.mrb[0].mxu0
  %v8053 = vadd.f32 0.0, %v8052
  %v8054 = vpop.f32.mrb[0].mxu0
  %8055 = vmatprep.mubr.bf16.mxu0 0
  %8056 = vmatmul.mubr.bf16.gmra.mrb[0].mxu0 %v7895
  %v8057 = vpop.f32.mrb[0].mxu0
  %v8058 = vadd.f32 0.0, %v8057
  %v8059 = vpop.f32.mrb[0].mxu0
  %v8060 = vpop.f32.mrb[0].mxu0
  %v8061 = vadd.f32 0.0, %v8060
  %v8062 = vpop.f32.mrb[0].mxu0
  %8063 = vmatprep.mubr.bf16.mxu0 0
  %8064 = vmatmul.mubr.bf16.gmra.mrb[0].mxu0 %v7898
  %v8065 = vpop.f32.mrb[0].mxu0
  %v8066 = vadd.f32 0.0, %v8065
  %v8067 = vpop.f32.mrb[0].mxu0
  %v8068 = vpop.f32.mrb[0].mxu0
  %v8069 = vadd.f32 0.0, %v8068
  %v8070 = vpop.f32.mrb[0].mxu0
  %8071 = vmatprep.mubr.bf16.mxu0 0
  %8072 = vmatmul.mubr.bf16.gmra.mrb[0].mxu0 %v7901
  %v8073 = vpop.f32.mrb[0].mxu0
  %v8074 = vadd.f32 0.0, %v8073
  %v8075 = vpop.f32.mrb[0].mxu0
  %v8076 = vpop.f32.mrb[0].mxu0
  %v8077 = vadd.f32 0.0, %v8076
  %v8078 = vpop.f32.mrb[0].mxu0
  %8079 = vmatprep.mubr.bf16.mxu0 0
  %8080 = vmatmul.mubr.bf16.gmra.mrb[0].mxu0 %v7904
  %v8081 = vpop.f32.mrb[0].mxu0
  %v8082 = vadd.f32 0.0, %v8081
  %v8083 = vpop.f32.mrb[0].mxu0
  %v8084 = vpop.f32.mrb[0].mxu0
  %v8085 = vadd.f32 0.0, %v8084
  %v8086 = vpop.f32.mrb[0].mxu0
  %8087 = vmatprep.mubr.bf16.mxu0 0
  %8088 = vmatmul.mubr.bf16.gmra.mrb[0].mxu0 %v7907
  %v8089 = vpop.f32.mrb[0].mxu0
  %v8090 = vadd.f32 0.0, %v8089
  %v8091 = vpop.f32.mrb[0].mxu0
  %v8092 = vpop.f32.mrb[0].mxu0
  %v8093 = vadd.f32 0.0, %v8092
  %v8094 = vpop.f32.mrb[0].mxu0
  %8095 = vmatprep.mubr.bf16.mxu0 0
  %8096 = vmatmul.mubr.bf16.gmra.mrb[0].mxu0 %v7910
  %v8097 = vpop.f32.mrb[0].mxu0
  %v8098 = vadd.f32 0.0, %v8097
  %v8099 = vpop.f32.mrb[0].mxu0
  %v8100 = vpop.f32.mrb[0].mxu0
  %v8101 = vadd.f32 0.0, %v8100
  %v8102 = vpop.f32.mrb[0].mxu0
  %8103 = vmatprep.mubr.bf16.mxu0 0
  %8104 = vmatmul.mubr.bf16.gmra.mrb[0].mxu0 %v7913
  %v8105 = vpop.f32.mrb[0].mxu0
  %v8106 = vadd.f32 0.0, %v8105
  %v8107 = vpop.f32.mrb[0].mxu0
  %v8108 = vpop.f32.mrb[0].mxu0
  %v8109 = vadd.f32 0.0, %v8108
  %v8110 = vpop.f32.mrb[0].mxu0
  %8111 = vmatprep.mubr.bf16.mxu0 0
  %8112 = vmatmul.mubr.bf16.gmra.mrb[0].mxu0 %v7916
  %v8113 = vpop.f32.mrb[0].mxu0
  %v8114 = vadd.f32 0.0, %v8113
  %v8115 = vpop.f32.mrb[0].mxu0
  %v8116 = vpop.f32.mrb[0].mxu0
  %v8117 = vadd.f32 0.0, %v8116
  %v8118 = vpop.f32.mrb[0].mxu0
  %8119 = vmatprep.mubr.bf16.mxu0 0
  %8120 = vmatmul.mubr.bf16.gmra.mrb[0].mxu0 %v7919
  %v8121 = vpop.f32.mrb[0].mxu0
  %v8122 = vadd.f32 0.0, %v8121
  %v8123 = vpop.f32.mrb[0].mxu0
  %v8124 = vpop.f32.mrb[0].mxu0
  %v8125 = vadd.f32 0.0, %v8124
  %v8126 = vpop.f32.mrb[0].mxu0
  %8127 = vmatprep.mubr.bf16.mxu0 0
  %8128 = vmatmul.mubr.bf16.gmra.mrb[0].mxu0 %v7922
  %v8129 = vpop.f32.mrb[0].mxu0
  %v8130 = vadd.f32 0.0, %v8129
  %v8131 = vpop.f32.mrb[0].mxu0
  %v8132 = vpop.f32.mrb[0].mxu0
  %v8133 = vadd.f32 0.0, %v8132
  %v8134 = vpop.f32.mrb[0].mxu0
  %8135 = vmatprep.mubr.bf16.mxu0 0
  %8136 = vmatmul.mubr.bf16.gmra.mrb[0].mxu0 %v7925
  %v8137 = vpop.f32.mrb[0].mxu0
  %v8138 = vadd.f32 0.0, %v8137
  %v8139 = vpop.f32.mrb[0].mxu0
  %v8140 = vpop.f32.mrb[0].mxu0
  %v8141 = vadd.f32 0.0, %v8140
  %v8142 = vpop.f32.mrb[0].mxu0
  %8143 = vmatprep.mubr.bf16.mxu0 0
  %8144 = vmatmul.mubr.bf16.gmra.mrb[0].mxu0 %v7928
  %v8145 = vpop.f32.mrb[0].mxu0
  %v8146 = vadd.f32 0.0, %v8145
  %v8147 = vpop.f32.mrb[0].mxu0
  %v8148 = vpop.f32.mrb[0].mxu0
  %v8149 = vadd.f32 0.0, %v8148
  %v8150 = vpop.f32.mrb[0].mxu0
  %8151 = vmatprep.mubr.bf16.mxu0 0
  %8152 = vmatmul.mubr.bf16.gmra.mrb[0].mxu0 %v7931
  %v8153 = vpop.f32.mrb[0].mxu0
  %v8154 = vadd.f32 0.0, %v8153
  %v8155 = vpop.f32.mrb[0].mxu0
  %v8156 = vpop.f32.mrb[0].mxu0
  %v8157 = vadd.f32 0.0, %v8156
  %v8158 = vpop.f32.mrb[0].mxu0
  %8159 = vmatprep.mubr.bf16.mxu0 0
  %8160 = vmatmul.mubr.bf16.gmra.mrb[0].mxu0 %v7934
  %v8161 = vpop.f32.mrb[0].mxu0
  %v8162 = vadd.f32 0.0, %v8161
  %v8163 = vpop.f32.mrb[0].mxu0
  %v8164 = vpop.f32.mrb[0].mxu0
  %v8165 = vadd.f32 0.0, %v8164
  %v8166 = vpop.f32.mrb[0].mxu0
  %8167 = vmatprep.mubr.bf16.mxu0 0
  %8168 = vmatmul.mubr.bf16.gmra.mrb[0].mxu0 %v7937
  %v8169 = vpop.f32.mrb[0].mxu0
  %v8170 = vadd.f32 0.0, %v8169
  %v8171 = vpop.f32.mrb[0].mxu0
  %v8172 = vpop.f32.mrb[0].mxu0
  %v8173 = vadd.f32 0.0, %v8172
  %v8174 = vpop.f32.mrb[0].mxu0
  %8175 = vmatprep.mubr.bf16.mxu0 0
  %8176 = vmatmul.mubr.bf16.gmra.mrb[0].mxu0 %v7940
  %v8177 = vpop.f32.mrb[0].mxu0
  %v8178 = vadd.f32 0.0, %v8177
  %v8179 = vpop.f32.mrb[0].mxu0
  %v8180 = vpop.f32.mrb[0].mxu0
  %v8181 = vadd.f32 0.0, %v8180
  %v8182 = vpop.f32.mrb[0].mxu0
  %8183 = vmatprep.mubr.bf16.mxu0 0
  %8184 = vmatmul.mubr.bf16.gmra.mrb[0].mxu0 %v7943
  %v8185 = vpop.f32.mrb[0].mxu0
  %v8186 = vadd.f32 0.0, %v8185
  %v8187 = vpop.f32.mrb[0].mxu0
  %v8188 = vpop.f32.mrb[0].mxu0
  %v8189 = vadd.f32 0.0, %v8188
  %v8190 = vpop.f32.mrb[0].mxu0
  %8191 = vmatprep.mubr.bf16.mxu0 0
  %8192 = vmatmul.mubr.bf16.gmra.mrb[0].mxu0 %v7946
  %v8193 = vpop.f32.mrb[0].mxu0
  %v8194 = vadd.f32 0.0, %v8193
  %v8195 = vpop.f32.mrb[0].mxu0
  %v8196 = vpop.f32.mrb[0].mxu0
  %v8197 = vadd.f32 0.0, %v8196
  %v8198 = vpop.f32.mrb[0].mxu0
  %8199 = vmatprep.mubr.bf16.mxu0 0
  %8200 = vmatmul.mubr.bf16.gmra.mrb[0].mxu0 %v7949
  %v8201 = vpop.f32.mrb[0].mxu0
  %v8202 = vadd.f32 0.0, %v8201
  %v8203 = vpop.f32.mrb[0].mxu0
  %v8204 = vpop.f32.mrb[0].mxu0
  %v8205 = vadd.f32 0.0, %v8204
  %v8206 = vpop.f32.mrb[0].mxu0
  %8207 = vmatprep.mubr.bf16.mxu0 0
  %8208 = vmatmul.mubr.bf16.gmra.mrb[0].mxu0 %v7952
  %v8209 = vpop.f32.mrb[0].mxu0
  %v8210 = vadd.f32 0.0, %v8209
  %v8211 = vpop.f32.mrb[0].mxu0
  %v8212 = vpop.f32.mrb[0].mxu0
  %v8213 = vadd.f32 0.0, %v8212
  %v8214 = vpop.f32.mrb[0].mxu0
  %8215 = vmatprep.mubr.bf16.mxu0 0
  %8216 = vmatmul.mubr.bf16.gmra.mrb[0].mxu0 %v7955
  %v8217 = vpop.f32.mrb[0].mxu0
  %v8218 = vadd.f32 0.0, %v8217
  %v8219 = vpop.f32.mrb[0].mxu0
  %v8220 = vpop.f32.mrb[0].mxu0
  %v8221 = vadd.f32 0.0, %v8220
  %v8222 = vpop.f32.mrb[0].mxu0
  %8223 = vmatprep.mubr.bf16.mxu0 0
  %8224 = vmatmul.mubr.bf16.gmra.mrb[0].mxu0 %v7958
  %v8225 = vpop.f32.mrb[0].mxu0
  %v8226 = vadd.f32 0.0, %v8225
  %v8227 = vpop.f32.mrb[0].mxu0
  %v8228 = vpop.f32.mrb[0].mxu0
  %v8229 = vadd.f32 0.0, %v8228
  %v8230 = vpop.f32.mrb[0].mxu0
  %8231 = vmatprep.mubr.bf16.mxu0 0
  %8232 = vmatmul.mubr.bf16.gmra.mrb[0].mxu0 %v7961
  %v8233 = vpop.f32.mrb[0].mxu0
  %v8234 = vadd.f32 0.0, %v8233
  %v8235 = vpop.f32.mrb[0].mxu0
  %v8236 = vpop.f32.mrb[0].mxu0
  %v8237 = vadd.f32 0.0, %v8236
  %v8238 = vpop.f32.mrb[0].mxu0
  %8239 = vmatprep.mubr.bf16.mxu0 0
  %8240 = vmatmul.mubr.bf16.gmra.mrb[0].mxu0 %v7964
  %v8241 = vpop.f32.mrb[0].mxu0
  %v8242 = vadd.f32 0.0, %v8241
  %v8243 = vpop.f32.mrb[0].mxu0
  %v8244 = vpop.f32.mrb[0].mxu0
  %v8245 = vadd.f32 0.0, %v8244
  %v8246 = vpop.f32.mrb[0].mxu0
  %8247 = vmatprep.mubr.bf16.mxu0 0
  %8248 = vmatmul.mubr.bf16.gmra.mrb[0].mxu0 %v7967
  %v8249 = vpop.f32.mrb[0].mxu0
  %v8250 = vadd.f32 0.0, %v8249
  %v8251 = vpop.f32.mrb[0].mxu0
  %v8252 = vpop.f32.mrb[0].mxu0
  %v8253 = vadd.f32 0.0, %v8252
  %v8254 = vpop.f32.mrb[0].mxu0
  %8255 = vmatprep.mubr.bf16.mxu0 0
  %8256 = vmatmul.mubr.bf16.gmra.mrb[0].mxu0 %v7970
  %v8257 = vpop.f32.mrb[0].mxu0
  %v8258 = vadd.f32 0.0, %v8257
  %v8259 = vpop.f32.mrb[0].mxu0
  %v8260 = vpop.f32.mrb[0].mxu0
  %v8261 = vadd.f32 0.0, %v8260
  %v8262 = vpop.f32.mrb[0].mxu0
  %8263 = vdwg.mxu0
  %v8264 = vsel %vm27, %v8010, 0.0
  %v8265 = vsel %vm27, %v8013, 0.0
  %v8266 = vadd.f32 %v8264, %v8265
  %v8267 = vsel %vm27, %v8018, 0.0
  %v8268 = vadd.f32 %v8266, %v8267
  %v8269 = vsel %vm27, %v8021, 0.0
  %v8270 = vadd.f32 %v8268, %v8269
  %v8271 = vsel %vm27, %v8026, 0.0
  %v8272 = vadd.f32 %v8270, %v8271
  %v8273 = vsel %vm27, %v8029, 0.0
  %v8274 = vadd.f32 %v8272, %v8273
  %v8275 = vsel %vm27, %v8034, 0.0
  %v8276 = vadd.f32 %v8274, %v8275
  %v8277 = vsel %vm27, %v8037, 0.0
  %v8278 = vadd.f32 %v8276, %v8277
  %v8279 = vsel %vm27, %v8042, 0.0
  %v8280 = vadd.f32 %v8278, %v8279
  %v8281 = vsel %vm27, %v8045, 0.0
  %v8282 = vadd.f32 %v8280, %v8281
  %v8283 = vsel %vm27, %v8050, 0.0
  %v8284 = vadd.f32 %v8282, %v8283
  %v8285 = vsel %vm27, %v8053, 0.0
  %v8286 = vadd.f32 %v8284, %v8285
  %v8287 = vsel %vm27, %v8058, 0.0
  %v8288 = vadd.f32 %v8286, %v8287
  %v8289 = vsel %vm27, %v8061, 0.0
  %v8290 = vadd.f32 %v8288, %v8289
  %v8291 = vsel %vm27, %v8066, 0.0
  %v8292 = vadd.f32 %v8290, %v8291
  %v8293 = vsel %vm27, %v8069, 0.0
  %v8294 = vadd.f32 %v8292, %v8293
  %v8295 = vsel %vm27, %v8074, 0.0
  %v8296 = vadd.f32 %v8294, %v8295
  %v8297 = vsel %vm27, %v8077, 0.0
  %v8298 = vadd.f32 %v8296, %v8297
  %v8299 = vsel %vm27, %v8082, 0.0
  %v8300 = vadd.f32 %v8298, %v8299
  %v8301 = vsel %vm27, %v8085, 0.0
  %v8302 = vadd.f32 %v8300, %v8301
  %v8303 = vsel %vm27, %v8090, 0.0
  %v8304 = vadd.f32 %v8302, %v8303
  %v8305 = vsel %vm27, %v8093, 0.0
  %v8306 = vadd.f32 %v8304, %v8305
  %v8307 = vsel %vm27, %v8098, 0.0
  %v8308 = vadd.f32 %v8306, %v8307
  %v8309 = vsel %vm27, %v8101, 0.0
  %v8310 = vadd.f32 %v8308, %v8309
  %v8311 = vsel %vm27, %v8106, 0.0
  %v8312 = vadd.f32 %v8310, %v8311
  %v8313 = vsel %vm27, %v8109, 0.0
  %v8314 = vadd.f32 %v8312, %v8313
  %v8315 = vsel %vm27, %v8114, 0.0
  %v8316 = vadd.f32 %v8314, %v8315
  %v8317 = vsel %vm27, %v8117, 0.0
  %v8318 = vadd.f32 %v8316, %v8317
  %v8319 = vsel %vm27, %v8122, 0.0
  %v8320 = vadd.f32 %v8318, %v8319
  %v8321 = vsel %vm27, %v8125, 0.0
  %v8322 = vadd.f32 %v8320, %v8321
  %v8323 = vsel %vm27, %v8130, 0.0
  %v8324 = vadd.f32 %v8322, %v8323
  %v8325 = vsel %vm27, %v8133, 0.0
  %v8326 = vadd.f32 %v8324, %v8325
  %v8327 = vsel %vm27, %v8138, 0.0
  %v8328 = vadd.f32 %v8326, %v8327
  %v8329 = vsel %vm27, %v8141, 0.0
  %v8330 = vadd.f32 %v8328, %v8329
  %v8331 = vsel %vm27, %v8146, 0.0
  %v8332 = vadd.f32 %v8330, %v8331
  %v8333 = vsel %vm27, %v8149, 0.0
  %v8334 = vadd.f32 %v8332, %v8333
  %v8335 = vsel %vm27, %v8154, 0.0
  %v8336 = vadd.f32 %v8334, %v8335
  %v8337 = vsel %vm27, %v8157, 0.0
  %v8338 = vadd.f32 %v8336, %v8337
  %v8339 = vsel %vm27, %v8162, 0.0
  %v8340 = vadd.f32 %v8338, %v8339
  %v8341 = vsel %vm27, %v8165, 0.0
  %v8342 = vadd.f32 %v8340, %v8341
  %v8343 = vsel %vm27, %v8170, 0.0
  %v8344 = vadd.f32 %v8342, %v8343
  %v8345 = vsel %vm27, %v8173, 0.0
  %v8346 = vadd.f32 %v8344, %v8345
  %v8347 = vsel %vm27, %v8178, 0.0
  %v8348 = vadd.f32 %v8346, %v8347
  %v8349 = vsel %vm27, %v8181, 0.0
  %v8350 = vadd.f32 %v8348, %v8349
  %v8351 = vsel %vm27, %v8186, 0.0
  %v8352 = vadd.f32 %v8350, %v8351
  %v8353 = vsel %vm27, %v8189, 0.0
  %v8354 = vadd.f32 %v8352, %v8353
  %v8355 = vsel %vm27, %v8194, 0.0
  %v8356 = vadd.f32 %v8354, %v8355
  %v8357 = vsel %vm27, %v8197, 0.0
  %v8358 = vadd.f32 %v8356, %v8357
  %v8359 = vsel %vm27, %v8202, 0.0
  %v8360 = vadd.f32 %v8358, %v8359
  %v8361 = vsel %vm27, %v8205, 0.0
  %v8362 = vadd.f32 %v8360, %v8361
  %v8363 = vsel %vm27, %v8210, 0.0
  %v8364 = vadd.f32 %v8362, %v8363
  %v8365 = vsel %vm27, %v8213, 0.0
  %v8366 = vadd.f32 %v8364, %v8365
  %v8367 = vsel %vm27, %v8218, 0.0
  %v8368 = vadd.f32 %v8366, %v8367
  %v8369 = vsel %vm27, %v8221, 0.0
  %v8370 = vadd.f32 %v8368, %v8369
  %v8371 = vsel %vm27, %v8226, 0.0
  %v8372 = vadd.f32 %v8370, %v8371
  %v8373 = vsel %vm27, %v8229, 0.0
  %v8374 = vadd.f32 %v8372, %v8373
  %v8375 = vsel %vm27, %v8234, 0.0
  %v8376 = vadd.f32 %v8374, %v8375
  %v8377 = vsel %vm27, %v8237, 0.0
  %v8378 = vadd.f32 %v8376, %v8377
  %v8379 = vsel %vm27, %v8242, 0.0
  %v8380 = vadd.f32 %v8378, %v8379
  %v8381 = vsel %vm27, %v8245, 0.0
  %v8382 = vadd.f32 %v8380, %v8381
  %v8383 = vsel %vm27, %v8250, 0.0
  %v8384 = vadd.f32 %v8382, %v8383
  %v8385 = vsel %vm27, %v8253, 0.0
  %v8386 = vadd.f32 %v8384, %v8385
  %v8387 = vsel %vm27, %v8258, 0.0
  %v8388 = vadd.f32 %v8386, %v8387
  %v8389 = vsel %vm27, %v8261, 0.0
  %v8390 = vadd.f32 %v8388, %v8389
  %v8391 = vrot.slane %v8390, 4
  %v8392 = vadd.f32 %v8390, %v8391
  %v8393 = vrot.slane %v8392, 2
  %v8394 = vadd.f32 %v8392, %v8393
  %v8395 = vrot.slane %v8394, 1
  %v8396 = vadd.f32 %v8394, %v8395
  %v8397 = vmul.f32 %v8396, 0.001953125
  %v8398 = vmul.f32 %v8010, %v8010
  %v8399 = vmul.f32 %v8013, %v8013
  %v8400 = vmul.f32 %v8018, %v8018
  %v8401 = vmul.f32 %v8021, %v8021
  %v8402 = vmul.f32 %v8026, %v8026
  %v8403 = vmul.f32 %v8029, %v8029
  %v8404 = vmul.f32 %v8034, %v8034
  %v8405 = vmul.f32 %v8037, %v8037
  %v8406 = vmul.f32 %v8042, %v8042
  %v8407 = vmul.f32 %v8045, %v8045
  %v8408 = vmul.f32 %v8050, %v8050
  %v8409 = vmul.f32 %v8053, %v8053
  %v8410 = vmul.f32 %v8058, %v8058
  %v8411 = vmul.f32 %v8061, %v8061
  %v8412 = vmul.f32 %v8066, %v8066
  %v8413 = vmul.f32 %v8069, %v8069
  %v8414 = vmul.f32 %v8074, %v8074
  %v8415 = vmul.f32 %v8077, %v8077
  %v8416 = vmul.f32 %v8082, %v8082
  %v8417 = vmul.f32 %v8085, %v8085
  %v8418 = vmul.f32 %v8090, %v8090
  %v8419 = vmul.f32 %v8093, %v8093
  %v8420 = vmul.f32 %v8098, %v8098
  %v8421 = vmul.f32 %v8101, %v8101
  %v8422 = vmul.f32 %v8106, %v8106
  %v8423 = vmul.f32 %v8109, %v8109
  %v8424 = vmul.f32 %v8114, %v8114
  %v8425 = vmul.f32 %v8117, %v8117
  %v8426 = vmul.f32 %v8122, %v8122
  %v8427 = vmul.f32 %v8125, %v8125
  %v8428 = vmul.f32 %v8130, %v8130
  %v8429 = vmul.f32 %v8133, %v8133
  %v8430 = vmul.f32 %v8138, %v8138
  %v8431 = vmul.f32 %v8141, %v8141
  %v8432 = vmul.f32 %v8146, %v8146
  %v8433 = vmul.f32 %v8149, %v8149
  %v8434 = vmul.f32 %v8154, %v8154
  %v8435 = vmul.f32 %v8157, %v8157
  %v8436 = vmul.f32 %v8162, %v8162
  %v8437 = vmul.f32 %v8165, %v8165
  %v8438 = vmul.f32 %v8170, %v8170
  %v8439 = vmul.f32 %v8173, %v8173
  %v8440 = vmul.f32 %v8178, %v8178
  %v8441 = vmul.f32 %v8181, %v8181
  %v8442 = vmul.f32 %v8186, %v8186
  %v8443 = vmul.f32 %v8189, %v8189
  %v8444 = vmul.f32 %v8194, %v8194
  %v8445 = vmul.f32 %v8197, %v8197
  %v8446 = vmul.f32 %v8202, %v8202
  %v8447 = vmul.f32 %v8205, %v8205
  %v8448 = vmul.f32 %v8210, %v8210
  %v8449 = vmul.f32 %v8213, %v8213
  %v8450 = vmul.f32 %v8218, %v8218
  %v8451 = vmul.f32 %v8221, %v8221
  %v8452 = vmul.f32 %v8226, %v8226
  %v8453 = vmul.f32 %v8229, %v8229
  %v8454 = vmul.f32 %v8234, %v8234
  %v8455 = vmul.f32 %v8237, %v8237
  %v8456 = vmul.f32 %v8242, %v8242
  %v8457 = vmul.f32 %v8245, %v8245
  %v8458 = vmul.f32 %v8250, %v8250
  %v8459 = vmul.f32 %v8253, %v8253
  %v8460 = vmul.f32 %v8258, %v8258
  %v8461 = vmul.f32 %v8261, %v8261
  %v8462 = vsel %vm27, %v8398, 0.0
  %v8463 = vsel %vm27, %v8399, 0.0
  %v8464 = vadd.f32 %v8462, %v8463
  %v8465 = vsel %vm27, %v8400, 0.0
  %v8466 = vadd.f32 %v8464, %v8465
  %v8467 = vsel %vm27, %v8401, 0.0
  %v8468 = vadd.f32 %v8466, %v8467
  %v8469 = vsel %vm27, %v8402, 0.0
  %v8470 = vadd.f32 %v8468, %v8469
  %v8471 = vsel %vm27, %v8403, 0.0
  %v8472 = vadd.f32 %v8470, %v8471
  %v8473 = vsel %vm27, %v8404, 0.0
  %v8474 = vadd.f32 %v8472, %v8473
  %v8475 = vsel %vm27, %v8405, 0.0
  %v8476 = vadd.f32 %v8474, %v8475
  %v8477 = vsel %vm27, %v8406, 0.0
  %v8478 = vadd.f32 %v8476, %v8477
  %v8479 = vsel %vm27, %v8407, 0.0
  %v8480 = vadd.f32 %v8478, %v8479
  %v8481 = vsel %vm27, %v8408, 0.0
  %v8482 = vadd.f32 %v8480, %v8481
  %v8483 = vsel %vm27, %v8409, 0.0
  %v8484 = vadd.f32 %v8482, %v8483
  %v8485 = vsel %vm27, %v8410, 0.0
  %v8486 = vadd.f32 %v8484, %v8485
  %v8487 = vsel %vm27, %v8411, 0.0
  %v8488 = vadd.f32 %v8486, %v8487
  %v8489 = vsel %vm27, %v8412, 0.0
  %v8490 = vadd.f32 %v8488, %v8489
  %v8491 = vsel %vm27, %v8413, 0.0
  %v8492 = vadd.f32 %v8490, %v8491
  %v8493 = vsel %vm27, %v8414, 0.0
  %v8494 = vadd.f32 %v8492, %v8493
  %v8495 = vsel %vm27, %v8415, 0.0
  %v8496 = vadd.f32 %v8494, %v8495
  %v8497 = vsel %vm27, %v8416, 0.0
  %v8498 = vadd.f32 %v8496, %v8497
  %v8499 = vsel %vm27, %v8417, 0.0
  %v8500 = vadd.f32 %v8498, %v8499
  %v8501 = vsel %vm27, %v8418, 0.0
  %v8502 = vadd.f32 %v8500, %v8501
  %v8503 = vsel %vm27, %v8419, 0.0
  %v8504 = vadd.f32 %v8502, %v8503
  %v8505 = vsel %vm27, %v8420, 0.0
  %v8506 = vadd.f32 %v8504, %v8505
  %v8507 = vsel %vm27, %v8421, 0.0
  %v8508 = vadd.f32 %v8506, %v8507
  %v8509 = vsel %vm27, %v8422, 0.0
  %v8510 = vadd.f32 %v8508, %v8509
  %v8511 = vsel %vm27, %v8423, 0.0
  %v8512 = vadd.f32 %v8510, %v8511
  %v8513 = vsel %vm27, %v8424, 0.0
  %v8514 = vadd.f32 %v8512, %v8513
  %v8515 = vsel %vm27, %v8425, 0.0
  %v8516 = vadd.f32 %v8514, %v8515
  %v8517 = vsel %vm27, %v8426, 0.0
  %v8518 = vadd.f32 %v8516, %v8517
  %v8519 = vsel %vm27, %v8427, 0.0
  %v8520 = vadd.f32 %v8518, %v8519
  %v8521 = vsel %vm27, %v8428, 0.0
  %v8522 = vadd.f32 %v8520, %v8521
  %v8523 = vsel %vm27, %v8429, 0.0
  %v8524 = vadd.f32 %v8522, %v8523
  %v8525 = vsel %vm27, %v8430, 0.0
  %v8526 = vadd.f32 %v8524, %v8525
  %v8527 = vsel %vm27, %v8431, 0.0
  %v8528 = vadd.f32 %v8526, %v8527
  %v8529 = vsel %vm27, %v8432, 0.0
  %v8530 = vadd.f32 %v8528, %v8529
  %v8531 = vsel %vm27, %v8433, 0.0
  %v8532 = vadd.f32 %v8530, %v8531
  %v8533 = vsel %vm27, %v8434, 0.0
  %v8534 = vadd.f32 %v8532, %v8533
  %v8535 = vsel %vm27, %v8435, 0.0
  %v8536 = vadd.f32 %v8534, %v8535
  %v8537 = vsel %vm27, %v8436, 0.0
  %v8538 = vadd.f32 %v8536, %v8537
  %v8539 = vsel %vm27, %v8437, 0.0
  %v8540 = vadd.f32 %v8538, %v8539
  %v8541 = vsel %vm27, %v8438, 0.0
  %v8542 = vadd.f32 %v8540, %v8541
  %v8543 = vsel %vm27, %v8439, 0.0
  %v8544 = vadd.f32 %v8542, %v8543
  %v8545 = vsel %vm27, %v8440, 0.0
  %v8546 = vadd.f32 %v8544, %v8545
  %v8547 = vsel %vm27, %v8441, 0.0
  %v8548 = vadd.f32 %v8546, %v8547
  %v8549 = vsel %vm27, %v8442, 0.0
  %v8550 = vadd.f32 %v8548, %v8549
  %v8551 = vsel %vm27, %v8443, 0.0
  %v8552 = vadd.f32 %v8550, %v8551
  %v8553 = vsel %vm27, %v8444, 0.0
  %v8554 = vadd.f32 %v8552, %v8553
  %v8555 = vsel %vm27, %v8445, 0.0
  %v8556 = vadd.f32 %v8554, %v8555
  %v8557 = vsel %vm27, %v8446, 0.0
  %v8558 = vadd.f32 %v8556, %v8557
  %v8559 = vsel %vm27, %v8447, 0.0
  %v8560 = vadd.f32 %v8558, %v8559
  %v8561 = vsel %vm27, %v8448, 0.0
  %v8562 = vadd.f32 %v8560, %v8561
  %v8563 = vsel %vm27, %v8449, 0.0
  %v8564 = vadd.f32 %v8562, %v8563
  %v8565 = vsel %vm27, %v8450, 0.0
  %v8566 = vadd.f32 %v8564, %v8565
  %v8567 = vsel %vm27, %v8451, 0.0
  %v8568 = vadd.f32 %v8566, %v8567
  %v8569 = vsel %vm27, %v8452, 0.0
  %v8570 = vadd.f32 %v8568, %v8569
  %v8571 = vsel %vm27, %v8453, 0.0
  %v8572 = vadd.f32 %v8570, %v8571
  %v8573 = vsel %vm27, %v8454, 0.0
  %v8574 = vadd.f32 %v8572, %v8573
  %v8575 = vsel %vm27, %v8455, 0.0
  %v8576 = vadd.f32 %v8574, %v8575
  %v8577 = vsel %vm27, %v8456, 0.0
  %v8578 = vadd.f32 %v8576, %v8577
  %v8579 = vsel %vm27, %v8457, 0.0
  %v8580 = vadd.f32 %v8578, %v8579
  %v8581 = vsel %vm27, %v8458, 0.0
  %v8582 = vadd.f32 %v8580, %v8581
  %v8583 = vsel %vm27, %v8459, 0.0
  %v8584 = vadd.f32 %v8582, %v8583
  %v8585 = vsel %vm27, %v8460, 0.0
  %v8586 = vadd.f32 %v8584, %v8585
  %v8587 = vsel %vm27, %v8461, 0.0
  %v8588 = vadd.f32 %v8586, %v8587
  %v8589 = vrot.slane %v8588, 4
  %v8590 = vadd.f32 %v8588, %v8589
  %v8591 = vrot.slane %v8590, 2
  %v8592 = vadd.f32 %v8590, %v8591
  %v8593 = vrot.slane %v8592, 1
  %v8594 = vadd.f32 %v8592, %v8593
  %v8595 = vmul.f32 %v8594, 0.001953125
  %v8596 = vmul.f32 %v8397, %v8397
  %v8597 = vsub.f32 %v8595, %v8596
  %v8598 = vld [vmem:[%s5] sm:$0x1]
  %v8599 = vadd.f32 %v8597, 1e-05
  %v8600 = vrsqrt.pop %v8599
  %v8601 = vmul.f32 %v8598, %v8600
  %v8602 = vld [vmem:[%s6] sm:$0x1]
  %v8603 = vmul.f32 %v8397, %v8601
  %v8604 = vsub.f32 %v8602, %v8603
  %v8606 = vlaneseq
  %v8607 = vshrl.u32 %v8606, 7
  %v8608 = vsub.s32 0, %v8607
  %v8609 = vrot.slane %v8601, %v8608
  %v8611 = vmul.f32 %v8010, %v8609
  %v8612 = vmul.f32 %v8013, %v8609
  %v8613 = vmul.f32 %v8018, %v8609
  %v8614 = vmul.f32 %v8021, %v8609
  %v8615 = vmul.f32 %v8026, %v8609
  %v8616 = vmul.f32 %v8029, %v8609
  %v8617 = vmul.f32 %v8034, %v8609
  %v8618 = vmul.f32 %v8037, %v8609
  %v8619 = vmul.f32 %v8042, %v8609
  %v8620 = vmul.f32 %v8045, %v8609
  %v8621 = vmul.f32 %v8050, %v8609
  %v8622 = vmul.f32 %v8053, %v8609
  %v8623 = vmul.f32 %v8058, %v8609
  %v8624 = vmul.f32 %v8061, %v8609
  %v8625 = vmul.f32 %v8066, %v8609
  %v8626 = vmul.f32 %v8069, %v8609
  %v8627 = vmul.f32 %v8074, %v8609
  %v8628 = vmul.f32 %v8077, %v8609
  %v8629 = vmul.f32 %v8082, %v8609
  %v8630 = vmul.f32 %v8085, %v8609
  %v8631 = vmul.f32 %v8090, %v8609
  %v8632 = vmul.f32 %v8093, %v8609
  %v8633 = vmul.f32 %v8098, %v8609
  %v8634 = vmul.f32 %v8101, %v8609
  %v8635 = vmul.f32 %v8106, %v8609
  %v8636 = vmul.f32 %v8109, %v8609
  %v8637 = vmul.f32 %v8114, %v8609
  %v8638 = vmul.f32 %v8117, %v8609
  %v8639 = vmul.f32 %v8122, %v8609
  %v8640 = vmul.f32 %v8125, %v8609
  %v8641 = vmul.f32 %v8130, %v8609
  %v8642 = vmul.f32 %v8133, %v8609
  %v8643 = vmul.f32 %v8138, %v8609
  %v8644 = vmul.f32 %v8141, %v8609
  %v8645 = vmul.f32 %v8146, %v8609
  %v8646 = vmul.f32 %v8149, %v8609
  %v8647 = vmul.f32 %v8154, %v8609
  %v8648 = vmul.f32 %v8157, %v8609
  %v8649 = vmul.f32 %v8162, %v8609
  %v8650 = vmul.f32 %v8165, %v8609
  %v8651 = vmul.f32 %v8170, %v8609
  %v8652 = vmul.f32 %v8173, %v8609
  %v8653 = vmul.f32 %v8178, %v8609
  %v8654 = vmul.f32 %v8181, %v8609
  %v8655 = vmul.f32 %v8186, %v8609
  %v8656 = vmul.f32 %v8189, %v8609
  %v8657 = vmul.f32 %v8194, %v8609
  %v8658 = vmul.f32 %v8197, %v8609
  %v8659 = vmul.f32 %v8202, %v8609
  %v8660 = vmul.f32 %v8205, %v8609
  %v8661 = vmul.f32 %v8210, %v8609
  %v8662 = vmul.f32 %v8213, %v8609
  %v8663 = vmul.f32 %v8218, %v8609
  %v8664 = vmul.f32 %v8221, %v8609
  %v8665 = vmul.f32 %v8226, %v8609
  %v8666 = vmul.f32 %v8229, %v8609
  %v8667 = vmul.f32 %v8234, %v8609
  %v8668 = vmul.f32 %v8237, %v8609
  %v8669 = vmul.f32 %v8242, %v8609
  %v8670 = vmul.f32 %v8245, %v8609
  %v8671 = vmul.f32 %v8250, %v8609
  %v8672 = vmul.f32 %v8253, %v8609
  %v8673 = vmul.f32 %v8258, %v8609
  %v8674 = vmul.f32 %v8261, %v8609
  %v8676 = vlaneseq
  %v8677 = vshrl.u32 %v8676, 7
  %v8678 = vsub.s32 0, %v8677
  %v8679 = vrot.slane %v8604, %v8678
  %v8681 = vadd.f32 %v8611, %v8679
  %v8682 = vadd.f32 %v8612, %v8679
  %v8683 = vadd.f32 %v8613, %v8679
  %v8684 = vadd.f32 %v8614, %v8679
  %v8685 = vadd.f32 %v8615, %v8679
  %v8686 = vadd.f32 %v8616, %v8679
  %v8687 = vadd.f32 %v8617, %v8679
  %v8688 = vadd.f32 %v8618, %v8679
  %v8689 = vadd.f32 %v8619, %v8679
  %v8690 = vadd.f32 %v8620, %v8679
  %v8691 = vadd.f32 %v8621, %v8679
  %v8692 = vadd.f32 %v8622, %v8679
  %v8693 = vadd.f32 %v8623, %v8679
  %v8694 = vadd.f32 %v8624, %v8679
  %v8695 = vadd.f32 %v8625, %v8679
  %v8696 = vadd.f32 %v8626, %v8679
  %v8697 = vadd.f32 %v8627, %v8679
  %v8698 = vadd.f32 %v8628, %v8679
  %v8699 = vadd.f32 %v8629, %v8679
  %v8700 = vadd.f32 %v8630, %v8679
  %v8701 = vadd.f32 %v8631, %v8679
  %v8702 = vadd.f32 %v8632, %v8679
  %v8703 = vadd.f32 %v8633, %v8679
  %v8704 = vadd.f32 %v8634, %v8679
  %v8705 = vadd.f32 %v8635, %v8679
  %v8706 = vadd.f32 %v8636, %v8679
  %v8707 = vadd.f32 %v8637, %v8679
  %v8708 = vadd.f32 %v8638, %v8679
  %v8709 = vadd.f32 %v8639, %v8679
  %v8710 = vadd.f32 %v8640, %v8679
  %v8711 = vadd.f32 %v8641, %v8679
  %v8712 = vadd.f32 %v8642, %v8679
  %v8713 = vadd.f32 %v8643, %v8679
  %v8714 = vadd.f32 %v8644, %v8679
  %v8715 = vadd.f32 %v8645, %v8679
  %v8716 = vadd.f32 %v8646, %v8679
  %v8717 = vadd.f32 %v8647, %v8679
  %v8718 = vadd.f32 %v8648, %v8679
  %v8719 = vadd.f32 %v8649, %v8679
  %v8720 = vadd.f32 %v8650, %v8679
  %v8721 = vadd.f32 %v8651, %v8679
  %v8722 = vadd.f32 %v8652, %v8679
  %v8723 = vadd.f32 %v8653, %v8679
  %v8724 = vadd.f32 %v8654, %v8679
  %v8725 = vadd.f32 %v8655, %v8679
  %v8726 = vadd.f32 %v8656, %v8679
  %v8727 = vadd.f32 %v8657, %v8679
  %v8728 = vadd.f32 %v8658, %v8679
  %v8729 = vadd.f32 %v8659, %v8679
  %v8730 = vadd.f32 %v8660, %v8679
  %v8731 = vadd.f32 %v8661, %v8679
  %v8732 = vadd.f32 %v8662, %v8679
  %v8733 = vadd.f32 %v8663, %v8679
  %v8734 = vadd.f32 %v8664, %v8679
  %v8735 = vadd.f32 %v8665, %v8679
  %v8736 = vadd.f32 %v8666, %v8679
  %v8737 = vadd.f32 %v8667, %v8679
  %v8738 = vadd.f32 %v8668, %v8679
  %v8739 = vadd.f32 %v8669, %v8679
  %v8740 = vadd.f32 %v8670, %v8679
  %v8741 = vadd.f32 %v8671, %v8679
  %v8742 = vadd.f32 %v8672, %v8679
  %v8743 = vadd.f32 %v8673, %v8679
  %v8744 = vadd.f32 %v8674, %v8679
  %v8745 = vld [vmem:[%s0] sm:$0xff]
  %v8746 = vld [vmem:[%s0 + $0x8] sm:$0xff]
  %v8747 = vld [vmem:[%s0 + $0x10] sm:$0xff]
  %v8748 = vld [vmem:[%s0 + $0x18] sm:$0xff]
  %v8749 = vld [vmem:[%s0 + $0x20] sm:$0xff]
  %v8750 = vld [vmem:[%s0 + $0x28] sm:$0xff]
  %v8751 = vld [vmem:[%s0 + $0x30] sm:$0xff]
  %v8752 = vld [vmem:[%s0 + $0x38] sm:$0xff]
  %v8753 = vld [vmem:[%s0 + $0x40] sm:$0xff]
  %v8754 = vld [vmem:[%s0 + $0x48] sm:$0xff]
  %v8755 = vld [vmem:[%s0 + $0x50] sm:$0xff]
  %v8756 = vld [vmem:[%s0 + $0x58] sm:$0xff]
  %v8757 = vld [vmem:[%s0 + $0x60] sm:$0xff]
  %v8758 = vld [vmem:[%s0 + $0x68] sm:$0xff]
  %v8759 = vld [vmem:[%s0 + $0x70] sm:$0xff]
  %v8760 = vld [vmem:[%s0 + $0x78] sm:$0xff]
  %v8761 = vld [vmem:[%s0 + $0x80] sm:$0xff]
  %v8762 = vld [vmem:[%s0 + $0x88] sm:$0xff]
  %v8763 = vld [vmem:[%s0 + $0x90] sm:$0xff]
  %v8764 = vld [vmem:[%s0 + $0x98] sm:$0xff]
  %v8765 = vld [vmem:[%s0 + $0xa0] sm:$0xff]
  %v8766 = vld [vmem:[%s0 + $0xa8] sm:$0xff]
  %v8767 = vld [vmem:[%s0 + $0xb0] sm:$0xff]
  %v8768 = vld [vmem:[%s0 + $0xb8] sm:$0xff]
  %v8769 = vld [vmem:[%s0 + $0xc0] sm:$0xff]
  %v8770 = vld [vmem:[%s0 + $0xc8] sm:$0xff]
  %v8771 = vld [vmem:[%s0 + $0xd0] sm:$0xff]
  %v8772 = vld [vmem:[%s0 + $0xd8] sm:$0xff]
  %v8773 = vld [vmem:[%s0 + $0xe0] sm:$0xff]
  %v8774 = vld [vmem:[%s0 + $0xe8] sm:$0xff]
  %v8775 = vld [vmem:[%s0 + $0xf0] sm:$0xff]
  %v8776 = vld [vmem:[%s0 + $0xf8] sm:$0xff]
  %v8777 = vld [vmem:[%s0 + $0x100] sm:$0xff]
  %v8778 = vld [vmem:[%s0 + $0x108] sm:$0xff]
  %v8779 = vld [vmem:[%s0 + $0x110] sm:$0xff]
  %v8780 = vld [vmem:[%s0 + $0x118] sm:$0xff]
  %v8781 = vld [vmem:[%s0 + $0x120] sm:$0xff]
  %v8782 = vld [vmem:[%s0 + $0x128] sm:$0xff]
  %v8783 = vld [vmem:[%s0 + $0x130] sm:$0xff]
  %v8784 = vld [vmem:[%s0 + $0x138] sm:$0xff]
  %v8785 = vld [vmem:[%s0 + $0x140] sm:$0xff]
  %v8786 = vld [vmem:[%s0 + $0x148] sm:$0xff]
  %v8787 = vld [vmem:[%s0 + $0x150] sm:$0xff]
  %v8788 = vld [vmem:[%s0 + $0x158] sm:$0xff]
  %v8789 = vld [vmem:[%s0 + $0x160] sm:$0xff]
  %v8790 = vld [vmem:[%s0 + $0x168] sm:$0xff]
  %v8791 = vld [vmem:[%s0 + $0x170] sm:$0xff]
  %v8792 = vld [vmem:[%s0 + $0x178] sm:$0xff]
  %v8793 = vld [vmem:[%s0 + $0x180] sm:$0xff]
  %v8794 = vld [vmem:[%s0 + $0x188] sm:$0xff]
  %v8795 = vld [vmem:[%s0 + $0x190] sm:$0xff]
  %v8796 = vld [vmem:[%s0 + $0x198] sm:$0xff]
  %v8797 = vld [vmem:[%s0 + $0x1a0] sm:$0xff]
  %v8798 = vld [vmem:[%s0 + $0x1a8] sm:$0xff]
  %v8799 = vld [vmem:[%s0 + $0x1b0] sm:$0xff]
  %v8800 = vld [vmem:[%s0 + $0x1b8] sm:$0xff]
  %v8801 = vld [vmem:[%s0 + $0x1c0] sm:$0xff]
  %v8802 = vld [vmem:[%s0 + $0x1c8] sm:$0xff]
  %v8803 = vld [vmem:[%s0 + $0x1d0] sm:$0xff]
  %v8804 = vld [vmem:[%s0 + $0x1d8] sm:$0xff]
  %v8805 = vld [vmem:[%s0 + $0x1e0] sm:$0xff]
  %v8806 = vld [vmem:[%s0 + $0x1e8] sm:$0xff]
  %v8807 = vld [vmem:[%s0 + $0x1f0] sm:$0xff]
  %v8808 = vld [vmem:[%s0 + $0x1f8] sm:$0xff]
  %v8809 = vadd.f32 %v8745, %v8681
  %v8810 = vadd.f32 %v8746, %v8682
  %v8811 = vadd.f32 %v8747, %v8683
  %v8812 = vadd.f32 %v8748, %v8684
  %v8813 = vadd.f32 %v8749, %v8685
  %v8814 = vadd.f32 %v8750, %v8686
  %v8815 = vadd.f32 %v8751, %v8687
  %v8816 = vadd.f32 %v8752, %v8688
  %v8817 = vadd.f32 %v8753, %v8689
  %v8818 = vadd.f32 %v8754, %v8690
  %v8819 = vadd.f32 %v8755, %v8691
  %v8820 = vadd.f32 %v8756, %v8692
  %v8821 = vadd.f32 %v8757, %v8693
  %v8822 = vadd.f32 %v8758, %v8694
  %v8823 = vadd.f32 %v8759, %v8695
  %v8824 = vadd.f32 %v8760, %v8696
  %v8825 = vadd.f32 %v8761, %v8697
  %v8826 = vadd.f32 %v8762, %v8698
  %v8827 = vadd.f32 %v8763, %v8699
  %v8828 = vadd.f32 %v8764, %v8700
  %v8829 = vadd.f32 %v8765, %v8701
  %v8830 = vadd.f32 %v8766, %v8702
  %v8831 = vadd.f32 %v8767, %v8703
  %v8832 = vadd.f32 %v8768, %v8704
  %v8833 = vadd.f32 %v8769, %v8705
  %v8834 = vadd.f32 %v8770, %v8706
  %v8835 = vadd.f32 %v8771, %v8707
  %v8836 = vadd.f32 %v8772, %v8708
  %v8837 = vadd.f32 %v8773, %v8709
  %v8838 = vadd.f32 %v8774, %v8710
  %v8839 = vadd.f32 %v8775, %v8711
  %v8840 = vadd.f32 %v8776, %v8712
  %v8841 = vadd.f32 %v8777, %v8713
  %v8842 = vadd.f32 %v8778, %v8714
  %v8843 = vadd.f32 %v8779, %v8715
  %v8844 = vadd.f32 %v8780, %v8716
  %v8845 = vadd.f32 %v8781, %v8717
  %v8846 = vadd.f32 %v8782, %v8718
  %v8847 = vadd.f32 %v8783, %v8719
  %v8848 = vadd.f32 %v8784, %v8720
  %v8849 = vadd.f32 %v8785, %v8721
  %v8850 = vadd.f32 %v8786, %v8722
  %v8851 = vadd.f32 %v8787, %v8723
  %v8852 = vadd.f32 %v8788, %v8724
  %v8853 = vadd.f32 %v8789, %v8725
  %v8854 = vadd.f32 %v8790, %v8726
  %v8855 = vadd.f32 %v8791, %v8727
  %v8856 = vadd.f32 %v8792, %v8728
  %v8857 = vadd.f32 %v8793, %v8729
  %v8858 = vadd.f32 %v8794, %v8730
  %v8859 = vadd.f32 %v8795, %v8731
  %v8860 = vadd.f32 %v8796, %v8732
  %v8861 = vadd.f32 %v8797, %v8733
  %v8862 = vadd.f32 %v8798, %v8734
  %v8863 = vadd.f32 %v8799, %v8735
  %v8864 = vadd.f32 %v8800, %v8736
  %v8865 = vadd.f32 %v8801, %v8737
  %v8866 = vadd.f32 %v8802, %v8738
  %v8867 = vadd.f32 %v8803, %v8739
  %v8868 = vadd.f32 %v8804, %v8740
  %v8869 = vadd.f32 %v8805, %v8741
  %v8870 = vadd.f32 %v8806, %v8742
  %v8871 = vadd.f32 %v8807, %v8743
  %v8872 = vadd.f32 %v8808, %v8744
  %v8873 = vmax.f32 %v8809, 0.0
  %v8874 = vmax.f32 %v8810, 0.0
  %v8875 = vmax.f32 %v8811, 0.0
  %v8876 = vmax.f32 %v8812, 0.0
  %v8877 = vmax.f32 %v8813, 0.0
  %v8878 = vmax.f32 %v8814, 0.0
  %v8879 = vmax.f32 %v8815, 0.0
  %v8880 = vmax.f32 %v8816, 0.0
  %v8881 = vmax.f32 %v8817, 0.0
  %v8882 = vmax.f32 %v8818, 0.0
  %v8883 = vmax.f32 %v8819, 0.0
  %v8884 = vmax.f32 %v8820, 0.0
  %v8885 = vmax.f32 %v8821, 0.0
  %v8886 = vmax.f32 %v8822, 0.0
  %v8887 = vmax.f32 %v8823, 0.0
  %v8888 = vmax.f32 %v8824, 0.0
  %v8889 = vmax.f32 %v8825, 0.0
  %v8890 = vmax.f32 %v8826, 0.0
  %v8891 = vmax.f32 %v8827, 0.0
  %v8892 = vmax.f32 %v8828, 0.0
  %v8893 = vmax.f32 %v8829, 0.0
  %v8894 = vmax.f32 %v8830, 0.0
  %v8895 = vmax.f32 %v8831, 0.0
  %v8896 = vmax.f32 %v8832, 0.0
  %v8897 = vmax.f32 %v8833, 0.0
  %v8898 = vmax.f32 %v8834, 0.0
  %v8899 = vmax.f32 %v8835, 0.0
  %v8900 = vmax.f32 %v8836, 0.0
  %v8901 = vmax.f32 %v8837, 0.0
  %v8902 = vmax.f32 %v8838, 0.0
  %v8903 = vmax.f32 %v8839, 0.0
  %v8904 = vmax.f32 %v8840, 0.0
  %v8905 = vmax.f32 %v8841, 0.0
  %v8906 = vmax.f32 %v8842, 0.0
  %v8907 = vmax.f32 %v8843, 0.0
  %v8908 = vmax.f32 %v8844, 0.0
  %v8909 = vmax.f32 %v8845, 0.0
  %v8910 = vmax.f32 %v8846, 0.0
  %v8911 = vmax.f32 %v8847, 0.0
  %v8912 = vmax.f32 %v8848, 0.0
  %v8913 = vmax.f32 %v8849, 0.0
  %v8914 = vmax.f32 %v8850, 0.0
  %v8915 = vmax.f32 %v8851, 0.0
  %v8916 = vmax.f32 %v8852, 0.0
  %v8917 = vmax.f32 %v8853, 0.0
  %v8918 = vmax.f32 %v8854, 0.0
  %v8919 = vmax.f32 %v8855, 0.0
  %v8920 = vmax.f32 %v8856, 0.0
  %v8921 = vmax.f32 %v8857, 0.0
  %v8922 = vmax.f32 %v8858, 0.0
  %v8923 = vmax.f32 %v8859, 0.0
  %v8924 = vmax.f32 %v8860, 0.0
  %v8925 = vmax.f32 %v8861, 0.0
  %v8926 = vmax.f32 %v8862, 0.0
  %v8927 = vmax.f32 %v8863, 0.0
  %v8928 = vmax.f32 %v8864, 0.0
  %v8929 = vmax.f32 %v8865, 0.0
  %v8930 = vmax.f32 %v8866, 0.0
  %v8931 = vmax.f32 %v8867, 0.0
  %v8932 = vmax.f32 %v8868, 0.0
  %v8933 = vmax.f32 %v8869, 0.0
  %v8934 = vmax.f32 %v8870, 0.0
  %v8935 = vmax.f32 %v8871, 0.0
  %v8936 = vmax.f32 %v8872, 0.0
  %8937 = vst.msk [vmem:[%s7] sm:$0xff] %vm27, %v8873
  %8938 = vst.msk [vmem:[%s7 + $0x8] sm:$0xff] %vm27, %v8874
  %8939 = vst.msk [vmem:[%s7 + $0x10] sm:$0xff] %vm27, %v8875
  %8940 = vst.msk [vmem:[%s7 + $0x18] sm:$0xff] %vm27, %v8876
  %8941 = vst.msk [vmem:[%s7 + $0x20] sm:$0xff] %vm27, %v8877
  %8942 = vst.msk [vmem:[%s7 + $0x28] sm:$0xff] %vm27, %v8878
  %8943 = vst.msk [vmem:[%s7 + $0x30] sm:$0xff] %vm27, %v8879
  %8944 = vst.msk [vmem:[%s7 + $0x38] sm:$0xff] %vm27, %v8880
  %8945 = vst.msk [vmem:[%s7 + $0x40] sm:$0xff] %vm27, %v8881
  %8946 = vst.msk [vmem:[%s7 + $0x48] sm:$0xff] %vm27, %v8882
  %8947 = vst.msk [vmem:[%s7 + $0x50] sm:$0xff] %vm27, %v8883
  %8948 = vst.msk [vmem:[%s7 + $0x58] sm:$0xff] %vm27, %v8884
  %8949 = vst.msk [vmem:[%s7 + $0x60] sm:$0xff] %vm27, %v8885
  %8950 = vst.msk [vmem:[%s7 + $0x68] sm:$0xff] %vm27, %v8886
  %8951 = vst.msk [vmem:[%s7 + $0x70] sm:$0xff] %vm27, %v8887
  %8952 = vst.msk [vmem:[%s7 + $0x78] sm:$0xff] %vm27, %v8888
  %8953 = vst.msk [vmem:[%s7 + $0x80] sm:$0xff] %vm27, %v8889
  %8954 = vst.msk [vmem:[%s7 + $0x88] sm:$0xff] %vm27, %v8890
  %8955 = vst.msk [vmem:[%s7 + $0x90] sm:$0xff] %vm27, %v8891
  %8956 = vst.msk [vmem:[%s7 + $0x98] sm:$0xff] %vm27, %v8892
  %8957 = vst.msk [vmem:[%s7 + $0xa0] sm:$0xff] %vm27, %v8893
  %8958 = vst.msk [vmem:[%s7 + $0xa8] sm:$0xff] %vm27, %v8894
  %8959 = vst.msk [vmem:[%s7 + $0xb0] sm:$0xff] %vm27, %v8895
  %8960 = vst.msk [vmem:[%s7 + $0xb8] sm:$0xff] %vm27, %v8896
  %8961 = vst.msk [vmem:[%s7 + $0xc0] sm:$0xff] %vm27, %v8897
  %8962 = vst.msk [vmem:[%s7 + $0xc8] sm:$0xff] %vm27, %v8898
  %8963 = vst.msk [vmem:[%s7 + $0xd0] sm:$0xff] %vm27, %v8899
  %8964 = vst.msk [vmem:[%s7 + $0xd8] sm:$0xff] %vm27, %v8900
  %8965 = vst.msk [vmem:[%s7 + $0xe0] sm:$0xff] %vm27, %v8901
  %8966 = vst.msk [vmem:[%s7 + $0xe8] sm:$0xff] %vm27, %v8902
  %8967 = vst.msk [vmem:[%s7 + $0xf0] sm:$0xff] %vm27, %v8903
  %8968 = vst.msk [vmem:[%s7 + $0xf8] sm:$0xff] %vm27, %v8904
  %8969 = vst.msk [vmem:[%s7 + $0x100] sm:$0xff] %vm27, %v8905
  %8970 = vst.msk [vmem:[%s7 + $0x108] sm:$0xff] %vm27, %v8906
  %8971 = vst.msk [vmem:[%s7 + $0x110] sm:$0xff] %vm27, %v8907
  %8972 = vst.msk [vmem:[%s7 + $0x118] sm:$0xff] %vm27, %v8908
  %8973 = vst.msk [vmem:[%s7 + $0x120] sm:$0xff] %vm27, %v8909
  %8974 = vst.msk [vmem:[%s7 + $0x128] sm:$0xff] %vm27, %v8910
  %8975 = vst.msk [vmem:[%s7 + $0x130] sm:$0xff] %vm27, %v8911
  %8976 = vst.msk [vmem:[%s7 + $0x138] sm:$0xff] %vm27, %v8912
  %8977 = vst.msk [vmem:[%s7 + $0x140] sm:$0xff] %vm27, %v8913
  %8978 = vst.msk [vmem:[%s7 + $0x148] sm:$0xff] %vm27, %v8914
  %8979 = vst.msk [vmem:[%s7 + $0x150] sm:$0xff] %vm27, %v8915
  %8980 = vst.msk [vmem:[%s7 + $0x158] sm:$0xff] %vm27, %v8916
  %8981 = vst.msk [vmem:[%s7 + $0x160] sm:$0xff] %vm27, %v8917
  %8982 = vst.msk [vmem:[%s7 + $0x168] sm:$0xff] %vm27, %v8918
  %8983 = vst.msk [vmem:[%s7 + $0x170] sm:$0xff] %vm27, %v8919
  %8984 = vst.msk [vmem:[%s7 + $0x178] sm:$0xff] %vm27, %v8920
  %8985 = vst.msk [vmem:[%s7 + $0x180] sm:$0xff] %vm27, %v8921
  %8986 = vst.msk [vmem:[%s7 + $0x188] sm:$0xff] %vm27, %v8922
  %8987 = vst.msk [vmem:[%s7 + $0x190] sm:$0xff] %vm27, %v8923
  %8988 = vst.msk [vmem:[%s7 + $0x198] sm:$0xff] %vm27, %v8924
  %8989 = vst.msk [vmem:[%s7 + $0x1a0] sm:$0xff] %vm27, %v8925
  %8990 = vst.msk [vmem:[%s7 + $0x1a8] sm:$0xff] %vm27, %v8926
  %8991 = vst.msk [vmem:[%s7 + $0x1b0] sm:$0xff] %vm27, %v8927
  %8992 = vst.msk [vmem:[%s7 + $0x1b8] sm:$0xff] %vm27, %v8928
  %8993 = vst.msk [vmem:[%s7 + $0x1c0] sm:$0xff] %vm27, %v8929
  %8994 = vst.msk [vmem:[%s7 + $0x1c8] sm:$0xff] %vm27, %v8930
  %8995 = vst.msk [vmem:[%s7 + $0x1d0] sm:$0xff] %vm27, %v8931
  %8996 = vst.msk [vmem:[%s7 + $0x1d8] sm:$0xff] %vm27, %v8932
  %8997 = vst.msk [vmem:[%s7 + $0x1e0] sm:$0xff] %vm27, %v8933
  %8998 = vst.msk [vmem:[%s7 + $0x1e8] sm:$0xff] %vm27, %v8934
  %8999 = vst.msk [vmem:[%s7 + $0x1f0] sm:$0xff] %vm27, %v8935
  %9000 = vst.msk [vmem:[%s7 + $0x1f8] sm:$0xff] %vm27, %v8936
  // Predicated region
  $region30: #{residual_block_nchw.1} parent=0 // pred_check
    _
  $region31: #{residual_block_nchw.1} parent=0 // pred_check_branch
    %9002 = sbr.rel (0) target = $region33
  $region32: #{residual_block_nchw.1} parent=0 // pred_region
    _
  $region33: #{residual_block_nchw.1} parent=0 // pred_fallthru
    _
  // Predicated region
  $region34: #{residual_block_nchw.1} parent=0 // pred_check
    _
  $region35: #{residual_block_nchw.1} parent=0 // pred_check_branch
    %9004 = sbr.rel (0) target = $region37
  $region36: #{residual_block_nchw.1} parent=0 // pred_region
    _
  $region37: #{residual_block_nchw.1} parent=0 // pred_fallthru
    _

</llo_original>
